<compile_context>
chip_gen: v7x
topology: tpu7x:2x2x1
jax: 0.10.0
libtpu: 0.0.40
codegen_flags: <defaults>
</compile_context>

<pallas_src>
import functools
import math

import jax
import jax.numpy as jnp
from jax.experimental import pallas as pl
from jax.experimental.pallas import tpu as pltpu


_COMPUTE_DTYPE = jnp.bfloat16          # MXU-native operand dtype
_VMEM_CAP = 32 * 1024 * 1024           # never request more than half of v7x per-TC VMEM
_VMEM_FLOOR = 4 * 1024 * 1024


def _round_up(x, m):
    return ((x + m - 1) // m) * m


def _vmem_budget(in_bytes, out_bytes, scratch_bytes=0, headroom=2 << 20):
    """Double-buffered tile footprint + scratch + headroom, clamped to a safe range."""
    b = 2 * (in_bytes + out_bytes) + scratch_bytes + headroom
    return int(min(max(b, _VMEM_FLOOR), _VMEM_CAP))


def _row_tile(dim, t):
    """Row (sublane) tiling: full block if small, else tile + pad to a multiple of t."""
    if dim <= t:
        return dim, dim
    return t, _round_up(dim, t)


def _col_tile(dim, t):
    """Column (lane) tiling: prefer a 128-multiple divisor of dim, else tile + pad."""
    if dim <= t:
        return dim, dim
    cand = (t // 128) * 128
    while cand >= 128:
        if dim % cand == 0:
            return cand, dim
        cand -= 128
    bt = (t // 128) * 128
    return bt, _round_up(dim, bt)


# ----------------------------- Pallas kernels ------------------------------ #

def _fused_matmul_kernel(*refs, has_ln, has_res, act, eps, single_k, cache_ln):
    """Tiled  y = [opt LN](x) @ W + b  [opt GELU]  [opt + residual].

    refs layout: x, [gamma, beta], w, b, [residual], out, [acc_scratch], [ln_cache]
    Grid: (M/bm, N/bn, K/bk); when has_ln the K axis is a single full-K block.
    """
    idx = 0
    x_ref = refs[idx]; idx += 1
    if has_ln:
        g_ref = refs[idx]; bt_ref = refs[idx + 1]; idx += 2
    w_ref = refs[idx]; b_ref = refs[idx + 1]; idx += 2
    if has_res:
        res_ref = refs[idx]; idx += 1
    o_ref = refs[idx]; idx += 1
    scr = list(refs[idx:])
    acc_ref = None if single_k else scr.pop(0)
    xn_ref = scr.pop(0) if cache_ln else None

    def _layernorm_tile():
        xf = x_ref[...].astype(jnp.float32)                 # LN statistics in f32 (VPU)
        mu = jnp.mean(xf, axis=-1, keepdims=True)
        var = jnp.mean(jnp.square(xf - mu), axis=-1, keepdims=True)
        xn = (xf - mu) * jax.lax.rsqrt(var + eps)
        xn = xn * g_ref[...].astype(jnp.float32) + bt_ref[...].astype(jnp.float32)
        return xn.astype(_COMPUTE_DTYPE)                     # back to MXU dtype

    if has_ln:
        if cache_ln:
            # Compute LN once per row tile; reuse across all N tiles (j axis is sequential).
            @pl.when(pl.program_id(1) == 0)
            def _():
                xn_ref[...] = _layernorm_tile()
            xop = xn_ref[...]
        else:
            xop = _layernorm_tile()
    else:
        xop = x_ref[...].astype(_COMPUTE_DTYPE)
    wop = w_ref[...].astype(_COMPUTE_DTYPE)

    def _epilogue(y):
        y = y + b_ref[...].astype(jnp.float32)
        if act == "gelu":
            y = jax.nn.gelu(y)                               # tanh-approx GELU (EUP)
        if has_res:
            y = y + res_ref[...].astype(jnp.float32)
        o_ref[...] = y.astype(o_ref.dtype)

    if single_k:
        # No K reduction -> skip the accumulator scratch read-modify-write entirely.
        _epilogue(jnp.dot(xop, wop, preferred_element_type=jnp.float32))
    else:
        k = pl.program_id(2)

        @pl.when(k == 0)
        def _():
            acc_ref[...] = jnp.zeros_like(acc_ref)

        acc_ref[...] += jnp.dot(xop, wop, preferred_element_type=jnp.float32)

        @pl.when(k == pl.num_programs(2) - 1)
        def _():
            _epilogue(acc_ref[...])


def fused_matmul(x, w, b, *, gamma=None, beta=None, residual=None, act=None,
                 eps=1e-6, tm=512, tn=512, tk=1024):
    """y = [LN](x) @ w + b [gelu] [+ residual]; x: [..., K] (bf16), w: [K, N] (bf16)."""
    lead = x.shape[:-1]
    K = x.shape[-1]
    N = w.shape[-1]
    M = math.prod(lead)
    x2 = x.reshape(M, K)
    has_ln = gamma is not None
    has_res = residual is not None
    res2 = residual.reshape(M, N) if has_res else None

    bm, Mp = _row_tile(M, tm)
    bn, Np = _col_tile(N, tn)
    if has_ln:
        bk, Kp = K, K                                       # LN statistics need the full row
    else:
        bk, Kp = _col_tile(K, tk)

    # Zero-pad ragged shapes to tile multiples (padded rows/cols are sliced away below).
    if Mp != M or Kp != K:
        x2 = jnp.pad(x2, ((0, Mp - M), (0, Kp - K)))
    wp = w
    if Kp != K or Np != N:
        wp = jnp.pad(w, ((0, Kp - K), (0, Np - N)))
    bp = b.reshape(1, N)
    if Np != N:
        bp = jnp.pad(bp, ((0, 0), (0, Np - N)))
    if has_res and (Mp != M or Np != N):
        res2 = jnp.pad(res2, ((0, Mp - M), (0, Np - N)))

    grid = (Mp // bm, Np // bn, Kp // bk)
    single_k = grid[2] == 1
    cache_ln = has_ln and grid[1] > 1

    in_specs = [pl.BlockSpec((bm, bk), lambda i, j, k: (i, k))]
    inputs = [x2]
    in_bytes = bm * bk * x2.dtype.itemsize
    if has_ln:
        in_specs += [pl.BlockSpec((1, bk), lambda i, j, k: (0, 0)),
                     pl.BlockSpec((1, bk), lambda i, j, k: (0, 0))]
        inputs += [gamma.reshape(1, K).astype(jnp.float32),
                   beta.reshape(1, K).astype(jnp.float32)]
        in_bytes += 2 * bk * 4
    in_specs += [pl.BlockSpec((bk, bn), lambda i, j, k: (k, j)),
                 pl.BlockSpec((1, bn), lambda i, j, k: (0, j))]
    inputs += [wp, bp.astype(jnp.float32)]
    in_bytes += bk * bn * wp.dtype.itemsize + bn * 4
    if has_res:
        in_specs += [pl.BlockSpec((bm, bn), lambda i, j, k: (i, j))]
        inputs += [res2]
        in_bytes += bm * bn * res2.dtype.itemsize

    scratch_shapes = []
    scratch_bytes = 0
    if not single_k:
        scratch_shapes.append(pltpu.VMEM((bm, bn), jnp.float32))
        scratch_bytes += bm * bn * 4
    if cache_ln:
        scratch_shapes.append(pltpu.VMEM((bm, bk), _COMPUTE_DTYPE))
        scratch_bytes += bm * bk * 2

    out_bytes = bm * bn * x.dtype.itemsize
    # When the LN cache is reused across j, keep j sequential so the cache stays valid.
    dims = (("parallel", "arbitrary", "arbitrary") if cache_ln
            else ("parallel", "parallel", "arbitrary"))

    out = pl.pallas_call(
        functools.partial(_fused_matmul_kernel, has_ln=has_ln, has_res=has_res,
                          act=act, eps=eps, single_k=single_k, cache_ln=cache_ln),
        out_shape=jax.ShapeDtypeStruct((Mp, Np), x.dtype),
        grid=grid,
        in_specs=in_specs,
        out_specs=pl.BlockSpec((bm, bn), lambda i, j, k: (i, j)),
        scratch_shapes=scratch_shapes,
        compiler_params=pltpu.CompilerParams(
            dimension_semantics=dims,
            vmem_limit_bytes=_vmem_budget(in_bytes, out_bytes, scratch_bytes)),
    )(*inputs)
    if Mp != M or Np != N:
        out = out[:M, :N]
    return out.reshape(*lead, N)


def _ln_kernel(x_ref, g_ref, b_ref, o_ref, *, eps):
    x = x_ref[...].astype(jnp.float32)                       # (bm, H)
    mu = jnp.mean(x, axis=-1, keepdims=True)
    var = jnp.mean(jnp.square(x - mu), axis=-1, keepdims=True)
    y = (x - mu) * jax.lax.rsqrt(var + eps)
    o_ref[...] = (y * g_ref[...].astype(jnp.float32)
                  + b_ref[...].astype(jnp.float32)).astype(o_ref.dtype)


def layernorm(x, gamma, beta, eps=1e-6, tm=1024):
    """Row-tiled LayerNorm over the last axis. x: [B, S, H]."""
    B, S, H = x.shape
    M = B * S
    x2 = x.reshape(M, H)
    bm, Mp = _row_tile(M, tm)
    if Mp != M:
        x2 = jnp.pad(x2, ((0, Mp - M), (0, 0)))
    dt = x.dtype.itemsize
    out = pl.pallas_call(
        functools.partial(_ln_kernel, eps=eps),
        out_shape=jax.ShapeDtypeStruct((Mp, H), x.dtype),
        grid=(Mp // bm,),
        in_specs=[pl.BlockSpec((bm, H), lambda i: (i, 0)),
                  pl.BlockSpec((1, H), lambda i: (0, 0)),
                  pl.BlockSpec((1, H), lambda i: (0, 0))],
        out_specs=pl.BlockSpec((bm, H), lambda i: (i, 0)),
        compiler_params=pltpu.CompilerParams(
            dimension_semantics=("parallel",),
            vmem_limit_bytes=_vmem_budget(bm * H * dt + 2 * H * 4, bm * H * dt)),
    )(x2, gamma.reshape(1, H).astype(jnp.float32), beta.reshape(1, H).astype(jnp.float32))
    if Mp != M:
        out = out[:M]
    return out.reshape(B, S, H)


def _attn_kernel(qkv_ref, *out_refs, num_heads, hidden, scale, with_weights):
    """Per-batch MHSA reading the fused (S, 3H) tensor; static head loop, lane-dense store."""
    o_ref = out_refs[0]
    w_ref = out_refs[1] if with_weights else None
    d = hidden // num_heads
    qkv = qkv_ref[...]                                        # one lane-dense (S, 3H) load
    ctx_heads = []
    for h in range(num_heads):                                # static unrolled head loop
        q = qkv[:, h * d:(h + 1) * d]
        k = qkv[:, hidden + h * d:hidden + (h + 1) * d]
        v = qkv[:, 2 * hidden + h * d:2 * hidden + (h + 1) * d]
        # QK^T without materializing a transpose: contract the head dim of both operands.
        s = jax.lax.dot_general(q, k, (((1,), (1,)), ((), ())),
                                preferred_element_type=jnp.float32) * scale
        s = s - jnp.max(s, axis=-1, keepdims=True)
        e = jnp.exp(s)
        p = e * pl.reciprocal(jnp.sum(e, axis=-1, keepdims=True), approx=True)
        ctx_heads.append(jnp.dot(p.astype(v.dtype), v,
                                 preferred_element_type=jnp.float32))
        if with_weights:
            w_ref[h, :, :] = p.astype(w_ref.dtype)
    # Single lane-dense (S, H) store instead of per-head masked stores.
    o_ref[...] = jnp.concatenate(ctx_heads, axis=-1).astype(o_ref.dtype)


def fused_attention(qkv, *, num_heads, hidden, vis):
    """qkv: [B, S, 3H] -> (context [B, S, H], attn weights [B, nH, S, S] or None)."""
    B, S, threeH = qkv.shape
    d = hidden // num_heads
    scale = 1.0 / math.sqrt(d)
    dt = qkv.dtype.itemsize
    ctx_shape = jax.ShapeDtypeStruct((B, S, hidden), qkv.dtype)
    ctx_spec = pl.BlockSpec((None, S, hidden), lambda b: (b, 0, 0))
    in_bytes = S * threeH * dt
    out_bytes = S * hidden * dt
    if vis:
        out_shape = (ctx_shape, jax.ShapeDtypeStruct((B, num_heads, S, S), qkv.dtype))
        out_specs = (ctx_spec,
                     pl.BlockSpec((None, num_heads, S, S), lambda b: (b, 0, 0, 0)))
        out_bytes += num_heads * S * S * dt
    else:
        out_shape = ctx_shape
        out_specs = ctx_spec
    scratch_est = 4 * S * S * 4                               # in-flight f32 softmax temps
    res = pl.pallas_call(
        functools.partial(_attn_kernel, num_heads=num_heads, hidden=hidden,
                          scale=scale, with_weights=vis),
        out_shape=out_shape,
        grid=(B,),
        in_specs=[pl.BlockSpec((None, S, threeH), lambda b: (b, 0, 0))],
        out_specs=out_specs,
        compiler_params=pltpu.CompilerParams(
            dimension_semantics=("parallel",),
            vmem_limit_bytes=_vmem_budget(in_bytes, out_bytes, scratch_est)),
    )(qkv)
    if vis:
        return res[0], res[1]
    return res, None


# --------------------------- Module-level forward --------------------------- #

def block_forward(p, x, num_heads, vis):
    B, S, H = x.shape
    # LN + fused QKV projection (weights pre-concatenated at init -> one matmul, one pass).
    qkv = fused_matmul(x, p["qkv_w"], p["qkv_b"],
                       gamma=p["attn_norm"]["g"], beta=p["attn_norm"]["b"])    # [B, S, 3H]
    # Attention straight from the fused tensor -- no head-split/merge transposes.
    ctx, weights = fused_attention(qkv, num_heads=num_heads, hidden=H, vis=vis)
    # Output projection + residual fused into the matmul epilogue.
    x = fused_matmul(ctx, p["out"]["w"], p["out"]["b"], residual=x)
    # FFN: LN + fc1 + GELU fused; fc2 + residual fused (K-tiled over mlp_dim).
    h1 = fused_matmul(x, p["fc1"]["w"], p["fc1"]["b"],
                      gamma=p["ffn_norm"]["g"], beta=p["ffn_norm"]["b"], act="gelu")
    x = fused_matmul(h1, p["fc2"]["w"], p["fc2"]["b"], residual=x)
    return x, weights


def mm_block_forward(p, x, text, clinical, num_heads, vis):
    # mm=True Block modeled as per-modality sub-blocks with separate parameters.
    x, w = block_forward(p["img"], x, num_heads, vis)
    text, _ = block_forward(p["text"], text, num_heads, False)
    clinical, _ = block_forward(p["clinical"], clinical, num_heads, False)
    return x, text, clinical, w


def encoder_forward(params, hidden_states, text, clinical, *, num_heads, vis=True):
    orig_dtype = hidden_states.dtype
    hidden_states = hidden_states.astype(_COMPUTE_DTYPE)
    text = text.astype(_COMPUTE_DTYPE)
    clinical = clinical.astype(_COMPUTE_DTYPE)

    attn_weights = []
    for i, layer_p in enumerate(params["layers"]):
        if i == 2:
            hidden_states = jnp.concatenate([hidden_states, text, clinical], axis=1)
            hidden_states, w = block_forward(layer_p, hidden_states, num_heads, vis)
        elif i < 2:
            hidden_states, text, clinical, w = mm_block_forward(
                layer_p, hidden_states, text, clinical, num_heads, vis)
        else:
            hidden_states, w = block_forward(layer_p, hidden_states, num_heads, vis)
        if vis:
            attn_weights.append(w)
    encoded = layernorm(hidden_states,
                        params["encoder_norm"]["g"],
                        params["encoder_norm"]["b"])
    return encoded.astype(orig_dtype), attn_weights


# ------------------------------- Param init --------------------------------- #

def init_linear_params(key, in_dim, out_dim):
    k_w, k_b = jax.random.split(key)
    lim = 1.0 / math.sqrt(in_dim)
    return {
        # Weights stored in bf16 (MXU-native); biases/LN params stay f32 (epilogue math).
        "w": jax.random.uniform(k_w, (in_dim, out_dim), jnp.float32, -lim, lim
                                ).astype(_COMPUTE_DTYPE),
        "b": jax.random.uniform(k_b, (out_dim,), jnp.float32, -lim, lim),
    }


def init_ln_params(dim):
    return {"g": jnp.ones((dim,), jnp.float32), "b": jnp.zeros((dim,), jnp.float32)}


def init_block_params(key, hidden, mlp_dim):
    ks = jax.random.split(key, 6)
    q = init_linear_params(ks[0], hidden, hidden)
    k = init_linear_params(ks[1], hidden, hidden)
    v = init_linear_params(ks[2], hidden, hidden)
    return {
        "attn_norm": init_ln_params(hidden),
        # q/k/v pre-concatenated once at init (no per-step concat under jit).
        "qkv_w": jnp.concatenate([q["w"], k["w"], v["w"]], axis=1),   # [H, 3H] bf16
        "qkv_b": jnp.concatenate([q["b"], k["b"], v["b"]], axis=0),   # [3H] f32
        "out": init_linear_params(ks[3], hidden, hidden),
        "ffn_norm": init_ln_params(hidden),
        "fc1": init_linear_params(ks[4], hidden, mlp_dim),
        "fc2": init_linear_params(ks[5], mlp_dim, hidden),
    }


def init_mm_block_params(key, hidden, mlp_dim):
    k_img, k_txt, k_cli = jax.random.split(key, 3)
    return {
        "img": init_block_params(k_img, hidden, mlp_dim),
        "text": init_block_params(k_txt, hidden, mlp_dim),
        "clinical": init_block_params(k_cli, hidden, mlp_dim),
    }


# ---------------------------------- Main ------------------------------------ #

if __name__ == "__main__":
    hidden_size = 32
    num_heads = 4
    mlp_dim = 64
    num_layers = 4
    vis = True

    B, S_img, S_txt, S_cli = 2, 8, 4, 2

    key = jax.random.PRNGKey(0)
    k_params, k_x, k_t, k_c = jax.random.split(key, 4)
    layer_keys = jax.random.split(k_params, num_layers)

    layers = []
    for i in range(num_layers):
        if i < 2:
            layers.append(init_mm_block_params(layer_keys[i], hidden_size, mlp_dim))
        else:
            layers.append(init_block_params(layer_keys[i], hidden_size, mlp_dim))
    params = {"layers": layers, "encoder_norm": init_ln_params(hidden_size)}

    hidden_states = jax.random.normal(k_x, (B, S_img, hidden_size), jnp.float32)
    text = jax.random.normal(k_t, (B, S_txt, hidden_size), jnp.float32)
    clinical = jax.random.normal(k_c, (B, S_cli, hidden_size), jnp.float32)

    fwd = jax.jit(functools.partial(encoder_forward, num_heads=num_heads, vis=vis))
    encoded, attn_weights = fwd(params, hidden_states, text, clinical)

    encoded = jax.block_until_ready(encoded)
    for w in attn_weights:
        jax.block_until_ready(w)

    assert encoded.shape == (B, S_img + S_txt + S_cli, hidden_size)
    assert len(attn_weights) == num_layers
    assert attn_weights[0].shape == (B, num_heads, S_img, S_img)
    assert attn_weights[2].shape == (B, num_heads, S_img + S_txt + S_cli,
                                     S_img + S_txt + S_cli)
    print("KERNEL_OK")
</pallas_src>

<mosaic_0001>
module attributes {stable_mosaic.version = 11 : i64} {
  func.func @_fused_matmul_kernel(%arg0: i32, %arg1: i32, %arg2: i32, %arg3: memref<4x32xbf16, #tpu.memory_space<vmem>>, %arg4: memref<32x32xbf16, #tpu.memory_space<vmem>>, %arg5: memref<1x32xf32, #tpu.memory_space<vmem>>, %arg6: memref<4x32xbf16, #tpu.memory_space<vmem>>, %arg7: memref<4x32xbf16, #tpu.memory_space<vmem>>) attributes {dimension_semantics = [#tpu.dimension_semantics<parallel>, #tpu.dimension_semantics<parallel>, #tpu.dimension_semantics<arbitrary>], iteration_bounds = array<i64: 1, 1, 1>, scalar_prefetch = 0 : i64, scratch_operands = 0 : i64, tpu.core_type = #tpu.core_type<tc>, window_params = [{transform_indices = @transform_0, window_bounds = array<i64: 4, 32>}, {transform_indices = @transform_1, window_bounds = array<i64: 32, 32>}, {transform_indices = @transform_2, window_bounds = array<i64: 1, 32>}, {transform_indices = @transform_3, window_bounds = array<i64: 4, 32>}, {transform_indices = @transform_4, window_bounds = array<i64: 4, 32>}]} {
    %c0 = arith.constant 0 : index
    %c0_0 = arith.constant 0 : index
    %0 = vector.load %arg3[%c0, %c0_0] : memref<4x32xbf16, #tpu.memory_space<vmem>>, vector<4x32xbf16>
    %c0_1 = arith.constant 0 : index
    %c0_2 = arith.constant 0 : index
    %1 = vector.load %arg4[%c0_1, %c0_2] : memref<32x32xbf16, #tpu.memory_space<vmem>>, vector<32x32xbf16>
    %cst = arith.constant dense<0.000000e+00> : vector<4x32xf32>
    %2 = tpu.matmul %0, %1, %cst {dimension_numbers = #tpu.dot_dimension_numbers<[1], [0], [0], [1], [0, 0, 1, 1], [], []>} : vector<4x32xbf16>, vector<32x32xbf16>, vector<4x32xf32> -> vector<4x32xf32>
    %c0_3 = arith.constant 0 : index
    %c0_4 = arith.constant 0 : index
    %3 = vector.load %arg5[%c0_3, %c0_4] : memref<1x32xf32, #tpu.memory_space<vmem>>, vector<1x32xf32>
    %4 = vector.broadcast %3 : vector<1x32xf32> to vector<4x32xf32>
    %5 = arith.addf %2, %4 : vector<4x32xf32>
    %c0_5 = arith.constant 0 : index
    %c0_6 = arith.constant 0 : index
    %6 = vector.load %arg6[%c0_5, %c0_6] : memref<4x32xbf16, #tpu.memory_space<vmem>>, vector<4x32xbf16>
    %7 = arith.extf %6 : vector<4x32xbf16> to vector<4x32xf32>
    %8 = arith.addf %5, %7 : vector<4x32xf32>
    %9 = arith.truncf %8 : vector<4x32xf32> to vector<4x32xbf16>
    %c0_7 = arith.constant 0 : index
    %c0_8 = arith.constant 0 : index
    %10 = vector.load %arg7[%c0_7, %c0_8] : memref<4x32xbf16, #tpu.memory_space<vmem>>, vector<4x32xbf16>
    tpu.vector_store %arg7[%c0_7, %c0_8], %9 {strides = array<i32>} : memref<4x32xbf16, #tpu.memory_space<vmem>>, vector<4x32xbf16>,
    return
  }
  func.func @transform_0(%arg0: i32, %arg1: i32, %arg2: i32) -> (i32, i32) {
    %c0_i32 = arith.constant 0 : i32
    return %arg0, %arg2 : i32, i32
  }
  func.func @transform_1(%arg0: i32, %arg1: i32, %arg2: i32) -> (i32, i32) {
    %c0_i32 = arith.constant 0 : i32
    return %arg2, %arg1 : i32, i32
  }
  func.func @transform_2(%arg0: i32, %arg1: i32, %arg2: i32) -> (i32, i32) {
    %c0_i32 = arith.constant 0 : i32
    %c0_i32_0 = arith.constant 0 : i32
    return %c0_i32, %arg1 : i32, i32
  }
  func.func @transform_3(%arg0: i32, %arg1: i32, %arg2: i32) -> (i32, i32) {
    %c0_i32 = arith.constant 0 : i32
    return %arg0, %arg1 : i32, i32
  }
  func.func @transform_4(%arg0: i32, %arg1: i32, %arg2: i32) -> (i32, i32) {
    %c0_i32 = arith.constant 0 : i32
    return %arg0, %arg1 : i32, i32
  }
}

module attributes {stable_mosaic.version = 11 : i64} {
  func.func @_fused_matmul_kernel(%arg0: i32, %arg1: i32, %arg2: i32, %arg3: memref<4x32xbf16, #tpu.memory_space<vmem>>, %arg4: memref<1x32xf32, #tpu.memory_space<vmem>>, %arg5: memref<1x32xf32, #tpu.memory_space<vmem>>, %arg6: memref<32x96xbf16, #tpu.memory_space<vmem>>, %arg7: memref<1x96xf32, #tpu.memory_space<vmem>>, %arg8: memref<4x96xbf16, #tpu.memory_space<vmem>>) attributes {dimension_semantics = [#tpu.dimension_semantics<parallel>, #tpu.dimension_semantics<parallel>, #tpu.dimension_semantics<arbitrary>], iteration_bounds = array<i64: 1, 1, 1>, scalar_prefetch = 0 : i64, scratch_operands = 0 : i64, tpu.core_type = #tpu.core_type<tc>, window_params = [{transform_indices = @transform_0, window_bounds = array<i64: 4, 32>}, {pipeline_mode = #tpu.pipeline_mode<synchronous>, transform_indices = @transform_1, window_bounds = array<i64: 1, 32>}, {pipeline_mode = #tpu.pipeline_mode<synchronous>, transform_indices = @transform_2, window_bounds = array<i64: 1, 32>}, {transform_indices = @transform_3, window_bounds = array<i64: 32, 96>}, {transform_indices = @transform_4, window_bounds = array<i64: 1, 96>}, {transform_indices = @transform_5, window_bounds = array<i64: 4, 96>}]} {
    %c0 = arith.constant 0 : index
    %c0_0 = arith.constant 0 : index
    %0 = vector.load %arg3[%c0, %c0_0] : memref<4x32xbf16, #tpu.memory_space<vmem>>, vector<4x32xbf16>
    %1 = arith.extf %0 : vector<4x32xbf16> to vector<4x32xf32>
    %cst = arith.constant dense<0.000000e+00> : vector<4xf32>
    %2 = vector.multi_reduction <add>, %1, %cst [1] : vector<4x32xf32> to vector<4xf32>
    %3 = vector.shape_cast %2 : vector<4xf32> to vector<4x1xf32>
    %cst_1 = arith.constant 3.200000e+01 : f32
    %4 = vector.broadcast %cst_1 : f32 to vector<4x1xf32>
    %5 = arith.divf %3, %4 : vector<4x1xf32>
    %6 = vector.broadcast %5 : vector<4x1xf32> to vector<4x32xf32>
    %7 = arith.subf %1, %6 : vector<4x32xf32>
    %8 = arith.mulf %7, %7 : vector<4x32xf32>
    %cst_2 = arith.constant dense<0.000000e+00> : vector<4xf32>
    %9 = vector.multi_reduction <add>, %8, %cst_2 [1] : vector<4x32xf32> to vector<4xf32>
    %10 = vector.shape_cast %9 : vector<4xf32> to vector<4x1xf32>
    %cst_3 = arith.constant 3.200000e+01 : f32
    %11 = vector.broadcast %cst_3 : f32 to vector<4x1xf32>
    %12 = arith.divf %10, %11 : vector<4x1xf32>
    %13 = vector.broadcast %5 : vector<4x1xf32> to vector<4x32xf32>
    %14 = arith.subf %1, %13 : vector<4x32xf32>
    %cst_4 = arith.constant 9.99999997E-7 : f32
    %15 = vector.broadcast %cst_4 : f32 to vector<4x1xf32>
    %16 = arith.addf %12, %15 : vector<4x1xf32>
    %17 = math.rsqrt %16 : vector<4x1xf32>
    %18 = vector.broadcast %17 : vector<4x1xf32> to vector<4x32xf32>
    %19 = arith.mulf %14, %18 : vector<4x32xf32>
    %c0_5 = arith.constant 0 : index
    %c0_6 = arith.constant 0 : index
    %20 = vector.load %arg4[%c0_5, %c0_6] : memref<1x32xf32, #tpu.memory_space<vmem>>, vector<1x32xf32>
    %21 = vector.broadcast %20 : vector<1x32xf32> to vector<4x32xf32>
    %22 = arith.mulf %19, %21 : vector<4x32xf32>
    %c0_7 = arith.constant 0 : index
    %c0_8 = arith.constant 0 : index
    %23 = vector.load %arg5[%c0_7, %c0_8] : memref<1x32xf32, #tpu.memory_space<vmem>>, vector<1x32xf32>
    %24 = vector.broadcast %23 : vector<1x32xf32> to vector<4x32xf32>
    %25 = arith.addf %22, %24 : vector<4x32xf32>
    %26 = arith.truncf %25 : vector<4x32xf32> to vector<4x32xbf16>
    %c0_9 = arith.constant 0 : index
    %c0_10 = arith.constant 0 : index
    %27 = vector.load %arg6[%c0_9, %c0_10] : memref<32x96xbf16, #tpu.memory_space<vmem>>, vector<32x96xbf16>
    %cst_11 = arith.constant dense<0.000000e+00> : vector<4x96xf32>
    %28 = tpu.matmul %26, %27, %cst_11 {dimension_numbers = #tpu.dot_dimension_numbers<[1], [0], [0], [1], [0, 0, 1, 1], [], []>} : vector<4x32xbf16>, vector<32x96xbf16>, vector<4x96xf32> -> vector<4x96xf32>
    %c0_12 = arith.constant 0 : index
    %c0_13 = arith.constant 0 : index
    %29 = vector.load %arg7[%c0_12, %c0_13] : memref<1x96xf32, #tpu.memory_space<vmem>>, vector<1x96xf32>
    %30 = vector.broadcast %29 : vector<1x96xf32> to vector<4x96xf32>
    %31 = arith.addf %28, %30 : vector<4x96xf32>
    %32 = arith.truncf %31 : vector<4x96xf32> to vector<4x96xbf16>
    %c0_14 = arith.constant 0 : index
    %c0_15 = arith.constant 0 : index
    %33 = vector.load %arg8[%c0_14, %c0_15] : memref<4x96xbf16, #tpu.memory_space<vmem>>, vector<4x96xbf16>
    tpu.vector_store %arg8[%c0_14, %c0_15], %32 {strides = array<i32>} : memref<4x96xbf16, #tpu.memory_space<vmem>>, vector<4x96xbf16>,
    return
  }
  func.func @transform_0(%arg0: i32, %arg1: i32, %arg2: i32) -> (i32, i32) {
    %c0_i32 = arith.constant 0 : i32
    return %arg0, %arg2 : i32, i32
  }
  func.func @transform_1(%arg0: i32, %arg1: i32, %arg2: i32) -> (i32, i32) {
    %c0_i32 = arith.constant 0 : i32
    %c0_i32_0 = arith.constant 0 : i32
    %c0_i32_1 = arith.constant 0 : i32
    return %c0_i32, %c0_i32_0 : i32, i32
  }
  func.func @transform_2(%arg0: i32, %arg1: i32, %arg2: i32) -> (i32, i32) {
    %c0_i32 = arith.constant 0 : i32
    %c0_i32_0 = arith.constant 0 : i32
    %c0_i32_1 = arith.constant 0 : i32
    return %c0_i32, %c0_i32_0 : i32, i32
  }
  func.func @transform_3(%arg0: i32, %arg1: i32, %arg2: i32) -> (i32, i32) {
    %c0_i32 = arith.constant 0 : i32
    return %arg2, %arg1 : i32, i32
  }
  func.func @transform_4(%arg0: i32, %arg1: i32, %arg2: i32) -> (i32, i32) {
    %c0_i32 = arith.constant 0 : i32
    %c0_i32_0 = arith.constant 0 : i32
    return %c0_i32, %arg1 : i32, i32
  }
  func.func @transform_5(%arg0: i32, %arg1: i32, %arg2: i32) -> (i32, i32) {
    %c0_i32 = arith.constant 0 : i32
    return %arg0, %arg1 : i32, i32
  }
}

module attributes {stable_mosaic.version = 11 : i64} {
  func.func @_attn_kernel(%arg0: i32, %arg1: memref<1x2x96xbf16, #tpu.memory_space<vmem>>, %arg2: memref<1x2x32xbf16, #tpu.memory_space<vmem>>) attributes {dimension_semantics = [#tpu.dimension_semantics<parallel>], iteration_bounds = array<i64: 2>, scalar_prefetch = 0 : i64, scratch_operands = 0 : i64, tpu.core_type = #tpu.core_type<tc>, window_params = [{transform_indices = @transform_0, window_bounds = array<i64: 1, 2, 96>}, {transform_indices = @transform_1, window_bounds = array<i64: 1, 2, 32>}]} {
    %c0 = arith.constant 0 : index
    %c0_0 = arith.constant 0 : index
    %c0_1 = arith.constant 0 : index
    %0 = vector.load %arg1[%c0, %c0_0, %c0_1] : memref<1x2x96xbf16, #tpu.memory_space<vmem>>, vector<1x2x96xbf16>
    %1 = vector.shape_cast %0 : vector<1x2x96xbf16> to vector<2x96xbf16>
    %2 = vector.extract_strided_slice %1 {offsets = [0, 0], sizes = [2, 8], strides = [1, 1]} : vector<2x96xbf16> to vector<2x8xbf16>
    %3 = vector.extract_strided_slice %1 {offsets = [0, 32], sizes = [2, 8], strides = [1, 1]} : vector<2x96xbf16> to vector<2x8xbf16>
    %4 = vector.extract_strided_slice %1 {offsets = [0, 64], sizes = [2, 8], strides = [1, 1]} : vector<2x96xbf16> to vector<2x8xbf16>
    %cst = arith.constant dense<0.000000e+00> : vector<2x2xf32>
    %5 = tpu.matmul %2, %3, %cst {dimension_numbers = #tpu.dot_dimension_numbers<[1], [1], [0], [0], [0, 0, 1, 0], [], []>} : vector<2x8xbf16>, vector<2x8xbf16>, vector<2x2xf32> -> vector<2x2xf32>
    %cst_2 = arith.constant 0.353553385 : f32
    %6 = vector.broadcast %cst_2 : f32 to vector<2x2xf32>
    %7 = arith.mulf %5, %6 : vector<2x2xf32>
    %cst_3 = arith.constant dense<0xFF800000> : vector<2xf32>
    %8 = vector.multi_reduction <maximumf>, %7, %cst_3 [1] : vector<2x2xf32> to vector<2xf32>
    %9 = vector.shape_cast %8 : vector<2xf32> to vector<2x1xf32>
    %10 = vector.broadcast %9 : vector<2x1xf32> to vector<2x2xf32>
    %11 = arith.subf %7, %10 : vector<2x2xf32>
    %12 = math.exp %11 : vector<2x2xf32>
    %cst_4 = arith.constant dense<0.000000e+00> : vector<2xf32>
    %13 = vector.multi_reduction <add>, %12, %cst_4 [1] : vector<2x2xf32> to vector<2xf32>
    %14 = vector.shape_cast %13 : vector<2xf32> to vector<2x1xf32>
    %15 = tpu.reciprocal %14 {approx = true} : vector<2x1xf32> -> vector<2x1xf32>
    %16 = vector.broadcast %15 : vector<2x1xf32> to vector<2x2xf32>
    %17 = arith.mulf %12, %16 : vector<2x2xf32>
    %18 = arith.truncf %17 : vector<2x2xf32> to vector<2x2xbf16>
    %cst_5 = arith.constant dense<0.000000e+00> : vector<2x8xf32>
    %19 = tpu.matmul %18, %4, %cst_5 {dimension_numbers = #tpu.dot_dimension_numbers<[1], [0], [0], [1], [0, 0, 1, 1], [], []>} : vector<2x2xbf16>, vector<2x8xbf16>, vector<2x8xf32> -> vector<2x8xf32>
    %20 = vector.extract_strided_slice %1 {offsets = [0, 8], sizes = [2, 8], strides = [1, 1]} : vector<2x96xbf16> to vector<2x8xbf16>
    %21 = vector.extract_strided_slice %1 {offsets = [0, 40], sizes = [2, 8], strides = [1, 1]} : vector<2x96xbf16> to vector<2x8xbf16>
    %22 = vector.extract_strided_slice %1 {offsets = [0, 72], sizes = [2, 8], strides = [1, 1]} : vector<2x96xbf16> to vector<2x8xbf16>
    %cst_6 = arith.constant dense<0.000000e+00> : vector<2x2xf32>
    %23 = tpu.matmul %20, %21, %cst_6 {dimension_numbers = #tpu.dot_dimension_numbers<[1], [1], [0], [0], [0, 0, 1, 0], [], []>} : vector<2x8xbf16>, vector<2x8xbf16>, vector<2x2xf32> -> vector<2x2xf32>
    %cst_7 = arith.constant 0.353553385 : f32
    %24 = vector.broadcast %cst_7 : f32 to vector<2x2xf32>
    %25 = arith.mulf %23, %24 : vector<2x2xf32>
    %cst_8 = arith.constant dense<0xFF800000> : vector<2xf32>
    %26 = vector.multi_reduction <maximumf>, %25, %cst_8 [1] : vector<2x2xf32> to vector<2xf32>
    %27 = vector.shape_cast %26 : vector<2xf32> to vector<2x1xf32>
    %28 = vector.broadcast %27 : vector<2x1xf32> to vector<2x2xf32>
    %29 = arith.subf %25, %28 : vector<2x2xf32>
    %30 = math.exp %29 : vector<2x2xf32>
    %cst_9 = arith.constant dense<0.000000e+00> : vector<2xf32>
    %31 = vector.multi_reduction <add>, %30, %cst_9 [1] : vector<2x2xf32> to vector<2xf32>
    %32 = vector.shape_cast %31 : vector<2xf32> to vector<2x1xf32>
    %33 = tpu.reciprocal %32 {approx = true} : vector<2x1xf32> -> vector<2x1xf32>
    %34 = vector.broadcast %33 : vector<2x1xf32> to vector<2x2xf32>
    %35 = arith.mulf %30, %34 : vector<2x2xf32>
    %36 = arith.truncf %35 : vector<2x2xf32> to vector<2x2xbf16>
    %cst_10 = arith.constant dense<0.000000e+00> : vector<2x8xf32>
    %37 = tpu.matmul %36, %22, %cst_10 {dimension_numbers = #tpu.dot_dimension_numbers<[1], [0], [0], [1], [0, 0, 1, 1], [], []>} : vector<2x2xbf16>, vector<2x8xbf16>, vector<2x8xf32> -> vector<2x8xf32>
    %38 = vector.extract_strided_slice %1 {offsets = [0, 16], sizes = [2, 8], strides = [1, 1]} : vector<2x96xbf16> to vector<2x8xbf16>
    %39 = vector.extract_strided_slice %1 {offsets = [0, 48], sizes = [2, 8], strides = [1, 1]} : vector<2x96xbf16> to vector<2x8xbf16>
    %40 = vector.extract_strided_slice %1 {offsets = [0, 80], sizes = [2, 8], strides = [1, 1]} : vector<2x96xbf16> to vector<2x8xbf16>
    %cst_11 = arith.constant dense<0.000000e+00> : vector<2x2xf32>
    %41 = tpu.matmul %38, %39, %cst_11 {dimension_numbers = #tpu.dot_dimension_numbers<[1], [1], [0], [0], [0, 0, 1, 0], [], []>} : vector<2x8xbf16>, vector<2x8xbf16>, vector<2x2xf32> -> vector<2x2xf32>
    %cst_12 = arith.constant 0.353553385 : f32
    %42 = vector.broadcast %cst_12 : f32 to vector<2x2xf32>
    %43 = arith.mulf %41, %42 : vector<2x2xf32>
    %cst_13 = arith.constant dense<0xFF800000> : vector<2xf32>
    %44 = vector.multi_reduction <maximumf>, %43, %cst_13 [1] : vector<2x2xf32> to vector<2xf32>
    %45 = vector.shape_cast %44 : vector<2xf32> to vector<2x1xf32>
    %46 = vector.broadcast %45 : vector<2x1xf32> to vector<2x2xf32>
    %47 = arith.subf %43, %46 : vector<2x2xf32>
    %48 = math.exp %47 : vector<2x2xf32>
    %cst_14 = arith.constant dense<0.000000e+00> : vector<2xf32>
    %49 = vector.multi_reduction <add>, %48, %cst_14 [1] : vector<2x2xf32> to vector<2xf32>
    %50 = vector.shape_cast %49 : vector<2xf32> to vector<2x1xf32>
    %51 = tpu.reciprocal %50 {approx = true} : vector<2x1xf32> -> vector<2x1xf32>
    %52 = vector.broadcast %51 : vector<2x1xf32> to vector<2x2xf32>
    %53 = arith.mulf %48, %52 : vector<2x2xf32>
    %54 = arith.truncf %53 : vector<2x2xf32> to vector<2x2xbf16>
    %cst_15 = arith.constant dense<0.000000e+00> : vector<2x8xf32>
    %55 = tpu.matmul %54, %40, %cst_15 {dimension_numbers = #tpu.dot_dimension_numbers<[1], [0], [0], [1], [0, 0, 1, 1], [], []>} : vector<2x2xbf16>, vector<2x8xbf16>, vector<2x8xf32> -> vector<2x8xf32>
    %56 = vector.extract_strided_slice %1 {offsets = [0, 24], sizes = [2, 8], strides = [1, 1]} : vector<2x96xbf16> to vector<2x8xbf16>
    %57 = vector.extract_strided_slice %1 {offsets = [0, 56], sizes = [2, 8], strides = [1, 1]} : vector<2x96xbf16> to vector<2x8xbf16>
    %58 = vector.extract_strided_slice %1 {offsets = [0, 88], sizes = [2, 8], strides = [1, 1]} : vector<2x96xbf16> to vector<2x8xbf16>
    %cst_16 = arith.constant dense<0.000000e+00> : vector<2x2xf32>
    %59 = tpu.matmul %56, %57, %cst_16 {dimension_numbers = #tpu.dot_dimension_numbers<[1], [1], [0], [0], [0, 0, 1, 0], [], []>} : vector<2x8xbf16>, vector<2x8xbf16>, vector<2x2xf32> -> vector<2x2xf32>
    %cst_17 = arith.constant 0.353553385 : f32
    %60 = vector.broadcast %cst_17 : f32 to vector<2x2xf32>
    %61 = arith.mulf %59, %60 : vector<2x2xf32>
    %cst_18 = arith.constant dense<0xFF800000> : vector<2xf32>
    %62 = vector.multi_reduction <maximumf>, %61, %cst_18 [1] : vector<2x2xf32> to vector<2xf32>
    %63 = vector.shape_cast %62 : vector<2xf32> to vector<2x1xf32>
    %64 = vector.broadcast %63 : vector<2x1xf32> to vector<2x2xf32>
    %65 = arith.subf %61, %64 : vector<2x2xf32>
    %66 = math.exp %65 : vector<2x2xf32>
    %cst_19 = arith.constant dense<0.000000e+00> : vector<2xf32>
    %67 = vector.multi_reduction <add>, %66, %cst_19 [1] : vector<2x2xf32> to vector<2xf32>
    %68 = vector.shape_cast %67 : vector<2xf32> to vector<2x1xf32>
    %69 = tpu.reciprocal %68 {approx = true} : vector<2x1xf32> -> vector<2x1xf32>
    %70 = vector.broadcast %69 : vector<2x1xf32> to vector<2x2xf32>
    %71 = arith.mulf %66, %70 : vector<2x2xf32>
    %72 = arith.truncf %71 : vector<2x2xf32> to vector<2x2xbf16>
    %cst_20 = arith.constant dense<0.000000e+00> : vector<2x8xf32>
    %73 = tpu.matmul %72, %58, %cst_20 {dimension_numbers = #tpu.dot_dimension_numbers<[1], [0], [0], [1], [0, 0, 1, 1], [], []>} : vector<2x2xbf16>, vector<2x8xbf16>, vector<2x8xf32> -> vector<2x8xf32>
    %74 = tpu.concatenate %19, %37, %55, %73 in 1 : vector<2x8xf32>, vector<2x8xf32>, vector<2x8xf32>, vector<2x8xf32> -> vector<2x32xf32>
    %75 = arith.truncf %74 : vector<2x32xf32> to vector<2x32xbf16>
    %c0_21 = arith.constant 0 : index
    %c0_22 = arith.constant 0 : index
    %c0_23 = arith.constant 0 : index
    %76 = vector.load %arg2[%c0_21, %c0_22, %c0_23] : memref<1x2x32xbf16, #tpu.memory_space<vmem>>, vector<1x2x32xbf16>
    %77 = vector.shape_cast %76 : vector<1x2x32xbf16> to vector<2x32xbf16>
    %78 = vector.shape_cast %75 : vector<2x32xbf16> to vector<1x2x32xbf16>
    tpu.vector_store %arg2[%c0_21, %c0_22, %c0_23], %78 {strides = array<i32>} : memref<1x2x32xbf16, #tpu.memory_space<vmem>>, vector<1x2x32xbf16>,
    return
  }
  func.func @transform_0(%arg0: i32) -> (i32, i32, i32) {
    %c0_i32 = arith.constant 0 : i32
    %c0_i32_0 = arith.constant 0 : i32
    %c0_i32_1 = arith.constant 0 : i32
    return %arg0, %c0_i32, %c0_i32_0 : i32, i32, i32
  }
  func.func @transform_1(%arg0: i32) -> (i32, i32, i32) {
    %c0_i32 = arith.constant 0 : i32
    %c0_i32_0 = arith.constant 0 : i32
    %c0_i32_1 = arith.constant 0 : i32
    return %arg0, %c0_i32, %c0_i32_0 : i32, i32, i32
  }
}

module attributes {stable_mosaic.version = 11 : i64} {
  func.func @_fused_matmul_kernel(%arg0: i32, %arg1: i32, %arg2: i32, %arg3: memref<4x32xbf16, #tpu.memory_space<vmem>>, %arg4: memref<1x32xf32, #tpu.memory_space<vmem>>, %arg5: memref<1x32xf32, #tpu.memory_space<vmem>>, %arg6: memref<32x64xbf16, #tpu.memory_space<vmem>>, %arg7: memref<1x64xf32, #tpu.memory_space<vmem>>, %arg8: memref<4x64xbf16, #tpu.memory_space<vmem>>) attributes {dimension_semantics = [#tpu.dimension_semantics<parallel>, #tpu.dimension_semantics<parallel>, #tpu.dimension_semantics<arbitrary>], iteration_bounds = array<i64: 1, 1, 1>, scalar_prefetch = 0 : i64, scratch_operands = 0 : i64, tpu.core_type = #tpu.core_type<tc>, window_params = [{transform_indices = @transform_0, window_bounds = array<i64: 4, 32>}, {pipeline_mode = #tpu.pipeline_mode<synchronous>, transform_indices = @transform_1, window_bounds = array<i64: 1, 32>}, {pipeline_mode = #tpu.pipeline_mode<synchronous>, transform_indices = @transform_2, window_bounds = array<i64: 1, 32>}, {transform_indices = @transform_3, window_bounds = array<i64: 32, 64>}, {transform_indices = @transform_4, window_bounds = array<i64: 1, 64>}, {transform_indices = @transform_5, window_bounds = array<i64: 4, 64>}]} {
    %c0 = arith.constant 0 : index
    %c0_0 = arith.constant 0 : index
    %0 = vector.load %arg3[%c0, %c0_0] : memref<4x32xbf16, #tpu.memory_space<vmem>>, vector<4x32xbf16>
    %1 = arith.extf %0 : vector<4x32xbf16> to vector<4x32xf32>
    %cst = arith.constant dense<0.000000e+00> : vector<4xf32>
    %2 = vector.multi_reduction <add>, %1, %cst [1] : vector<4x32xf32> to vector<4xf32>
    %3 = vector.shape_cast %2 : vector<4xf32> to vector<4x1xf32>
    %cst_1 = arith.constant 3.200000e+01 : f32
    %4 = vector.broadcast %cst_1 : f32 to vector<4x1xf32>
    %5 = arith.divf %3, %4 : vector<4x1xf32>
    %6 = vector.broadcast %5 : vector<4x1xf32> to vector<4x32xf32>
    %7 = arith.subf %1, %6 : vector<4x32xf32>
    %8 = arith.mulf %7, %7 : vector<4x32xf32>
    %cst_2 = arith.constant dense<0.000000e+00> : vector<4xf32>
    %9 = vector.multi_reduction <add>, %8, %cst_2 [1] : vector<4x32xf32> to vector<4xf32>
    %10 = vector.shape_cast %9 : vector<4xf32> to vector<4x1xf32>
    %cst_3 = arith.constant 3.200000e+01 : f32
    %11 = vector.broadcast %cst_3 : f32 to vector<4x1xf32>
    %12 = arith.divf %10, %11 : vector<4x1xf32>
    %13 = vector.broadcast %5 : vector<4x1xf32> to vector<4x32xf32>
    %14 = arith.subf %1, %13 : vector<4x32xf32>
    %cst_4 = arith.constant 9.99999997E-7 : f32
    %15 = vector.broadcast %cst_4 : f32 to vector<4x1xf32>
    %16 = arith.addf %12, %15 : vector<4x1xf32>
    %17 = math.rsqrt %16 : vector<4x1xf32>
    %18 = vector.broadcast %17 : vector<4x1xf32> to vector<4x32xf32>
    %19 = arith.mulf %14, %18 : vector<4x32xf32>
    %c0_5 = arith.constant 0 : index
    %c0_6 = arith.constant 0 : index
    %20 = vector.load %arg4[%c0_5, %c0_6] : memref<1x32xf32, #tpu.memory_space<vmem>>, vector<1x32xf32>
    %21 = vector.broadcast %20 : vector<1x32xf32> to vector<4x32xf32>
    %22 = arith.mulf %19, %21 : vector<4x32xf32>
    %c0_7 = arith.constant 0 : index
    %c0_8 = arith.constant 0 : index
    %23 = vector.load %arg5[%c0_7, %c0_8] : memref<1x32xf32, #tpu.memory_space<vmem>>, vector<1x32xf32>
    %24 = vector.broadcast %23 : vector<1x32xf32> to vector<4x32xf32>
    %25 = arith.addf %22, %24 : vector<4x32xf32>
    %26 = arith.truncf %25 : vector<4x32xf32> to vector<4x32xbf16>
    %c0_9 = arith.constant 0 : index
    %c0_10 = arith.constant 0 : index
    %27 = vector.load %arg6[%c0_9, %c0_10] : memref<32x64xbf16, #tpu.memory_space<vmem>>, vector<32x64xbf16>
    %cst_11 = arith.constant dense<0.000000e+00> : vector<4x64xf32>
    %28 = tpu.matmul %26, %27, %cst_11 {dimension_numbers = #tpu.dot_dimension_numbers<[1], [0], [0], [1], [0, 0, 1, 1], [], []>} : vector<4x32xbf16>, vector<32x64xbf16>, vector<4x64xf32> -> vector<4x64xf32>
    %c0_12 = arith.constant 0 : index
    %c0_13 = arith.constant 0 : index
    %29 = vector.load %arg7[%c0_12, %c0_13] : memref<1x64xf32, #tpu.memory_space<vmem>>, vector<1x64xf32>
    %30 = vector.broadcast %29 : vector<1x64xf32> to vector<4x64xf32>
    %31 = arith.addf %28, %30 : vector<4x64xf32>
    %32 = arith.mulf %31, %31 : vector<4x64xf32>
    %33 = arith.mulf %31, %32 : vector<4x64xf32>
    %cst_14 = arith.constant 4.471500e-02 : f32
    %34 = vector.broadcast %cst_14 : f32 to vector<4x64xf32>
    %35 = arith.mulf %34, %33 : vector<4x64xf32>
    %36 = arith.addf %31, %35 : vector<4x64xf32>
    %cst_15 = arith.constant 0.797884583 : f32
    %37 = vector.broadcast %cst_15 : f32 to vector<4x64xf32>
    %38 = arith.mulf %37, %36 : vector<4x64xf32>
    %39 = math.tanh %38 : vector<4x64xf32>
    %cst_16 = arith.constant 1.000000e+00 : f32
    %40 = vector.broadcast %cst_16 : f32 to vector<4x64xf32>
    %41 = arith.addf %40, %39 : vector<4x64xf32>
    %cst_17 = arith.constant 5.000000e-01 : f32
    %42 = vector.broadcast %cst_17 : f32 to vector<4x64xf32>
    %43 = arith.mulf %42, %41 : vector<4x64xf32>
    %44 = arith.mulf %31, %43 : vector<4x64xf32>
    %45 = arith.truncf %44 : vector<4x64xf32> to vector<4x64xbf16>
    %c0_18 = arith.constant 0 : index
    %c0_19 = arith.constant 0 : index
    %46 = vector.load %arg8[%c0_18, %c0_19] : memref<4x64xbf16, #tpu.memory_space<vmem>>, vector<4x64xbf16>
    tpu.vector_store %arg8[%c0_18, %c0_19], %45 {strides = array<i32>} : memref<4x64xbf16, #tpu.memory_space<vmem>>, vector<4x64xbf16>,
    return
  }
  func.func @transform_0(%arg0: i32, %arg1: i32, %arg2: i32) -> (i32, i32) {
    %c0_i32 = arith.constant 0 : i32
    return %arg0, %arg2 : i32, i32
  }
  func.func @transform_1(%arg0: i32, %arg1: i32, %arg2: i32) -> (i32, i32) {
    %c0_i32 = arith.constant 0 : i32
    %c0_i32_0 = arith.constant 0 : i32
    %c0_i32_1 = arith.constant 0 : i32
    return %c0_i32, %c0_i32_0 : i32, i32
  }
  func.func @transform_2(%arg0: i32, %arg1: i32, %arg2: i32) -> (i32, i32) {
    %c0_i32 = arith.constant 0 : i32
    %c0_i32_0 = arith.constant 0 : i32
    %c0_i32_1 = arith.constant 0 : i32
    return %c0_i32, %c0_i32_0 : i32, i32
  }
  func.func @transform_3(%arg0: i32, %arg1: i32, %arg2: i32) -> (i32, i32) {
    %c0_i32 = arith.constant 0 : i32
    return %arg2, %arg1 : i32, i32
  }
  func.func @transform_4(%arg0: i32, %arg1: i32, %arg2: i32) -> (i32, i32) {
    %c0_i32 = arith.constant 0 : i32
    %c0_i32_0 = arith.constant 0 : i32
    return %c0_i32, %arg1 : i32, i32
  }
  func.func @transform_5(%arg0: i32, %arg1: i32, %arg2: i32) -> (i32, i32) {
    %c0_i32 = arith.constant 0 : i32
    return %arg0, %arg1 : i32, i32
  }
}

module attributes {stable_mosaic.version = 11 : i64} {
  func.func @_fused_matmul_kernel(%arg0: i32, %arg1: i32, %arg2: i32, %arg3: memref<8x32xbf16, #tpu.memory_space<vmem>>, %arg4: memref<1x32xf32, #tpu.memory_space<vmem>>, %arg5: memref<1x32xf32, #tpu.memory_space<vmem>>, %arg6: memref<32x96xbf16, #tpu.memory_space<vmem>>, %arg7: memref<1x96xf32, #tpu.memory_space<vmem>>, %arg8: memref<8x96xbf16, #tpu.memory_space<vmem>>) attributes {dimension_semantics = [#tpu.dimension_semantics<parallel>, #tpu.dimension_semantics<parallel>, #tpu.dimension_semantics<arbitrary>], iteration_bounds = array<i64: 1, 1, 1>, scalar_prefetch = 0 : i64, scratch_operands = 0 : i64, tpu.core_type = #tpu.core_type<tc>, window_params = [{transform_indices = @transform_0, window_bounds = array<i64: 8, 32>}, {pipeline_mode = #tpu.pipeline_mode<synchronous>, transform_indices = @transform_1, window_bounds = array<i64: 1, 32>}, {pipeline_mode = #tpu.pipeline_mode<synchronous>, transform_indices = @transform_2, window_bounds = array<i64: 1, 32>}, {transform_indices = @transform_3, window_bounds = array<i64: 32, 96>}, {transform_indices = @transform_4, window_bounds = array<i64: 1, 96>}, {transform_indices = @transform_5, window_bounds = array<i64: 8, 96>}]} {
    %c0 = arith.constant 0 : index
    %c0_0 = arith.constant 0 : index
    %0 = vector.load %arg3[%c0, %c0_0] : memref<8x32xbf16, #tpu.memory_space<vmem>>, vector<8x32xbf16>
    %1 = arith.extf %0 : vector<8x32xbf16> to vector<8x32xf32>
    %cst = arith.constant dense<0.000000e+00> : vector<8xf32>
    %2 = vector.multi_reduction <add>, %1, %cst [1] : vector<8x32xf32> to vector<8xf32>
    %3 = vector.shape_cast %2 : vector<8xf32> to vector<8x1xf32>
    %cst_1 = arith.constant 3.200000e+01 : f32
    %4 = vector.broadcast %cst_1 : f32 to vector<8x1xf32>
    %5 = arith.divf %3, %4 : vector<8x1xf32>
    %6 = vector.broadcast %5 : vector<8x1xf32> to vector<8x32xf32>
    %7 = arith.subf %1, %6 : vector<8x32xf32>
    %8 = arith.mulf %7, %7 : vector<8x32xf32>
    %cst_2 = arith.constant dense<0.000000e+00> : vector<8xf32>
    %9 = vector.multi_reduction <add>, %8, %cst_2 [1] : vector<8x32xf32> to vector<8xf32>
    %10 = vector.shape_cast %9 : vector<8xf32> to vector<8x1xf32>
    %cst_3 = arith.constant 3.200000e+01 : f32
    %11 = vector.broadcast %cst_3 : f32 to vector<8x1xf32>
    %12 = arith.divf %10, %11 : vector<8x1xf32>
    %13 = vector.broadcast %5 : vector<8x1xf32> to vector<8x32xf32>
    %14 = arith.subf %1, %13 : vector<8x32xf32>
    %cst_4 = arith.constant 9.99999997E-7 : f32
    %15 = vector.broadcast %cst_4 : f32 to vector<8x1xf32>
    %16 = arith.addf %12, %15 : vector<8x1xf32>
    %17 = math.rsqrt %16 : vector<8x1xf32>
    %18 = vector.broadcast %17 : vector<8x1xf32> to vector<8x32xf32>
    %19 = arith.mulf %14, %18 : vector<8x32xf32>
    %c0_5 = arith.constant 0 : index
    %c0_6 = arith.constant 0 : index
    %20 = vector.load %arg4[%c0_5, %c0_6] : memref<1x32xf32, #tpu.memory_space<vmem>>, vector<1x32xf32>
    %21 = vector.broadcast %20 : vector<1x32xf32> to vector<8x32xf32>
    %22 = arith.mulf %19, %21 : vector<8x32xf32>
    %c0_7 = arith.constant 0 : index
    %c0_8 = arith.constant 0 : index
    %23 = vector.load %arg5[%c0_7, %c0_8] : memref<1x32xf32, #tpu.memory_space<vmem>>, vector<1x32xf32>
    %24 = vector.broadcast %23 : vector<1x32xf32> to vector<8x32xf32>
    %25 = arith.addf %22, %24 : vector<8x32xf32>
    %26 = arith.truncf %25 : vector<8x32xf32> to vector<8x32xbf16>
    %c0_9 = arith.constant 0 : index
    %c0_10 = arith.constant 0 : index
    %27 = vector.load %arg6[%c0_9, %c0_10] : memref<32x96xbf16, #tpu.memory_space<vmem>>, vector<32x96xbf16>
    %cst_11 = arith.constant dense<0.000000e+00> : vector<8x96xf32>
    %28 = tpu.matmul %26, %27, %cst_11 {dimension_numbers = #tpu.dot_dimension_numbers<[1], [0], [0], [1], [0, 0, 1, 1], [], []>} : vector<8x32xbf16>, vector<32x96xbf16>, vector<8x96xf32> -> vector<8x96xf32>
    %c0_12 = arith.constant 0 : index
    %c0_13 = arith.constant 0 : index
    %29 = vector.load %arg7[%c0_12, %c0_13] : memref<1x96xf32, #tpu.memory_space<vmem>>, vector<1x96xf32>
    %30 = vector.broadcast %29 : vector<1x96xf32> to vector<8x96xf32>
    %31 = arith.addf %28, %30 : vector<8x96xf32>
    %32 = arith.truncf %31 : vector<8x96xf32> to vector<8x96xbf16>
    %c0_14 = arith.constant 0 : index
    %c0_15 = arith.constant 0 : index
    %33 = vector.load %arg8[%c0_14, %c0_15] : memref<8x96xbf16, #tpu.memory_space<vmem>>, vector<8x96xbf16>
    tpu.vector_store %arg8[%c0_14, %c0_15], %32 {strides = array<i32>} : memref<8x96xbf16, #tpu.memory_space<vmem>>, vector<8x96xbf16>,
    return
  }
  func.func @transform_0(%arg0: i32, %arg1: i32, %arg2: i32) -> (i32, i32) {
    %c0_i32 = arith.constant 0 : i32
    return %arg0, %arg2 : i32, i32
  }
  func.func @transform_1(%arg0: i32, %arg1: i32, %arg2: i32) -> (i32, i32) {
    %c0_i32 = arith.constant 0 : i32
    %c0_i32_0 = arith.constant 0 : i32
    %c0_i32_1 = arith.constant 0 : i32
    return %c0_i32, %c0_i32_0 : i32, i32
  }
  func.func @transform_2(%arg0: i32, %arg1: i32, %arg2: i32) -> (i32, i32) {
    %c0_i32 = arith.constant 0 : i32
    %c0_i32_0 = arith.constant 0 : i32
    %c0_i32_1 = arith.constant 0 : i32
    return %c0_i32, %c0_i32_0 : i32, i32
  }
  func.func @transform_3(%arg0: i32, %arg1: i32, %arg2: i32) -> (i32, i32) {
    %c0_i32 = arith.constant 0 : i32
    return %arg2, %arg1 : i32, i32
  }
  func.func @transform_4(%arg0: i32, %arg1: i32, %arg2: i32) -> (i32, i32) {
    %c0_i32 = arith.constant 0 : i32
    %c0_i32_0 = arith.constant 0 : i32
    return %c0_i32, %arg1 : i32, i32
  }
  func.func @transform_5(%arg0: i32, %arg1: i32, %arg2: i32) -> (i32, i32) {
    %c0_i32 = arith.constant 0 : i32
    return %arg0, %arg1 : i32, i32
  }
}

module attributes {stable_mosaic.version = 11 : i64} {
  func.func @_attn_kernel(%arg0: i32, %arg1: memref<1x4x96xbf16, #tpu.memory_space<vmem>>, %arg2: memref<1x4x32xbf16, #tpu.memory_space<vmem>>) attributes {dimension_semantics = [#tpu.dimension_semantics<parallel>], iteration_bounds = array<i64: 2>, scalar_prefetch = 0 : i64, scratch_operands = 0 : i64, tpu.core_type = #tpu.core_type<tc>, window_params = [{transform_indices = @transform_0, window_bounds = array<i64: 1, 4, 96>}, {transform_indices = @transform_1, window_bounds = array<i64: 1, 4, 32>}]} {
    %c0 = arith.constant 0 : index
    %c0_0 = arith.constant 0 : index
    %c0_1 = arith.constant 0 : index
    %0 = vector.load %arg1[%c0, %c0_0, %c0_1] : memref<1x4x96xbf16, #tpu.memory_space<vmem>>, vector<1x4x96xbf16>
    %1 = vector.shape_cast %0 : vector<1x4x96xbf16> to vector<4x96xbf16>
    %2 = vector.extract_strided_slice %1 {offsets = [0, 0], sizes = [4, 8], strides = [1, 1]} : vector<4x96xbf16> to vector<4x8xbf16>
    %3 = vector.extract_strided_slice %1 {offsets = [0, 32], sizes = [4, 8], strides = [1, 1]} : vector<4x96xbf16> to vector<4x8xbf16>
    %4 = vector.extract_strided_slice %1 {offsets = [0, 64], sizes = [4, 8], strides = [1, 1]} : vector<4x96xbf16> to vector<4x8xbf16>
    %cst = arith.constant dense<0.000000e+00> : vector<4x4xf32>
    %5 = tpu.matmul %2, %3, %cst {dimension_numbers = #tpu.dot_dimension_numbers<[1], [1], [0], [0], [0, 0, 1, 0], [], []>} : vector<4x8xbf16>, vector<4x8xbf16>, vector<4x4xf32> -> vector<4x4xf32>
    %cst_2 = arith.constant 0.353553385 : f32
    %6 = vector.broadcast %cst_2 : f32 to vector<4x4xf32>
    %7 = arith.mulf %5, %6 : vector<4x4xf32>
    %cst_3 = arith.constant dense<0xFF800000> : vector<4xf32>
    %8 = vector.multi_reduction <maximumf>, %7, %cst_3 [1] : vector<4x4xf32> to vector<4xf32>
    %9 = vector.shape_cast %8 : vector<4xf32> to vector<4x1xf32>
    %10 = vector.broadcast %9 : vector<4x1xf32> to vector<4x4xf32>
    %11 = arith.subf %7, %10 : vector<4x4xf32>
    %12 = math.exp %11 : vector<4x4xf32>
    %cst_4 = arith.constant dense<0.000000e+00> : vector<4xf32>
    %13 = vector.multi_reduction <add>, %12, %cst_4 [1] : vector<4x4xf32> to vector<4xf32>
    %14 = vector.shape_cast %13 : vector<4xf32> to vector<4x1xf32>
    %15 = tpu.reciprocal %14 {approx = true} : vector<4x1xf32> -> vector<4x1xf32>
    %16 = vector.broadcast %15 : vector<4x1xf32> to vector<4x4xf32>
    %17 = arith.mulf %12, %16 : vector<4x4xf32>
    %18 = arith.truncf %17 : vector<4x4xf32> to vector<4x4xbf16>
    %cst_5 = arith.constant dense<0.000000e+00> : vector<4x8xf32>
    %19 = tpu.matmul %18, %4, %cst_5 {dimension_numbers = #tpu.dot_dimension_numbers<[1], [0], [0], [1], [0, 0, 1, 1], [], []>} : vector<4x4xbf16>, vector<4x8xbf16>, vector<4x8xf32> -> vector<4x8xf32>
    %20 = vector.extract_strided_slice %1 {offsets = [0, 8], sizes = [4, 8], strides = [1, 1]} : vector<4x96xbf16> to vector<4x8xbf16>
    %21 = vector.extract_strided_slice %1 {offsets = [0, 40], sizes = [4, 8], strides = [1, 1]} : vector<4x96xbf16> to vector<4x8xbf16>
    %22 = vector.extract_strided_slice %1 {offsets = [0, 72], sizes = [4, 8], strides = [1, 1]} : vector<4x96xbf16> to vector<4x8xbf16>
    %cst_6 = arith.constant dense<0.000000e+00> : vector<4x4xf32>
    %23 = tpu.matmul %20, %21, %cst_6 {dimension_numbers = #tpu.dot_dimension_numbers<[1], [1], [0], [0], [0, 0, 1, 0], [], []>} : vector<4x8xbf16>, vector<4x8xbf16>, vector<4x4xf32> -> vector<4x4xf32>
    %cst_7 = arith.constant 0.353553385 : f32
    %24 = vector.broadcast %cst_7 : f32 to vector<4x4xf32>
    %25 = arith.mulf %23, %24 : vector<4x4xf32>
    %cst_8 = arith.constant dense<0xFF800000> : vector<4xf32>
    %26 = vector.multi_reduction <maximumf>, %25, %cst_8 [1] : vector<4x4xf32> to vector<4xf32>
    %27 = vector.shape_cast %26 : vector<4xf32> to vector<4x1xf32>
    %28 = vector.broadcast %27 : vector<4x1xf32> to vector<4x4xf32>
    %29 = arith.subf %25, %28 : vector<4x4xf32>
    %30 = math.exp %29 : vector<4x4xf32>
    %cst_9 = arith.constant dense<0.000000e+00> : vector<4xf32>
    %31 = vector.multi_reduction <add>, %30, %cst_9 [1] : vector<4x4xf32> to vector<4xf32>
    %32 = vector.shape_cast %31 : vector<4xf32> to vector<4x1xf32>
    %33 = tpu.reciprocal %32 {approx = true} : vector<4x1xf32> -> vector<4x1xf32>
    %34 = vector.broadcast %33 : vector<4x1xf32> to vector<4x4xf32>
    %35 = arith.mulf %30, %34 : vector<4x4xf32>
    %36 = arith.truncf %35 : vector<4x4xf32> to vector<4x4xbf16>
    %cst_10 = arith.constant dense<0.000000e+00> : vector<4x8xf32>
    %37 = tpu.matmul %36, %22, %cst_10 {dimension_numbers = #tpu.dot_dimension_numbers<[1], [0], [0], [1], [0, 0, 1, 1], [], []>} : vector<4x4xbf16>, vector<4x8xbf16>, vector<4x8xf32> -> vector<4x8xf32>
    %38 = vector.extract_strided_slice %1 {offsets = [0, 16], sizes = [4, 8], strides = [1, 1]} : vector<4x96xbf16> to vector<4x8xbf16>
    %39 = vector.extract_strided_slice %1 {offsets = [0, 48], sizes = [4, 8], strides = [1, 1]} : vector<4x96xbf16> to vector<4x8xbf16>
    %40 = vector.extract_strided_slice %1 {offsets = [0, 80], sizes = [4, 8], strides = [1, 1]} : vector<4x96xbf16> to vector<4x8xbf16>
    %cst_11 = arith.constant dense<0.000000e+00> : vector<4x4xf32>
    %41 = tpu.matmul %38, %39, %cst_11 {dimension_numbers = #tpu.dot_dimension_numbers<[1], [1], [0], [0], [0, 0, 1, 0], [], []>} : vector<4x8xbf16>, vector<4x8xbf16>, vector<4x4xf32> -> vector<4x4xf32>
    %cst_12 = arith.constant 0.353553385 : f32
    %42 = vector.broadcast %cst_12 : f32 to vector<4x4xf32>
    %43 = arith.mulf %41, %42 : vector<4x4xf32>
    %cst_13 = arith.constant dense<0xFF800000> : vector<4xf32>
    %44 = vector.multi_reduction <maximumf>, %43, %cst_13 [1] : vector<4x4xf32> to vector<4xf32>
    %45 = vector.shape_cast %44 : vector<4xf32> to vector<4x1xf32>
    %46 = vector.broadcast %45 : vector<4x1xf32> to vector<4x4xf32>
    %47 = arith.subf %43, %46 : vector<4x4xf32>
    %48 = math.exp %47 : vector<4x4xf32>
    %cst_14 = arith.constant dense<0.000000e+00> : vector<4xf32>
    %49 = vector.multi_reduction <add>, %48, %cst_14 [1] : vector<4x4xf32> to vector<4xf32>
    %50 = vector.shape_cast %49 : vector<4xf32> to vector<4x1xf32>
    %51 = tpu.reciprocal %50 {approx = true} : vector<4x1xf32> -> vector<4x1xf32>
    %52 = vector.broadcast %51 : vector<4x1xf32> to vector<4x4xf32>
    %53 = arith.mulf %48, %52 : vector<4x4xf32>
    %54 = arith.truncf %53 : vector<4x4xf32> to vector<4x4xbf16>
    %cst_15 = arith.constant dense<0.000000e+00> : vector<4x8xf32>
    %55 = tpu.matmul %54, %40, %cst_15 {dimension_numbers = #tpu.dot_dimension_numbers<[1], [0], [0], [1], [0, 0, 1, 1], [], []>} : vector<4x4xbf16>, vector<4x8xbf16>, vector<4x8xf32> -> vector<4x8xf32>
    %56 = vector.extract_strided_slice %1 {offsets = [0, 24], sizes = [4, 8], strides = [1, 1]} : vector<4x96xbf16> to vector<4x8xbf16>
    %57 = vector.extract_strided_slice %1 {offsets = [0, 56], sizes = [4, 8], strides = [1, 1]} : vector<4x96xbf16> to vector<4x8xbf16>
    %58 = vector.extract_strided_slice %1 {offsets = [0, 88], sizes = [4, 8], strides = [1, 1]} : vector<4x96xbf16> to vector<4x8xbf16>
    %cst_16 = arith.constant dense<0.000000e+00> : vector<4x4xf32>
    %59 = tpu.matmul %56, %57, %cst_16 {dimension_numbers = #tpu.dot_dimension_numbers<[1], [1], [0], [0], [0, 0, 1, 0], [], []>} : vector<4x8xbf16>, vector<4x8xbf16>, vector<4x4xf32> -> vector<4x4xf32>
    %cst_17 = arith.constant 0.353553385 : f32
    %60 = vector.broadcast %cst_17 : f32 to vector<4x4xf32>
    %61 = arith.mulf %59, %60 : vector<4x4xf32>
    %cst_18 = arith.constant dense<0xFF800000> : vector<4xf32>
    %62 = vector.multi_reduction <maximumf>, %61, %cst_18 [1] : vector<4x4xf32> to vector<4xf32>
    %63 = vector.shape_cast %62 : vector<4xf32> to vector<4x1xf32>
    %64 = vector.broadcast %63 : vector<4x1xf32> to vector<4x4xf32>
    %65 = arith.subf %61, %64 : vector<4x4xf32>
    %66 = math.exp %65 : vector<4x4xf32>
    %cst_19 = arith.constant dense<0.000000e+00> : vector<4xf32>
    %67 = vector.multi_reduction <add>, %66, %cst_19 [1] : vector<4x4xf32> to vector<4xf32>
    %68 = vector.shape_cast %67 : vector<4xf32> to vector<4x1xf32>
    %69 = tpu.reciprocal %68 {approx = true} : vector<4x1xf32> -> vector<4x1xf32>
    %70 = vector.broadcast %69 : vector<4x1xf32> to vector<4x4xf32>
    %71 = arith.mulf %66, %70 : vector<4x4xf32>
    %72 = arith.truncf %71 : vector<4x4xf32> to vector<4x4xbf16>
    %cst_20 = arith.constant dense<0.000000e+00> : vector<4x8xf32>
    %73 = tpu.matmul %72, %58, %cst_20 {dimension_numbers = #tpu.dot_dimension_numbers<[1], [0], [0], [1], [0, 0, 1, 1], [], []>} : vector<4x4xbf16>, vector<4x8xbf16>, vector<4x8xf32> -> vector<4x8xf32>
    %74 = tpu.concatenate %19, %37, %55, %73 in 1 : vector<4x8xf32>, vector<4x8xf32>, vector<4x8xf32>, vector<4x8xf32> -> vector<4x32xf32>
    %75 = arith.truncf %74 : vector<4x32xf32> to vector<4x32xbf16>
    %c0_21 = arith.constant 0 : index
    %c0_22 = arith.constant 0 : index
    %c0_23 = arith.constant 0 : index
    %76 = vector.load %arg2[%c0_21, %c0_22, %c0_23] : memref<1x4x32xbf16, #tpu.memory_space<vmem>>, vector<1x4x32xbf16>
    %77 = vector.shape_cast %76 : vector<1x4x32xbf16> to vector<4x32xbf16>
    %78 = vector.shape_cast %75 : vector<4x32xbf16> to vector<1x4x32xbf16>
    tpu.vector_store %arg2[%c0_21, %c0_22, %c0_23], %78 {strides = array<i32>} : memref<1x4x32xbf16, #tpu.memory_space<vmem>>, vector<1x4x32xbf16>,
    return
  }
  func.func @transform_0(%arg0: i32) -> (i32, i32, i32) {
    %c0_i32 = arith.constant 0 : i32
    %c0_i32_0 = arith.constant 0 : i32
    %c0_i32_1 = arith.constant 0 : i32
    return %arg0, %c0_i32, %c0_i32_0 : i32, i32, i32
  }
  func.func @transform_1(%arg0: i32) -> (i32, i32, i32) {
    %c0_i32 = arith.constant 0 : i32
    %c0_i32_0 = arith.constant 0 : i32
    %c0_i32_1 = arith.constant 0 : i32
    return %arg0, %c0_i32, %c0_i32_0 : i32, i32, i32
  }
}

module attributes {stable_mosaic.version = 11 : i64} {
  func.func @_fused_matmul_kernel(%arg0: i32, %arg1: i32, %arg2: i32, %arg3: memref<8x32xbf16, #tpu.memory_space<vmem>>, %arg4: memref<32x32xbf16, #tpu.memory_space<vmem>>, %arg5: memref<1x32xf32, #tpu.memory_space<vmem>>, %arg6: memref<8x32xbf16, #tpu.memory_space<vmem>>, %arg7: memref<8x32xbf16, #tpu.memory_space<vmem>>) attributes {dimension_semantics = [#tpu.dimension_semantics<parallel>, #tpu.dimension_semantics<parallel>, #tpu.dimension_semantics<arbitrary>], iteration_bounds = array<i64: 1, 1, 1>, scalar_prefetch = 0 : i64, scratch_operands = 0 : i64, tpu.core_type = #tpu.core_type<tc>, window_params = [{transform_indices = @transform_0, window_bounds = array<i64: 8, 32>}, {transform_indices = @transform_1, window_bounds = array<i64: 32, 32>}, {transform_indices = @transform_2, window_bounds = array<i64: 1, 32>}, {transform_indices = @transform_3, window_bounds = array<i64: 8, 32>}, {transform_indices = @transform_4, window_bounds = array<i64: 8, 32>}]} {
    %c0 = arith.constant 0 : index
    %c0_0 = arith.constant 0 : index
    %0 = vector.load %arg3[%c0, %c0_0] : memref<8x32xbf16, #tpu.memory_space<vmem>>, vector<8x32xbf16>
    %c0_1 = arith.constant 0 : index
    %c0_2 = arith.constant 0 : index
    %1 = vector.load %arg4[%c0_1, %c0_2] : memref<32x32xbf16, #tpu.memory_space<vmem>>, vector<32x32xbf16>
    %cst = arith.constant dense<0.000000e+00> : vector<8x32xf32>
    %2 = tpu.matmul %0, %1, %cst {dimension_numbers = #tpu.dot_dimension_numbers<[1], [0], [0], [1], [0, 0, 1, 1], [], []>} : vector<8x32xbf16>, vector<32x32xbf16>, vector<8x32xf32> -> vector<8x32xf32>
    %c0_3 = arith.constant 0 : index
    %c0_4 = arith.constant 0 : index
    %3 = vector.load %arg5[%c0_3, %c0_4] : memref<1x32xf32, #tpu.memory_space<vmem>>, vector<1x32xf32>
    %4 = vector.broadcast %3 : vector<1x32xf32> to vector<8x32xf32>
    %5 = arith.addf %2, %4 : vector<8x32xf32>
    %c0_5 = arith.constant 0 : index
    %c0_6 = arith.constant 0 : index
    %6 = vector.load %arg6[%c0_5, %c0_6] : memref<8x32xbf16, #tpu.memory_space<vmem>>, vector<8x32xbf16>
    %7 = arith.extf %6 : vector<8x32xbf16> to vector<8x32xf32>
    %8 = arith.addf %5, %7 : vector<8x32xf32>
    %9 = arith.truncf %8 : vector<8x32xf32> to vector<8x32xbf16>
    %c0_7 = arith.constant 0 : index
    %c0_8 = arith.constant 0 : index
    %10 = vector.load %arg7[%c0_7, %c0_8] : memref<8x32xbf16, #tpu.memory_space<vmem>>, vector<8x32xbf16>
    tpu.vector_store %arg7[%c0_7, %c0_8], %9 {strides = array<i32>} : memref<8x32xbf16, #tpu.memory_space<vmem>>, vector<8x32xbf16>,
    return
  }
  func.func @transform_0(%arg0: i32, %arg1: i32, %arg2: i32) -> (i32, i32) {
    %c0_i32 = arith.constant 0 : i32
    return %arg0, %arg2 : i32, i32
  }
  func.func @transform_1(%arg0: i32, %arg1: i32, %arg2: i32) -> (i32, i32) {
    %c0_i32 = arith.constant 0 : i32
    return %arg2, %arg1 : i32, i32
  }
  func.func @transform_2(%arg0: i32, %arg1: i32, %arg2: i32) -> (i32, i32) {
    %c0_i32 = arith.constant 0 : i32
    %c0_i32_0 = arith.constant 0 : i32
    return %c0_i32, %arg1 : i32, i32
  }
  func.func @transform_3(%arg0: i32, %arg1: i32, %arg2: i32) -> (i32, i32) {
    %c0_i32 = arith.constant 0 : i32
    return %arg0, %arg1 : i32, i32
  }
  func.func @transform_4(%arg0: i32, %arg1: i32, %arg2: i32) -> (i32, i32) {
    %c0_i32 = arith.constant 0 : i32
    return %arg0, %arg1 : i32, i32
  }
}

module attributes {stable_mosaic.version = 11 : i64} {
  func.func @_fused_matmul_kernel(%arg0: i32, %arg1: i32, %arg2: i32, %arg3: memref<8x32xbf16, #tpu.memory_space<vmem>>, %arg4: memref<1x32xf32, #tpu.memory_space<vmem>>, %arg5: memref<1x32xf32, #tpu.memory_space<vmem>>, %arg6: memref<32x64xbf16, #tpu.memory_space<vmem>>, %arg7: memref<1x64xf32, #tpu.memory_space<vmem>>, %arg8: memref<8x64xbf16, #tpu.memory_space<vmem>>) attributes {dimension_semantics = [#tpu.dimension_semantics<parallel>, #tpu.dimension_semantics<parallel>, #tpu.dimension_semantics<arbitrary>], iteration_bounds = array<i64: 1, 1, 1>, scalar_prefetch = 0 : i64, scratch_operands = 0 : i64, tpu.core_type = #tpu.core_type<tc>, window_params = [{transform_indices = @transform_0, window_bounds = array<i64: 8, 32>}, {pipeline_mode = #tpu.pipeline_mode<synchronous>, transform_indices = @transform_1, window_bounds = array<i64: 1, 32>}, {pipeline_mode = #tpu.pipeline_mode<synchronous>, transform_indices = @transform_2, window_bounds = array<i64: 1, 32>}, {transform_indices = @transform_3, window_bounds = array<i64: 32, 64>}, {transform_indices = @transform_4, window_bounds = array<i64: 1, 64>}, {transform_indices = @transform_5, window_bounds = array<i64: 8, 64>}]} {
    %c0 = arith.constant 0 : index
    %c0_0 = arith.constant 0 : index
    %0 = vector.load %arg3[%c0, %c0_0] : memref<8x32xbf16, #tpu.memory_space<vmem>>, vector<8x32xbf16>
    %1 = arith.extf %0 : vector<8x32xbf16> to vector<8x32xf32>
    %cst = arith.constant dense<0.000000e+00> : vector<8xf32>
    %2 = vector.multi_reduction <add>, %1, %cst [1] : vector<8x32xf32> to vector<8xf32>
    %3 = vector.shape_cast %2 : vector<8xf32> to vector<8x1xf32>
    %cst_1 = arith.constant 3.200000e+01 : f32
    %4 = vector.broadcast %cst_1 : f32 to vector<8x1xf32>
    %5 = arith.divf %3, %4 : vector<8x1xf32>
    %6 = vector.broadcast %5 : vector<8x1xf32> to vector<8x32xf32>
    %7 = arith.subf %1, %6 : vector<8x32xf32>
    %8 = arith.mulf %7, %7 : vector<8x32xf32>
    %cst_2 = arith.constant dense<0.000000e+00> : vector<8xf32>
    %9 = vector.multi_reduction <add>, %8, %cst_2 [1] : vector<8x32xf32> to vector<8xf32>
    %10 = vector.shape_cast %9 : vector<8xf32> to vector<8x1xf32>
    %cst_3 = arith.constant 3.200000e+01 : f32
    %11 = vector.broadcast %cst_3 : f32 to vector<8x1xf32>
    %12 = arith.divf %10, %11 : vector<8x1xf32>
    %13 = vector.broadcast %5 : vector<8x1xf32> to vector<8x32xf32>
    %14 = arith.subf %1, %13 : vector<8x32xf32>
    %cst_4 = arith.constant 9.99999997E-7 : f32
    %15 = vector.broadcast %cst_4 : f32 to vector<8x1xf32>
    %16 = arith.addf %12, %15 : vector<8x1xf32>
    %17 = math.rsqrt %16 : vector<8x1xf32>
    %18 = vector.broadcast %17 : vector<8x1xf32> to vector<8x32xf32>
    %19 = arith.mulf %14, %18 : vector<8x32xf32>
    %c0_5 = arith.constant 0 : index
    %c0_6 = arith.constant 0 : index
    %20 = vector.load %arg4[%c0_5, %c0_6] : memref<1x32xf32, #tpu.memory_space<vmem>>, vector<1x32xf32>
    %21 = vector.broadcast %20 : vector<1x32xf32> to vector<8x32xf32>
    %22 = arith.mulf %19, %21 : vector<8x32xf32>
    %c0_7 = arith.constant 0 : index
    %c0_8 = arith.constant 0 : index
    %23 = vector.load %arg5[%c0_7, %c0_8] : memref<1x32xf32, #tpu.memory_space<vmem>>, vector<1x32xf32>
    %24 = vector.broadcast %23 : vector<1x32xf32> to vector<8x32xf32>
    %25 = arith.addf %22, %24 : vector<8x32xf32>
    %26 = arith.truncf %25 : vector<8x32xf32> to vector<8x32xbf16>
    %c0_9 = arith.constant 0 : index
    %c0_10 = arith.constant 0 : index
    %27 = vector.load %arg6[%c0_9, %c0_10] : memref<32x64xbf16, #tpu.memory_space<vmem>>, vector<32x64xbf16>
    %cst_11 = arith.constant dense<0.000000e+00> : vector<8x64xf32>
    %28 = tpu.matmul %26, %27, %cst_11 {dimension_numbers = #tpu.dot_dimension_numbers<[1], [0], [0], [1], [0, 0, 1, 1], [], []>} : vector<8x32xbf16>, vector<32x64xbf16>, vector<8x64xf32> -> vector<8x64xf32>
    %c0_12 = arith.constant 0 : index
    %c0_13 = arith.constant 0 : index
    %29 = vector.load %arg7[%c0_12, %c0_13] : memref<1x64xf32, #tpu.memory_space<vmem>>, vector<1x64xf32>
    %30 = vector.broadcast %29 : vector<1x64xf32> to vector<8x64xf32>
    %31 = arith.addf %28, %30 : vector<8x64xf32>
    %32 = arith.mulf %31, %31 : vector<8x64xf32>
    %33 = arith.mulf %31, %32 : vector<8x64xf32>
    %cst_14 = arith.constant 4.471500e-02 : f32
    %34 = vector.broadcast %cst_14 : f32 to vector<8x64xf32>
    %35 = arith.mulf %34, %33 : vector<8x64xf32>
    %36 = arith.addf %31, %35 : vector<8x64xf32>
    %cst_15 = arith.constant 0.797884583 : f32
    %37 = vector.broadcast %cst_15 : f32 to vector<8x64xf32>
    %38 = arith.mulf %37, %36 : vector<8x64xf32>
    %39 = math.tanh %38 : vector<8x64xf32>
    %cst_16 = arith.constant 1.000000e+00 : f32
    %40 = vector.broadcast %cst_16 : f32 to vector<8x64xf32>
    %41 = arith.addf %40, %39 : vector<8x64xf32>
    %cst_17 = arith.constant 5.000000e-01 : f32
    %42 = vector.broadcast %cst_17 : f32 to vector<8x64xf32>
    %43 = arith.mulf %42, %41 : vector<8x64xf32>
    %44 = arith.mulf %31, %43 : vector<8x64xf32>
    %45 = arith.truncf %44 : vector<8x64xf32> to vector<8x64xbf16>
    %c0_18 = arith.constant 0 : index
    %c0_19 = arith.constant 0 : index
    %46 = vector.load %arg8[%c0_18, %c0_19] : memref<8x64xbf16, #tpu.memory_space<vmem>>, vector<8x64xbf16>
    tpu.vector_store %arg8[%c0_18, %c0_19], %45 {strides = array<i32>} : memref<8x64xbf16, #tpu.memory_space<vmem>>, vector<8x64xbf16>,
    return
  }
  func.func @transform_0(%arg0: i32, %arg1: i32, %arg2: i32) -> (i32, i32) {
    %c0_i32 = arith.constant 0 : i32
    return %arg0, %arg2 : i32, i32
  }
  func.func @transform_1(%arg0: i32, %arg1: i32, %arg2: i32) -> (i32, i32) {
    %c0_i32 = arith.constant 0 : i32
    %c0_i32_0 = arith.constant 0 : i32
    %c0_i32_1 = arith.constant 0 : i32
    return %c0_i32, %c0_i32_0 : i32, i32
  }
  func.func @transform_2(%arg0: i32, %arg1: i32, %arg2: i32) -> (i32, i32) {
    %c0_i32 = arith.constant 0 : i32
    %c0_i32_0 = arith.constant 0 : i32
    %c0_i32_1 = arith.constant 0 : i32
    return %c0_i32, %c0_i32_0 : i32, i32
  }
  func.func @transform_3(%arg0: i32, %arg1: i32, %arg2: i32) -> (i32, i32) {
    %c0_i32 = arith.constant 0 : i32
    return %arg2, %arg1 : i32, i32
  }
  func.func @transform_4(%arg0: i32, %arg1: i32, %arg2: i32) -> (i32, i32) {
    %c0_i32 = arith.constant 0 : i32
    %c0_i32_0 = arith.constant 0 : i32
    return %c0_i32, %arg1 : i32, i32
  }
  func.func @transform_5(%arg0: i32, %arg1: i32, %arg2: i32) -> (i32, i32) {
    %c0_i32 = arith.constant 0 : i32
    return %arg0, %arg1 : i32, i32
  }
}

module attributes {stable_mosaic.version = 11 : i64} {
  func.func @_fused_matmul_kernel(%arg0: i32, %arg1: i32, %arg2: i32, %arg3: memref<16x32xbf16, #tpu.memory_space<vmem>>, %arg4: memref<1x32xf32, #tpu.memory_space<vmem>>, %arg5: memref<1x32xf32, #tpu.memory_space<vmem>>, %arg6: memref<32x96xbf16, #tpu.memory_space<vmem>>, %arg7: memref<1x96xf32, #tpu.memory_space<vmem>>, %arg8: memref<16x96xbf16, #tpu.memory_space<vmem>>) attributes {dimension_semantics = [#tpu.dimension_semantics<parallel>, #tpu.dimension_semantics<parallel>, #tpu.dimension_semantics<arbitrary>], iteration_bounds = array<i64: 1, 1, 1>, scalar_prefetch = 0 : i64, scratch_operands = 0 : i64, tpu.core_type = #tpu.core_type<tc>, window_params = [{transform_indices = @transform_0, window_bounds = array<i64: 16, 32>}, {pipeline_mode = #tpu.pipeline_mode<synchronous>, transform_indices = @transform_1, window_bounds = array<i64: 1, 32>}, {pipeline_mode = #tpu.pipeline_mode<synchronous>, transform_indices = @transform_2, window_bounds = array<i64: 1, 32>}, {transform_indices = @transform_3, window_bounds = array<i64: 32, 96>}, {transform_indices = @transform_4, window_bounds = array<i64: 1, 96>}, {transform_indices = @transform_5, window_bounds = array<i64: 16, 96>}]} {
    %c0 = arith.constant 0 : index
    %c0_0 = arith.constant 0 : index
    %0 = vector.load %arg3[%c0, %c0_0] : memref<16x32xbf16, #tpu.memory_space<vmem>>, vector<16x32xbf16>
    %1 = arith.extf %0 : vector<16x32xbf16> to vector<16x32xf32>
    %cst = arith.constant dense<0.000000e+00> : vector<16xf32>
    %2 = vector.multi_reduction <add>, %1, %cst [1] : vector<16x32xf32> to vector<16xf32>
    %3 = vector.shape_cast %2 : vector<16xf32> to vector<16x1xf32>
    %cst_1 = arith.constant 3.200000e+01 : f32
    %4 = vector.broadcast %cst_1 : f32 to vector<16x1xf32>
    %5 = arith.divf %3, %4 : vector<16x1xf32>
    %6 = vector.broadcast %5 : vector<16x1xf32> to vector<16x32xf32>
    %7 = arith.subf %1, %6 : vector<16x32xf32>
    %8 = arith.mulf %7, %7 : vector<16x32xf32>
    %cst_2 = arith.constant dense<0.000000e+00> : vector<16xf32>
    %9 = vector.multi_reduction <add>, %8, %cst_2 [1] : vector<16x32xf32> to vector<16xf32>
    %10 = vector.shape_cast %9 : vector<16xf32> to vector<16x1xf32>
    %cst_3 = arith.constant 3.200000e+01 : f32
    %11 = vector.broadcast %cst_3 : f32 to vector<16x1xf32>
    %12 = arith.divf %10, %11 : vector<16x1xf32>
    %13 = vector.broadcast %5 : vector<16x1xf32> to vector<16x32xf32>
    %14 = arith.subf %1, %13 : vector<16x32xf32>
    %cst_4 = arith.constant 9.99999997E-7 : f32
    %15 = vector.broadcast %cst_4 : f32 to vector<16x1xf32>
    %16 = arith.addf %12, %15 : vector<16x1xf32>
    %17 = math.rsqrt %16 : vector<16x1xf32>
    %18 = vector.broadcast %17 : vector<16x1xf32> to vector<16x32xf32>
    %19 = arith.mulf %14, %18 : vector<16x32xf32>
    %c0_5 = arith.constant 0 : index
    %c0_6 = arith.constant 0 : index
    %20 = vector.load %arg4[%c0_5, %c0_6] : memref<1x32xf32, #tpu.memory_space<vmem>>, vector<1x32xf32>
    %21 = vector.broadcast %20 : vector<1x32xf32> to vector<16x32xf32>
    %22 = arith.mulf %19, %21 : vector<16x32xf32>
    %c0_7 = arith.constant 0 : index
    %c0_8 = arith.constant 0 : index
    %23 = vector.load %arg5[%c0_7, %c0_8] : memref<1x32xf32, #tpu.memory_space<vmem>>, vector<1x32xf32>
    %24 = vector.broadcast %23 : vector<1x32xf32> to vector<16x32xf32>
    %25 = arith.addf %22, %24 : vector<16x32xf32>
    %26 = arith.truncf %25 : vector<16x32xf32> to vector<16x32xbf16>
    %c0_9 = arith.constant 0 : index
    %c0_10 = arith.constant 0 : index
    %27 = vector.load %arg6[%c0_9, %c0_10] : memref<32x96xbf16, #tpu.memory_space<vmem>>, vector<32x96xbf16>
    %cst_11 = arith.constant dense<0.000000e+00> : vector<16x96xf32>
    %28 = tpu.matmul %26, %27, %cst_11 {dimension_numbers = #tpu.dot_dimension_numbers<[1], [0], [0], [1], [0, 0, 1, 1], [], []>} : vector<16x32xbf16>, vector<32x96xbf16>, vector<16x96xf32> -> vector<16x96xf32>
    %c0_12 = arith.constant 0 : index
    %c0_13 = arith.constant 0 : index
    %29 = vector.load %arg7[%c0_12, %c0_13] : memref<1x96xf32, #tpu.memory_space<vmem>>, vector<1x96xf32>
    %30 = vector.broadcast %29 : vector<1x96xf32> to vector<16x96xf32>
    %31 = arith.addf %28, %30 : vector<16x96xf32>
    %32 = arith.truncf %31 : vector<16x96xf32> to vector<16x96xbf16>
    %c0_14 = arith.constant 0 : index
    %c0_15 = arith.constant 0 : index
    %33 = vector.load %arg8[%c0_14, %c0_15] : memref<16x96xbf16, #tpu.memory_space<vmem>>, vector<16x96xbf16>
    tpu.vector_store %arg8[%c0_14, %c0_15], %32 {strides = array<i32>} : memref<16x96xbf16, #tpu.memory_space<vmem>>, vector<16x96xbf16>,
    return
  }
  func.func @transform_0(%arg0: i32, %arg1: i32, %arg2: i32) -> (i32, i32) {
    %c0_i32 = arith.constant 0 : i32
    return %arg0, %arg2 : i32, i32
  }
  func.func @transform_1(%arg0: i32, %arg1: i32, %arg2: i32) -> (i32, i32) {
    %c0_i32 = arith.constant 0 : i32
    %c0_i32_0 = arith.constant 0 : i32
    %c0_i32_1 = arith.constant 0 : i32
    return %c0_i32, %c0_i32_0 : i32, i32
  }
  func.func @transform_2(%arg0: i32, %arg1: i32, %arg2: i32) -> (i32, i32) {
    %c0_i32 = arith.constant 0 : i32
    %c0_i32_0 = arith.constant 0 : i32
    %c0_i32_1 = arith.constant 0 : i32
    return %c0_i32, %c0_i32_0 : i32, i32
  }
  func.func @transform_3(%arg0: i32, %arg1: i32, %arg2: i32) -> (i32, i32) {
    %c0_i32 = arith.constant 0 : i32
    return %arg2, %arg1 : i32, i32
  }
  func.func @transform_4(%arg0: i32, %arg1: i32, %arg2: i32) -> (i32, i32) {
    %c0_i32 = arith.constant 0 : i32
    %c0_i32_0 = arith.constant 0 : i32
    return %c0_i32, %arg1 : i32, i32
  }
  func.func @transform_5(%arg0: i32, %arg1: i32, %arg2: i32) -> (i32, i32) {
    %c0_i32 = arith.constant 0 : i32
    return %arg0, %arg1 : i32, i32
  }
}

module attributes {stable_mosaic.version = 11 : i64} {
  func.func @_fused_matmul_kernel(%arg0: i32, %arg1: i32, %arg2: i32, %arg3: memref<4x64xbf16, #tpu.memory_space<vmem>>, %arg4: memref<64x32xbf16, #tpu.memory_space<vmem>>, %arg5: memref<1x32xf32, #tpu.memory_space<vmem>>, %arg6: memref<4x32xbf16, #tpu.memory_space<vmem>>, %arg7: memref<4x32xbf16, #tpu.memory_space<vmem>>) attributes {dimension_semantics = [#tpu.dimension_semantics<parallel>, #tpu.dimension_semantics<parallel>, #tpu.dimension_semantics<arbitrary>], iteration_bounds = array<i64: 1, 1, 1>, scalar_prefetch = 0 : i64, scratch_operands = 0 : i64, tpu.core_type = #tpu.core_type<tc>, window_params = [{transform_indices = @transform_0, window_bounds = array<i64: 4, 64>}, {transform_indices = @transform_1, window_bounds = array<i64: 64, 32>}, {transform_indices = @transform_2, window_bounds = array<i64: 1, 32>}, {transform_indices = @transform_3, window_bounds = array<i64: 4, 32>}, {transform_indices = @transform_4, window_bounds = array<i64: 4, 32>}]} {
    %c0 = arith.constant 0 : index
    %c0_0 = arith.constant 0 : index
    %0 = vector.load %arg3[%c0, %c0_0] : memref<4x64xbf16, #tpu.memory_space<vmem>>, vector<4x64xbf16>
    %c0_1 = arith.constant 0 : index
    %c0_2 = arith.constant 0 : index
    %1 = vector.load %arg4[%c0_1, %c0_2] : memref<64x32xbf16, #tpu.memory_space<vmem>>, vector<64x32xbf16>
    %cst = arith.constant dense<0.000000e+00> : vector<4x32xf32>
    %2 = tpu.matmul %0, %1, %cst {dimension_numbers = #tpu.dot_dimension_numbers<[1], [0], [0], [1], [0, 0, 1, 1], [], []>} : vector<4x64xbf16>, vector<64x32xbf16>, vector<4x32xf32> -> vector<4x32xf32>
    %c0_3 = arith.constant 0 : index
    %c0_4 = arith.constant 0 : index
    %3 = vector.load %arg5[%c0_3, %c0_4] : memref<1x32xf32, #tpu.memory_space<vmem>>, vector<1x32xf32>
    %4 = vector.broadcast %3 : vector<1x32xf32> to vector<4x32xf32>
    %5 = arith.addf %2, %4 : vector<4x32xf32>
    %c0_5 = arith.constant 0 : index
    %c0_6 = arith.constant 0 : index
    %6 = vector.load %arg6[%c0_5, %c0_6] : memref<4x32xbf16, #tpu.memory_space<vmem>>, vector<4x32xbf16>
    %7 = arith.extf %6 : vector<4x32xbf16> to vector<4x32xf32>
    %8 = arith.addf %5, %7 : vector<4x32xf32>
    %9 = arith.truncf %8 : vector<4x32xf32> to vector<4x32xbf16>
    %c0_7 = arith.constant 0 : index
    %c0_8 = arith.constant 0 : index
    %10 = vector.load %arg7[%c0_7, %c0_8] : memref<4x32xbf16, #tpu.memory_space<vmem>>, vector<4x32xbf16>
    tpu.vector_store %arg7[%c0_7, %c0_8], %9 {strides = array<i32>} : memref<4x32xbf16, #tpu.memory_space<vmem>>, vector<4x32xbf16>,
    return
  }
  func.func @transform_0(%arg0: i32, %arg1: i32, %arg2: i32) -> (i32, i32) {
    %c0_i32 = arith.constant 0 : i32
    return %arg0, %arg2 : i32, i32
  }
  func.func @transform_1(%arg0: i32, %arg1: i32, %arg2: i32) -> (i32, i32) {
    %c0_i32 = arith.constant 0 : i32
    return %arg2, %arg1 : i32, i32
  }
  func.func @transform_2(%arg0: i32, %arg1: i32, %arg2: i32) -> (i32, i32) {
    %c0_i32 = arith.constant 0 : i32
    %c0_i32_0 = arith.constant 0 : i32
    return %c0_i32, %arg1 : i32, i32
  }
  func.func @transform_3(%arg0: i32, %arg1: i32, %arg2: i32) -> (i32, i32) {
    %c0_i32 = arith.constant 0 : i32
    return %arg0, %arg1 : i32, i32
  }
  func.func @transform_4(%arg0: i32, %arg1: i32, %arg2: i32) -> (i32, i32) {
    %c0_i32 = arith.constant 0 : i32
    return %arg0, %arg1 : i32, i32
  }
}

module attributes {stable_mosaic.version = 11 : i64} {
  func.func @_fused_matmul_kernel(%arg0: i32, %arg1: i32, %arg2: i32, %arg3: memref<8x64xbf16, #tpu.memory_space<vmem>>, %arg4: memref<64x32xbf16, #tpu.memory_space<vmem>>, %arg5: memref<1x32xf32, #tpu.memory_space<vmem>>, %arg6: memref<8x32xbf16, #tpu.memory_space<vmem>>, %arg7: memref<8x32xbf16, #tpu.memory_space<vmem>>) attributes {dimension_semantics = [#tpu.dimension_semantics<parallel>, #tpu.dimension_semantics<parallel>, #tpu.dimension_semantics<arbitrary>], iteration_bounds = array<i64: 1, 1, 1>, scalar_prefetch = 0 : i64, scratch_operands = 0 : i64, tpu.core_type = #tpu.core_type<tc>, window_params = [{transform_indices = @transform_0, window_bounds = array<i64: 8, 64>}, {transform_indices = @transform_1, window_bounds = array<i64: 64, 32>}, {transform_indices = @transform_2, window_bounds = array<i64: 1, 32>}, {transform_indices = @transform_3, window_bounds = array<i64: 8, 32>}, {transform_indices = @transform_4, window_bounds = array<i64: 8, 32>}]} {
    %c0 = arith.constant 0 : index
    %c0_0 = arith.constant 0 : index
    %0 = vector.load %arg3[%c0, %c0_0] : memref<8x64xbf16, #tpu.memory_space<vmem>>, vector<8x64xbf16>
    %c0_1 = arith.constant 0 : index
    %c0_2 = arith.constant 0 : index
    %1 = vector.load %arg4[%c0_1, %c0_2] : memref<64x32xbf16, #tpu.memory_space<vmem>>, vector<64x32xbf16>
    %cst = arith.constant dense<0.000000e+00> : vector<8x32xf32>
    %2 = tpu.matmul %0, %1, %cst {dimension_numbers = #tpu.dot_dimension_numbers<[1], [0], [0], [1], [0, 0, 1, 1], [], []>} : vector<8x64xbf16>, vector<64x32xbf16>, vector<8x32xf32> -> vector<8x32xf32>
    %c0_3 = arith.constant 0 : index
    %c0_4 = arith.constant 0 : index
    %3 = vector.load %arg5[%c0_3, %c0_4] : memref<1x32xf32, #tpu.memory_space<vmem>>, vector<1x32xf32>
    %4 = vector.broadcast %3 : vector<1x32xf32> to vector<8x32xf32>
    %5 = arith.addf %2, %4 : vector<8x32xf32>
    %c0_5 = arith.constant 0 : index
    %c0_6 = arith.constant 0 : index
    %6 = vector.load %arg6[%c0_5, %c0_6] : memref<8x32xbf16, #tpu.memory_space<vmem>>, vector<8x32xbf16>
    %7 = arith.extf %6 : vector<8x32xbf16> to vector<8x32xf32>
    %8 = arith.addf %5, %7 : vector<8x32xf32>
    %9 = arith.truncf %8 : vector<8x32xf32> to vector<8x32xbf16>
    %c0_7 = arith.constant 0 : index
    %c0_8 = arith.constant 0 : index
    %10 = vector.load %arg7[%c0_7, %c0_8] : memref<8x32xbf16, #tpu.memory_space<vmem>>, vector<8x32xbf16>
    tpu.vector_store %arg7[%c0_7, %c0_8], %9 {strides = array<i32>} : memref<8x32xbf16, #tpu.memory_space<vmem>>, vector<8x32xbf16>,
    return
  }
  func.func @transform_0(%arg0: i32, %arg1: i32, %arg2: i32) -> (i32, i32) {
    %c0_i32 = arith.constant 0 : i32
    return %arg0, %arg2 : i32, i32
  }
  func.func @transform_1(%arg0: i32, %arg1: i32, %arg2: i32) -> (i32, i32) {
    %c0_i32 = arith.constant 0 : i32
    return %arg2, %arg1 : i32, i32
  }
  func.func @transform_2(%arg0: i32, %arg1: i32, %arg2: i32) -> (i32, i32) {
    %c0_i32 = arith.constant 0 : i32
    %c0_i32_0 = arith.constant 0 : i32
    return %c0_i32, %arg1 : i32, i32
  }
  func.func @transform_3(%arg0: i32, %arg1: i32, %arg2: i32) -> (i32, i32) {
    %c0_i32 = arith.constant 0 : i32
    return %arg0, %arg1 : i32, i32
  }
  func.func @transform_4(%arg0: i32, %arg1: i32, %arg2: i32) -> (i32, i32) {
    %c0_i32 = arith.constant 0 : i32
    return %arg0, %arg1 : i32, i32
  }
}

module attributes {stable_mosaic.version = 11 : i64} {
  func.func @_attn_kernel(%arg0: i32, %arg1: memref<1x8x96xbf16, #tpu.memory_space<vmem>>, %arg2: memref<1x8x32xbf16, #tpu.memory_space<vmem>>, %arg3: memref<1x4x8x8xbf16, #tpu.memory_space<vmem>>) attributes {dimension_semantics = [#tpu.dimension_semantics<parallel>], iteration_bounds = array<i64: 2>, scalar_prefetch = 0 : i64, scratch_operands = 0 : i64, tpu.core_type = #tpu.core_type<tc>, window_params = [{transform_indices = @transform_0, window_bounds = array<i64: 1, 8, 96>}, {transform_indices = @transform_1, window_bounds = array<i64: 1, 8, 32>}, {transform_indices = @transform_2, window_bounds = array<i64: 1, 4, 8, 8>}]} {
    %c0 = arith.constant 0 : index
    %c0_0 = arith.constant 0 : index
    %c0_1 = arith.constant 0 : index
    %0 = vector.load %arg1[%c0, %c0_0, %c0_1] : memref<1x8x96xbf16, #tpu.memory_space<vmem>>, vector<1x8x96xbf16>
    %1 = vector.shape_cast %0 : vector<1x8x96xbf16> to vector<8x96xbf16>
    %2 = vector.extract_strided_slice %1 {offsets = [0, 0], sizes = [8, 8], strides = [1, 1]} : vector<8x96xbf16> to vector<8x8xbf16>
    %3 = vector.extract_strided_slice %1 {offsets = [0, 32], sizes = [8, 8], strides = [1, 1]} : vector<8x96xbf16> to vector<8x8xbf16>
    %4 = vector.extract_strided_slice %1 {offsets = [0, 64], sizes = [8, 8], strides = [1, 1]} : vector<8x96xbf16> to vector<8x8xbf16>
    %cst = arith.constant dense<0.000000e+00> : vector<8x8xf32>
    %5 = tpu.matmul %2, %3, %cst {dimension_numbers = #tpu.dot_dimension_numbers<[1], [1], [0], [0], [0, 0, 1, 0], [], []>} : vector<8x8xbf16>, vector<8x8xbf16>, vector<8x8xf32> -> vector<8x8xf32>
    %cst_2 = arith.constant 0.353553385 : f32
    %6 = vector.broadcast %cst_2 : f32 to vector<8x8xf32>
    %7 = arith.mulf %5, %6 : vector<8x8xf32>
    %cst_3 = arith.constant dense<0xFF800000> : vector<8xf32>
    %8 = vector.multi_reduction <maximumf>, %7, %cst_3 [1] : vector<8x8xf32> to vector<8xf32>
    %9 = vector.shape_cast %8 : vector<8xf32> to vector<8x1xf32>
    %10 = vector.broadcast %9 : vector<8x1xf32> to vector<8x8xf32>
    %11 = arith.subf %7, %10 : vector<8x8xf32>
    %12 = math.exp %11 : vector<8x8xf32>
    %cst_4 = arith.constant dense<0.000000e+00> : vector<8xf32>
    %13 = vector.multi_reduction <add>, %12, %cst_4 [1] : vector<8x8xf32> to vector<8xf32>
    %14 = vector.shape_cast %13 : vector<8xf32> to vector<8x1xf32>
    %15 = tpu.reciprocal %14 {approx = true} : vector<8x1xf32> -> vector<8x1xf32>
    %16 = vector.broadcast %15 : vector<8x1xf32> to vector<8x8xf32>
    %17 = arith.mulf %12, %16 : vector<8x8xf32>
    %18 = arith.truncf %17 : vector<8x8xf32> to vector<8x8xbf16>
    %cst_5 = arith.constant dense<0.000000e+00> : vector<8x8xf32>
    %19 = tpu.matmul %18, %4, %cst_5 {dimension_numbers = #tpu.dot_dimension_numbers<[1], [0], [0], [1], [0, 0, 1, 1], [], []>} : vector<8x8xbf16>, vector<8x8xbf16>, vector<8x8xf32> -> vector<8x8xf32>
    %20 = arith.truncf %17 : vector<8x8xf32> to vector<8x8xbf16>
    %c0_6 = arith.constant 0 : index
    %c0_7 = arith.constant 0 : index
    %c0_8 = arith.constant 0 : index
    %c0_9 = arith.constant 0 : index
    %21 = vector.load %arg3[%c0_6, %c0_7, %c0_8, %c0_9] : memref<1x4x8x8xbf16, #tpu.memory_space<vmem>>, vector<1x1x8x8xbf16>
    %22 = vector.shape_cast %21 : vector<1x1x8x8xbf16> to vector<8x8xbf16>
    %23 = vector.shape_cast %20 : vector<8x8xbf16> to vector<1x1x8x8xbf16>
    tpu.vector_store %arg3[%c0_6, %c0_7, %c0_8, %c0_9], %23 {strides = array<i32>} : memref<1x4x8x8xbf16, #tpu.memory_space<vmem>>, vector<1x1x8x8xbf16>,
    %24 = vector.extract_strided_slice %1 {offsets = [0, 8], sizes = [8, 8], strides = [1, 1]} : vector<8x96xbf16> to vector<8x8xbf16>
    %25 = vector.extract_strided_slice %1 {offsets = [0, 40], sizes = [8, 8], strides = [1, 1]} : vector<8x96xbf16> to vector<8x8xbf16>
    %26 = vector.extract_strided_slice %1 {offsets = [0, 72], sizes = [8, 8], strides = [1, 1]} : vector<8x96xbf16> to vector<8x8xbf16>
    %cst_10 = arith.constant dense<0.000000e+00> : vector<8x8xf32>
    %27 = tpu.matmul %24, %25, %cst_10 {dimension_numbers = #tpu.dot_dimension_numbers<[1], [1], [0], [0], [0, 0, 1, 0], [], []>} : vector<8x8xbf16>, vector<8x8xbf16>, vector<8x8xf32> -> vector<8x8xf32>
    %cst_11 = arith.constant 0.353553385 : f32
    %28 = vector.broadcast %cst_11 : f32 to vector<8x8xf32>
    %29 = arith.mulf %27, %28 : vector<8x8xf32>
    %cst_12 = arith.constant dense<0xFF800000> : vector<8xf32>
    %30 = vector.multi_reduction <maximumf>, %29, %cst_12 [1] : vector<8x8xf32> to vector<8xf32>
    %31 = vector.shape_cast %30 : vector<8xf32> to vector<8x1xf32>
    %32 = vector.broadcast %31 : vector<8x1xf32> to vector<8x8xf32>
    %33 = arith.subf %29, %32 : vector<8x8xf32>
    %34 = math.exp %33 : vector<8x8xf32>
    %cst_13 = arith.constant dense<0.000000e+00> : vector<8xf32>
    %35 = vector.multi_reduction <add>, %34, %cst_13 [1] : vector<8x8xf32> to vector<8xf32>
    %36 = vector.shape_cast %35 : vector<8xf32> to vector<8x1xf32>
    %37 = tpu.reciprocal %36 {approx = true} : vector<8x1xf32> -> vector<8x1xf32>
    %38 = vector.broadcast %37 : vector<8x1xf32> to vector<8x8xf32>
    %39 = arith.mulf %34, %38 : vector<8x8xf32>
    %40 = arith.truncf %39 : vector<8x8xf32> to vector<8x8xbf16>
    %cst_14 = arith.constant dense<0.000000e+00> : vector<8x8xf32>
    %41 = tpu.matmul %40, %26, %cst_14 {dimension_numbers = #tpu.dot_dimension_numbers<[1], [0], [0], [1], [0, 0, 1, 1], [], []>} : vector<8x8xbf16>, vector<8x8xbf16>, vector<8x8xf32> -> vector<8x8xf32>
    %42 = arith.truncf %39 : vector<8x8xf32> to vector<8x8xbf16>
    %c0_15 = arith.constant 0 : index
    %c1 = arith.constant 1 : index
    %c0_16 = arith.constant 0 : index
    %c0_17 = arith.constant 0 : index
    %43 = vector.load %arg3[%c0_15, %c1, %c0_16, %c0_17] : memref<1x4x8x8xbf16, #tpu.memory_space<vmem>>, vector<1x1x8x8xbf16>
    %44 = vector.shape_cast %43 : vector<1x1x8x8xbf16> to vector<8x8xbf16>
    %45 = vector.shape_cast %42 : vector<8x8xbf16> to vector<1x1x8x8xbf16>
    tpu.vector_store %arg3[%c0_15, %c1, %c0_16, %c0_17], %45 {strides = array<i32>} : memref<1x4x8x8xbf16, #tpu.memory_space<vmem>>, vector<1x1x8x8xbf16>,
    %46 = vector.extract_strided_slice %1 {offsets = [0, 16], sizes = [8, 8], strides = [1, 1]} : vector<8x96xbf16> to vector<8x8xbf16>
    %47 = vector.extract_strided_slice %1 {offsets = [0, 48], sizes = [8, 8], strides = [1, 1]} : vector<8x96xbf16> to vector<8x8xbf16>
    %48 = vector.extract_strided_slice %1 {offsets = [0, 80], sizes = [8, 8], strides = [1, 1]} : vector<8x96xbf16> to vector<8x8xbf16>
    %cst_18 = arith.constant dense<0.000000e+00> : vector<8x8xf32>
    %49 = tpu.matmul %46, %47, %cst_18 {dimension_numbers = #tpu.dot_dimension_numbers<[1], [1], [0], [0], [0, 0, 1, 0], [], []>} : vector<8x8xbf16>, vector<8x8xbf16>, vector<8x8xf32> -> vector<8x8xf32>
    %cst_19 = arith.constant 0.353553385 : f32
    %50 = vector.broadcast %cst_19 : f32 to vector<8x8xf32>
    %51 = arith.mulf %49, %50 : vector<8x8xf32>
    %cst_20 = arith.constant dense<0xFF800000> : vector<8xf32>
    %52 = vector.multi_reduction <maximumf>, %51, %cst_20 [1] : vector<8x8xf32> to vector<8xf32>
    %53 = vector.shape_cast %52 : vector<8xf32> to vector<8x1xf32>
    %54 = vector.broadcast %53 : vector<8x1xf32> to vector<8x8xf32>
    %55 = arith.subf %51, %54 : vector<8x8xf32>
    %56 = math.exp %55 : vector<8x8xf32>
    %cst_21 = arith.constant dense<0.000000e+00> : vector<8xf32>
    %57 = vector.multi_reduction <add>, %56, %cst_21 [1] : vector<8x8xf32> to vector<8xf32>
    %58 = vector.shape_cast %57 : vector<8xf32> to vector<8x1xf32>
    %59 = tpu.reciprocal %58 {approx = true} : vector<8x1xf32> -> vector<8x1xf32>
    %60 = vector.broadcast %59 : vector<8x1xf32> to vector<8x8xf32>
    %61 = arith.mulf %56, %60 : vector<8x8xf32>
    %62 = arith.truncf %61 : vector<8x8xf32> to vector<8x8xbf16>
    %cst_22 = arith.constant dense<0.000000e+00> : vector<8x8xf32>
    %63 = tpu.matmul %62, %48, %cst_22 {dimension_numbers = #tpu.dot_dimension_numbers<[1], [0], [0], [1], [0, 0, 1, 1], [], []>} : vector<8x8xbf16>, vector<8x8xbf16>, vector<8x8xf32> -> vector<8x8xf32>
    %64 = arith.truncf %61 : vector<8x8xf32> to vector<8x8xbf16>
    %c0_23 = arith.constant 0 : index
    %c2 = arith.constant 2 : index
    %c0_24 = arith.constant 0 : index
    %c0_25 = arith.constant 0 : index
    %65 = vector.load %arg3[%c0_23, %c2, %c0_24, %c0_25] : memref<1x4x8x8xbf16, #tpu.memory_space<vmem>>, vector<1x1x8x8xbf16>
    %66 = vector.shape_cast %65 : vector<1x1x8x8xbf16> to vector<8x8xbf16>
    %67 = vector.shape_cast %64 : vector<8x8xbf16> to vector<1x1x8x8xbf16>
    tpu.vector_store %arg3[%c0_23, %c2, %c0_24, %c0_25], %67 {strides = array<i32>} : memref<1x4x8x8xbf16, #tpu.memory_space<vmem>>, vector<1x1x8x8xbf16>,
    %68 = vector.extract_strided_slice %1 {offsets = [0, 24], sizes = [8, 8], strides = [1, 1]} : vector<8x96xbf16> to vector<8x8xbf16>
    %69 = vector.extract_strided_slice %1 {offsets = [0, 56], sizes = [8, 8], strides = [1, 1]} : vector<8x96xbf16> to vector<8x8xbf16>
    %70 = vector.extract_strided_slice %1 {offsets = [0, 88], sizes = [8, 8], strides = [1, 1]} : vector<8x96xbf16> to vector<8x8xbf16>
    %cst_26 = arith.constant dense<0.000000e+00> : vector<8x8xf32>
    %71 = tpu.matmul %68, %69, %cst_26 {dimension_numbers = #tpu.dot_dimension_numbers<[1], [1], [0], [0], [0, 0, 1, 0], [], []>} : vector<8x8xbf16>, vector<8x8xbf16>, vector<8x8xf32> -> vector<8x8xf32>
    %cst_27 = arith.constant 0.353553385 : f32
    %72 = vector.broadcast %cst_27 : f32 to vector<8x8xf32>
    %73 = arith.mulf %71, %72 : vector<8x8xf32>
    %cst_28 = arith.constant dense<0xFF800000> : vector<8xf32>
    %74 = vector.multi_reduction <maximumf>, %73, %cst_28 [1] : vector<8x8xf32> to vector<8xf32>
    %75 = vector.shape_cast %74 : vector<8xf32> to vector<8x1xf32>
    %76 = vector.broadcast %75 : vector<8x1xf32> to vector<8x8xf32>
    %77 = arith.subf %73, %76 : vector<8x8xf32>
    %78 = math.exp %77 : vector<8x8xf32>
    %cst_29 = arith.constant dense<0.000000e+00> : vector<8xf32>
    %79 = vector.multi_reduction <add>, %78, %cst_29 [1] : vector<8x8xf32> to vector<8xf32>
    %80 = vector.shape_cast %79 : vector<8xf32> to vector<8x1xf32>
    %81 = tpu.reciprocal %80 {approx = true} : vector<8x1xf32> -> vector<8x1xf32>
    %82 = vector.broadcast %81 : vector<8x1xf32> to vector<8x8xf32>
    %83 = arith.mulf %78, %82 : vector<8x8xf32>
    %84 = arith.truncf %83 : vector<8x8xf32> to vector<8x8xbf16>
    %cst_30 = arith.constant dense<0.000000e+00> : vector<8x8xf32>
    %85 = tpu.matmul %84, %70, %cst_30 {dimension_numbers = #tpu.dot_dimension_numbers<[1], [0], [0], [1], [0, 0, 1, 1], [], []>} : vector<8x8xbf16>, vector<8x8xbf16>, vector<8x8xf32> -> vector<8x8xf32>
    %86 = arith.truncf %83 : vector<8x8xf32> to vector<8x8xbf16>
    %c0_31 = arith.constant 0 : index
    %c3 = arith.constant 3 : index
    %c0_32 = arith.constant 0 : index
    %c0_33 = arith.constant 0 : index
    %87 = vector.load %arg3[%c0_31, %c3, %c0_32, %c0_33] : memref<1x4x8x8xbf16, #tpu.memory_space<vmem>>, vector<1x1x8x8xbf16>
    %88 = vector.shape_cast %87 : vector<1x1x8x8xbf16> to vector<8x8xbf16>
    %89 = vector.shape_cast %86 : vector<8x8xbf16> to vector<1x1x8x8xbf16>
    tpu.vector_store %arg3[%c0_31, %c3, %c0_32, %c0_33], %89 {strides = array<i32>} : memref<1x4x8x8xbf16, #tpu.memory_space<vmem>>, vector<1x1x8x8xbf16>,
    %90 = tpu.concatenate %19, %41, %63, %85 in 1 : vector<8x8xf32>, vector<8x8xf32>, vector<8x8xf32>, vector<8x8xf32> -> vector<8x32xf32>
    %91 = arith.truncf %90 : vector<8x32xf32> to vector<8x32xbf16>
    %c0_34 = arith.constant 0 : index
    %c0_35 = arith.constant 0 : index
    %c0_36 = arith.constant 0 : index
    %92 = vector.load %arg2[%c0_34, %c0_35, %c0_36] : memref<1x8x32xbf16, #tpu.memory_space<vmem>>, vector<1x8x32xbf16>
    %93 = vector.shape_cast %92 : vector<1x8x32xbf16> to vector<8x32xbf16>
    %94 = vector.shape_cast %91 : vector<8x32xbf16> to vector<1x8x32xbf16>
    tpu.vector_store %arg2[%c0_34, %c0_35, %c0_36], %94 {strides = array<i32>} : memref<1x8x32xbf16, #tpu.memory_space<vmem>>, vector<1x8x32xbf16>,
    return
  }
  func.func @transform_0(%arg0: i32) -> (i32, i32, i32) {
    %c0_i32 = arith.constant 0 : i32
    %c0_i32_0 = arith.constant 0 : i32
    %c0_i32_1 = arith.constant 0 : i32
    return %arg0, %c0_i32, %c0_i32_0 : i32, i32, i32
  }
  func.func @transform_1(%arg0: i32) -> (i32, i32, i32) {
    %c0_i32 = arith.constant 0 : i32
    %c0_i32_0 = arith.constant 0 : i32
    %c0_i32_1 = arith.constant 0 : i32
    return %arg0, %c0_i32, %c0_i32_0 : i32, i32, i32
  }
  func.func @transform_2(%arg0: i32) -> (i32, i32, i32, i32) {
    %c0_i32 = arith.constant 0 : i32
    %c0_i32_0 = arith.constant 0 : i32
    %c0_i32_1 = arith.constant 0 : i32
    %c0_i32_2 = arith.constant 0 : i32
    return %arg0, %c0_i32, %c0_i32_0, %c0_i32_1 : i32, i32, i32, i32
  }
}

module attributes {stable_mosaic.version = 11 : i64} {
  func.func @_fused_matmul_kernel(%arg0: i32, %arg1: i32, %arg2: i32, %arg3: memref<16x32xbf16, #tpu.memory_space<vmem>>, %arg4: memref<32x32xbf16, #tpu.memory_space<vmem>>, %arg5: memref<1x32xf32, #tpu.memory_space<vmem>>, %arg6: memref<16x32xbf16, #tpu.memory_space<vmem>>, %arg7: memref<16x32xbf16, #tpu.memory_space<vmem>>) attributes {dimension_semantics = [#tpu.dimension_semantics<parallel>, #tpu.dimension_semantics<parallel>, #tpu.dimension_semantics<arbitrary>], iteration_bounds = array<i64: 1, 1, 1>, scalar_prefetch = 0 : i64, scratch_operands = 0 : i64, tpu.core_type = #tpu.core_type<tc>, window_params = [{transform_indices = @transform_0, window_bounds = array<i64: 16, 32>}, {transform_indices = @transform_1, window_bounds = array<i64: 32, 32>}, {transform_indices = @transform_2, window_bounds = array<i64: 1, 32>}, {transform_indices = @transform_3, window_bounds = array<i64: 16, 32>}, {transform_indices = @transform_4, window_bounds = array<i64: 16, 32>}]} {
    %c0 = arith.constant 0 : index
    %c0_0 = arith.constant 0 : index
    %0 = vector.load %arg3[%c0, %c0_0] : memref<16x32xbf16, #tpu.memory_space<vmem>>, vector<16x32xbf16>
    %c0_1 = arith.constant 0 : index
    %c0_2 = arith.constant 0 : index
    %1 = vector.load %arg4[%c0_1, %c0_2] : memref<32x32xbf16, #tpu.memory_space<vmem>>, vector<32x32xbf16>
    %cst = arith.constant dense<0.000000e+00> : vector<16x32xf32>
    %2 = tpu.matmul %0, %1, %cst {dimension_numbers = #tpu.dot_dimension_numbers<[1], [0], [0], [1], [0, 0, 1, 1], [], []>} : vector<16x32xbf16>, vector<32x32xbf16>, vector<16x32xf32> -> vector<16x32xf32>
    %c0_3 = arith.constant 0 : index
    %c0_4 = arith.constant 0 : index
    %3 = vector.load %arg5[%c0_3, %c0_4] : memref<1x32xf32, #tpu.memory_space<vmem>>, vector<1x32xf32>
    %4 = vector.broadcast %3 : vector<1x32xf32> to vector<16x32xf32>
    %5 = arith.addf %2, %4 : vector<16x32xf32>
    %c0_5 = arith.constant 0 : index
    %c0_6 = arith.constant 0 : index
    %6 = vector.load %arg6[%c0_5, %c0_6] : memref<16x32xbf16, #tpu.memory_space<vmem>>, vector<16x32xbf16>
    %7 = arith.extf %6 : vector<16x32xbf16> to vector<16x32xf32>
    %8 = arith.addf %5, %7 : vector<16x32xf32>
    %9 = arith.truncf %8 : vector<16x32xf32> to vector<16x32xbf16>
    %c0_7 = arith.constant 0 : index
    %c0_8 = arith.constant 0 : index
    %10 = vector.load %arg7[%c0_7, %c0_8] : memref<16x32xbf16, #tpu.memory_space<vmem>>, vector<16x32xbf16>
    tpu.vector_store %arg7[%c0_7, %c0_8], %9 {strides = array<i32>} : memref<16x32xbf16, #tpu.memory_space<vmem>>, vector<16x32xbf16>,
    return
  }
  func.func @transform_0(%arg0: i32, %arg1: i32, %arg2: i32) -> (i32, i32) {
    %c0_i32 = arith.constant 0 : i32
    return %arg0, %arg2 : i32, i32
  }
  func.func @transform_1(%arg0: i32, %arg1: i32, %arg2: i32) -> (i32, i32) {
    %c0_i32 = arith.constant 0 : i32
    return %arg2, %arg1 : i32, i32
  }
  func.func @transform_2(%arg0: i32, %arg1: i32, %arg2: i32) -> (i32, i32) {
    %c0_i32 = arith.constant 0 : i32
    %c0_i32_0 = arith.constant 0 : i32
    return %c0_i32, %arg1 : i32, i32
  }
  func.func @transform_3(%arg0: i32, %arg1: i32, %arg2: i32) -> (i32, i32) {
    %c0_i32 = arith.constant 0 : i32
    return %arg0, %arg1 : i32, i32
  }
  func.func @transform_4(%arg0: i32, %arg1: i32, %arg2: i32) -> (i32, i32) {
    %c0_i32 = arith.constant 0 : i32
    return %arg0, %arg1 : i32, i32
  }
}

module attributes {stable_mosaic.version = 11 : i64} {
  func.func @_fused_matmul_kernel(%arg0: i32, %arg1: i32, %arg2: i32, %arg3: memref<16x32xbf16, #tpu.memory_space<vmem>>, %arg4: memref<1x32xf32, #tpu.memory_space<vmem>>, %arg5: memref<1x32xf32, #tpu.memory_space<vmem>>, %arg6: memref<32x64xbf16, #tpu.memory_space<vmem>>, %arg7: memref<1x64xf32, #tpu.memory_space<vmem>>, %arg8: memref<16x64xbf16, #tpu.memory_space<vmem>>) attributes {dimension_semantics = [#tpu.dimension_semantics<parallel>, #tpu.dimension_semantics<parallel>, #tpu.dimension_semantics<arbitrary>], iteration_bounds = array<i64: 1, 1, 1>, scalar_prefetch = 0 : i64, scratch_operands = 0 : i64, tpu.core_type = #tpu.core_type<tc>, window_params = [{transform_indices = @transform_0, window_bounds = array<i64: 16, 32>}, {pipeline_mode = #tpu.pipeline_mode<synchronous>, transform_indices = @transform_1, window_bounds = array<i64: 1, 32>}, {pipeline_mode = #tpu.pipeline_mode<synchronous>, transform_indices = @transform_2, window_bounds = array<i64: 1, 32>}, {transform_indices = @transform_3, window_bounds = array<i64: 32, 64>}, {transform_indices = @transform_4, window_bounds = array<i64: 1, 64>}, {transform_indices = @transform_5, window_bounds = array<i64: 16, 64>}]} {
    %c0 = arith.constant 0 : index
    %c0_0 = arith.constant 0 : index
    %0 = vector.load %arg3[%c0, %c0_0] : memref<16x32xbf16, #tpu.memory_space<vmem>>, vector<16x32xbf16>
    %1 = arith.extf %0 : vector<16x32xbf16> to vector<16x32xf32>
    %cst = arith.constant dense<0.000000e+00> : vector<16xf32>
    %2 = vector.multi_reduction <add>, %1, %cst [1] : vector<16x32xf32> to vector<16xf32>
    %3 = vector.shape_cast %2 : vector<16xf32> to vector<16x1xf32>
    %cst_1 = arith.constant 3.200000e+01 : f32
    %4 = vector.broadcast %cst_1 : f32 to vector<16x1xf32>
    %5 = arith.divf %3, %4 : vector<16x1xf32>
    %6 = vector.broadcast %5 : vector<16x1xf32> to vector<16x32xf32>
    %7 = arith.subf %1, %6 : vector<16x32xf32>
    %8 = arith.mulf %7, %7 : vector<16x32xf32>
    %cst_2 = arith.constant dense<0.000000e+00> : vector<16xf32>
    %9 = vector.multi_reduction <add>, %8, %cst_2 [1] : vector<16x32xf32> to vector<16xf32>
    %10 = vector.shape_cast %9 : vector<16xf32> to vector<16x1xf32>
    %cst_3 = arith.constant 3.200000e+01 : f32
    %11 = vector.broadcast %cst_3 : f32 to vector<16x1xf32>
    %12 = arith.divf %10, %11 : vector<16x1xf32>
    %13 = vector.broadcast %5 : vector<16x1xf32> to vector<16x32xf32>
    %14 = arith.subf %1, %13 : vector<16x32xf32>
    %cst_4 = arith.constant 9.99999997E-7 : f32
    %15 = vector.broadcast %cst_4 : f32 to vector<16x1xf32>
    %16 = arith.addf %12, %15 : vector<16x1xf32>
    %17 = math.rsqrt %16 : vector<16x1xf32>
    %18 = vector.broadcast %17 : vector<16x1xf32> to vector<16x32xf32>
    %19 = arith.mulf %14, %18 : vector<16x32xf32>
    %c0_5 = arith.constant 0 : index
    %c0_6 = arith.constant 0 : index
    %20 = vector.load %arg4[%c0_5, %c0_6] : memref<1x32xf32, #tpu.memory_space<vmem>>, vector<1x32xf32>
    %21 = vector.broadcast %20 : vector<1x32xf32> to vector<16x32xf32>
    %22 = arith.mulf %19, %21 : vector<16x32xf32>
    %c0_7 = arith.constant 0 : index
    %c0_8 = arith.constant 0 : index
    %23 = vector.load %arg5[%c0_7, %c0_8] : memref<1x32xf32, #tpu.memory_space<vmem>>, vector<1x32xf32>
    %24 = vector.broadcast %23 : vector<1x32xf32> to vector<16x32xf32>
    %25 = arith.addf %22, %24 : vector<16x32xf32>
    %26 = arith.truncf %25 : vector<16x32xf32> to vector<16x32xbf16>
    %c0_9 = arith.constant 0 : index
    %c0_10 = arith.constant 0 : index
    %27 = vector.load %arg6[%c0_9, %c0_10] : memref<32x64xbf16, #tpu.memory_space<vmem>>, vector<32x64xbf16>
    %cst_11 = arith.constant dense<0.000000e+00> : vector<16x64xf32>
    %28 = tpu.matmul %26, %27, %cst_11 {dimension_numbers = #tpu.dot_dimension_numbers<[1], [0], [0], [1], [0, 0, 1, 1], [], []>} : vector<16x32xbf16>, vector<32x64xbf16>, vector<16x64xf32> -> vector<16x64xf32>
    %c0_12 = arith.constant 0 : index
    %c0_13 = arith.constant 0 : index
    %29 = vector.load %arg7[%c0_12, %c0_13] : memref<1x64xf32, #tpu.memory_space<vmem>>, vector<1x64xf32>
    %30 = vector.broadcast %29 : vector<1x64xf32> to vector<16x64xf32>
    %31 = arith.addf %28, %30 : vector<16x64xf32>
    %32 = arith.mulf %31, %31 : vector<16x64xf32>
    %33 = arith.mulf %31, %32 : vector<16x64xf32>
    %cst_14 = arith.constant 4.471500e-02 : f32
    %34 = vector.broadcast %cst_14 : f32 to vector<16x64xf32>
    %35 = arith.mulf %34, %33 : vector<16x64xf32>
    %36 = arith.addf %31, %35 : vector<16x64xf32>
    %cst_15 = arith.constant 0.797884583 : f32
    %37 = vector.broadcast %cst_15 : f32 to vector<16x64xf32>
    %38 = arith.mulf %37, %36 : vector<16x64xf32>
    %39 = math.tanh %38 : vector<16x64xf32>
    %cst_16 = arith.constant 1.000000e+00 : f32
    %40 = vector.broadcast %cst_16 : f32 to vector<16x64xf32>
    %41 = arith.addf %40, %39 : vector<16x64xf32>
    %cst_17 = arith.constant 5.000000e-01 : f32
    %42 = vector.broadcast %cst_17 : f32 to vector<16x64xf32>
    %43 = arith.mulf %42, %41 : vector<16x64xf32>
    %44 = arith.mulf %31, %43 : vector<16x64xf32>
    %45 = arith.truncf %44 : vector<16x64xf32> to vector<16x64xbf16>
    %c0_18 = arith.constant 0 : index
    %c0_19 = arith.constant 0 : index
    %46 = vector.load %arg8[%c0_18, %c0_19] : memref<16x64xbf16, #tpu.memory_space<vmem>>, vector<16x64xbf16>
    tpu.vector_store %arg8[%c0_18, %c0_19], %45 {strides = array<i32>} : memref<16x64xbf16, #tpu.memory_space<vmem>>, vector<16x64xbf16>,
    return
  }
  func.func @transform_0(%arg0: i32, %arg1: i32, %arg2: i32) -> (i32, i32) {
    %c0_i32 = arith.constant 0 : i32
    return %arg0, %arg2 : i32, i32
  }
  func.func @transform_1(%arg0: i32, %arg1: i32, %arg2: i32) -> (i32, i32) {
    %c0_i32 = arith.constant 0 : i32
    %c0_i32_0 = arith.constant 0 : i32
    %c0_i32_1 = arith.constant 0 : i32
    return %c0_i32, %c0_i32_0 : i32, i32
  }
  func.func @transform_2(%arg0: i32, %arg1: i32, %arg2: i32) -> (i32, i32) {
    %c0_i32 = arith.constant 0 : i32
    %c0_i32_0 = arith.constant 0 : i32
    %c0_i32_1 = arith.constant 0 : i32
    return %c0_i32, %c0_i32_0 : i32, i32
  }
  func.func @transform_3(%arg0: i32, %arg1: i32, %arg2: i32) -> (i32, i32) {
    %c0_i32 = arith.constant 0 : i32
    return %arg2, %arg1 : i32, i32
  }
  func.func @transform_4(%arg0: i32, %arg1: i32, %arg2: i32) -> (i32, i32) {
    %c0_i32 = arith.constant 0 : i32
    %c0_i32_0 = arith.constant 0 : i32
    return %c0_i32, %arg1 : i32, i32
  }
  func.func @transform_5(%arg0: i32, %arg1: i32, %arg2: i32) -> (i32, i32) {
    %c0_i32 = arith.constant 0 : i32
    return %arg0, %arg1 : i32, i32
  }
}

module attributes {stable_mosaic.version = 11 : i64} {
  func.func @_fused_matmul_kernel(%arg0: i32, %arg1: i32, %arg2: i32, %arg3: memref<16x64xbf16, #tpu.memory_space<vmem>>, %arg4: memref<64x32xbf16, #tpu.memory_space<vmem>>, %arg5: memref<1x32xf32, #tpu.memory_space<vmem>>, %arg6: memref<16x32xbf16, #tpu.memory_space<vmem>>, %arg7: memref<16x32xbf16, #tpu.memory_space<vmem>>) attributes {dimension_semantics = [#tpu.dimension_semantics<parallel>, #tpu.dimension_semantics<parallel>, #tpu.dimension_semantics<arbitrary>], iteration_bounds = array<i64: 1, 1, 1>, scalar_prefetch = 0 : i64, scratch_operands = 0 : i64, tpu.core_type = #tpu.core_type<tc>, window_params = [{transform_indices = @transform_0, window_bounds = array<i64: 16, 64>}, {transform_indices = @transform_1, window_bounds = array<i64: 64, 32>}, {transform_indices = @transform_2, window_bounds = array<i64: 1, 32>}, {transform_indices = @transform_3, window_bounds = array<i64: 16, 32>}, {transform_indices = @transform_4, window_bounds = array<i64: 16, 32>}]} {
    %c0 = arith.constant 0 : index
    %c0_0 = arith.constant 0 : index
    %0 = vector.load %arg3[%c0, %c0_0] : memref<16x64xbf16, #tpu.memory_space<vmem>>, vector<16x64xbf16>
    %c0_1 = arith.constant 0 : index
    %c0_2 = arith.constant 0 : index
    %1 = vector.load %arg4[%c0_1, %c0_2] : memref<64x32xbf16, #tpu.memory_space<vmem>>, vector<64x32xbf16>
    %cst = arith.constant dense<0.000000e+00> : vector<16x32xf32>
    %2 = tpu.matmul %0, %1, %cst {dimension_numbers = #tpu.dot_dimension_numbers<[1], [0], [0], [1], [0, 0, 1, 1], [], []>} : vector<16x64xbf16>, vector<64x32xbf16>, vector<16x32xf32> -> vector<16x32xf32>
    %c0_3 = arith.constant 0 : index
    %c0_4 = arith.constant 0 : index
    %3 = vector.load %arg5[%c0_3, %c0_4] : memref<1x32xf32, #tpu.memory_space<vmem>>, vector<1x32xf32>
    %4 = vector.broadcast %3 : vector<1x32xf32> to vector<16x32xf32>
    %5 = arith.addf %2, %4 : vector<16x32xf32>
    %c0_5 = arith.constant 0 : index
    %c0_6 = arith.constant 0 : index
    %6 = vector.load %arg6[%c0_5, %c0_6] : memref<16x32xbf16, #tpu.memory_space<vmem>>, vector<16x32xbf16>
    %7 = arith.extf %6 : vector<16x32xbf16> to vector<16x32xf32>
    %8 = arith.addf %5, %7 : vector<16x32xf32>
    %9 = arith.truncf %8 : vector<16x32xf32> to vector<16x32xbf16>
    %c0_7 = arith.constant 0 : index
    %c0_8 = arith.constant 0 : index
    %10 = vector.load %arg7[%c0_7, %c0_8] : memref<16x32xbf16, #tpu.memory_space<vmem>>, vector<16x32xbf16>
    tpu.vector_store %arg7[%c0_7, %c0_8], %9 {strides = array<i32>} : memref<16x32xbf16, #tpu.memory_space<vmem>>, vector<16x32xbf16>,
    return
  }
  func.func @transform_0(%arg0: i32, %arg1: i32, %arg2: i32) -> (i32, i32) {
    %c0_i32 = arith.constant 0 : i32
    return %arg0, %arg2 : i32, i32
  }
  func.func @transform_1(%arg0: i32, %arg1: i32, %arg2: i32) -> (i32, i32) {
    %c0_i32 = arith.constant 0 : i32
    return %arg2, %arg1 : i32, i32
  }
  func.func @transform_2(%arg0: i32, %arg1: i32, %arg2: i32) -> (i32, i32) {
    %c0_i32 = arith.constant 0 : i32
    %c0_i32_0 = arith.constant 0 : i32
    return %c0_i32, %arg1 : i32, i32
  }
  func.func @transform_3(%arg0: i32, %arg1: i32, %arg2: i32) -> (i32, i32) {
    %c0_i32 = arith.constant 0 : i32
    return %arg0, %arg1 : i32, i32
  }
  func.func @transform_4(%arg0: i32, %arg1: i32, %arg2: i32) -> (i32, i32) {
    %c0_i32 = arith.constant 0 : i32
    return %arg0, %arg1 : i32, i32
  }
}

module attributes {stable_mosaic.version = 11 : i64} {
  func.func @_fused_matmul_kernel(%arg0: i32, %arg1: i32, %arg2: i32, %arg3: memref<28x32xbf16, #tpu.memory_space<vmem>>, %arg4: memref<1x32xf32, #tpu.memory_space<vmem>>, %arg5: memref<1x32xf32, #tpu.memory_space<vmem>>, %arg6: memref<32x96xbf16, #tpu.memory_space<vmem>>, %arg7: memref<1x96xf32, #tpu.memory_space<vmem>>, %arg8: memref<28x96xbf16, #tpu.memory_space<vmem>>) attributes {dimension_semantics = [#tpu.dimension_semantics<parallel>, #tpu.dimension_semantics<parallel>, #tpu.dimension_semantics<arbitrary>], iteration_bounds = array<i64: 1, 1, 1>, scalar_prefetch = 0 : i64, scratch_operands = 0 : i64, tpu.core_type = #tpu.core_type<tc>, window_params = [{transform_indices = @transform_0, window_bounds = array<i64: 28, 32>}, {pipeline_mode = #tpu.pipeline_mode<synchronous>, transform_indices = @transform_1, window_bounds = array<i64: 1, 32>}, {pipeline_mode = #tpu.pipeline_mode<synchronous>, transform_indices = @transform_2, window_bounds = array<i64: 1, 32>}, {transform_indices = @transform_3, window_bounds = array<i64: 32, 96>}, {transform_indices = @transform_4, window_bounds = array<i64: 1, 96>}, {transform_indices = @transform_5, window_bounds = array<i64: 28, 96>}]} {
    %c0 = arith.constant 0 : index
    %c0_0 = arith.constant 0 : index
    %0 = vector.load %arg3[%c0, %c0_0] : memref<28x32xbf16, #tpu.memory_space<vmem>>, vector<28x32xbf16>
    %1 = arith.extf %0 : vector<28x32xbf16> to vector<28x32xf32>
    %cst = arith.constant dense<0.000000e+00> : vector<28xf32>
    %2 = vector.multi_reduction <add>, %1, %cst [1] : vector<28x32xf32> to vector<28xf32>
    %3 = vector.shape_cast %2 : vector<28xf32> to vector<28x1xf32>
    %cst_1 = arith.constant 3.200000e+01 : f32
    %4 = vector.broadcast %cst_1 : f32 to vector<28x1xf32>
    %5 = arith.divf %3, %4 : vector<28x1xf32>
    %6 = vector.broadcast %5 : vector<28x1xf32> to vector<28x32xf32>
    %7 = arith.subf %1, %6 : vector<28x32xf32>
    %8 = arith.mulf %7, %7 : vector<28x32xf32>
    %cst_2 = arith.constant dense<0.000000e+00> : vector<28xf32>
    %9 = vector.multi_reduction <add>, %8, %cst_2 [1] : vector<28x32xf32> to vector<28xf32>
    %10 = vector.shape_cast %9 : vector<28xf32> to vector<28x1xf32>
    %cst_3 = arith.constant 3.200000e+01 : f32
    %11 = vector.broadcast %cst_3 : f32 to vector<28x1xf32>
    %12 = arith.divf %10, %11 : vector<28x1xf32>
    %13 = vector.broadcast %5 : vector<28x1xf32> to vector<28x32xf32>
    %14 = arith.subf %1, %13 : vector<28x32xf32>
    %cst_4 = arith.constant 9.99999997E-7 : f32
    %15 = vector.broadcast %cst_4 : f32 to vector<28x1xf32>
    %16 = arith.addf %12, %15 : vector<28x1xf32>
    %17 = math.rsqrt %16 : vector<28x1xf32>
    %18 = vector.broadcast %17 : vector<28x1xf32> to vector<28x32xf32>
    %19 = arith.mulf %14, %18 : vector<28x32xf32>
    %c0_5 = arith.constant 0 : index
    %c0_6 = arith.constant 0 : index
    %20 = vector.load %arg4[%c0_5, %c0_6] : memref<1x32xf32, #tpu.memory_space<vmem>>, vector<1x32xf32>
    %21 = vector.broadcast %20 : vector<1x32xf32> to vector<28x32xf32>
    %22 = arith.mulf %19, %21 : vector<28x32xf32>
    %c0_7 = arith.constant 0 : index
    %c0_8 = arith.constant 0 : index
    %23 = vector.load %arg5[%c0_7, %c0_8] : memref<1x32xf32, #tpu.memory_space<vmem>>, vector<1x32xf32>
    %24 = vector.broadcast %23 : vector<1x32xf32> to vector<28x32xf32>
    %25 = arith.addf %22, %24 : vector<28x32xf32>
    %26 = arith.truncf %25 : vector<28x32xf32> to vector<28x32xbf16>
    %c0_9 = arith.constant 0 : index
    %c0_10 = arith.constant 0 : index
    %27 = vector.load %arg6[%c0_9, %c0_10] : memref<32x96xbf16, #tpu.memory_space<vmem>>, vector<32x96xbf16>
    %cst_11 = arith.constant dense<0.000000e+00> : vector<28x96xf32>
    %28 = tpu.matmul %26, %27, %cst_11 {dimension_numbers = #tpu.dot_dimension_numbers<[1], [0], [0], [1], [0, 0, 1, 1], [], []>} : vector<28x32xbf16>, vector<32x96xbf16>, vector<28x96xf32> -> vector<28x96xf32>
    %c0_12 = arith.constant 0 : index
    %c0_13 = arith.constant 0 : index
    %29 = vector.load %arg7[%c0_12, %c0_13] : memref<1x96xf32, #tpu.memory_space<vmem>>, vector<1x96xf32>
    %30 = vector.broadcast %29 : vector<1x96xf32> to vector<28x96xf32>
    %31 = arith.addf %28, %30 : vector<28x96xf32>
    %32 = arith.truncf %31 : vector<28x96xf32> to vector<28x96xbf16>
    %c0_14 = arith.constant 0 : index
    %c0_15 = arith.constant 0 : index
    %33 = vector.load %arg8[%c0_14, %c0_15] : memref<28x96xbf16, #tpu.memory_space<vmem>>, vector<28x96xbf16>
    tpu.vector_store %arg8[%c0_14, %c0_15], %32 {strides = array<i32>} : memref<28x96xbf16, #tpu.memory_space<vmem>>, vector<28x96xbf16>,
    return
  }
  func.func @transform_0(%arg0: i32, %arg1: i32, %arg2: i32) -> (i32, i32) {
    %c0_i32 = arith.constant 0 : i32
    return %arg0, %arg2 : i32, i32
  }
  func.func @transform_1(%arg0: i32, %arg1: i32, %arg2: i32) -> (i32, i32) {
    %c0_i32 = arith.constant 0 : i32
    %c0_i32_0 = arith.constant 0 : i32
    %c0_i32_1 = arith.constant 0 : i32
    return %c0_i32, %c0_i32_0 : i32, i32
  }
  func.func @transform_2(%arg0: i32, %arg1: i32, %arg2: i32) -> (i32, i32) {
    %c0_i32 = arith.constant 0 : i32
    %c0_i32_0 = arith.constant 0 : i32
    %c0_i32_1 = arith.constant 0 : i32
    return %c0_i32, %c0_i32_0 : i32, i32
  }
  func.func @transform_3(%arg0: i32, %arg1: i32, %arg2: i32) -> (i32, i32) {
    %c0_i32 = arith.constant 0 : i32
    return %arg2, %arg1 : i32, i32
  }
  func.func @transform_4(%arg0: i32, %arg1: i32, %arg2: i32) -> (i32, i32) {
    %c0_i32 = arith.constant 0 : i32
    %c0_i32_0 = arith.constant 0 : i32
    return %c0_i32, %arg1 : i32, i32
  }
  func.func @transform_5(%arg0: i32, %arg1: i32, %arg2: i32) -> (i32, i32) {
    %c0_i32 = arith.constant 0 : i32
    return %arg0, %arg1 : i32, i32
  }
}

module attributes {stable_mosaic.version = 11 : i64} {
  func.func @_attn_kernel(%arg0: i32, %arg1: memref<1x14x96xbf16, #tpu.memory_space<vmem>>, %arg2: memref<1x14x32xbf16, #tpu.memory_space<vmem>>, %arg3: memref<1x4x14x14xbf16, #tpu.memory_space<vmem>>) attributes {dimension_semantics = [#tpu.dimension_semantics<parallel>], iteration_bounds = array<i64: 2>, scalar_prefetch = 0 : i64, scratch_operands = 0 : i64, tpu.core_type = #tpu.core_type<tc>, window_params = [{transform_indices = @transform_0, window_bounds = array<i64: 1, 14, 96>}, {transform_indices = @transform_1, window_bounds = array<i64: 1, 14, 32>}, {transform_indices = @transform_2, window_bounds = array<i64: 1, 4, 14, 14>}]} {
    %c0 = arith.constant 0 : index
    %c0_0 = arith.constant 0 : index
    %c0_1 = arith.constant 0 : index
    %0 = vector.load %arg1[%c0, %c0_0, %c0_1] : memref<1x14x96xbf16, #tpu.memory_space<vmem>>, vector<1x14x96xbf16>
    %1 = vector.shape_cast %0 : vector<1x14x96xbf16> to vector<14x96xbf16>
    %2 = vector.extract_strided_slice %1 {offsets = [0, 0], sizes = [14, 8], strides = [1, 1]} : vector<14x96xbf16> to vector<14x8xbf16>
    %3 = vector.extract_strided_slice %1 {offsets = [0, 32], sizes = [14, 8], strides = [1, 1]} : vector<14x96xbf16> to vector<14x8xbf16>
    %4 = vector.extract_strided_slice %1 {offsets = [0, 64], sizes = [14, 8], strides = [1, 1]} : vector<14x96xbf16> to vector<14x8xbf16>
    %cst = arith.constant dense<0.000000e+00> : vector<14x14xf32>
    %5 = tpu.matmul %2, %3, %cst {dimension_numbers = #tpu.dot_dimension_numbers<[1], [1], [0], [0], [0, 0, 1, 0], [], []>} : vector<14x8xbf16>, vector<14x8xbf16>, vector<14x14xf32> -> vector<14x14xf32>
    %cst_2 = arith.constant 0.353553385 : f32
    %6 = vector.broadcast %cst_2 : f32 to vector<14x14xf32>
    %7 = arith.mulf %5, %6 : vector<14x14xf32>
    %cst_3 = arith.constant dense<0xFF800000> : vector<14xf32>
    %8 = vector.multi_reduction <maximumf>, %7, %cst_3 [1] : vector<14x14xf32> to vector<14xf32>
    %9 = vector.shape_cast %8 : vector<14xf32> to vector<14x1xf32>
    %10 = vector.broadcast %9 : vector<14x1xf32> to vector<14x14xf32>
    %11 = arith.subf %7, %10 : vector<14x14xf32>
    %12 = math.exp %11 : vector<14x14xf32>
    %cst_4 = arith.constant dense<0.000000e+00> : vector<14xf32>
    %13 = vector.multi_reduction <add>, %12, %cst_4 [1] : vector<14x14xf32> to vector<14xf32>
    %14 = vector.shape_cast %13 : vector<14xf32> to vector<14x1xf32>
    %15 = tpu.reciprocal %14 {approx = true} : vector<14x1xf32> -> vector<14x1xf32>
    %16 = vector.broadcast %15 : vector<14x1xf32> to vector<14x14xf32>
    %17 = arith.mulf %12, %16 : vector<14x14xf32>
    %18 = arith.truncf %17 : vector<14x14xf32> to vector<14x14xbf16>
    %cst_5 = arith.constant dense<0.000000e+00> : vector<14x8xf32>
    %19 = tpu.matmul %18, %4, %cst_5 {dimension_numbers = #tpu.dot_dimension_numbers<[1], [0], [0], [1], [0, 0, 1, 1], [], []>} : vector<14x14xbf16>, vector<14x8xbf16>, vector<14x8xf32> -> vector<14x8xf32>
    %20 = arith.truncf %17 : vector<14x14xf32> to vector<14x14xbf16>
    %c0_6 = arith.constant 0 : index
    %c0_7 = arith.constant 0 : index
    %c0_8 = arith.constant 0 : index
    %c0_9 = arith.constant 0 : index
    %21 = vector.load %arg3[%c0_6, %c0_7, %c0_8, %c0_9] : memref<1x4x14x14xbf16, #tpu.memory_space<vmem>>, vector<1x1x14x14xbf16>
    %22 = vector.shape_cast %21 : vector<1x1x14x14xbf16> to vector<14x14xbf16>
    %23 = vector.shape_cast %20 : vector<14x14xbf16> to vector<1x1x14x14xbf16>
    tpu.vector_store %arg3[%c0_6, %c0_7, %c0_8, %c0_9], %23 {strides = array<i32>} : memref<1x4x14x14xbf16, #tpu.memory_space<vmem>>, vector<1x1x14x14xbf16>,
    %24 = vector.extract_strided_slice %1 {offsets = [0, 8], sizes = [14, 8], strides = [1, 1]} : vector<14x96xbf16> to vector<14x8xbf16>
    %25 = vector.extract_strided_slice %1 {offsets = [0, 40], sizes = [14, 8], strides = [1, 1]} : vector<14x96xbf16> to vector<14x8xbf16>
    %26 = vector.extract_strided_slice %1 {offsets = [0, 72], sizes = [14, 8], strides = [1, 1]} : vector<14x96xbf16> to vector<14x8xbf16>
    %cst_10 = arith.constant dense<0.000000e+00> : vector<14x14xf32>
    %27 = tpu.matmul %24, %25, %cst_10 {dimension_numbers = #tpu.dot_dimension_numbers<[1], [1], [0], [0], [0, 0, 1, 0], [], []>} : vector<14x8xbf16>, vector<14x8xbf16>, vector<14x14xf32> -> vector<14x14xf32>
    %cst_11 = arith.constant 0.353553385 : f32
    %28 = vector.broadcast %cst_11 : f32 to vector<14x14xf32>
    %29 = arith.mulf %27, %28 : vector<14x14xf32>
    %cst_12 = arith.constant dense<0xFF800000> : vector<14xf32>
    %30 = vector.multi_reduction <maximumf>, %29, %cst_12 [1] : vector<14x14xf32> to vector<14xf32>
    %31 = vector.shape_cast %30 : vector<14xf32> to vector<14x1xf32>
    %32 = vector.broadcast %31 : vector<14x1xf32> to vector<14x14xf32>
    %33 = arith.subf %29, %32 : vector<14x14xf32>
    %34 = math.exp %33 : vector<14x14xf32>
    %cst_13 = arith.constant dense<0.000000e+00> : vector<14xf32>
    %35 = vector.multi_reduction <add>, %34, %cst_13 [1] : vector<14x14xf32> to vector<14xf32>
    %36 = vector.shape_cast %35 : vector<14xf32> to vector<14x1xf32>
    %37 = tpu.reciprocal %36 {approx = true} : vector<14x1xf32> -> vector<14x1xf32>
    %38 = vector.broadcast %37 : vector<14x1xf32> to vector<14x14xf32>
    %39 = arith.mulf %34, %38 : vector<14x14xf32>
    %40 = arith.truncf %39 : vector<14x14xf32> to vector<14x14xbf16>
    %cst_14 = arith.constant dense<0.000000e+00> : vector<14x8xf32>
    %41 = tpu.matmul %40, %26, %cst_14 {dimension_numbers = #tpu.dot_dimension_numbers<[1], [0], [0], [1], [0, 0, 1, 1], [], []>} : vector<14x14xbf16>, vector<14x8xbf16>, vector<14x8xf32> -> vector<14x8xf32>
    %42 = arith.truncf %39 : vector<14x14xf32> to vector<14x14xbf16>
    %c0_15 = arith.constant 0 : index
    %c1 = arith.constant 1 : index
    %c0_16 = arith.constant 0 : index
    %c0_17 = arith.constant 0 : index
    %43 = vector.load %arg3[%c0_15, %c1, %c0_16, %c0_17] : memref<1x4x14x14xbf16, #tpu.memory_space<vmem>>, vector<1x1x14x14xbf16>
    %44 = vector.shape_cast %43 : vector<1x1x14x14xbf16> to vector<14x14xbf16>
    %45 = vector.shape_cast %42 : vector<14x14xbf16> to vector<1x1x14x14xbf16>
    tpu.vector_store %arg3[%c0_15, %c1, %c0_16, %c0_17], %45 {strides = array<i32>} : memref<1x4x14x14xbf16, #tpu.memory_space<vmem>>, vector<1x1x14x14xbf16>,
    %46 = vector.extract_strided_slice %1 {offsets = [0, 16], sizes = [14, 8], strides = [1, 1]} : vector<14x96xbf16> to vector<14x8xbf16>
    %47 = vector.extract_strided_slice %1 {offsets = [0, 48], sizes = [14, 8], strides = [1, 1]} : vector<14x96xbf16> to vector<14x8xbf16>
    %48 = vector.extract_strided_slice %1 {offsets = [0, 80], sizes = [14, 8], strides = [1, 1]} : vector<14x96xbf16> to vector<14x8xbf16>
    %cst_18 = arith.constant dense<0.000000e+00> : vector<14x14xf32>
    %49 = tpu.matmul %46, %47, %cst_18 {dimension_numbers = #tpu.dot_dimension_numbers<[1], [1], [0], [0], [0, 0, 1, 0], [], []>} : vector<14x8xbf16>, vector<14x8xbf16>, vector<14x14xf32> -> vector<14x14xf32>
    %cst_19 = arith.constant 0.353553385 : f32
    %50 = vector.broadcast %cst_19 : f32 to vector<14x14xf32>
    %51 = arith.mulf %49, %50 : vector<14x14xf32>
    %cst_20 = arith.constant dense<0xFF800000> : vector<14xf32>
    %52 = vector.multi_reduction <maximumf>, %51, %cst_20 [1] : vector<14x14xf32> to vector<14xf32>
    %53 = vector.shape_cast %52 : vector<14xf32> to vector<14x1xf32>
    %54 = vector.broadcast %53 : vector<14x1xf32> to vector<14x14xf32>
    %55 = arith.subf %51, %54 : vector<14x14xf32>
    %56 = math.exp %55 : vector<14x14xf32>
    %cst_21 = arith.constant dense<0.000000e+00> : vector<14xf32>
    %57 = vector.multi_reduction <add>, %56, %cst_21 [1] : vector<14x14xf32> to vector<14xf32>
    %58 = vector.shape_cast %57 : vector<14xf32> to vector<14x1xf32>
    %59 = tpu.reciprocal %58 {approx = true} : vector<14x1xf32> -> vector<14x1xf32>
    %60 = vector.broadcast %59 : vector<14x1xf32> to vector<14x14xf32>
    %61 = arith.mulf %56, %60 : vector<14x14xf32>
    %62 = arith.truncf %61 : vector<14x14xf32> to vector<14x14xbf16>
    %cst_22 = arith.constant dense<0.000000e+00> : vector<14x8xf32>
    %63 = tpu.matmul %62, %48, %cst_22 {dimension_numbers = #tpu.dot_dimension_numbers<[1], [0], [0], [1], [0, 0, 1, 1], [], []>} : vector<14x14xbf16>, vector<14x8xbf16>, vector<14x8xf32> -> vector<14x8xf32>
    %64 = arith.truncf %61 : vector<14x14xf32> to vector<14x14xbf16>
    %c0_23 = arith.constant 0 : index
    %c2 = arith.constant 2 : index
    %c0_24 = arith.constant 0 : index
    %c0_25 = arith.constant 0 : index
    %65 = vector.load %arg3[%c0_23, %c2, %c0_24, %c0_25] : memref<1x4x14x14xbf16, #tpu.memory_space<vmem>>, vector<1x1x14x14xbf16>
    %66 = vector.shape_cast %65 : vector<1x1x14x14xbf16> to vector<14x14xbf16>
    %67 = vector.shape_cast %64 : vector<14x14xbf16> to vector<1x1x14x14xbf16>
    tpu.vector_store %arg3[%c0_23, %c2, %c0_24, %c0_25], %67 {strides = array<i32>} : memref<1x4x14x14xbf16, #tpu.memory_space<vmem>>, vector<1x1x14x14xbf16>,
    %68 = vector.extract_strided_slice %1 {offsets = [0, 24], sizes = [14, 8], strides = [1, 1]} : vector<14x96xbf16> to vector<14x8xbf16>
    %69 = vector.extract_strided_slice %1 {offsets = [0, 56], sizes = [14, 8], strides = [1, 1]} : vector<14x96xbf16> to vector<14x8xbf16>
    %70 = vector.extract_strided_slice %1 {offsets = [0, 88], sizes = [14, 8], strides = [1, 1]} : vector<14x96xbf16> to vector<14x8xbf16>
    %cst_26 = arith.constant dense<0.000000e+00> : vector<14x14xf32>
    %71 = tpu.matmul %68, %69, %cst_26 {dimension_numbers = #tpu.dot_dimension_numbers<[1], [1], [0], [0], [0, 0, 1, 0], [], []>} : vector<14x8xbf16>, vector<14x8xbf16>, vector<14x14xf32> -> vector<14x14xf32>
    %cst_27 = arith.constant 0.353553385 : f32
    %72 = vector.broadcast %cst_27 : f32 to vector<14x14xf32>
    %73 = arith.mulf %71, %72 : vector<14x14xf32>
    %cst_28 = arith.constant dense<0xFF800000> : vector<14xf32>
    %74 = vector.multi_reduction <maximumf>, %73, %cst_28 [1] : vector<14x14xf32> to vector<14xf32>
    %75 = vector.shape_cast %74 : vector<14xf32> to vector<14x1xf32>
    %76 = vector.broadcast %75 : vector<14x1xf32> to vector<14x14xf32>
    %77 = arith.subf %73, %76 : vector<14x14xf32>
    %78 = math.exp %77 : vector<14x14xf32>
    %cst_29 = arith.constant dense<0.000000e+00> : vector<14xf32>
    %79 = vector.multi_reduction <add>, %78, %cst_29 [1] : vector<14x14xf32> to vector<14xf32>
    %80 = vector.shape_cast %79 : vector<14xf32> to vector<14x1xf32>
    %81 = tpu.reciprocal %80 {approx = true} : vector<14x1xf32> -> vector<14x1xf32>
    %82 = vector.broadcast %81 : vector<14x1xf32> to vector<14x14xf32>
    %83 = arith.mulf %78, %82 : vector<14x14xf32>
    %84 = arith.truncf %83 : vector<14x14xf32> to vector<14x14xbf16>
    %cst_30 = arith.constant dense<0.000000e+00> : vector<14x8xf32>
    %85 = tpu.matmul %84, %70, %cst_30 {dimension_numbers = #tpu.dot_dimension_numbers<[1], [0], [0], [1], [0, 0, 1, 1], [], []>} : vector<14x14xbf16>, vector<14x8xbf16>, vector<14x8xf32> -> vector<14x8xf32>
    %86 = arith.truncf %83 : vector<14x14xf32> to vector<14x14xbf16>
    %c0_31 = arith.constant 0 : index
    %c3 = arith.constant 3 : index
    %c0_32 = arith.constant 0 : index
    %c0_33 = arith.constant 0 : index
    %87 = vector.load %arg3[%c0_31, %c3, %c0_32, %c0_33] : memref<1x4x14x14xbf16, #tpu.memory_space<vmem>>, vector<1x1x14x14xbf16>
    %88 = vector.shape_cast %87 : vector<1x1x14x14xbf16> to vector<14x14xbf16>
    %89 = vector.shape_cast %86 : vector<14x14xbf16> to vector<1x1x14x14xbf16>
    tpu.vector_store %arg3[%c0_31, %c3, %c0_32, %c0_33], %89 {strides = array<i32>} : memref<1x4x14x14xbf16, #tpu.memory_space<vmem>>, vector<1x1x14x14xbf16>,
    %90 = tpu.concatenate %19, %41, %63, %85 in 1 : vector<14x8xf32>, vector<14x8xf32>, vector<14x8xf32>, vector<14x8xf32> -> vector<14x32xf32>
    %91 = arith.truncf %90 : vector<14x32xf32> to vector<14x32xbf16>
    %c0_34 = arith.constant 0 : index
    %c0_35 = arith.constant 0 : index
    %c0_36 = arith.constant 0 : index
    %92 = vector.load %arg2[%c0_34, %c0_35, %c0_36] : memref<1x14x32xbf16, #tpu.memory_space<vmem>>, vector<1x14x32xbf16>
    %93 = vector.shape_cast %92 : vector<1x14x32xbf16> to vector<14x32xbf16>
    %94 = vector.shape_cast %91 : vector<14x32xbf16> to vector<1x14x32xbf16>
    tpu.vector_store %arg2[%c0_34, %c0_35, %c0_36], %94 {strides = array<i32>} : memref<1x14x32xbf16, #tpu.memory_space<vmem>>, vector<1x14x32xbf16>,
    return
  }
  func.func @transform_0(%arg0: i32) -> (i32, i32, i32) {
    %c0_i32 = arith.constant 0 : i32
    %c0_i32_0 = arith.constant 0 : i32
    %c0_i32_1 = arith.constant 0 : i32
    return %arg0, %c0_i32, %c0_i32_0 : i32, i32, i32
  }
  func.func @transform_1(%arg0: i32) -> (i32, i32, i32) {
    %c0_i32 = arith.constant 0 : i32
    %c0_i32_0 = arith.constant 0 : i32
    %c0_i32_1 = arith.constant 0 : i32
    return %arg0, %c0_i32, %c0_i32_0 : i32, i32, i32
  }
  func.func @transform_2(%arg0: i32) -> (i32, i32, i32, i32) {
    %c0_i32 = arith.constant 0 : i32
    %c0_i32_0 = arith.constant 0 : i32
    %c0_i32_1 = arith.constant 0 : i32
    %c0_i32_2 = arith.constant 0 : i32
    return %arg0, %c0_i32, %c0_i32_0, %c0_i32_1 : i32, i32, i32, i32
  }
}

module attributes {stable_mosaic.version = 11 : i64} {
  func.func @_fused_matmul_kernel(%arg0: i32, %arg1: i32, %arg2: i32, %arg3: memref<28x32xbf16, #tpu.memory_space<vmem>>, %arg4: memref<32x32xbf16, #tpu.memory_space<vmem>>, %arg5: memref<1x32xf32, #tpu.memory_space<vmem>>, %arg6: memref<28x32xbf16, #tpu.memory_space<vmem>>, %arg7: memref<28x32xbf16, #tpu.memory_space<vmem>>) attributes {dimension_semantics = [#tpu.dimension_semantics<parallel>, #tpu.dimension_semantics<parallel>, #tpu.dimension_semantics<arbitrary>], iteration_bounds = array<i64: 1, 1, 1>, scalar_prefetch = 0 : i64, scratch_operands = 0 : i64, tpu.core_type = #tpu.core_type<tc>, window_params = [{transform_indices = @transform_0, window_bounds = array<i64: 28, 32>}, {transform_indices = @transform_1, window_bounds = array<i64: 32, 32>}, {transform_indices = @transform_2, window_bounds = array<i64: 1, 32>}, {transform_indices = @transform_3, window_bounds = array<i64: 28, 32>}, {transform_indices = @transform_4, window_bounds = array<i64: 28, 32>}]} {
    %c0 = arith.constant 0 : index
    %c0_0 = arith.constant 0 : index
    %0 = vector.load %arg3[%c0, %c0_0] : memref<28x32xbf16, #tpu.memory_space<vmem>>, vector<28x32xbf16>
    %c0_1 = arith.constant 0 : index
    %c0_2 = arith.constant 0 : index
    %1 = vector.load %arg4[%c0_1, %c0_2] : memref<32x32xbf16, #tpu.memory_space<vmem>>, vector<32x32xbf16>
    %cst = arith.constant dense<0.000000e+00> : vector<28x32xf32>
    %2 = tpu.matmul %0, %1, %cst {dimension_numbers = #tpu.dot_dimension_numbers<[1], [0], [0], [1], [0, 0, 1, 1], [], []>} : vector<28x32xbf16>, vector<32x32xbf16>, vector<28x32xf32> -> vector<28x32xf32>
    %c0_3 = arith.constant 0 : index
    %c0_4 = arith.constant 0 : index
    %3 = vector.load %arg5[%c0_3, %c0_4] : memref<1x32xf32, #tpu.memory_space<vmem>>, vector<1x32xf32>
    %4 = vector.broadcast %3 : vector<1x32xf32> to vector<28x32xf32>
    %5 = arith.addf %2, %4 : vector<28x32xf32>
    %c0_5 = arith.constant 0 : index
    %c0_6 = arith.constant 0 : index
    %6 = vector.load %arg6[%c0_5, %c0_6] : memref<28x32xbf16, #tpu.memory_space<vmem>>, vector<28x32xbf16>
    %7 = arith.extf %6 : vector<28x32xbf16> to vector<28x32xf32>
    %8 = arith.addf %5, %7 : vector<28x32xf32>
    %9 = arith.truncf %8 : vector<28x32xf32> to vector<28x32xbf16>
    %c0_7 = arith.constant 0 : index
    %c0_8 = arith.constant 0 : index
    %10 = vector.load %arg7[%c0_7, %c0_8] : memref<28x32xbf16, #tpu.memory_space<vmem>>, vector<28x32xbf16>
    tpu.vector_store %arg7[%c0_7, %c0_8], %9 {strides = array<i32>} : memref<28x32xbf16, #tpu.memory_space<vmem>>, vector<28x32xbf16>,
    return
  }
  func.func @transform_0(%arg0: i32, %arg1: i32, %arg2: i32) -> (i32, i32) {
    %c0_i32 = arith.constant 0 : i32
    return %arg0, %arg2 : i32, i32
  }
  func.func @transform_1(%arg0: i32, %arg1: i32, %arg2: i32) -> (i32, i32) {
    %c0_i32 = arith.constant 0 : i32
    return %arg2, %arg1 : i32, i32
  }
  func.func @transform_2(%arg0: i32, %arg1: i32, %arg2: i32) -> (i32, i32) {
    %c0_i32 = arith.constant 0 : i32
    %c0_i32_0 = arith.constant 0 : i32
    return %c0_i32, %arg1 : i32, i32
  }
  func.func @transform_3(%arg0: i32, %arg1: i32, %arg2: i32) -> (i32, i32) {
    %c0_i32 = arith.constant 0 : i32
    return %arg0, %arg1 : i32, i32
  }
  func.func @transform_4(%arg0: i32, %arg1: i32, %arg2: i32) -> (i32, i32) {
    %c0_i32 = arith.constant 0 : i32
    return %arg0, %arg1 : i32, i32
  }
}

module attributes {stable_mosaic.version = 11 : i64} {
  func.func @_fused_matmul_kernel(%arg0: i32, %arg1: i32, %arg2: i32, %arg3: memref<28x32xbf16, #tpu.memory_space<vmem>>, %arg4: memref<1x32xf32, #tpu.memory_space<vmem>>, %arg5: memref<1x32xf32, #tpu.memory_space<vmem>>, %arg6: memref<32x64xbf16, #tpu.memory_space<vmem>>, %arg7: memref<1x64xf32, #tpu.memory_space<vmem>>, %arg8: memref<28x64xbf16, #tpu.memory_space<vmem>>) attributes {dimension_semantics = [#tpu.dimension_semantics<parallel>, #tpu.dimension_semantics<parallel>, #tpu.dimension_semantics<arbitrary>], iteration_bounds = array<i64: 1, 1, 1>, scalar_prefetch = 0 : i64, scratch_operands = 0 : i64, tpu.core_type = #tpu.core_type<tc>, window_params = [{transform_indices = @transform_0, window_bounds = array<i64: 28, 32>}, {pipeline_mode = #tpu.pipeline_mode<synchronous>, transform_indices = @transform_1, window_bounds = array<i64: 1, 32>}, {pipeline_mode = #tpu.pipeline_mode<synchronous>, transform_indices = @transform_2, window_bounds = array<i64: 1, 32>}, {transform_indices = @transform_3, window_bounds = array<i64: 32, 64>}, {transform_indices = @transform_4, window_bounds = array<i64: 1, 64>}, {transform_indices = @transform_5, window_bounds = array<i64: 28, 64>}]} {
    %c0 = arith.constant 0 : index
    %c0_0 = arith.constant 0 : index
    %0 = vector.load %arg3[%c0, %c0_0] : memref<28x32xbf16, #tpu.memory_space<vmem>>, vector<28x32xbf16>
    %1 = arith.extf %0 : vector<28x32xbf16> to vector<28x32xf32>
    %cst = arith.constant dense<0.000000e+00> : vector<28xf32>
    %2 = vector.multi_reduction <add>, %1, %cst [1] : vector<28x32xf32> to vector<28xf32>
    %3 = vector.shape_cast %2 : vector<28xf32> to vector<28x1xf32>
    %cst_1 = arith.constant 3.200000e+01 : f32
    %4 = vector.broadcast %cst_1 : f32 to vector<28x1xf32>
    %5 = arith.divf %3, %4 : vector<28x1xf32>
    %6 = vector.broadcast %5 : vector<28x1xf32> to vector<28x32xf32>
    %7 = arith.subf %1, %6 : vector<28x32xf32>
    %8 = arith.mulf %7, %7 : vector<28x32xf32>
    %cst_2 = arith.constant dense<0.000000e+00> : vector<28xf32>
    %9 = vector.multi_reduction <add>, %8, %cst_2 [1] : vector<28x32xf32> to vector<28xf32>
    %10 = vector.shape_cast %9 : vector<28xf32> to vector<28x1xf32>
    %cst_3 = arith.constant 3.200000e+01 : f32
    %11 = vector.broadcast %cst_3 : f32 to vector<28x1xf32>
    %12 = arith.divf %10, %11 : vector<28x1xf32>
    %13 = vector.broadcast %5 : vector<28x1xf32> to vector<28x32xf32>
    %14 = arith.subf %1, %13 : vector<28x32xf32>
    %cst_4 = arith.constant 9.99999997E-7 : f32
    %15 = vector.broadcast %cst_4 : f32 to vector<28x1xf32>
    %16 = arith.addf %12, %15 : vector<28x1xf32>
    %17 = math.rsqrt %16 : vector<28x1xf32>
    %18 = vector.broadcast %17 : vector<28x1xf32> to vector<28x32xf32>
    %19 = arith.mulf %14, %18 : vector<28x32xf32>
    %c0_5 = arith.constant 0 : index
    %c0_6 = arith.constant 0 : index
    %20 = vector.load %arg4[%c0_5, %c0_6] : memref<1x32xf32, #tpu.memory_space<vmem>>, vector<1x32xf32>
    %21 = vector.broadcast %20 : vector<1x32xf32> to vector<28x32xf32>
    %22 = arith.mulf %19, %21 : vector<28x32xf32>
    %c0_7 = arith.constant 0 : index
    %c0_8 = arith.constant 0 : index
    %23 = vector.load %arg5[%c0_7, %c0_8] : memref<1x32xf32, #tpu.memory_space<vmem>>, vector<1x32xf32>
    %24 = vector.broadcast %23 : vector<1x32xf32> to vector<28x32xf32>
    %25 = arith.addf %22, %24 : vector<28x32xf32>
    %26 = arith.truncf %25 : vector<28x32xf32> to vector<28x32xbf16>
    %c0_9 = arith.constant 0 : index
    %c0_10 = arith.constant 0 : index
    %27 = vector.load %arg6[%c0_9, %c0_10] : memref<32x64xbf16, #tpu.memory_space<vmem>>, vector<32x64xbf16>
    %cst_11 = arith.constant dense<0.000000e+00> : vector<28x64xf32>
    %28 = tpu.matmul %26, %27, %cst_11 {dimension_numbers = #tpu.dot_dimension_numbers<[1], [0], [0], [1], [0, 0, 1, 1], [], []>} : vector<28x32xbf16>, vector<32x64xbf16>, vector<28x64xf32> -> vector<28x64xf32>
    %c0_12 = arith.constant 0 : index
    %c0_13 = arith.constant 0 : index
    %29 = vector.load %arg7[%c0_12, %c0_13] : memref<1x64xf32, #tpu.memory_space<vmem>>, vector<1x64xf32>
    %30 = vector.broadcast %29 : vector<1x64xf32> to vector<28x64xf32>
    %31 = arith.addf %28, %30 : vector<28x64xf32>
    %32 = arith.mulf %31, %31 : vector<28x64xf32>
    %33 = arith.mulf %31, %32 : vector<28x64xf32>
    %cst_14 = arith.constant 4.471500e-02 : f32
    %34 = vector.broadcast %cst_14 : f32 to vector<28x64xf32>
    %35 = arith.mulf %34, %33 : vector<28x64xf32>
    %36 = arith.addf %31, %35 : vector<28x64xf32>
    %cst_15 = arith.constant 0.797884583 : f32
    %37 = vector.broadcast %cst_15 : f32 to vector<28x64xf32>
    %38 = arith.mulf %37, %36 : vector<28x64xf32>
    %39 = math.tanh %38 : vector<28x64xf32>
    %cst_16 = arith.constant 1.000000e+00 : f32
    %40 = vector.broadcast %cst_16 : f32 to vector<28x64xf32>
    %41 = arith.addf %40, %39 : vector<28x64xf32>
    %cst_17 = arith.constant 5.000000e-01 : f32
    %42 = vector.broadcast %cst_17 : f32 to vector<28x64xf32>
    %43 = arith.mulf %42, %41 : vector<28x64xf32>
    %44 = arith.mulf %31, %43 : vector<28x64xf32>
    %45 = arith.truncf %44 : vector<28x64xf32> to vector<28x64xbf16>
    %c0_18 = arith.constant 0 : index
    %c0_19 = arith.constant 0 : index
    %46 = vector.load %arg8[%c0_18, %c0_19] : memref<28x64xbf16, #tpu.memory_space<vmem>>, vector<28x64xbf16>
    tpu.vector_store %arg8[%c0_18, %c0_19], %45 {strides = array<i32>} : memref<28x64xbf16, #tpu.memory_space<vmem>>, vector<28x64xbf16>,
    return
  }
  func.func @transform_0(%arg0: i32, %arg1: i32, %arg2: i32) -> (i32, i32) {
    %c0_i32 = arith.constant 0 : i32
    return %arg0, %arg2 : i32, i32
  }
  func.func @transform_1(%arg0: i32, %arg1: i32, %arg2: i32) -> (i32, i32) {
    %c0_i32 = arith.constant 0 : i32
    %c0_i32_0 = arith.constant 0 : i32
    %c0_i32_1 = arith.constant 0 : i32
    return %c0_i32, %c0_i32_0 : i32, i32
  }
  func.func @transform_2(%arg0: i32, %arg1: i32, %arg2: i32) -> (i32, i32) {
    %c0_i32 = arith.constant 0 : i32
    %c0_i32_0 = arith.constant 0 : i32
    %c0_i32_1 = arith.constant 0 : i32
    return %c0_i32, %c0_i32_0 : i32, i32
  }
  func.func @transform_3(%arg0: i32, %arg1: i32, %arg2: i32) -> (i32, i32) {
    %c0_i32 = arith.constant 0 : i32
    return %arg2, %arg1 : i32, i32
  }
  func.func @transform_4(%arg0: i32, %arg1: i32, %arg2: i32) -> (i32, i32) {
    %c0_i32 = arith.constant 0 : i32
    %c0_i32_0 = arith.constant 0 : i32
    return %c0_i32, %arg1 : i32, i32
  }
  func.func @transform_5(%arg0: i32, %arg1: i32, %arg2: i32) -> (i32, i32) {
    %c0_i32 = arith.constant 0 : i32
    return %arg0, %arg1 : i32, i32
  }
}

module attributes {stable_mosaic.version = 11 : i64} {
  func.func @_fused_matmul_kernel(%arg0: i32, %arg1: i32, %arg2: i32, %arg3: memref<28x64xbf16, #tpu.memory_space<vmem>>, %arg4: memref<64x32xbf16, #tpu.memory_space<vmem>>, %arg5: memref<1x32xf32, #tpu.memory_space<vmem>>, %arg6: memref<28x32xbf16, #tpu.memory_space<vmem>>, %arg7: memref<28x32xbf16, #tpu.memory_space<vmem>>) attributes {dimension_semantics = [#tpu.dimension_semantics<parallel>, #tpu.dimension_semantics<parallel>, #tpu.dimension_semantics<arbitrary>], iteration_bounds = array<i64: 1, 1, 1>, scalar_prefetch = 0 : i64, scratch_operands = 0 : i64, tpu.core_type = #tpu.core_type<tc>, window_params = [{transform_indices = @transform_0, window_bounds = array<i64: 28, 64>}, {transform_indices = @transform_1, window_bounds = array<i64: 64, 32>}, {transform_indices = @transform_2, window_bounds = array<i64: 1, 32>}, {transform_indices = @transform_3, window_bounds = array<i64: 28, 32>}, {transform_indices = @transform_4, window_bounds = array<i64: 28, 32>}]} {
    %c0 = arith.constant 0 : index
    %c0_0 = arith.constant 0 : index
    %0 = vector.load %arg3[%c0, %c0_0] : memref<28x64xbf16, #tpu.memory_space<vmem>>, vector<28x64xbf16>
    %c0_1 = arith.constant 0 : index
    %c0_2 = arith.constant 0 : index
    %1 = vector.load %arg4[%c0_1, %c0_2] : memref<64x32xbf16, #tpu.memory_space<vmem>>, vector<64x32xbf16>
    %cst = arith.constant dense<0.000000e+00> : vector<28x32xf32>
    %2 = tpu.matmul %0, %1, %cst {dimension_numbers = #tpu.dot_dimension_numbers<[1], [0], [0], [1], [0, 0, 1, 1], [], []>} : vector<28x64xbf16>, vector<64x32xbf16>, vector<28x32xf32> -> vector<28x32xf32>
    %c0_3 = arith.constant 0 : index
    %c0_4 = arith.constant 0 : index
    %3 = vector.load %arg5[%c0_3, %c0_4] : memref<1x32xf32, #tpu.memory_space<vmem>>, vector<1x32xf32>
    %4 = vector.broadcast %3 : vector<1x32xf32> to vector<28x32xf32>
    %5 = arith.addf %2, %4 : vector<28x32xf32>
    %c0_5 = arith.constant 0 : index
    %c0_6 = arith.constant 0 : index
    %6 = vector.load %arg6[%c0_5, %c0_6] : memref<28x32xbf16, #tpu.memory_space<vmem>>, vector<28x32xbf16>
    %7 = arith.extf %6 : vector<28x32xbf16> to vector<28x32xf32>
    %8 = arith.addf %5, %7 : vector<28x32xf32>
    %9 = arith.truncf %8 : vector<28x32xf32> to vector<28x32xbf16>
    %c0_7 = arith.constant 0 : index
    %c0_8 = arith.constant 0 : index
    %10 = vector.load %arg7[%c0_7, %c0_8] : memref<28x32xbf16, #tpu.memory_space<vmem>>, vector<28x32xbf16>
    tpu.vector_store %arg7[%c0_7, %c0_8], %9 {strides = array<i32>} : memref<28x32xbf16, #tpu.memory_space<vmem>>, vector<28x32xbf16>,
    return
  }
  func.func @transform_0(%arg0: i32, %arg1: i32, %arg2: i32) -> (i32, i32) {
    %c0_i32 = arith.constant 0 : i32
    return %arg0, %arg2 : i32, i32
  }
  func.func @transform_1(%arg0: i32, %arg1: i32, %arg2: i32) -> (i32, i32) {
    %c0_i32 = arith.constant 0 : i32
    return %arg2, %arg1 : i32, i32
  }
  func.func @transform_2(%arg0: i32, %arg1: i32, %arg2: i32) -> (i32, i32) {
    %c0_i32 = arith.constant 0 : i32
    %c0_i32_0 = arith.constant 0 : i32
    return %c0_i32, %arg1 : i32, i32
  }
  func.func @transform_3(%arg0: i32, %arg1: i32, %arg2: i32) -> (i32, i32) {
    %c0_i32 = arith.constant 0 : i32
    return %arg0, %arg1 : i32, i32
  }
  func.func @transform_4(%arg0: i32, %arg1: i32, %arg2: i32) -> (i32, i32) {
    %c0_i32 = arith.constant 0 : i32
    return %arg0, %arg1 : i32, i32
  }
}

module attributes {stable_mosaic.version = 11 : i64} {
  func.func @_ln_kernel(%arg0: i32, %arg1: memref<28x32xbf16, #tpu.memory_space<vmem>>, %arg2: memref<1x32xf32, #tpu.memory_space<vmem>>, %arg3: memref<1x32xf32, #tpu.memory_space<vmem>>, %arg4: memref<28x32xbf16, #tpu.memory_space<vmem>>) attributes {dimension_semantics = [#tpu.dimension_semantics<parallel>], iteration_bounds = array<i64: 1>, scalar_prefetch = 0 : i64, scratch_operands = 0 : i64, tpu.core_type = #tpu.core_type<tc>, window_params = [{transform_indices = @transform_0, window_bounds = array<i64: 28, 32>}, {pipeline_mode = #tpu.pipeline_mode<synchronous>, transform_indices = @transform_1, window_bounds = array<i64: 1, 32>}, {pipeline_mode = #tpu.pipeline_mode<synchronous>, transform_indices = @transform_2, window_bounds = array<i64: 1, 32>}, {transform_indices = @transform_3, window_bounds = array<i64: 28, 32>}]} {
    %c0 = arith.constant 0 : index
    %c0_0 = arith.constant 0 : index
    %0 = vector.load %arg1[%c0, %c0_0] : memref<28x32xbf16, #tpu.memory_space<vmem>>, vector<28x32xbf16>
    %1 = arith.extf %0 : vector<28x32xbf16> to vector<28x32xf32>
    %cst = arith.constant dense<0.000000e+00> : vector<28xf32>
    %2 = vector.multi_reduction <add>, %1, %cst [1] : vector<28x32xf32> to vector<28xf32>
    %3 = vector.shape_cast %2 : vector<28xf32> to vector<28x1xf32>
    %cst_1 = arith.constant 3.200000e+01 : f32
    %4 = vector.broadcast %cst_1 : f32 to vector<28x1xf32>
    %5 = arith.divf %3, %4 : vector<28x1xf32>
    %6 = vector.broadcast %5 : vector<28x1xf32> to vector<28x32xf32>
    %7 = arith.subf %1, %6 : vector<28x32xf32>
    %8 = arith.mulf %7, %7 : vector<28x32xf32>
    %cst_2 = arith.constant dense<0.000000e+00> : vector<28xf32>
    %9 = vector.multi_reduction <add>, %8, %cst_2 [1] : vector<28x32xf32> to vector<28xf32>
    %10 = vector.shape_cast %9 : vector<28xf32> to vector<28x1xf32>
    %cst_3 = arith.constant 3.200000e+01 : f32
    %11 = vector.broadcast %cst_3 : f32 to vector<28x1xf32>
    %12 = arith.divf %10, %11 : vector<28x1xf32>
    %13 = vector.broadcast %5 : vector<28x1xf32> to vector<28x32xf32>
    %14 = arith.subf %1, %13 : vector<28x32xf32>
    %cst_4 = arith.constant 9.99999997E-7 : f32
    %15 = vector.broadcast %cst_4 : f32 to vector<28x1xf32>
    %16 = arith.addf %12, %15 : vector<28x1xf32>
    %17 = math.rsqrt %16 : vector<28x1xf32>
    %18 = vector.broadcast %17 : vector<28x1xf32> to vector<28x32xf32>
    %19 = arith.mulf %14, %18 : vector<28x32xf32>
    %c0_5 = arith.constant 0 : index
    %c0_6 = arith.constant 0 : index
    %20 = vector.load %arg2[%c0_5, %c0_6] : memref<1x32xf32, #tpu.memory_space<vmem>>, vector<1x32xf32>
    %21 = vector.broadcast %20 : vector<1x32xf32> to vector<28x32xf32>
    %22 = arith.mulf %19, %21 : vector<28x32xf32>
    %c0_7 = arith.constant 0 : index
    %c0_8 = arith.constant 0 : index
    %23 = vector.load %arg3[%c0_7, %c0_8] : memref<1x32xf32, #tpu.memory_space<vmem>>, vector<1x32xf32>
    %24 = vector.broadcast %23 : vector<1x32xf32> to vector<28x32xf32>
    %25 = arith.addf %22, %24 : vector<28x32xf32>
    %26 = arith.truncf %25 : vector<28x32xf32> to vector<28x32xbf16>
    %c0_9 = arith.constant 0 : index
    %c0_10 = arith.constant 0 : index
    %27 = vector.load %arg4[%c0_9, %c0_10] : memref<28x32xbf16, #tpu.memory_space<vmem>>, vector<28x32xbf16>
    tpu.vector_store %arg4[%c0_9, %c0_10], %26 {strides = array<i32>} : memref<28x32xbf16, #tpu.memory_space<vmem>>, vector<28x32xbf16>,
    return
  }
  func.func @transform_0(%arg0: i32) -> (i32, i32) {
    %c0_i32 = arith.constant 0 : i32
    %c0_i32_0 = arith.constant 0 : i32
    return %arg0, %c0_i32 : i32, i32
  }
  func.func @transform_1(%arg0: i32) -> (i32, i32) {
    %c0_i32 = arith.constant 0 : i32
    %c0_i32_0 = arith.constant 0 : i32
    %c0_i32_1 = arith.constant 0 : i32
    return %c0_i32, %c0_i32_0 : i32, i32
  }
  func.func @transform_2(%arg0: i32) -> (i32, i32) {
    %c0_i32 = arith.constant 0 : i32
    %c0_i32_0 = arith.constant 0 : i32
    %c0_i32_1 = arith.constant 0 : i32
    return %c0_i32, %c0_i32_0 : i32, i32
  }
  func.func @transform_3(%arg0: i32) -> (i32, i32) {
    %c0_i32 = arith.constant 0 : i32
    %c0_i32_0 = arith.constant 0 : i32
    return %arg0, %c0_i32 : i32, i32
  }
}

</mosaic_0001>

<llo_original>
// kernel: encoder_forward.51
$region0: #{encoder_forward.51}
  #allocation0 [shape = 'u32[]', space=smem, size = 0x4, offset = 0x4, fixed_abs, tag = 'smem constant byte address 0x4 - core index']
  #allocation1 [shape = 'u32[144,128]{1,0:T(1,128)}', space=vmem, size = 0x12000, scoped, tag = 'internal scratch']
  %s0 = inlined_call_operand.vmem [shape: bf16[4,32], index: 0, kind: input, shape index: {}]
  %s1 = inlined_call_operand.vmem [shape: f32[1,32], index: 1, kind: input, shape index: {}]
  %s2 = inlined_call_operand.vmem [shape: f32[1,32], index: 2, kind: input, shape index: {}]
  %s3 = inlined_call_operand.vmem [shape: bf16[32,96], index: 3, kind: input, shape index: {}]
  %s4 = inlined_call_operand.vmem [shape: f32[1,96], index: 4, kind: input, shape index: {}]
  %s5 = inlined_call_operand.vmem [shape: bf16[4,96], index: 5, kind: output, shape index: {}]
  %s6 = sld [smem:[#allocation0]]
  $region30: #{encoder_forward.51} parent=0
    _
  %s8 = ssub.s32 1, %s6
  %s9 = scalar_select 0, %s8, %s6
  // Predicated region
  $region2: #{encoder_forward.51} parent=0 // pred_check
    _
  $region3: #{encoder_forward.51} parent=0 // pred_check_branch
    %11 = sbr.rel (0) target = $region5
  $region4: #{encoder_forward.51} parent=0 // pred_region
    _
  $region5: #{encoder_forward.51} parent=0 // pred_fallthru
    _
  // Predicated region
  $region6: #{encoder_forward.51} parent=0 // pred_check
    _
  $region7: #{encoder_forward.51} parent=0 // pred_check_branch
    %13 = sbr.rel (0) target = $region9
  $region8: #{encoder_forward.51} parent=0 // pred_region
    _
  $region9: #{encoder_forward.51} parent=0 // pred_fallthru
    _
  // Predicated region
  $region10: #{encoder_forward.51} parent=0 // pred_check
    _
  $region11: #{encoder_forward.51} parent=0 // pred_check_branch
    %15 = sbr.rel (0) target = $region13
  $region12: #{encoder_forward.51} parent=0 // pred_region
    _
  $region13: #{encoder_forward.51} parent=0 // pred_fallthru
    _
  // Predicated region
  $region14: #{encoder_forward.51} parent=0 // pred_check
    _
  $region15: #{encoder_forward.51} parent=0 // pred_check_branch
    %17 = sbr.rel (0) target = $region17
  $region16: #{encoder_forward.51} parent=0 // pred_region
    _
  $region17: #{encoder_forward.51} parent=0 // pred_fallthru
    _
  // Predicated region
  $region18: #{encoder_forward.51} parent=0 // pred_check
    _
  $region19: #{encoder_forward.51} parent=0 // pred_check_branch
    %19 = sbr.rel (0) target = $region21
  $region20: #{encoder_forward.51} parent=0 // pred_region
    _
  $region21: #{encoder_forward.51} parent=0 // pred_fallthru
    _
  %v21 = vld [vmem:[%s0] sm:$0x3]
  %v22 = vunpack.c.l.bf16 %v21
  %vm23 = vcmask 257024
  %v24 = vsel %vm23, %v22, 0.0
  %25 = vadd.xlane.f32.xlu0 %v24
  %v26 = vpop.xlane.xlu0 %25
  %v27 = vrcp.pop 32.0
  %v28 = vmul.f32 %v26, %v27
  %v29 = vsub.f32 %v22, %v28
  %v30 = vmul.f32 %v29, %v29
  %v31 = vsel %vm23, %v30, 0.0
  %32 = vadd.xlane.f32.xlu0 %v31
  %v33 = vpop.xlane.xlu0 %32
  %v34 = vmul.f32 %v33, %v27
  %v35 = vadd.f32 %v34, 1e-06
  %v36 = vrsqrt.pop %v35
  %v37 = vmul.f32 %v29, %v36
  %v38 = vld [vmem:[%s1] sm:$0x1]
  %v40 = vlaneseq
  %v41 = vshrl.u32 %v40, 7
  %v42 = vsub.s32 0, %v41
  %v43 = vrot.slane %v38, %v42
  %v45 = vmul.f32 %v37, %v43
  %v46 = vld [vmem:[%s2] sm:$0x1]
  %v48 = vlaneseq
  %v49 = vshrl.u32 %v48, 7
  %v50 = vsub.s32 0, %v49
  %v51 = vrot.slane %v46, %v50
  %v53 = vadd.f32 %v45, %v51
  %v54 = vpack.c.bf16 %v53, %v53
  %v55 = vld [vmem:[%s3] sm:$0xf]
  %v56 = vld [vmem:[%s3 + $0x4] sm:$0xf]
  %v57 = vld [vmem:[%s3 + $0x8] sm:$0xf]
  %v58 = vld [vmem:[%s3 + $0xc] sm:$0xf]
  %v59 = vld [vmem:[%s4] sm:$0x1]
  %v61 = vlaneseq
  %v62 = vshrl.u32 %v61, 7
  %v63 = vsub.s32 0, %v62
  %v64 = vrot.slane %v59, %v63
  %v70 = vunpack.c.l.b16 %v55
  %v71 = vunpack.c.l.b16 %v56
  %v72 = vunpack.c.l.b16 %v57
  %v73 = vunpack.c.l.b16 %v58
  %v74 = vpack.c.b16 %v71, %v70
  %v75 = vpack.c.b16 %v73, %v72
  %vm78 = vcmask 261120
  %v80 = vsel %vm78, %v54, 0
  %82 = vmatprep.subr.bf16.mxu0 0
  %83 = vmatpush1.bf16.msra.mxu0 %v74
  %84 = vmatprep.subr.bf16.mxu0 0
  %85 = vmatpush1.bf16.msra.mxu0 %v75
  %86 = vmatprep.subr.bf16.mxu0 0
  %87 = vmatpush1.bf16.msra.mxu0 0
  %88 = vmatprep.subr.bf16.mxu0 0
  %89 = vmatpush1.bf16.msra.mxu0 0
  %90 = vmatprep.subr.bf16.mxu0 0
  %91 = vmatpush1.bf16.msra.mxu0 0
  %92 = vmatprep.subr.bf16.mxu0 0
  %93 = vmatpush1.bf16.msra.mxu0 0
  %94 = vmatprep.subr.bf16.mxu0 0
  %95 = vmatpush1.bf16.msra.mxu0 0
  %96 = vmatprep.subr.bf16.mxu0 0
  %97 = vmatpush1.bf16.msra.mxu0 0
  %98 = vmatprep.subr.bf16.mxu0 0
  %99 = vmatpush1.bf16.msra.mxu0 0
  %100 = vmatprep.subr.bf16.mxu0 0
  %101 = vmatpush1.bf16.msra.mxu0 0
  %102 = vmatprep.subr.bf16.mxu0 0
  %103 = vmatpush1.bf16.msra.mxu0 0
  %104 = vmatprep.subr.bf16.mxu0 0
  %105 = vmatpush1.bf16.msra.mxu0 0
  %106 = vmatprep.subr.bf16.mxu0 0
  %107 = vmatpush1.bf16.msra.mxu0 0
  %108 = vmatprep.subr.bf16.mxu0 0
  %109 = vmatpush1.bf16.msra.mxu0 0
  %110 = vmatprep.subr.bf16.mxu0 0
  %111 = vmatpush1.bf16.msra.mxu0 0
  %112 = vmatprep.subr.bf16.mxu0 0
  %113 = vmatpush1.bf16.msra.mxu0 0
  %114 = vmatprep.mubr.bf16.mxu0 0
  %115 = vmatmul.mubr.bf16.gmra.mrb[0].mxu0 %v80
  %v116 = vpop.f32.mrb[0].mxu0
  %v117 = vadd.f32 %v64, %v116
  %v118 = vpop.f32.mrb[0].mxu0
  %v119 = vpop.f32.mrb[0].mxu0
  %v120 = vpop.f32.mrb[0].mxu0
  %121 = vdwg.mxu0
  %v122 = vpack.c.bf16 %v117, %v117
  %vm123 = vcmask 779264
  %124 = vst.msk [vmem:[%s5] sm:$0x3] %vm123, %v122
  // Predicated region
  $region22: #{encoder_forward.51} parent=0 // pred_check
    _
  $region23: #{encoder_forward.51} parent=0 // pred_check_branch
    %126 = sbr.rel (0) target = $region25
  $region24: #{encoder_forward.51} parent=0 // pred_region
    _
  $region25: #{encoder_forward.51} parent=0 // pred_fallthru
    _
  // Predicated region
  $region26: #{encoder_forward.51} parent=0 // pred_check
    _
  $region27: #{encoder_forward.51} parent=0 // pred_check_branch
    %128 = sbr.rel (0) target = $region29
  $region28: #{encoder_forward.51} parent=0 // pred_region
    _
  $region29: #{encoder_forward.51} parent=0 // pred_fallthru
    _

// kernel: encoder_forward.53
$region0: #{encoder_forward.53}
  #allocation0 [shape = 'u32[]', space=smem, size = 0x4, offset = 0x4, fixed_abs, tag = 'smem constant byte address 0x4 - core index']
  #allocation1 [shape = 'u32[144,128]{1,0:T(1,128)}', space=vmem, size = 0x12000, scoped, tag = 'internal scratch']
  %s0 = inlined_call_operand.vmem [shape: bf16[4,32], index: 0, kind: input, shape index: {}]
  %s1 = inlined_call_operand.vmem [shape: bf16[32,32], index: 1, kind: input, shape index: {}]
  %s2 = inlined_call_operand.vmem [shape: f32[1,32], index: 2, kind: input, shape index: {}]
  %s3 = inlined_call_operand.vmem [shape: bf16[4,32], index: 3, kind: input, shape index: {}]
  %s4 = inlined_call_operand.vmem [shape: bf16[4,32], index: 4, kind: output, shape index: {}]
  %s5 = sld [smem:[#allocation0]]
  $region26: #{encoder_forward.53} parent=0
    _
  %s7 = ssub.s32 1, %s5
  %s8 = scalar_select 0, %s7, %s5
  // Predicated region
  $region2: #{encoder_forward.53} parent=0 // pred_check
    _
  $region3: #{encoder_forward.53} parent=0 // pred_check_branch
    %10 = sbr.rel (0) target = $region5
  $region4: #{encoder_forward.53} parent=0 // pred_region
    _
  $region5: #{encoder_forward.53} parent=0 // pred_fallthru
    _
  // Predicated region
  $region6: #{encoder_forward.53} parent=0 // pred_check
    _
  $region7: #{encoder_forward.53} parent=0 // pred_check_branch
    %12 = sbr.rel (0) target = $region9
  $region8: #{encoder_forward.53} parent=0 // pred_region
    _
  $region9: #{encoder_forward.53} parent=0 // pred_fallthru
    _
  // Predicated region
  $region10: #{encoder_forward.53} parent=0 // pred_check
    _
  $region11: #{encoder_forward.53} parent=0 // pred_check_branch
    %14 = sbr.rel (0) target = $region13
  $region12: #{encoder_forward.53} parent=0 // pred_region
    _
  $region13: #{encoder_forward.53} parent=0 // pred_fallthru
    _
  // Predicated region
  $region14: #{encoder_forward.53} parent=0 // pred_check
    _
  $region15: #{encoder_forward.53} parent=0 // pred_check_branch
    %16 = sbr.rel (0) target = $region17
  $region16: #{encoder_forward.53} parent=0 // pred_region
    _
  $region17: #{encoder_forward.53} parent=0 // pred_fallthru
    _
  %v18 = vld [vmem:[%s0] sm:$0x3]
  %v19 = vld [vmem:[%s1] sm:$0xf]
  %v20 = vld [vmem:[%s1 + $0x4] sm:$0xf]
  %v21 = vld [vmem:[%s1 + $0x8] sm:$0xf]
  %v22 = vld [vmem:[%s1 + $0xc] sm:$0xf]
  %v23 = vld [vmem:[%s2] sm:$0x1]
  %v25 = vlaneseq
  %v26 = vshrl.u32 %v25, 7
  %v27 = vsub.s32 0, %v26
  %v28 = vrot.slane %v23, %v27
  %v34 = vunpack.c.l.b16 %v19
  %v35 = vunpack.c.l.b16 %v20
  %v36 = vunpack.c.l.b16 %v21
  %v37 = vunpack.c.l.b16 %v22
  %v38 = vpack.c.b16 %v35, %v34
  %v39 = vpack.c.b16 %v37, %v36
  %vm42 = vcmask 261120
  %v44 = vsel %vm42, %v18, 0
  %46 = vmatprep.subr.bf16.mxu0 0
  %47 = vmatpush1.bf16.msra.mxu0 %v38
  %48 = vmatprep.subr.bf16.mxu0 0
  %49 = vmatpush1.bf16.msra.mxu0 %v39
  %50 = vmatprep.subr.bf16.mxu0 0
  %51 = vmatpush1.bf16.msra.mxu0 0
  %52 = vmatprep.subr.bf16.mxu0 0
  %53 = vmatpush1.bf16.msra.mxu0 0
  %54 = vmatprep.subr.bf16.mxu0 0
  %55 = vmatpush1.bf16.msra.mxu0 0
  %56 = vmatprep.subr.bf16.mxu0 0
  %57 = vmatpush1.bf16.msra.mxu0 0
  %58 = vmatprep.subr.bf16.mxu0 0
  %59 = vmatpush1.bf16.msra.mxu0 0
  %60 = vmatprep.subr.bf16.mxu0 0
  %61 = vmatpush1.bf16.msra.mxu0 0
  %62 = vmatprep.subr.bf16.mxu0 0
  %63 = vmatpush1.bf16.msra.mxu0 0
  %64 = vmatprep.subr.bf16.mxu0 0
  %65 = vmatpush1.bf16.msra.mxu0 0
  %66 = vmatprep.subr.bf16.mxu0 0
  %67 = vmatpush1.bf16.msra.mxu0 0
  %68 = vmatprep.subr.bf16.mxu0 0
  %69 = vmatpush1.bf16.msra.mxu0 0
  %70 = vmatprep.subr.bf16.mxu0 0
  %71 = vmatpush1.bf16.msra.mxu0 0
  %72 = vmatprep.subr.bf16.mxu0 0
  %73 = vmatpush1.bf16.msra.mxu0 0
  %74 = vmatprep.subr.bf16.mxu0 0
  %75 = vmatpush1.bf16.msra.mxu0 0
  %76 = vmatprep.subr.bf16.mxu0 0
  %77 = vmatpush1.bf16.msra.mxu0 0
  %78 = vmatprep.mubr.bf16.mxu0 0
  %79 = vmatmul.mubr.bf16.gmra.mrb[0].mxu0 %v44
  %v80 = vpop.f32.mrb[0].mxu0
  %v81 = vadd.f32 %v28, %v80
  %v82 = vpop.f32.mrb[0].mxu0
  %v83 = vpop.f32.mrb[0].mxu0
  %v84 = vpop.f32.mrb[0].mxu0
  %85 = vdwg.mxu0
  %v86 = vld [vmem:[%s3] sm:$0x3]
  %v87 = vunpack.c.l.bf16 %v86
  %v88 = vadd.f32 %v81, %v87
  %v89 = vpack.c.bf16 %v88, %v88
  %vm90 = vcmask 254976
  %91 = vst.msk [vmem:[%s4] sm:$0x3] %vm90, %v89
  // Predicated region
  $region18: #{encoder_forward.53} parent=0 // pred_check
    _
  $region19: #{encoder_forward.53} parent=0 // pred_check_branch
    %93 = sbr.rel (0) target = $region21
  $region20: #{encoder_forward.53} parent=0 // pred_region
    _
  $region21: #{encoder_forward.53} parent=0 // pred_fallthru
    _
  // Predicated region
  $region22: #{encoder_forward.53} parent=0 // pred_check
    _
  $region23: #{encoder_forward.53} parent=0 // pred_check_branch
    %95 = sbr.rel (0) target = $region25
  $region24: #{encoder_forward.53} parent=0 // pred_region
    _
  $region25: #{encoder_forward.53} parent=0 // pred_fallthru
    _

// kernel: encoder_forward.52
$region0: #{encoder_forward.52}
  #allocation0 [shape = 'u32[]', space=smem, size = 0x4, offset = 0x4, fixed_abs, tag = 'smem constant byte address 0x4 - core index']
  #allocation1 [shape = 'u32[144,128]{1,0:T(1,128)}', space=vmem, size = 0x12000, scoped, tag = 'internal scratch']
  %s0 = inlined_call_operand.vmem [shape: bf16[2,2,96], index: 0, kind: input, shape index: {}]
  %s1 = inlined_call_operand.vmem [shape: bf16[2,2,32], index: 1, kind: output, shape index: {}]
  %s2 = sld [smem:[#allocation0]]
  $region37: #{encoder_forward.52} parent=0
    _
  %s4 = ssub.s32 1, %s2
  %s5 = scalar_select 0, %s4, %s2
  loop: start=0, step=1, limit=4
  $region2: #{encoder_forward.52} parent=0 // loop_pre_header
    _
  $region3: #{encoder_forward.52} parent=0 // loop_header
    %s7 = sphi 0, %s11
    %p8 = scmp.ge.s32.totalorder %s7, 4
    %s17 = sphi 0, %s19
    %s20 = sphi 0, %s17
    %s21 = sphi 0, %s20
    %s37 = sphi 0, %s21
    %s43 = sphi 0, %s45
    %s46 = sphi 0, %s43
    %s47 = sphi 0, %s46
    %s63 = sphi 0, %s47
  $region4: #{encoder_forward.52} parent=0 // loop_header_branch
    %10 = sbr.rel (%p8) target = $region8
  $region5: #{encoder_forward.52} parent=0 // loop_body
    %s12 = ssub.s32 %s7, 1
    %s13 = ssub.s32 %s7, 2
    %s14 = sadd.s32 %s7, 1
    %s15 = ssub.s32 %s7, %s14
    %p16 = scmp.eq.s32.totalorder %s15, 0
    %s18 = sadd.s32 %s17, 1
    %s19 = scalar_select %p16, %s17, %s18
    %p22 = pneg %p16
    %p23 = scmp.eq.s32.totalorder %s7, 1
    %p24 = por %p22, %p23
    %p25 = scmp.ne.s32.totalorder %s17, %s20
    %p26 = scmp.eq.s32.totalorder %s7, 0
    %p27 = por %p25, %p26
    %p28 = scmp.ne.s32.totalorder %s17, %s20
    %p29 = scmp.eq.s32.totalorder %s12, 1
    %p30 = por %p28, %p29
    %p31 = scmp.ne.s32.totalorder %s20, %s21
    %p32 = scmp.eq.s32.totalorder %s12, 0
    %p33 = por %p31, %p32
    %p34 = scmp.ne.s32.totalorder %s20, %s21
    %p35 = scmp.eq.s32.totalorder %s13, 1
    %p36 = por %p34, %p35
    %p38 = scmp.ne.s32.totalorder %s21, %s37
    %p39 = scmp.eq.s32.totalorder %s13, 0
    %p40 = por %p38, %p39
    %s41 = ssub.s32 %s7, %s14
    %p42 = scmp.eq.s32.totalorder %s41, 0
    %s44 = sadd.s32 %s43, 1
    %s45 = scalar_select %p42, %s43, %s44
    %p48 = pneg %p42
    %p49 = scmp.eq.s32.totalorder %s7, 1
    %p50 = por %p48, %p49
    %p51 = scmp.ne.s32.totalorder %s43, %s46
    %p52 = scmp.eq.s32.totalorder %s7, 0
    %p53 = por %p51, %p52
    %p54 = scmp.ne.s32.totalorder %s43, %s46
    %p55 = scmp.eq.s32.totalorder %s12, 1
    %p56 = por %p54, %p55
    %p57 = scmp.ne.s32.totalorder %s46, %s47
    %p58 = scmp.eq.s32.totalorder %s12, 0
    %p59 = por %p57, %p58
    %p60 = scmp.ne.s32.totalorder %s46, %s47
    %p61 = scmp.eq.s32.totalorder %s13, 1
    %p62 = por %p60, %p61
    %p64 = scmp.ne.s32.totalorder %s47, %s63
    %p65 = scmp.eq.s32.totalorder %s13, 0
    %p66 = por %p64, %p65
    %p67 = scmp.le.s32.totalorder 1, %s7
    %p68 = scmp.lt.s32.totalorder %s7, 3
    %p69 = pnand %p67, %p68
    %p70 = pneg %p69
    // Predicated region
    $region9: #{encoder_forward.52} parent=5 // pred_check
      _
    $region10: #{encoder_forward.52} parent=5 // pred_check_branch
      %72 = sbr.rel (%p69) target = $region12
    $region11: #{encoder_forward.52} parent=5 // pred_region
      %s73 = ssub.s32 %s7, 1
    $region12: #{encoder_forward.52} parent=5 // pred_fallthru
      _
    %p74 = scmp.lt.s32.totalorder %s7, 2
    // Predicated region
    $region13: #{encoder_forward.52} parent=5 // pred_check
      %p75 = pneg %p74
    $region14: #{encoder_forward.52} parent=5 // pred_check_branch
      %77 = sbr.rel (%p75) target = $region16
    $region15: #{encoder_forward.52} parent=5 // pred_region
      // Predicated region
      $region17: #{encoder_forward.52} parent=15 // pred_check
        %p78 = pneg %p27
      $region18: #{encoder_forward.52} parent=15 // pred_check_branch
        %80 = sbr.rel (%p78) target = $region20
      $region19: #{encoder_forward.52} parent=15 // pred_region
        %p81 = scmp.lt.s32.totalorder %s7, 1
        %s82 = scalar_select %p81, %s7, 1
        %s83 = scalar_lea.vmem %s0, %s82
      $region20: #{encoder_forward.52} parent=15 // pred_fallthru
        _
    $region16: #{encoder_forward.52} parent=5 // pred_fallthru
      _
    %p84 = scmp.le.s32.totalorder 1, %s7
    %p85 = scmp.lt.s32.totalorder %s7, 3
    %p86 = pnand %p84, %p85
    %p87 = pneg %p86
    // Predicated region
    $region21: #{encoder_forward.52} parent=5 // pred_check
      _
    $region22: #{encoder_forward.52} parent=5 // pred_check_branch
      %89 = sbr.rel (%p86) target = $region24
    $region23: #{encoder_forward.52} parent=5 // pred_region
      %s90 = ssub.s32 %s7, 1
      %p91 = scmp.lt.s32.totalorder %s12, 1
      %s92 = scalar_select %p91, %s12, 1
      %s93 = scalar_lea.vmem %s0, %s92
      %p94 = pneg %p33
      %p95 = pneg %p30
      %p96 = pneg %p59
      %p97 = pneg %p56
      %p98 = scmp.lt.s32.totalorder %s12, 1
      %s99 = scalar_select %p98, %s12, 1
      %s100 = scalar_lea.vmem %s1, %s99
      %p101 = scmp.lt.s32.totalorder %s12, 1
      %s102 = scalar_select %p101, %s12, 1
      %s103 = scalar_lea.vmem %s0, %s102
      %p104 = scmp.lt.s32.totalorder %s12, 1
      %s105 = scalar_select %p104, %s12, 1
      %s106 = scalar_lea.vmem %s1, %s105
      %v108 = vld [vmem:[%s103] sm:$0x1]
      %v111 = vunpack.c.l.s4 1966171168
      %v112 = vunpack.c.0.s8 %v111
      %v113 = vlaneseq
      %v114 = vshrl.u32 %v113, 7
      %v115 = vsub.s32 %v112, %v114
      %v116 = vrot.slane %v108, %v115
      %v118 = vunpack.c.l.s4 1966171168
      %v119 = vunpack.c.0.s8 %v118
      %v120 = vlaneseq
      %v121 = vshrl.u32 %v120, 7
      %v122 = vsub.s32 %v119, %v121
      %v123 = vrot.slane %v116, %v122
      %124 = vrot.lane.b32.xlu0 %v123, 96
      %v125 = vpop.permute.xlu0 %124
      %vm126 = vcmask 64512
      %v128 = vsel %vm126, %v108, 0
      %v131 = vsel %vm126, %v125, 0
      %133 = vmatprep.subr.bf16.mxu0 0
      %134 = vmatpush1.bf16.xpose.msra.mxu0 %v131
      %135 = vmatprep.subr.bf16.mxu0 0
      %136 = vmatpush1.bf16.xpose.msra.mxu0 0
      %137 = vmatprep.subr.bf16.mxu0 0
      %138 = vmatpush1.bf16.xpose.msra.mxu0 0
      %139 = vmatprep.subr.bf16.mxu0 0
      %140 = vmatpush1.bf16.xpose.msra.mxu0 0
      %141 = vmatprep.subr.bf16.mxu0 0
      %142 = vmatpush1.bf16.xpose.msra.mxu0 0
      %143 = vmatprep.subr.bf16.mxu0 0
      %144 = vmatpush1.bf16.xpose.msra.mxu0 0
      %145 = vmatprep.subr.bf16.mxu0 0
      %146 = vmatpush1.bf16.xpose.msra.mxu0 0
      %147 = vmatprep.subr.bf16.mxu0 0
      %148 = vmatpush1.bf16.xpose.msra.mxu0 0
      %149 = vmatprep.subr.bf16.mxu0 0
      %150 = vmatpush1.bf16.xpose.msra.mxu0 0
      %151 = vmatprep.subr.bf16.mxu0 0
      %152 = vmatpush1.bf16.xpose.msra.mxu0 0
      %153 = vmatprep.subr.bf16.mxu0 0
      %154 = vmatpush1.bf16.xpose.msra.mxu0 0
      %155 = vmatprep.subr.bf16.mxu0 0
      %156 = vmatpush1.bf16.xpose.msra.mxu0 0
      %157 = vmatprep.subr.bf16.mxu0 0
      %158 = vmatpush1.bf16.xpose.msra.mxu0 0
      %159 = vmatprep.subr.bf16.mxu0 0
      %160 = vmatpush1.bf16.xpose.msra.mxu0 0
      %161 = vmatprep.subr.bf16.mxu0 0
      %162 = vmatpush1.bf16.xpose.msra.mxu0 0
      %163 = vmatprep.subr.bf16.mxu0 0
      %164 = vmatpush1.bf16.xpose.msra.mxu0 0
      %165 = vmatprep.mubr.bf16.mxu0 0
      %166 = vmatmul.mubr.bf16.gmra.mrb[0].mxu0 %v128
      %v167 = vpop.f32.mrb[0].mxu0
      %v168 = vadd.f32 0.0, %v167
      %v169 = vpop.f32.mrb[0].mxu0
      %v170 = vpop.f32.mrb[0].mxu0
      %v171 = vpop.f32.mrb[0].mxu0
      %172 = vdwg.mxu0
      %v173 = vmul.f32 %v168, 0.35355338
      %vm174 = vcmask 9216
      %v175 = vsel %vm174, %v173, -inf
      %176 = vmax.xlane.f32.xlu0 %v175
      %v177 = vpop.xlane.xlu0 %176
      %v178 = vsub.f32 %v173, %v177
      %v179 = vmul.f32 %v178, 1.442695
      %v180 = vpow.pop %v179
      %v181 = vsel %vm174, %v180, 0.0
      %182 = vadd.xlane.f32.xlu0 %v181
      %v183 = vpop.xlane.xlu0 %182
      %v184 = vrcp.pop %v183
      %v185 = vmul.f32 %v180, %v184
      %v186 = vpack.c.bf16 %v185, %v185
      %187 = vrot.lane.b32.xlu0 %v123, 64
      %v188 = vpop.permute.xlu0 %187
      %vm189 = vcmask 15360
      %v191 = vsel %vm189, %v186, 0
      %vm193 = vcmask 1040384
      %v195 = vsel %vm193, %v188, 0
      %197 = vmatprep.subr.bf16.mxu0 0
      %198 = vmatpush1.bf16.msra.mxu0 %v195
      %199 = vmatprep.subr.bf16.mxu0 0
      %200 = vmatpush1.bf16.msra.mxu0 0
      %201 = vmatprep.subr.bf16.mxu0 0
      %202 = vmatpush1.bf16.msra.mxu0 0
      %203 = vmatprep.subr.bf16.mxu0 0
      %204 = vmatpush1.bf16.msra.mxu0 0
      %205 = vmatprep.subr.bf16.mxu0 0
      %206 = vmatpush1.bf16.msra.mxu0 0
      %207 = vmatprep.subr.bf16.mxu0 0
      %208 = vmatpush1.bf16.msra.mxu0 0
      %209 = vmatprep.subr.bf16.mxu0 0
      %210 = vmatpush1.bf16.msra.mxu0 0
      %211 = vmatprep.subr.bf16.mxu0 0
      %212 = vmatpush1.bf16.msra.mxu0 0
      %213 = vmatprep.subr.bf16.mxu0 0
      %214 = vmatpush1.bf16.msra.mxu0 0
      %215 = vmatprep.subr.bf16.mxu0 0
      %216 = vmatpush1.bf16.msra.mxu0 0
      %217 = vmatprep.subr.bf16.mxu0 0
      %218 = vmatpush1.bf16.msra.mxu0 0
      %219 = vmatprep.subr.bf16.mxu0 0
      %220 = vmatpush1.bf16.msra.mxu0 0
      %221 = vmatprep.subr.bf16.mxu0 0
      %222 = vmatpush1.bf16.msra.mxu0 0
      %223 = vmatprep.subr.bf16.mxu0 0
      %224 = vmatpush1.bf16.msra.mxu0 0
      %225 = vmatprep.subr.bf16.mxu0 0
      %226 = vmatpush1.bf16.msra.mxu0 0
      %227 = vmatprep.subr.bf16.mxu0 0
      %228 = vmatpush1.bf16.msra.mxu0 0
      %229 = vmatprep.mubr.bf16.mxu0 0
      %230 = vmatmul.mubr.bf16.gmra.mrb[0].mxu0 %v191
      %v231 = vpop.f32.mrb[0].mxu0
      %v232 = vadd.f32 0.0, %v231
      %v233 = vpop.f32.mrb[0].mxu0
      %v234 = vpop.f32.mrb[0].mxu0
      %v235 = vpop.f32.mrb[0].mxu0
      %236 = vdwg.mxu0
      %237 = vrot.lane.b32.xlu0 %v123, 120
      %v238 = vpop.permute.xlu0 %237
      %239 = vrot.lane.b32.xlu0 %v123, 88
      %v240 = vpop.permute.xlu0 %239
      %v242 = vsel %vm126, %v238, 0
      %v245 = vsel %vm126, %v240, 0
      %247 = vmatprep.subr.bf16.mxu0 0
      %248 = vmatpush1.bf16.xpose.msra.mxu0 %v245
      %249 = vmatprep.subr.bf16.mxu0 0
      %250 = vmatpush1.bf16.xpose.msra.mxu0 0
      %251 = vmatprep.subr.bf16.mxu0 0
      %252 = vmatpush1.bf16.xpose.msra.mxu0 0
      %253 = vmatprep.subr.bf16.mxu0 0
      %254 = vmatpush1.bf16.xpose.msra.mxu0 0
      %255 = vmatprep.subr.bf16.mxu0 0
      %256 = vmatpush1.bf16.xpose.msra.mxu0 0
      %257 = vmatprep.subr.bf16.mxu0 0
      %258 = vmatpush1.bf16.xpose.msra.mxu0 0
      %259 = vmatprep.subr.bf16.mxu0 0
      %260 = vmatpush1.bf16.xpose.msra.mxu0 0
      %261 = vmatprep.subr.bf16.mxu0 0
      %262 = vmatpush1.bf16.xpose.msra.mxu0 0
      %263 = vmatprep.subr.bf16.mxu0 0
      %264 = vmatpush1.bf16.xpose.msra.mxu0 0
      %265 = vmatprep.subr.bf16.mxu0 0
      %266 = vmatpush1.bf16.xpose.msra.mxu0 0
      %267 = vmatprep.subr.bf16.mxu0 0
      %268 = vmatpush1.bf16.xpose.msra.mxu0 0
      %269 = vmatprep.subr.bf16.mxu0 0
      %270 = vmatpush1.bf16.xpose.msra.mxu0 0
      %271 = vmatprep.subr.bf16.mxu0 0
      %272 = vmatpush1.bf16.xpose.msra.mxu0 0
      %273 = vmatprep.subr.bf16.mxu0 0
      %274 = vmatpush1.bf16.xpose.msra.mxu0 0
      %275 = vmatprep.subr.bf16.mxu0 0
      %276 = vmatpush1.bf16.xpose.msra.mxu0 0
      %277 = vmatprep.subr.bf16.mxu0 0
      %278 = vmatpush1.bf16.xpose.msra.mxu0 0
      %279 = vmatprep.mubr.bf16.mxu0 0
      %280 = vmatmul.mubr.bf16.gmra.mrb[0].mxu0 %v242
      %v281 = vpop.f32.mrb[0].mxu0
      %v282 = vadd.f32 0.0, %v281
      %v283 = vpop.f32.mrb[0].mxu0
      %v284 = vpop.f32.mrb[0].mxu0
      %v285 = vpop.f32.mrb[0].mxu0
      %286 = vdwg.mxu0
      %v287 = vmul.f32 %v282, 0.35355338
      %v288 = vsel %vm174, %v287, -inf
      %289 = vmax.xlane.f32.xlu0 %v288
      %v290 = vpop.xlane.xlu0 %289
      %v291 = vsub.f32 %v287, %v290
      %v292 = vmul.f32 %v291, 1.442695
      %v293 = vpow.pop %v292
      %v294 = vsel %vm174, %v293, 0.0
      %295 = vadd.xlane.f32.xlu0 %v294
      %v296 = vpop.xlane.xlu0 %295
      %v297 = vrcp.pop %v296
      %v298 = vmul.f32 %v293, %v297
      %v299 = vpack.c.bf16 %v298, %v298
      %300 = vrot.lane.b32.xlu0 %v123, 56
      %v301 = vpop.permute.xlu0 %300
      %v303 = vsel %vm189, %v299, 0
      %v306 = vsel %vm193, %v301, 0
      %308 = vmatprep.subr.bf16.mxu0 0
      %309 = vmatpush1.bf16.msra.mxu0 %v306
      %310 = vmatprep.subr.bf16.mxu0 0
      %311 = vmatpush1.bf16.msra.mxu0 0
      %312 = vmatprep.subr.bf16.mxu0 0
      %313 = vmatpush1.bf16.msra.mxu0 0
      %314 = vmatprep.subr.bf16.mxu0 0
      %315 = vmatpush1.bf16.msra.mxu0 0
      %316 = vmatprep.subr.bf16.mxu0 0
      %317 = vmatpush1.bf16.msra.mxu0 0
      %318 = vmatprep.subr.bf16.mxu0 0
      %319 = vmatpush1.bf16.msra.mxu0 0
      %320 = vmatprep.subr.bf16.mxu0 0
      %321 = vmatpush1.bf16.msra.mxu0 0
      %322 = vmatprep.subr.bf16.mxu0 0
      %323 = vmatpush1.bf16.msra.mxu0 0
      %324 = vmatprep.subr.bf16.mxu0 0
      %325 = vmatpush1.bf16.msra.mxu0 0
      %326 = vmatprep.subr.bf16.mxu0 0
      %327 = vmatpush1.bf16.msra.mxu0 0
      %328 = vmatprep.subr.bf16.mxu0 0
      %329 = vmatpush1.bf16.msra.mxu0 0
      %330 = vmatprep.subr.bf16.mxu0 0
      %331 = vmatpush1.bf16.msra.mxu0 0
      %332 = vmatprep.subr.bf16.mxu0 0
      %333 = vmatpush1.bf16.msra.mxu0 0
      %334 = vmatprep.subr.bf16.mxu0 0
      %335 = vmatpush1.bf16.msra.mxu0 0
      %336 = vmatprep.subr.bf16.mxu0 0
      %337 = vmatpush1.bf16.msra.mxu0 0
      %338 = vmatprep.subr.bf16.mxu0 0
      %339 = vmatpush1.bf16.msra.mxu0 0
      %340 = vmatprep.mubr.bf16.mxu0 0
      %341 = vmatmul.mubr.bf16.gmra.mrb[0].mxu0 %v303
      %v342 = vpop.f32.mrb[0].mxu0
      %v343 = vadd.f32 0.0, %v342
      %v344 = vpop.f32.mrb[0].mxu0
      %v345 = vpop.f32.mrb[0].mxu0
      %v346 = vpop.f32.mrb[0].mxu0
      %347 = vdwg.mxu0
      %348 = vrot.lane.b32.xlu0 %v123, 112
      %v349 = vpop.permute.xlu0 %348
      %350 = vrot.lane.b32.xlu0 %v123, 80
      %v351 = vpop.permute.xlu0 %350
      %v353 = vsel %vm126, %v349, 0
      %v356 = vsel %vm126, %v351, 0
      %358 = vmatprep.subr.bf16.mxu0 0
      %359 = vmatpush1.bf16.xpose.msra.mxu0 %v356
      %360 = vmatprep.subr.bf16.mxu0 0
      %361 = vmatpush1.bf16.xpose.msra.mxu0 0
      %362 = vmatprep.subr.bf16.mxu0 0
      %363 = vmatpush1.bf16.xpose.msra.mxu0 0
      %364 = vmatprep.subr.bf16.mxu0 0
      %365 = vmatpush1.bf16.xpose.msra.mxu0 0
      %366 = vmatprep.subr.bf16.mxu0 0
      %367 = vmatpush1.bf16.xpose.msra.mxu0 0
      %368 = vmatprep.subr.bf16.mxu0 0
      %369 = vmatpush1.bf16.xpose.msra.mxu0 0
      %370 = vmatprep.subr.bf16.mxu0 0
      %371 = vmatpush1.bf16.xpose.msra.mxu0 0
      %372 = vmatprep.subr.bf16.mxu0 0
      %373 = vmatpush1.bf16.xpose.msra.mxu0 0
      %374 = vmatprep.subr.bf16.mxu0 0
      %375 = vmatpush1.bf16.xpose.msra.mxu0 0
      %376 = vmatprep.subr.bf16.mxu0 0
      %377 = vmatpush1.bf16.xpose.msra.mxu0 0
      %378 = vmatprep.subr.bf16.mxu0 0
      %379 = vmatpush1.bf16.xpose.msra.mxu0 0
      %380 = vmatprep.subr.bf16.mxu0 0
      %381 = vmatpush1.bf16.xpose.msra.mxu0 0
      %382 = vmatprep.subr.bf16.mxu0 0
      %383 = vmatpush1.bf16.xpose.msra.mxu0 0
      %384 = vmatprep.subr.bf16.mxu0 0
      %385 = vmatpush1.bf16.xpose.msra.mxu0 0
      %386 = vmatprep.subr.bf16.mxu0 0
      %387 = vmatpush1.bf16.xpose.msra.mxu0 0
      %388 = vmatprep.subr.bf16.mxu0 0
      %389 = vmatpush1.bf16.xpose.msra.mxu0 0
      %390 = vmatprep.mubr.bf16.mxu0 0
      %391 = vmatmul.mubr.bf16.gmra.mrb[0].mxu0 %v353
      %v392 = vpop.f32.mrb[0].mxu0
      %v393 = vadd.f32 0.0, %v392
      %v394 = vpop.f32.mrb[0].mxu0
      %v395 = vpop.f32.mrb[0].mxu0
      %v396 = vpop.f32.mrb[0].mxu0
      %397 = vdwg.mxu0
      %v398 = vmul.f32 %v393, 0.35355338
      %v399 = vsel %vm174, %v398, -inf
      %400 = vmax.xlane.f32.xlu0 %v399
      %v401 = vpop.xlane.xlu0 %400
      %v402 = vsub.f32 %v398, %v401
      %v403 = vmul.f32 %v402, 1.442695
      %v404 = vpow.pop %v403
      %v405 = vsel %vm174, %v404, 0.0
      %406 = vadd.xlane.f32.xlu0 %v405
      %v407 = vpop.xlane.xlu0 %406
      %v408 = vrcp.pop %v407
      %v409 = vmul.f32 %v404, %v408
      %v410 = vpack.c.bf16 %v409, %v409
      %411 = vrot.lane.b32.xlu0 %v123, 48
      %v412 = vpop.permute.xlu0 %411
      %v414 = vsel %vm189, %v410, 0
      %v417 = vsel %vm193, %v412, 0
      %419 = vmatprep.subr.bf16.mxu0 0
      %420 = vmatpush1.bf16.msra.mxu0 %v417
      %421 = vmatprep.subr.bf16.mxu0 0
      %422 = vmatpush1.bf16.msra.mxu0 0
      %423 = vmatprep.subr.bf16.mxu0 0
      %424 = vmatpush1.bf16.msra.mxu0 0
      %425 = vmatprep.subr.bf16.mxu0 0
      %426 = vmatpush1.bf16.msra.mxu0 0
      %427 = vmatprep.subr.bf16.mxu0 0
      %428 = vmatpush1.bf16.msra.mxu0 0
      %429 = vmatprep.subr.bf16.mxu0 0
      %430 = vmatpush1.bf16.msra.mxu0 0
      %431 = vmatprep.subr.bf16.mxu0 0
      %432 = vmatpush1.bf16.msra.mxu0 0
      %433 = vmatprep.subr.bf16.mxu0 0
      %434 = vmatpush1.bf16.msra.mxu0 0
      %435 = vmatprep.subr.bf16.mxu0 0
      %436 = vmatpush1.bf16.msra.mxu0 0
      %437 = vmatprep.subr.bf16.mxu0 0
      %438 = vmatpush1.bf16.msra.mxu0 0
      %439 = vmatprep.subr.bf16.mxu0 0
      %440 = vmatpush1.bf16.msra.mxu0 0
      %441 = vmatprep.subr.bf16.mxu0 0
      %442 = vmatpush1.bf16.msra.mxu0 0
      %443 = vmatprep.subr.bf16.mxu0 0
      %444 = vmatpush1.bf16.msra.mxu0 0
      %445 = vmatprep.subr.bf16.mxu0 0
      %446 = vmatpush1.bf16.msra.mxu0 0
      %447 = vmatprep.subr.bf16.mxu0 0
      %448 = vmatpush1.bf16.msra.mxu0 0
      %449 = vmatprep.subr.bf16.mxu0 0
      %450 = vmatpush1.bf16.msra.mxu0 0
      %451 = vmatprep.mubr.bf16.mxu0 0
      %452 = vmatmul.mubr.bf16.gmra.mrb[0].mxu0 %v414
      %v453 = vpop.f32.mrb[0].mxu0
      %v454 = vadd.f32 0.0, %v453
      %v455 = vpop.f32.mrb[0].mxu0
      %v456 = vpop.f32.mrb[0].mxu0
      %v457 = vpop.f32.mrb[0].mxu0
      %458 = vdwg.mxu0
      %459 = vrot.lane.b32.xlu0 %v123, 104
      %v460 = vpop.permute.xlu0 %459
      %461 = vrot.lane.b32.xlu0 %v123, 72
      %v462 = vpop.permute.xlu0 %461
      %v464 = vsel %vm126, %v460, 0
      %v467 = vsel %vm126, %v462, 0
      %469 = vmatprep.subr.bf16.mxu0 0
      %470 = vmatpush1.bf16.xpose.msra.mxu0 %v467
      %471 = vmatprep.subr.bf16.mxu0 0
      %472 = vmatpush1.bf16.xpose.msra.mxu0 0
      %473 = vmatprep.subr.bf16.mxu0 0
      %474 = vmatpush1.bf16.xpose.msra.mxu0 0
      %475 = vmatprep.subr.bf16.mxu0 0
      %476 = vmatpush1.bf16.xpose.msra.mxu0 0
      %477 = vmatprep.subr.bf16.mxu0 0
      %478 = vmatpush1.bf16.xpose.msra.mxu0 0
      %479 = vmatprep.subr.bf16.mxu0 0
      %480 = vmatpush1.bf16.xpose.msra.mxu0 0
      %481 = vmatprep.subr.bf16.mxu0 0
      %482 = vmatpush1.bf16.xpose.msra.mxu0 0
      %483 = vmatprep.subr.bf16.mxu0 0
      %484 = vmatpush1.bf16.xpose.msra.mxu0 0
      %485 = vmatprep.subr.bf16.mxu0 0
      %486 = vmatpush1.bf16.xpose.msra.mxu0 0
      %487 = vmatprep.subr.bf16.mxu0 0
      %488 = vmatpush1.bf16.xpose.msra.mxu0 0
      %489 = vmatprep.subr.bf16.mxu0 0
      %490 = vmatpush1.bf16.xpose.msra.mxu0 0
      %491 = vmatprep.subr.bf16.mxu0 0
      %492 = vmatpush1.bf16.xpose.msra.mxu0 0
      %493 = vmatprep.subr.bf16.mxu0 0
      %494 = vmatpush1.bf16.xpose.msra.mxu0 0
      %495 = vmatprep.subr.bf16.mxu0 0
      %496 = vmatpush1.bf16.xpose.msra.mxu0 0
      %497 = vmatprep.subr.bf16.mxu0 0
      %498 = vmatpush1.bf16.xpose.msra.mxu0 0
      %499 = vmatprep.subr.bf16.mxu0 0
      %500 = vmatpush1.bf16.xpose.msra.mxu0 0
      %501 = vmatprep.mubr.bf16.mxu0 0
      %502 = vmatmul.mubr.bf16.gmra.mrb[0].mxu0 %v464
      %v503 = vpop.f32.mrb[0].mxu0
      %v504 = vadd.f32 0.0, %v503
      %v505 = vpop.f32.mrb[0].mxu0
      %v506 = vpop.f32.mrb[0].mxu0
      %v507 = vpop.f32.mrb[0].mxu0
      %508 = vdwg.mxu0
      %v509 = vmul.f32 %v504, 0.35355338
      %v510 = vsel %vm174, %v509, -inf
      %511 = vmax.xlane.f32.xlu0 %v510
      %v512 = vpop.xlane.xlu0 %511
      %v513 = vsub.f32 %v509, %v512
      %v514 = vmul.f32 %v513, 1.442695
      %v515 = vpow.pop %v514
      %v516 = vsel %vm174, %v515, 0.0
      %517 = vadd.xlane.f32.xlu0 %v516
      %v518 = vpop.xlane.xlu0 %517
      %v519 = vrcp.pop %v518
      %v520 = vmul.f32 %v515, %v519
      %v521 = vpack.c.bf16 %v520, %v520
      %522 = vrot.lane.b32.xlu0 %v123, 40
      %v523 = vpop.permute.xlu0 %522
      %v525 = vsel %vm189, %v521, 0
      %v528 = vsel %vm193, %v523, 0
      %530 = vmatprep.subr.bf16.mxu0 0
      %531 = vmatpush1.bf16.msra.mxu0 %v528
      %532 = vmatprep.subr.bf16.mxu0 0
      %533 = vmatpush1.bf16.msra.mxu0 0
      %534 = vmatprep.subr.bf16.mxu0 0
      %535 = vmatpush1.bf16.msra.mxu0 0
      %536 = vmatprep.subr.bf16.mxu0 0
      %537 = vmatpush1.bf16.msra.mxu0 0
      %538 = vmatprep.subr.bf16.mxu0 0
      %539 = vmatpush1.bf16.msra.mxu0 0
      %540 = vmatprep.subr.bf16.mxu0 0
      %541 = vmatpush1.bf16.msra.mxu0 0
      %542 = vmatprep.subr.bf16.mxu0 0
      %543 = vmatpush1.bf16.msra.mxu0 0
      %544 = vmatprep.subr.bf16.mxu0 0
      %545 = vmatpush1.bf16.msra.mxu0 0
      %546 = vmatprep.subr.bf16.mxu0 0
      %547 = vmatpush1.bf16.msra.mxu0 0
      %548 = vmatprep.subr.bf16.mxu0 0
      %549 = vmatpush1.bf16.msra.mxu0 0
      %550 = vmatprep.subr.bf16.mxu0 0
      %551 = vmatpush1.bf16.msra.mxu0 0
      %552 = vmatprep.subr.bf16.mxu0 0
      %553 = vmatpush1.bf16.msra.mxu0 0
      %554 = vmatprep.subr.bf16.mxu0 0
      %555 = vmatpush1.bf16.msra.mxu0 0
      %556 = vmatprep.subr.bf16.mxu0 0
      %557 = vmatpush1.bf16.msra.mxu0 0
      %558 = vmatprep.subr.bf16.mxu0 0
      %559 = vmatpush1.bf16.msra.mxu0 0
      %560 = vmatprep.subr.bf16.mxu0 0
      %561 = vmatpush1.bf16.msra.mxu0 0
      %562 = vmatprep.mubr.bf16.mxu0 0
      %563 = vmatmul.mubr.bf16.gmra.mrb[0].mxu0 %v525
      %v564 = vpop.f32.mrb[0].mxu0
      %v565 = vadd.f32 0.0, %v564
      %v566 = vpop.f32.mrb[0].mxu0
      %v567 = vpop.f32.mrb[0].mxu0
      %v568 = vpop.f32.mrb[0].mxu0
      %569 = vdwg.mxu0
      %571 = vrot.lane.b32.xlu0 %v343, 8
      %v572 = vpop.permute.xlu0 %571
      %575 = vrot.lane.b32.xlu0 %v454, 16
      %v576 = vpop.permute.xlu0 %575
      %579 = vrot.lane.b32.xlu0 %v565, 24
      %v580 = vpop.permute.xlu0 %579
      %v582 = vsel %vm126, %v232, %v572
      %vm583 = vcmask 130048
      %v584 = vsel %vm583, %v582, %v576
      %vm585 = vcmask 195584
      %v586 = vsel %vm585, %v584, %v580
      %v587 = vpack.c.bf16 %v586, %v586
      %vm588 = vcmask 253952
      %589 = vst.msk [vmem:[%s106] sm:$0x1] %vm588, %v587
      %p590 = scmp.lt.s32.totalorder %s12, 1
      %s591 = scalar_select %p590, %s12, 1
      %s592 = scalar_lea.vmem %s1, %s591
      // Predicated region
      $region25: #{encoder_forward.52} parent=23 // pred_check
        %p593 = pneg %p56
      $region26: #{encoder_forward.52} parent=23 // pred_check_branch
        %595 = sbr.rel (%p593) target = $region28
      $region27: #{encoder_forward.52} parent=23 // pred_region
        _
      $region28: #{encoder_forward.52} parent=23 // pred_fallthru
        _
    $region24: #{encoder_forward.52} parent=5 // pred_fallthru
      _
    %p596 = scmp.le.s32.totalorder 2, %s7
    // Predicated region
    $region29: #{encoder_forward.52} parent=5 // pred_check
      %p597 = pneg %p596
    $region30: #{encoder_forward.52} parent=5 // pred_check_branch
      %599 = sbr.rel (%p597) target = $region32
    $region31: #{encoder_forward.52} parent=5 // pred_region
      %s600 = ssub.s32 %s7, 2
      // Predicated region
      $region33: #{encoder_forward.52} parent=31 // pred_check
        %p601 = pneg %p62
      $region34: #{encoder_forward.52} parent=31 // pred_check_branch
        %603 = sbr.rel (%p601) target = $region36
      $region35: #{encoder_forward.52} parent=31 // pred_region
        %p604 = scmp.lt.s32.totalorder %s13, 1
        %s605 = scalar_select %p604, %s13, 1
        %s606 = scalar_lea.vmem %s1, %s605
      $region36: #{encoder_forward.52} parent=31 // pred_fallthru
        _
    $region32: #{encoder_forward.52} parent=5 // pred_fallthru
      _
  $region6: #{encoder_forward.52} parent=0 // loop_footer
    %s11 = sadd.s32 1, %s7
  $region7: #{encoder_forward.52} parent=0 // loop_footer_branch
    %6 = sbr.rel target = $region3
  $region8: #{encoder_forward.52} parent=0 // loop_exit
    _

// kernel: encoder_forward.54
$region0: #{encoder_forward.54}
  #allocation0 [shape = 'u32[]', space=smem, size = 0x4, offset = 0x4, fixed_abs, tag = 'smem constant byte address 0x4 - core index']
  #allocation1 [shape = 'u32[144,128]{1,0:T(1,128)}', space=vmem, size = 0x12000, scoped, tag = 'internal scratch']
  %s0 = inlined_call_operand.vmem [shape: bf16[4,32], index: 0, kind: input, shape index: {}]
  %s1 = inlined_call_operand.vmem [shape: f32[1,32], index: 1, kind: input, shape index: {}]
  %s2 = inlined_call_operand.vmem [shape: f32[1,32], index: 2, kind: input, shape index: {}]
  %s3 = inlined_call_operand.vmem [shape: bf16[32,64], index: 3, kind: input, shape index: {}]
  %s4 = inlined_call_operand.vmem [shape: f32[1,64], index: 4, kind: input, shape index: {}]
  %s5 = inlined_call_operand.vmem [shape: bf16[4,64], index: 5, kind: output, shape index: {}]
  %s6 = sld [smem:[#allocation0]]
  $region30: #{encoder_forward.54} parent=0
    _
  %s8 = ssub.s32 1, %s6
  %s9 = scalar_select 0, %s8, %s6
  // Predicated region
  $region2: #{encoder_forward.54} parent=0 // pred_check
    _
  $region3: #{encoder_forward.54} parent=0 // pred_check_branch
    %11 = sbr.rel (0) target = $region5
  $region4: #{encoder_forward.54} parent=0 // pred_region
    _
  $region5: #{encoder_forward.54} parent=0 // pred_fallthru
    _
  // Predicated region
  $region6: #{encoder_forward.54} parent=0 // pred_check
    _
  $region7: #{encoder_forward.54} parent=0 // pred_check_branch
    %13 = sbr.rel (0) target = $region9
  $region8: #{encoder_forward.54} parent=0 // pred_region
    _
  $region9: #{encoder_forward.54} parent=0 // pred_fallthru
    _
  // Predicated region
  $region10: #{encoder_forward.54} parent=0 // pred_check
    _
  $region11: #{encoder_forward.54} parent=0 // pred_check_branch
    %15 = sbr.rel (0) target = $region13
  $region12: #{encoder_forward.54} parent=0 // pred_region
    _
  $region13: #{encoder_forward.54} parent=0 // pred_fallthru
    _
  // Predicated region
  $region14: #{encoder_forward.54} parent=0 // pred_check
    _
  $region15: #{encoder_forward.54} parent=0 // pred_check_branch
    %17 = sbr.rel (0) target = $region17
  $region16: #{encoder_forward.54} parent=0 // pred_region
    _
  $region17: #{encoder_forward.54} parent=0 // pred_fallthru
    _
  // Predicated region
  $region18: #{encoder_forward.54} parent=0 // pred_check
    _
  $region19: #{encoder_forward.54} parent=0 // pred_check_branch
    %19 = sbr.rel (0) target = $region21
  $region20: #{encoder_forward.54} parent=0 // pred_region
    _
  $region21: #{encoder_forward.54} parent=0 // pred_fallthru
    _
  %v21 = vld [vmem:[%s0] sm:$0x3]
  %v22 = vunpack.c.l.bf16 %v21
  %vm23 = vcmask 257024
  %v24 = vsel %vm23, %v22, 0.0
  %25 = vadd.xlane.f32.xlu0 %v24
  %v26 = vpop.xlane.xlu0 %25
  %v27 = vrcp.pop 32.0
  %v28 = vmul.f32 %v26, %v27
  %v29 = vsub.f32 %v22, %v28
  %v30 = vmul.f32 %v29, %v29
  %v31 = vsel %vm23, %v30, 0.0
  %32 = vadd.xlane.f32.xlu0 %v31
  %v33 = vpop.xlane.xlu0 %32
  %v34 = vmul.f32 %v33, %v27
  %v35 = vadd.f32 %v34, 1e-06
  %v36 = vrsqrt.pop %v35
  %v37 = vmul.f32 %v29, %v36
  %v38 = vld [vmem:[%s1] sm:$0x1]
  %v40 = vlaneseq
  %v41 = vshrl.u32 %v40, 7
  %v42 = vsub.s32 0, %v41
  %v43 = vrot.slane %v38, %v42
  %v45 = vmul.f32 %v37, %v43
  %v46 = vld [vmem:[%s2] sm:$0x1]
  %v48 = vlaneseq
  %v49 = vshrl.u32 %v48, 7
  %v50 = vsub.s32 0, %v49
  %v51 = vrot.slane %v46, %v50
  %v53 = vadd.f32 %v45, %v51
  %v54 = vpack.c.bf16 %v53, %v53
  %v55 = vld [vmem:[%s3] sm:$0xf]
  %v56 = vld [vmem:[%s3 + $0x4] sm:$0xf]
  %v57 = vld [vmem:[%s3 + $0x8] sm:$0xf]
  %v58 = vld [vmem:[%s3 + $0xc] sm:$0xf]
  %v59 = vld [vmem:[%s4] sm:$0x1]
  %v61 = vlaneseq
  %v62 = vshrl.u32 %v61, 7
  %v63 = vsub.s32 0, %v62
  %v64 = vrot.slane %v59, %v63
  %v70 = vunpack.c.l.b16 %v55
  %v71 = vunpack.c.l.b16 %v56
  %v72 = vunpack.c.l.b16 %v57
  %v73 = vunpack.c.l.b16 %v58
  %v74 = vpack.c.b16 %v71, %v70
  %v75 = vpack.c.b16 %v73, %v72
  %vm78 = vcmask 261120
  %v80 = vsel %vm78, %v54, 0
  %82 = vmatprep.subr.bf16.mxu0 0
  %83 = vmatpush1.bf16.msra.mxu0 %v74
  %84 = vmatprep.subr.bf16.mxu0 0
  %85 = vmatpush1.bf16.msra.mxu0 %v75
  %86 = vmatprep.subr.bf16.mxu0 0
  %87 = vmatpush1.bf16.msra.mxu0 0
  %88 = vmatprep.subr.bf16.mxu0 0
  %89 = vmatpush1.bf16.msra.mxu0 0
  %90 = vmatprep.subr.bf16.mxu0 0
  %91 = vmatpush1.bf16.msra.mxu0 0
  %92 = vmatprep.subr.bf16.mxu0 0
  %93 = vmatpush1.bf16.msra.mxu0 0
  %94 = vmatprep.subr.bf16.mxu0 0
  %95 = vmatpush1.bf16.msra.mxu0 0
  %96 = vmatprep.subr.bf16.mxu0 0
  %97 = vmatpush1.bf16.msra.mxu0 0
  %98 = vmatprep.subr.bf16.mxu0 0
  %99 = vmatpush1.bf16.msra.mxu0 0
  %100 = vmatprep.subr.bf16.mxu0 0
  %101 = vmatpush1.bf16.msra.mxu0 0
  %102 = vmatprep.subr.bf16.mxu0 0
  %103 = vmatpush1.bf16.msra.mxu0 0
  %104 = vmatprep.subr.bf16.mxu0 0
  %105 = vmatpush1.bf16.msra.mxu0 0
  %106 = vmatprep.subr.bf16.mxu0 0
  %107 = vmatpush1.bf16.msra.mxu0 0
  %108 = vmatprep.subr.bf16.mxu0 0
  %109 = vmatpush1.bf16.msra.mxu0 0
  %110 = vmatprep.subr.bf16.mxu0 0
  %111 = vmatpush1.bf16.msra.mxu0 0
  %112 = vmatprep.subr.bf16.mxu0 0
  %113 = vmatpush1.bf16.msra.mxu0 0
  %114 = vmatprep.mubr.bf16.mxu0 0
  %115 = vmatmul.mubr.bf16.gmra.mrb[0].mxu0 %v80
  %v116 = vpop.f32.mrb[0].mxu0
  %v117 = vadd.f32 %v64, %v116
  %v118 = vpop.f32.mrb[0].mxu0
  %v119 = vpop.f32.mrb[0].mxu0
  %v120 = vpop.f32.mrb[0].mxu0
  %121 = vdwg.mxu0
  %v122 = vmul.f32 %v117, %v117
  %v123 = vmul.f32 %v117, %v122
  %v124 = vmul.f32 %v123, 0.044715
  %v125 = vadd.f32 %v117, %v124
  %v126 = vmul.f32 %v125, 0.7978846
  %v127 = vtanh.pop %v126
  %v128 = vadd.f32 %v127, 1.0
  %v129 = vmul.f32 %v128, 0.5
  %v130 = vmul.f32 %v117, %v129
  %v131 = vpack.c.bf16 %v130, %v130
  %vm132 = vcmask 517120
  %133 = vst.msk [vmem:[%s5] sm:$0x3] %vm132, %v131
  // Predicated region
  $region22: #{encoder_forward.54} parent=0 // pred_check
    _
  $region23: #{encoder_forward.54} parent=0 // pred_check_branch
    %135 = sbr.rel (0) target = $region25
  $region24: #{encoder_forward.54} parent=0 // pred_region
    _
  $region25: #{encoder_forward.54} parent=0 // pred_fallthru
    _
  // Predicated region
  $region26: #{encoder_forward.54} parent=0 // pred_check
    _
  $region27: #{encoder_forward.54} parent=0 // pred_check_branch
    %137 = sbr.rel (0) target = $region29
  $region28: #{encoder_forward.54} parent=0 // pred_region
    _
  $region29: #{encoder_forward.54} parent=0 // pred_fallthru
    _

// kernel: encoder_forward.46
$region0: #{encoder_forward.46}
  #allocation0 [shape = 'u32[]', space=smem, size = 0x4, offset = 0x4, fixed_abs, tag = 'smem constant byte address 0x4 - core index']
  #allocation1 [shape = 'u32[144,128]{1,0:T(1,128)}', space=vmem, size = 0x12000, scoped, tag = 'internal scratch']
  %s0 = inlined_call_operand.vmem [shape: bf16[8,32], index: 0, kind: input, shape index: {}]
  %s1 = inlined_call_operand.vmem [shape: f32[1,32], index: 1, kind: input, shape index: {}]
  %s2 = inlined_call_operand.vmem [shape: f32[1,32], index: 2, kind: input, shape index: {}]
  %s3 = inlined_call_operand.vmem [shape: bf16[32,96], index: 3, kind: input, shape index: {}]
  %s4 = inlined_call_operand.vmem [shape: f32[1,96], index: 4, kind: input, shape index: {}]
  %s5 = inlined_call_operand.vmem [shape: bf16[8,96], index: 5, kind: output, shape index: {}]
  %s6 = sld [smem:[#allocation0]]
  $region30: #{encoder_forward.46} parent=0
    _
  %s8 = ssub.s32 1, %s6
  %s9 = scalar_select 0, %s8, %s6
  // Predicated region
  $region2: #{encoder_forward.46} parent=0 // pred_check
    _
  $region3: #{encoder_forward.46} parent=0 // pred_check_branch
    %11 = sbr.rel (0) target = $region5
  $region4: #{encoder_forward.46} parent=0 // pred_region
    _
  $region5: #{encoder_forward.46} parent=0 // pred_fallthru
    _
  // Predicated region
  $region6: #{encoder_forward.46} parent=0 // pred_check
    _
  $region7: #{encoder_forward.46} parent=0 // pred_check_branch
    %13 = sbr.rel (0) target = $region9
  $region8: #{encoder_forward.46} parent=0 // pred_region
    _
  $region9: #{encoder_forward.46} parent=0 // pred_fallthru
    _
  // Predicated region
  $region10: #{encoder_forward.46} parent=0 // pred_check
    _
  $region11: #{encoder_forward.46} parent=0 // pred_check_branch
    %15 = sbr.rel (0) target = $region13
  $region12: #{encoder_forward.46} parent=0 // pred_region
    _
  $region13: #{encoder_forward.46} parent=0 // pred_fallthru
    _
  // Predicated region
  $region14: #{encoder_forward.46} parent=0 // pred_check
    _
  $region15: #{encoder_forward.46} parent=0 // pred_check_branch
    %17 = sbr.rel (0) target = $region17
  $region16: #{encoder_forward.46} parent=0 // pred_region
    _
  $region17: #{encoder_forward.46} parent=0 // pred_fallthru
    _
  // Predicated region
  $region18: #{encoder_forward.46} parent=0 // pred_check
    _
  $region19: #{encoder_forward.46} parent=0 // pred_check_branch
    %19 = sbr.rel (0) target = $region21
  $region20: #{encoder_forward.46} parent=0 // pred_region
    _
  $region21: #{encoder_forward.46} parent=0 // pred_fallthru
    _
  %v21 = vld [vmem:[%s0] sm:$0xf]
  %v22 = vunpack.c.l.bf16 %v21
  %vm23 = vcmask 261120
  %v24 = vsel %vm23, %v22, 0.0
  %25 = vadd.xlane.f32.xlu0 %v24
  %v26 = vpop.xlane.xlu0 %25
  %v27 = vrcp.pop 32.0
  %v28 = vmul.f32 %v26, %v27
  %v29 = vsub.f32 %v22, %v28
  %v30 = vmul.f32 %v29, %v29
  %v31 = vsel %vm23, %v30, 0.0
  %32 = vadd.xlane.f32.xlu0 %v31
  %v33 = vpop.xlane.xlu0 %32
  %v34 = vmul.f32 %v33, %v27
  %v35 = vadd.f32 %v34, 1e-06
  %v36 = vrsqrt.pop %v35
  %v37 = vmul.f32 %v29, %v36
  %v38 = vld [vmem:[%s1] sm:$0x1]
  %v40 = vlaneseq
  %v41 = vshrl.u32 %v40, 7
  %v42 = vsub.s32 0, %v41
  %v43 = vrot.slane %v38, %v42
  %v45 = vmul.f32 %v37, %v43
  %v46 = vld [vmem:[%s2] sm:$0x1]
  %v48 = vlaneseq
  %v49 = vshrl.u32 %v48, 7
  %v50 = vsub.s32 0, %v49
  %v51 = vrot.slane %v46, %v50
  %v53 = vadd.f32 %v45, %v51
  %v54 = vpack.c.bf16 %v53, %v53
  %v55 = vld [vmem:[%s3] sm:$0xf]
  %v56 = vld [vmem:[%s3 + $0x4] sm:$0xf]
  %v57 = vld [vmem:[%s3 + $0x8] sm:$0xf]
  %v58 = vld [vmem:[%s3 + $0xc] sm:$0xf]
  %v59 = vld [vmem:[%s4] sm:$0x1]
  %v61 = vlaneseq
  %v62 = vshrl.u32 %v61, 7
  %v63 = vsub.s32 0, %v62
  %v64 = vrot.slane %v59, %v63
  %v70 = vunpack.c.l.b16 %v55
  %v71 = vunpack.c.l.b16 %v56
  %v72 = vunpack.c.l.b16 %v57
  %v73 = vunpack.c.l.b16 %v58
  %v74 = vpack.c.b16 %v71, %v70
  %v75 = vpack.c.b16 %v73, %v72
  %v79 = vsel %vm23, %v54, 0
  %81 = vmatprep.subr.bf16.mxu0 0
  %82 = vmatpush1.bf16.msra.mxu0 %v74
  %83 = vmatprep.subr.bf16.mxu0 0
  %84 = vmatpush1.bf16.msra.mxu0 %v75
  %85 = vmatprep.subr.bf16.mxu0 0
  %86 = vmatpush1.bf16.msra.mxu0 0
  %87 = vmatprep.subr.bf16.mxu0 0
  %88 = vmatpush1.bf16.msra.mxu0 0
  %89 = vmatprep.subr.bf16.mxu0 0
  %90 = vmatpush1.bf16.msra.mxu0 0
  %91 = vmatprep.subr.bf16.mxu0 0
  %92 = vmatpush1.bf16.msra.mxu0 0
  %93 = vmatprep.subr.bf16.mxu0 0
  %94 = vmatpush1.bf16.msra.mxu0 0
  %95 = vmatprep.subr.bf16.mxu0 0
  %96 = vmatpush1.bf16.msra.mxu0 0
  %97 = vmatprep.subr.bf16.mxu0 0
  %98 = vmatpush1.bf16.msra.mxu0 0
  %99 = vmatprep.subr.bf16.mxu0 0
  %100 = vmatpush1.bf16.msra.mxu0 0
  %101 = vmatprep.subr.bf16.mxu0 0
  %102 = vmatpush1.bf16.msra.mxu0 0
  %103 = vmatprep.subr.bf16.mxu0 0
  %104 = vmatpush1.bf16.msra.mxu0 0
  %105 = vmatprep.subr.bf16.mxu0 0
  %106 = vmatpush1.bf16.msra.mxu0 0
  %107 = vmatprep.subr.bf16.mxu0 0
  %108 = vmatpush1.bf16.msra.mxu0 0
  %109 = vmatprep.subr.bf16.mxu0 0
  %110 = vmatpush1.bf16.msra.mxu0 0
  %111 = vmatprep.subr.bf16.mxu0 0
  %112 = vmatpush1.bf16.msra.mxu0 0
  %113 = vmatprep.mubr.bf16.mxu0 0
  %114 = vmatmul.mubr.bf16.gmra.mrb[0].mxu0 %v79
  %v115 = vpop.f32.mrb[0].mxu0
  %v116 = vadd.f32 %v64, %v115
  %v117 = vpop.f32.mrb[0].mxu0
  %v118 = vpop.f32.mrb[0].mxu0
  %v119 = vpop.f32.mrb[0].mxu0
  %120 = vdwg.mxu0
  %v121 = vpack.c.bf16 %v116, %v116
  %vm122 = vcmask 781312
  %123 = vst.msk [vmem:[%s5] sm:$0xf] %vm122, %v121
  // Predicated region
  $region22: #{encoder_forward.46} parent=0 // pred_check
    _
  $region23: #{encoder_forward.46} parent=0 // pred_check_branch
    %125 = sbr.rel (0) target = $region25
  $region24: #{encoder_forward.46} parent=0 // pred_region
    _
  $region25: #{encoder_forward.46} parent=0 // pred_fallthru
    _
  // Predicated region
  $region26: #{encoder_forward.46} parent=0 // pred_check
    _
  $region27: #{encoder_forward.46} parent=0 // pred_check_branch
    %127 = sbr.rel (0) target = $region29
  $region28: #{encoder_forward.46} parent=0 // pred_region
    _
  $region29: #{encoder_forward.46} parent=0 // pred_fallthru
    _

// kernel: encoder_forward.47
$region0: #{encoder_forward.47}
  #allocation0 [shape = 'u32[]', space=smem, size = 0x4, offset = 0x4, fixed_abs, tag = 'smem constant byte address 0x4 - core index']
  #allocation1 [shape = 'u32[144,128]{1,0:T(1,128)}', space=vmem, size = 0x12000, scoped, tag = 'internal scratch']
  %s0 = inlined_call_operand.vmem [shape: bf16[2,4,96], index: 0, kind: input, shape index: {}]
  %s1 = inlined_call_operand.vmem [shape: bf16[2,4,32], index: 1, kind: output, shape index: {}]
  %s2 = sld [smem:[#allocation0]]
  $region37: #{encoder_forward.47} parent=0
    _
  %s4 = ssub.s32 1, %s2
  %s5 = scalar_select 0, %s4, %s2
  loop: start=0, step=1, limit=4
  $region2: #{encoder_forward.47} parent=0 // loop_pre_header
    _
  $region3: #{encoder_forward.47} parent=0 // loop_header
    %s7 = sphi 0, %s11
    %p8 = scmp.ge.s32.totalorder %s7, 4
    %s17 = sphi 0, %s19
    %s20 = sphi 0, %s17
    %s21 = sphi 0, %s20
    %s37 = sphi 0, %s21
    %s43 = sphi 0, %s45
    %s46 = sphi 0, %s43
    %s47 = sphi 0, %s46
    %s63 = sphi 0, %s47
  $region4: #{encoder_forward.47} parent=0 // loop_header_branch
    %10 = sbr.rel (%p8) target = $region8
  $region5: #{encoder_forward.47} parent=0 // loop_body
    %s12 = ssub.s32 %s7, 1
    %s13 = ssub.s32 %s7, 2
    %s14 = sadd.s32 %s7, 1
    %s15 = ssub.s32 %s7, %s14
    %p16 = scmp.eq.s32.totalorder %s15, 0
    %s18 = sadd.s32 %s17, 1
    %s19 = scalar_select %p16, %s17, %s18
    %p22 = pneg %p16
    %p23 = scmp.eq.s32.totalorder %s7, 1
    %p24 = por %p22, %p23
    %p25 = scmp.ne.s32.totalorder %s17, %s20
    %p26 = scmp.eq.s32.totalorder %s7, 0
    %p27 = por %p25, %p26
    %p28 = scmp.ne.s32.totalorder %s17, %s20
    %p29 = scmp.eq.s32.totalorder %s12, 1
    %p30 = por %p28, %p29
    %p31 = scmp.ne.s32.totalorder %s20, %s21
    %p32 = scmp.eq.s32.totalorder %s12, 0
    %p33 = por %p31, %p32
    %p34 = scmp.ne.s32.totalorder %s20, %s21
    %p35 = scmp.eq.s32.totalorder %s13, 1
    %p36 = por %p34, %p35
    %p38 = scmp.ne.s32.totalorder %s21, %s37
    %p39 = scmp.eq.s32.totalorder %s13, 0
    %p40 = por %p38, %p39
    %s41 = ssub.s32 %s7, %s14
    %p42 = scmp.eq.s32.totalorder %s41, 0
    %s44 = sadd.s32 %s43, 1
    %s45 = scalar_select %p42, %s43, %s44
    %p48 = pneg %p42
    %p49 = scmp.eq.s32.totalorder %s7, 1
    %p50 = por %p48, %p49
    %p51 = scmp.ne.s32.totalorder %s43, %s46
    %p52 = scmp.eq.s32.totalorder %s7, 0
    %p53 = por %p51, %p52
    %p54 = scmp.ne.s32.totalorder %s43, %s46
    %p55 = scmp.eq.s32.totalorder %s12, 1
    %p56 = por %p54, %p55
    %p57 = scmp.ne.s32.totalorder %s46, %s47
    %p58 = scmp.eq.s32.totalorder %s12, 0
    %p59 = por %p57, %p58
    %p60 = scmp.ne.s32.totalorder %s46, %s47
    %p61 = scmp.eq.s32.totalorder %s13, 1
    %p62 = por %p60, %p61
    %p64 = scmp.ne.s32.totalorder %s47, %s63
    %p65 = scmp.eq.s32.totalorder %s13, 0
    %p66 = por %p64, %p65
    %p67 = scmp.le.s32.totalorder 1, %s7
    %p68 = scmp.lt.s32.totalorder %s7, 3
    %p69 = pnand %p67, %p68
    %p70 = pneg %p69
    // Predicated region
    $region9: #{encoder_forward.47} parent=5 // pred_check
      _
    $region10: #{encoder_forward.47} parent=5 // pred_check_branch
      %72 = sbr.rel (%p69) target = $region12
    $region11: #{encoder_forward.47} parent=5 // pred_region
      %s73 = ssub.s32 %s7, 1
    $region12: #{encoder_forward.47} parent=5 // pred_fallthru
      _
    %p74 = scmp.lt.s32.totalorder %s7, 2
    // Predicated region
    $region13: #{encoder_forward.47} parent=5 // pred_check
      %p75 = pneg %p74
    $region14: #{encoder_forward.47} parent=5 // pred_check_branch
      %77 = sbr.rel (%p75) target = $region16
    $region15: #{encoder_forward.47} parent=5 // pred_region
      // Predicated region
      $region17: #{encoder_forward.47} parent=15 // pred_check
        %p78 = pneg %p27
      $region18: #{encoder_forward.47} parent=15 // pred_check_branch
        %80 = sbr.rel (%p78) target = $region20
      $region19: #{encoder_forward.47} parent=15 // pred_region
        %p81 = scmp.lt.s32.totalorder %s7, 1
        %s82 = scalar_select %p81, %s7, 1
        %s83 = smul.addr %s82, 2
        %s84 = scalar_lea.vmem %s0, %s83
      $region20: #{encoder_forward.47} parent=15 // pred_fallthru
        _
    $region16: #{encoder_forward.47} parent=5 // pred_fallthru
      _
    %p85 = scmp.le.s32.totalorder 1, %s7
    %p86 = scmp.lt.s32.totalorder %s7, 3
    %p87 = pnand %p85, %p86
    %p88 = pneg %p87
    // Predicated region
    $region21: #{encoder_forward.47} parent=5 // pred_check
      _
    $region22: #{encoder_forward.47} parent=5 // pred_check_branch
      %90 = sbr.rel (%p87) target = $region24
    $region23: #{encoder_forward.47} parent=5 // pred_region
      %s91 = ssub.s32 %s7, 1
      %p92 = scmp.lt.s32.totalorder %s12, 1
      %s93 = scalar_select %p92, %s12, 1
      %s94 = smul.addr %s93, 2
      %s95 = scalar_lea.vmem %s0, %s94
      %p96 = pneg %p33
      %p97 = pneg %p30
      %p98 = pneg %p59
      %p99 = pneg %p56
      %p100 = scmp.lt.s32.totalorder %s12, 1
      %s101 = scalar_select %p100, %s12, 1
      %s102 = smul.addr %s101, 2
      %s103 = scalar_lea.vmem %s1, %s102
      %p104 = scmp.lt.s32.totalorder %s12, 1
      %s105 = scalar_select %p104, %s12, 1
      %s106 = smul.addr %s105, 2
      %s107 = scalar_lea.vmem %s0, %s106
      %p108 = scmp.lt.s32.totalorder %s12, 1
      %s109 = scalar_select %p108, %s12, 1
      %s110 = smul.addr %s109, 2
      %s111 = scalar_lea.vmem %s1, %s110
      %v113 = vld [vmem:[%s107] sm:$0x3]
      %v116 = vunpack.c.l.s4 1983009808
      %v117 = vunpack.c.0.s8 %v116
      %v118 = vlaneseq
      %v119 = vshrl.u32 %v118, 7
      %v120 = vsub.s32 %v117, %v119
      %v121 = vrot.slane %v113, %v120
      %122 = vrot.lane.b32.xlu0 %v121, 96
      %v123 = vpop.permute.xlu0 %122
      %vm124 = vcmask 64512
      %v126 = vsel %vm124, %v113, 0
      %v129 = vsel %vm124, %v123, 0
      %131 = vmatprep.subr.bf16.mxu0 0
      %132 = vmatpush1.bf16.xpose.msra.mxu0 %v129
      %133 = vmatprep.subr.bf16.mxu0 0
      %134 = vmatpush1.bf16.xpose.msra.mxu0 0
      %135 = vmatprep.subr.bf16.mxu0 0
      %136 = vmatpush1.bf16.xpose.msra.mxu0 0
      %137 = vmatprep.subr.bf16.mxu0 0
      %138 = vmatpush1.bf16.xpose.msra.mxu0 0
      %139 = vmatprep.subr.bf16.mxu0 0
      %140 = vmatpush1.bf16.xpose.msra.mxu0 0
      %141 = vmatprep.subr.bf16.mxu0 0
      %142 = vmatpush1.bf16.xpose.msra.mxu0 0
      %143 = vmatprep.subr.bf16.mxu0 0
      %144 = vmatpush1.bf16.xpose.msra.mxu0 0
      %145 = vmatprep.subr.bf16.mxu0 0
      %146 = vmatpush1.bf16.xpose.msra.mxu0 0
      %147 = vmatprep.subr.bf16.mxu0 0
      %148 = vmatpush1.bf16.xpose.msra.mxu0 0
      %149 = vmatprep.subr.bf16.mxu0 0
      %150 = vmatpush1.bf16.xpose.msra.mxu0 0
      %151 = vmatprep.subr.bf16.mxu0 0
      %152 = vmatpush1.bf16.xpose.msra.mxu0 0
      %153 = vmatprep.subr.bf16.mxu0 0
      %154 = vmatpush1.bf16.xpose.msra.mxu0 0
      %155 = vmatprep.subr.bf16.mxu0 0
      %156 = vmatpush1.bf16.xpose.msra.mxu0 0
      %157 = vmatprep.subr.bf16.mxu0 0
      %158 = vmatpush1.bf16.xpose.msra.mxu0 0
      %159 = vmatprep.subr.bf16.mxu0 0
      %160 = vmatpush1.bf16.xpose.msra.mxu0 0
      %161 = vmatprep.subr.bf16.mxu0 0
      %162 = vmatpush1.bf16.xpose.msra.mxu0 0
      %163 = vmatprep.mubr.bf16.mxu0 0
      %164 = vmatmul.mubr.bf16.gmra.mrb[0].mxu0 %v126
      %v165 = vpop.f32.mrb[0].mxu0
      %v166 = vadd.f32 0.0, %v165
      %v167 = vpop.f32.mrb[0].mxu0
      %v168 = vpop.f32.mrb[0].mxu0
      %v169 = vpop.f32.mrb[0].mxu0
      %170 = vdwg.mxu0
      %v171 = vmul.f32 %v166, 0.35355338
      %vm172 = vcmask 27648
      %v173 = vsel %vm172, %v171, -inf
      %174 = vmax.xlane.f32.xlu0 %v173
      %v175 = vpop.xlane.xlu0 %174
      %v176 = vsub.f32 %v171, %v175
      %v177 = vmul.f32 %v176, 1.442695
      %v178 = vpow.pop %v177
      %v179 = vsel %vm172, %v178, 0.0
      %180 = vadd.xlane.f32.xlu0 %v179
      %v181 = vpop.xlane.xlu0 %180
      %v182 = vrcp.pop %v181
      %v183 = vmul.f32 %v178, %v182
      %v184 = vpack.c.bf16 %v183, %v183
      %185 = vrot.lane.b32.xlu0 %v121, 64
      %v186 = vpop.permute.xlu0 %185
      %vm187 = vcmask 31744
      %v189 = vsel %vm187, %v184, 0
      %vm191 = vcmask 1041408
      %v193 = vsel %vm191, %v186, 0
      %195 = vmatprep.subr.bf16.mxu0 0
      %196 = vmatpush1.bf16.msra.mxu0 %v193
      %197 = vmatprep.subr.bf16.mxu0 0
      %198 = vmatpush1.bf16.msra.mxu0 0
      %199 = vmatprep.subr.bf16.mxu0 0
      %200 = vmatpush1.bf16.msra.mxu0 0
      %201 = vmatprep.subr.bf16.mxu0 0
      %202 = vmatpush1.bf16.msra.mxu0 0
      %203 = vmatprep.subr.bf16.mxu0 0
      %204 = vmatpush1.bf16.msra.mxu0 0
      %205 = vmatprep.subr.bf16.mxu0 0
      %206 = vmatpush1.bf16.msra.mxu0 0
      %207 = vmatprep.subr.bf16.mxu0 0
      %208 = vmatpush1.bf16.msra.mxu0 0
      %209 = vmatprep.subr.bf16.mxu0 0
      %210 = vmatpush1.bf16.msra.mxu0 0
      %211 = vmatprep.subr.bf16.mxu0 0
      %212 = vmatpush1.bf16.msra.mxu0 0
      %213 = vmatprep.subr.bf16.mxu0 0
      %214 = vmatpush1.bf16.msra.mxu0 0
      %215 = vmatprep.subr.bf16.mxu0 0
      %216 = vmatpush1.bf16.msra.mxu0 0
      %217 = vmatprep.subr.bf16.mxu0 0
      %218 = vmatpush1.bf16.msra.mxu0 0
      %219 = vmatprep.subr.bf16.mxu0 0
      %220 = vmatpush1.bf16.msra.mxu0 0
      %221 = vmatprep.subr.bf16.mxu0 0
      %222 = vmatpush1.bf16.msra.mxu0 0
      %223 = vmatprep.subr.bf16.mxu0 0
      %224 = vmatpush1.bf16.msra.mxu0 0
      %225 = vmatprep.subr.bf16.mxu0 0
      %226 = vmatpush1.bf16.msra.mxu0 0
      %227 = vmatprep.mubr.bf16.mxu0 0
      %228 = vmatmul.mubr.bf16.gmra.mrb[0].mxu0 %v189
      %v229 = vpop.f32.mrb[0].mxu0
      %v230 = vadd.f32 0.0, %v229
      %v231 = vpop.f32.mrb[0].mxu0
      %v232 = vpop.f32.mrb[0].mxu0
      %v233 = vpop.f32.mrb[0].mxu0
      %234 = vdwg.mxu0
      %235 = vrot.lane.b32.xlu0 %v121, 120
      %v236 = vpop.permute.xlu0 %235
      %237 = vrot.lane.b32.xlu0 %v121, 88
      %v238 = vpop.permute.xlu0 %237
      %v240 = vsel %vm124, %v236, 0
      %v243 = vsel %vm124, %v238, 0
      %245 = vmatprep.subr.bf16.mxu0 0
      %246 = vmatpush1.bf16.xpose.msra.mxu0 %v243
      %247 = vmatprep.subr.bf16.mxu0 0
      %248 = vmatpush1.bf16.xpose.msra.mxu0 0
      %249 = vmatprep.subr.bf16.mxu0 0
      %250 = vmatpush1.bf16.xpose.msra.mxu0 0
      %251 = vmatprep.subr.bf16.mxu0 0
      %252 = vmatpush1.bf16.xpose.msra.mxu0 0
      %253 = vmatprep.subr.bf16.mxu0 0
      %254 = vmatpush1.bf16.xpose.msra.mxu0 0
      %255 = vmatprep.subr.bf16.mxu0 0
      %256 = vmatpush1.bf16.xpose.msra.mxu0 0
      %257 = vmatprep.subr.bf16.mxu0 0
      %258 = vmatpush1.bf16.xpose.msra.mxu0 0
      %259 = vmatprep.subr.bf16.mxu0 0
      %260 = vmatpush1.bf16.xpose.msra.mxu0 0
      %261 = vmatprep.subr.bf16.mxu0 0
      %262 = vmatpush1.bf16.xpose.msra.mxu0 0
      %263 = vmatprep.subr.bf16.mxu0 0
      %264 = vmatpush1.bf16.xpose.msra.mxu0 0
      %265 = vmatprep.subr.bf16.mxu0 0
      %266 = vmatpush1.bf16.xpose.msra.mxu0 0
      %267 = vmatprep.subr.bf16.mxu0 0
      %268 = vmatpush1.bf16.xpose.msra.mxu0 0
      %269 = vmatprep.subr.bf16.mxu0 0
      %270 = vmatpush1.bf16.xpose.msra.mxu0 0
      %271 = vmatprep.subr.bf16.mxu0 0
      %272 = vmatpush1.bf16.xpose.msra.mxu0 0
      %273 = vmatprep.subr.bf16.mxu0 0
      %274 = vmatpush1.bf16.xpose.msra.mxu0 0
      %275 = vmatprep.subr.bf16.mxu0 0
      %276 = vmatpush1.bf16.xpose.msra.mxu0 0
      %277 = vmatprep.mubr.bf16.mxu0 0
      %278 = vmatmul.mubr.bf16.gmra.mrb[0].mxu0 %v240
      %v279 = vpop.f32.mrb[0].mxu0
      %v280 = vadd.f32 0.0, %v279
      %v281 = vpop.f32.mrb[0].mxu0
      %v282 = vpop.f32.mrb[0].mxu0
      %v283 = vpop.f32.mrb[0].mxu0
      %284 = vdwg.mxu0
      %v285 = vmul.f32 %v280, 0.35355338
      %v286 = vsel %vm172, %v285, -inf
      %287 = vmax.xlane.f32.xlu0 %v286
      %v288 = vpop.xlane.xlu0 %287
      %v289 = vsub.f32 %v285, %v288
      %v290 = vmul.f32 %v289, 1.442695
      %v291 = vpow.pop %v290
      %v292 = vsel %vm172, %v291, 0.0
      %293 = vadd.xlane.f32.xlu0 %v292
      %v294 = vpop.xlane.xlu0 %293
      %v295 = vrcp.pop %v294
      %v296 = vmul.f32 %v291, %v295
      %v297 = vpack.c.bf16 %v296, %v296
      %298 = vrot.lane.b32.xlu0 %v121, 56
      %v299 = vpop.permute.xlu0 %298
      %v301 = vsel %vm187, %v297, 0
      %v304 = vsel %vm191, %v299, 0
      %306 = vmatprep.subr.bf16.mxu0 0
      %307 = vmatpush1.bf16.msra.mxu0 %v304
      %308 = vmatprep.subr.bf16.mxu0 0
      %309 = vmatpush1.bf16.msra.mxu0 0
      %310 = vmatprep.subr.bf16.mxu0 0
      %311 = vmatpush1.bf16.msra.mxu0 0
      %312 = vmatprep.subr.bf16.mxu0 0
      %313 = vmatpush1.bf16.msra.mxu0 0
      %314 = vmatprep.subr.bf16.mxu0 0
      %315 = vmatpush1.bf16.msra.mxu0 0
      %316 = vmatprep.subr.bf16.mxu0 0
      %317 = vmatpush1.bf16.msra.mxu0 0
      %318 = vmatprep.subr.bf16.mxu0 0
      %319 = vmatpush1.bf16.msra.mxu0 0
      %320 = vmatprep.subr.bf16.mxu0 0
      %321 = vmatpush1.bf16.msra.mxu0 0
      %322 = vmatprep.subr.bf16.mxu0 0
      %323 = vmatpush1.bf16.msra.mxu0 0
      %324 = vmatprep.subr.bf16.mxu0 0
      %325 = vmatpush1.bf16.msra.mxu0 0
      %326 = vmatprep.subr.bf16.mxu0 0
      %327 = vmatpush1.bf16.msra.mxu0 0
      %328 = vmatprep.subr.bf16.mxu0 0
      %329 = vmatpush1.bf16.msra.mxu0 0
      %330 = vmatprep.subr.bf16.mxu0 0
      %331 = vmatpush1.bf16.msra.mxu0 0
      %332 = vmatprep.subr.bf16.mxu0 0
      %333 = vmatpush1.bf16.msra.mxu0 0
      %334 = vmatprep.subr.bf16.mxu0 0
      %335 = vmatpush1.bf16.msra.mxu0 0
      %336 = vmatprep.subr.bf16.mxu0 0
      %337 = vmatpush1.bf16.msra.mxu0 0
      %338 = vmatprep.mubr.bf16.mxu0 0
      %339 = vmatmul.mubr.bf16.gmra.mrb[0].mxu0 %v301
      %v340 = vpop.f32.mrb[0].mxu0
      %v341 = vadd.f32 0.0, %v340
      %v342 = vpop.f32.mrb[0].mxu0
      %v343 = vpop.f32.mrb[0].mxu0
      %v344 = vpop.f32.mrb[0].mxu0
      %345 = vdwg.mxu0
      %346 = vrot.lane.b32.xlu0 %v121, 112
      %v347 = vpop.permute.xlu0 %346
      %348 = vrot.lane.b32.xlu0 %v121, 80
      %v349 = vpop.permute.xlu0 %348
      %v351 = vsel %vm124, %v347, 0
      %v354 = vsel %vm124, %v349, 0
      %356 = vmatprep.subr.bf16.mxu0 0
      %357 = vmatpush1.bf16.xpose.msra.mxu0 %v354
      %358 = vmatprep.subr.bf16.mxu0 0
      %359 = vmatpush1.bf16.xpose.msra.mxu0 0
      %360 = vmatprep.subr.bf16.mxu0 0
      %361 = vmatpush1.bf16.xpose.msra.mxu0 0
      %362 = vmatprep.subr.bf16.mxu0 0
      %363 = vmatpush1.bf16.xpose.msra.mxu0 0
      %364 = vmatprep.subr.bf16.mxu0 0
      %365 = vmatpush1.bf16.xpose.msra.mxu0 0
      %366 = vmatprep.subr.bf16.mxu0 0
      %367 = vmatpush1.bf16.xpose.msra.mxu0 0
      %368 = vmatprep.subr.bf16.mxu0 0
      %369 = vmatpush1.bf16.xpose.msra.mxu0 0
      %370 = vmatprep.subr.bf16.mxu0 0
      %371 = vmatpush1.bf16.xpose.msra.mxu0 0
      %372 = vmatprep.subr.bf16.mxu0 0
      %373 = vmatpush1.bf16.xpose.msra.mxu0 0
      %374 = vmatprep.subr.bf16.mxu0 0
      %375 = vmatpush1.bf16.xpose.msra.mxu0 0
      %376 = vmatprep.subr.bf16.mxu0 0
      %377 = vmatpush1.bf16.xpose.msra.mxu0 0
      %378 = vmatprep.subr.bf16.mxu0 0
      %379 = vmatpush1.bf16.xpose.msra.mxu0 0
      %380 = vmatprep.subr.bf16.mxu0 0
      %381 = vmatpush1.bf16.xpose.msra.mxu0 0
      %382 = vmatprep.subr.bf16.mxu0 0
      %383 = vmatpush1.bf16.xpose.msra.mxu0 0
      %384 = vmatprep.subr.bf16.mxu0 0
      %385 = vmatpush1.bf16.xpose.msra.mxu0 0
      %386 = vmatprep.subr.bf16.mxu0 0
      %387 = vmatpush1.bf16.xpose.msra.mxu0 0
      %388 = vmatprep.mubr.bf16.mxu0 0
      %389 = vmatmul.mubr.bf16.gmra.mrb[0].mxu0 %v351
      %v390 = vpop.f32.mrb[0].mxu0
      %v391 = vadd.f32 0.0, %v390
      %v392 = vpop.f32.mrb[0].mxu0
      %v393 = vpop.f32.mrb[0].mxu0
      %v394 = vpop.f32.mrb[0].mxu0
      %395 = vdwg.mxu0
      %v396 = vmul.f32 %v391, 0.35355338
      %v397 = vsel %vm172, %v396, -inf
      %398 = vmax.xlane.f32.xlu0 %v397
      %v399 = vpop.xlane.xlu0 %398
      %v400 = vsub.f32 %v396, %v399
      %v401 = vmul.f32 %v400, 1.442695
      %v402 = vpow.pop %v401
      %v403 = vsel %vm172, %v402, 0.0
      %404 = vadd.xlane.f32.xlu0 %v403
      %v405 = vpop.xlane.xlu0 %404
      %v406 = vrcp.pop %v405
      %v407 = vmul.f32 %v402, %v406
      %v408 = vpack.c.bf16 %v407, %v407
      %409 = vrot.lane.b32.xlu0 %v121, 48
      %v410 = vpop.permute.xlu0 %409
      %v412 = vsel %vm187, %v408, 0
      %v415 = vsel %vm191, %v410, 0
      %417 = vmatprep.subr.bf16.mxu0 0
      %418 = vmatpush1.bf16.msra.mxu0 %v415
      %419 = vmatprep.subr.bf16.mxu0 0
      %420 = vmatpush1.bf16.msra.mxu0 0
      %421 = vmatprep.subr.bf16.mxu0 0
      %422 = vmatpush1.bf16.msra.mxu0 0
      %423 = vmatprep.subr.bf16.mxu0 0
      %424 = vmatpush1.bf16.msra.mxu0 0
      %425 = vmatprep.subr.bf16.mxu0 0
      %426 = vmatpush1.bf16.msra.mxu0 0
      %427 = vmatprep.subr.bf16.mxu0 0
      %428 = vmatpush1.bf16.msra.mxu0 0
      %429 = vmatprep.subr.bf16.mxu0 0
      %430 = vmatpush1.bf16.msra.mxu0 0
      %431 = vmatprep.subr.bf16.mxu0 0
      %432 = vmatpush1.bf16.msra.mxu0 0
      %433 = vmatprep.subr.bf16.mxu0 0
      %434 = vmatpush1.bf16.msra.mxu0 0
      %435 = vmatprep.subr.bf16.mxu0 0
      %436 = vmatpush1.bf16.msra.mxu0 0
      %437 = vmatprep.subr.bf16.mxu0 0
      %438 = vmatpush1.bf16.msra.mxu0 0
      %439 = vmatprep.subr.bf16.mxu0 0
      %440 = vmatpush1.bf16.msra.mxu0 0
      %441 = vmatprep.subr.bf16.mxu0 0
      %442 = vmatpush1.bf16.msra.mxu0 0
      %443 = vmatprep.subr.bf16.mxu0 0
      %444 = vmatpush1.bf16.msra.mxu0 0
      %445 = vmatprep.subr.bf16.mxu0 0
      %446 = vmatpush1.bf16.msra.mxu0 0
      %447 = vmatprep.subr.bf16.mxu0 0
      %448 = vmatpush1.bf16.msra.mxu0 0
      %449 = vmatprep.mubr.bf16.mxu0 0
      %450 = vmatmul.mubr.bf16.gmra.mrb[0].mxu0 %v412
      %v451 = vpop.f32.mrb[0].mxu0
      %v452 = vadd.f32 0.0, %v451
      %v453 = vpop.f32.mrb[0].mxu0
      %v454 = vpop.f32.mrb[0].mxu0
      %v455 = vpop.f32.mrb[0].mxu0
      %456 = vdwg.mxu0
      %457 = vrot.lane.b32.xlu0 %v121, 104
      %v458 = vpop.permute.xlu0 %457
      %459 = vrot.lane.b32.xlu0 %v121, 72
      %v460 = vpop.permute.xlu0 %459
      %v462 = vsel %vm124, %v458, 0
      %v465 = vsel %vm124, %v460, 0
      %467 = vmatprep.subr.bf16.mxu0 0
      %468 = vmatpush1.bf16.xpose.msra.mxu0 %v465
      %469 = vmatprep.subr.bf16.mxu0 0
      %470 = vmatpush1.bf16.xpose.msra.mxu0 0
      %471 = vmatprep.subr.bf16.mxu0 0
      %472 = vmatpush1.bf16.xpose.msra.mxu0 0
      %473 = vmatprep.subr.bf16.mxu0 0
      %474 = vmatpush1.bf16.xpose.msra.mxu0 0
      %475 = vmatprep.subr.bf16.mxu0 0
      %476 = vmatpush1.bf16.xpose.msra.mxu0 0
      %477 = vmatprep.subr.bf16.mxu0 0
      %478 = vmatpush1.bf16.xpose.msra.mxu0 0
      %479 = vmatprep.subr.bf16.mxu0 0
      %480 = vmatpush1.bf16.xpose.msra.mxu0 0
      %481 = vmatprep.subr.bf16.mxu0 0
      %482 = vmatpush1.bf16.xpose.msra.mxu0 0
      %483 = vmatprep.subr.bf16.mxu0 0
      %484 = vmatpush1.bf16.xpose.msra.mxu0 0
      %485 = vmatprep.subr.bf16.mxu0 0
      %486 = vmatpush1.bf16.xpose.msra.mxu0 0
      %487 = vmatprep.subr.bf16.mxu0 0
      %488 = vmatpush1.bf16.xpose.msra.mxu0 0
      %489 = vmatprep.subr.bf16.mxu0 0
      %490 = vmatpush1.bf16.xpose.msra.mxu0 0
      %491 = vmatprep.subr.bf16.mxu0 0
      %492 = vmatpush1.bf16.xpose.msra.mxu0 0
      %493 = vmatprep.subr.bf16.mxu0 0
      %494 = vmatpush1.bf16.xpose.msra.mxu0 0
      %495 = vmatprep.subr.bf16.mxu0 0
      %496 = vmatpush1.bf16.xpose.msra.mxu0 0
      %497 = vmatprep.subr.bf16.mxu0 0
      %498 = vmatpush1.bf16.xpose.msra.mxu0 0
      %499 = vmatprep.mubr.bf16.mxu0 0
      %500 = vmatmul.mubr.bf16.gmra.mrb[0].mxu0 %v462
      %v501 = vpop.f32.mrb[0].mxu0
      %v502 = vadd.f32 0.0, %v501
      %v503 = vpop.f32.mrb[0].mxu0
      %v504 = vpop.f32.mrb[0].mxu0
      %v505 = vpop.f32.mrb[0].mxu0
      %506 = vdwg.mxu0
      %v507 = vmul.f32 %v502, 0.35355338
      %v508 = vsel %vm172, %v507, -inf
      %509 = vmax.xlane.f32.xlu0 %v508
      %v510 = vpop.xlane.xlu0 %509
      %v511 = vsub.f32 %v507, %v510
      %v512 = vmul.f32 %v511, 1.442695
      %v513 = vpow.pop %v512
      %v514 = vsel %vm172, %v513, 0.0
      %515 = vadd.xlane.f32.xlu0 %v514
      %v516 = vpop.xlane.xlu0 %515
      %v517 = vrcp.pop %v516
      %v518 = vmul.f32 %v513, %v517
      %v519 = vpack.c.bf16 %v518, %v518
      %520 = vrot.lane.b32.xlu0 %v121, 40
      %v521 = vpop.permute.xlu0 %520
      %v523 = vsel %vm187, %v519, 0
      %v526 = vsel %vm191, %v521, 0
      %528 = vmatprep.subr.bf16.mxu0 0
      %529 = vmatpush1.bf16.msra.mxu0 %v526
      %530 = vmatprep.subr.bf16.mxu0 0
      %531 = vmatpush1.bf16.msra.mxu0 0
      %532 = vmatprep.subr.bf16.mxu0 0
      %533 = vmatpush1.bf16.msra.mxu0 0
      %534 = vmatprep.subr.bf16.mxu0 0
      %535 = vmatpush1.bf16.msra.mxu0 0
      %536 = vmatprep.subr.bf16.mxu0 0
      %537 = vmatpush1.bf16.msra.mxu0 0
      %538 = vmatprep.subr.bf16.mxu0 0
      %539 = vmatpush1.bf16.msra.mxu0 0
      %540 = vmatprep.subr.bf16.mxu0 0
      %541 = vmatpush1.bf16.msra.mxu0 0
      %542 = vmatprep.subr.bf16.mxu0 0
      %543 = vmatpush1.bf16.msra.mxu0 0
      %544 = vmatprep.subr.bf16.mxu0 0
      %545 = vmatpush1.bf16.msra.mxu0 0
      %546 = vmatprep.subr.bf16.mxu0 0
      %547 = vmatpush1.bf16.msra.mxu0 0
      %548 = vmatprep.subr.bf16.mxu0 0
      %549 = vmatpush1.bf16.msra.mxu0 0
      %550 = vmatprep.subr.bf16.mxu0 0
      %551 = vmatpush1.bf16.msra.mxu0 0
      %552 = vmatprep.subr.bf16.mxu0 0
      %553 = vmatpush1.bf16.msra.mxu0 0
      %554 = vmatprep.subr.bf16.mxu0 0
      %555 = vmatpush1.bf16.msra.mxu0 0
      %556 = vmatprep.subr.bf16.mxu0 0
      %557 = vmatpush1.bf16.msra.mxu0 0
      %558 = vmatprep.subr.bf16.mxu0 0
      %559 = vmatpush1.bf16.msra.mxu0 0
      %560 = vmatprep.mubr.bf16.mxu0 0
      %561 = vmatmul.mubr.bf16.gmra.mrb[0].mxu0 %v523
      %v562 = vpop.f32.mrb[0].mxu0
      %v563 = vadd.f32 0.0, %v562
      %v564 = vpop.f32.mrb[0].mxu0
      %v565 = vpop.f32.mrb[0].mxu0
      %v566 = vpop.f32.mrb[0].mxu0
      %567 = vdwg.mxu0
      %569 = vrot.lane.b32.xlu0 %v341, 8
      %v570 = vpop.permute.xlu0 %569
      %573 = vrot.lane.b32.xlu0 %v452, 16
      %v574 = vpop.permute.xlu0 %573
      %577 = vrot.lane.b32.xlu0 %v563, 24
      %v578 = vpop.permute.xlu0 %577
      %v580 = vsel %vm124, %v230, %v570
      %vm581 = vcmask 130048
      %v582 = vsel %vm581, %v580, %v574
      %vm583 = vcmask 195584
      %v584 = vsel %vm583, %v582, %v578
      %v585 = vpack.c.bf16 %v584, %v584
      %vm586 = vcmask 254976
      %587 = vst.msk [vmem:[%s111] sm:$0x3] %vm586, %v585
      %p588 = scmp.lt.s32.totalorder %s12, 1
      %s589 = scalar_select %p588, %s12, 1
      %s590 = smul.addr %s589, 2
      %s591 = scalar_lea.vmem %s1, %s590
      // Predicated region
      $region25: #{encoder_forward.47} parent=23 // pred_check
        %p592 = pneg %p56
      $region26: #{encoder_forward.47} parent=23 // pred_check_branch
        %594 = sbr.rel (%p592) target = $region28
      $region27: #{encoder_forward.47} parent=23 // pred_region
        _
      $region28: #{encoder_forward.47} parent=23 // pred_fallthru
        _
    $region24: #{encoder_forward.47} parent=5 // pred_fallthru
      _
    %p595 = scmp.le.s32.totalorder 2, %s7
    // Predicated region
    $region29: #{encoder_forward.47} parent=5 // pred_check
      %p596 = pneg %p595
    $region30: #{encoder_forward.47} parent=5 // pred_check_branch
      %598 = sbr.rel (%p596) target = $region32
    $region31: #{encoder_forward.47} parent=5 // pred_region
      %s599 = ssub.s32 %s7, 2
      // Predicated region
      $region33: #{encoder_forward.47} parent=31 // pred_check
        %p600 = pneg %p62
      $region34: #{encoder_forward.47} parent=31 // pred_check_branch
        %602 = sbr.rel (%p600) target = $region36
      $region35: #{encoder_forward.47} parent=31 // pred_region
        %p603 = scmp.lt.s32.totalorder %s13, 1
        %s604 = scalar_select %p603, %s13, 1
        %s605 = smul.addr %s604, 2
        %s606 = scalar_lea.vmem %s1, %s605
      $region36: #{encoder_forward.47} parent=31 // pred_fallthru
        _
    $region32: #{encoder_forward.47} parent=5 // pred_fallthru
      _
  $region6: #{encoder_forward.47} parent=0 // loop_footer
    %s11 = sadd.s32 1, %s7
  $region7: #{encoder_forward.47} parent=0 // loop_footer_branch
    %6 = sbr.rel target = $region3
  $region8: #{encoder_forward.47} parent=0 // loop_exit
    _

// kernel: encoder_forward.48
$region0: #{encoder_forward.48}
  #allocation0 [shape = 'u32[]', space=smem, size = 0x4, offset = 0x4, fixed_abs, tag = 'smem constant byte address 0x4 - core index']
  #allocation1 [shape = 'u32[144,128]{1,0:T(1,128)}', space=vmem, size = 0x12000, scoped, tag = 'internal scratch']
  %s0 = inlined_call_operand.vmem [shape: bf16[8,32], index: 0, kind: input, shape index: {}]
  %s1 = inlined_call_operand.vmem [shape: bf16[32,32], index: 1, kind: input, shape index: {}]
  %s2 = inlined_call_operand.vmem [shape: f32[1,32], index: 2, kind: input, shape index: {}]
  %s3 = inlined_call_operand.vmem [shape: bf16[8,32], index: 3, kind: input, shape index: {}]
  %s4 = inlined_call_operand.vmem [shape: bf16[8,32], index: 4, kind: output, shape index: {}]
  %s5 = sld [smem:[#allocation0]]
  $region26: #{encoder_forward.48} parent=0
    _
  %s7 = ssub.s32 1, %s5
  %s8 = scalar_select 0, %s7, %s5
  // Predicated region
  $region2: #{encoder_forward.48} parent=0 // pred_check
    _
  $region3: #{encoder_forward.48} parent=0 // pred_check_branch
    %10 = sbr.rel (0) target = $region5
  $region4: #{encoder_forward.48} parent=0 // pred_region
    _
  $region5: #{encoder_forward.48} parent=0 // pred_fallthru
    _
  // Predicated region
  $region6: #{encoder_forward.48} parent=0 // pred_check
    _
  $region7: #{encoder_forward.48} parent=0 // pred_check_branch
    %12 = sbr.rel (0) target = $region9
  $region8: #{encoder_forward.48} parent=0 // pred_region
    _
  $region9: #{encoder_forward.48} parent=0 // pred_fallthru
    _
  // Predicated region
  $region10: #{encoder_forward.48} parent=0 // pred_check
    _
  $region11: #{encoder_forward.48} parent=0 // pred_check_branch
    %14 = sbr.rel (0) target = $region13
  $region12: #{encoder_forward.48} parent=0 // pred_region
    _
  $region13: #{encoder_forward.48} parent=0 // pred_fallthru
    _
  // Predicated region
  $region14: #{encoder_forward.48} parent=0 // pred_check
    _
  $region15: #{encoder_forward.48} parent=0 // pred_check_branch
    %16 = sbr.rel (0) target = $region17
  $region16: #{encoder_forward.48} parent=0 // pred_region
    _
  $region17: #{encoder_forward.48} parent=0 // pred_fallthru
    _
  %v18 = vld [vmem:[%s0] sm:$0xf]
  %v19 = vld [vmem:[%s1] sm:$0xf]
  %v20 = vld [vmem:[%s1 + $0x4] sm:$0xf]
  %v21 = vld [vmem:[%s1 + $0x8] sm:$0xf]
  %v22 = vld [vmem:[%s1 + $0xc] sm:$0xf]
  %v23 = vld [vmem:[%s2] sm:$0x1]
  %v25 = vlaneseq
  %v26 = vshrl.u32 %v25, 7
  %v27 = vsub.s32 0, %v26
  %v28 = vrot.slane %v23, %v27
  %v34 = vunpack.c.l.b16 %v19
  %v35 = vunpack.c.l.b16 %v20
  %v36 = vunpack.c.l.b16 %v21
  %v37 = vunpack.c.l.b16 %v22
  %v38 = vpack.c.b16 %v35, %v34
  %v39 = vpack.c.b16 %v37, %v36
  %vm42 = vcmask 261120
  %v44 = vsel %vm42, %v18, 0
  %46 = vmatprep.subr.bf16.mxu0 0
  %47 = vmatpush1.bf16.msra.mxu0 %v38
  %48 = vmatprep.subr.bf16.mxu0 0
  %49 = vmatpush1.bf16.msra.mxu0 %v39
  %50 = vmatprep.subr.bf16.mxu0 0
  %51 = vmatpush1.bf16.msra.mxu0 0
  %52 = vmatprep.subr.bf16.mxu0 0
  %53 = vmatpush1.bf16.msra.mxu0 0
  %54 = vmatprep.subr.bf16.mxu0 0
  %55 = vmatpush1.bf16.msra.mxu0 0
  %56 = vmatprep.subr.bf16.mxu0 0
  %57 = vmatpush1.bf16.msra.mxu0 0
  %58 = vmatprep.subr.bf16.mxu0 0
  %59 = vmatpush1.bf16.msra.mxu0 0
  %60 = vmatprep.subr.bf16.mxu0 0
  %61 = vmatpush1.bf16.msra.mxu0 0
  %62 = vmatprep.subr.bf16.mxu0 0
  %63 = vmatpush1.bf16.msra.mxu0 0
  %64 = vmatprep.subr.bf16.mxu0 0
  %65 = vmatpush1.bf16.msra.mxu0 0
  %66 = vmatprep.subr.bf16.mxu0 0
  %67 = vmatpush1.bf16.msra.mxu0 0
  %68 = vmatprep.subr.bf16.mxu0 0
  %69 = vmatpush1.bf16.msra.mxu0 0
  %70 = vmatprep.subr.bf16.mxu0 0
  %71 = vmatpush1.bf16.msra.mxu0 0
  %72 = vmatprep.subr.bf16.mxu0 0
  %73 = vmatpush1.bf16.msra.mxu0 0
  %74 = vmatprep.subr.bf16.mxu0 0
  %75 = vmatpush1.bf16.msra.mxu0 0
  %76 = vmatprep.subr.bf16.mxu0 0
  %77 = vmatpush1.bf16.msra.mxu0 0
  %78 = vmatprep.mubr.bf16.mxu0 0
  %79 = vmatmul.mubr.bf16.gmra.mrb[0].mxu0 %v44
  %v80 = vpop.f32.mrb[0].mxu0
  %v81 = vadd.f32 %v28, %v80
  %v82 = vpop.f32.mrb[0].mxu0
  %v83 = vpop.f32.mrb[0].mxu0
  %v84 = vpop.f32.mrb[0].mxu0
  %85 = vdwg.mxu0
  %v86 = vld [vmem:[%s3] sm:$0xf]
  %v87 = vunpack.c.l.bf16 %v86
  %v88 = vadd.f32 %v81, %v87
  %v89 = vpack.c.bf16 %v88, %v88
  %vm90 = vcmask 257024
  %91 = vst.msk [vmem:[%s4] sm:$0xf] %vm90, %v89
  // Predicated region
  $region18: #{encoder_forward.48} parent=0 // pred_check
    _
  $region19: #{encoder_forward.48} parent=0 // pred_check_branch
    %93 = sbr.rel (0) target = $region21
  $region20: #{encoder_forward.48} parent=0 // pred_region
    _
  $region21: #{encoder_forward.48} parent=0 // pred_fallthru
    _
  // Predicated region
  $region22: #{encoder_forward.48} parent=0 // pred_check
    _
  $region23: #{encoder_forward.48} parent=0 // pred_check_branch
    %95 = sbr.rel (0) target = $region25
  $region24: #{encoder_forward.48} parent=0 // pred_region
    _
  $region25: #{encoder_forward.48} parent=0 // pred_fallthru
    _

// kernel: encoder_forward.49
$region0: #{encoder_forward.49}
  #allocation0 [shape = 'u32[]', space=smem, size = 0x4, offset = 0x4, fixed_abs, tag = 'smem constant byte address 0x4 - core index']
  #allocation1 [shape = 'u32[144,128]{1,0:T(1,128)}', space=vmem, size = 0x12000, scoped, tag = 'internal scratch']
  %s0 = inlined_call_operand.vmem [shape: bf16[8,32], index: 0, kind: input, shape index: {}]
  %s1 = inlined_call_operand.vmem [shape: f32[1,32], index: 1, kind: input, shape index: {}]
  %s2 = inlined_call_operand.vmem [shape: f32[1,32], index: 2, kind: input, shape index: {}]
  %s3 = inlined_call_operand.vmem [shape: bf16[32,64], index: 3, kind: input, shape index: {}]
  %s4 = inlined_call_operand.vmem [shape: f32[1,64], index: 4, kind: input, shape index: {}]
  %s5 = inlined_call_operand.vmem [shape: bf16[8,64], index: 5, kind: output, shape index: {}]
  %s6 = sld [smem:[#allocation0]]
  $region30: #{encoder_forward.49} parent=0
    _
  %s8 = ssub.s32 1, %s6
  %s9 = scalar_select 0, %s8, %s6
  // Predicated region
  $region2: #{encoder_forward.49} parent=0 // pred_check
    _
  $region3: #{encoder_forward.49} parent=0 // pred_check_branch
    %11 = sbr.rel (0) target = $region5
  $region4: #{encoder_forward.49} parent=0 // pred_region
    _
  $region5: #{encoder_forward.49} parent=0 // pred_fallthru
    _
  // Predicated region
  $region6: #{encoder_forward.49} parent=0 // pred_check
    _
  $region7: #{encoder_forward.49} parent=0 // pred_check_branch
    %13 = sbr.rel (0) target = $region9
  $region8: #{encoder_forward.49} parent=0 // pred_region
    _
  $region9: #{encoder_forward.49} parent=0 // pred_fallthru
    _
  // Predicated region
  $region10: #{encoder_forward.49} parent=0 // pred_check
    _
  $region11: #{encoder_forward.49} parent=0 // pred_check_branch
    %15 = sbr.rel (0) target = $region13
  $region12: #{encoder_forward.49} parent=0 // pred_region
    _
  $region13: #{encoder_forward.49} parent=0 // pred_fallthru
    _
  // Predicated region
  $region14: #{encoder_forward.49} parent=0 // pred_check
    _
  $region15: #{encoder_forward.49} parent=0 // pred_check_branch
    %17 = sbr.rel (0) target = $region17
  $region16: #{encoder_forward.49} parent=0 // pred_region
    _
  $region17: #{encoder_forward.49} parent=0 // pred_fallthru
    _
  // Predicated region
  $region18: #{encoder_forward.49} parent=0 // pred_check
    _
  $region19: #{encoder_forward.49} parent=0 // pred_check_branch
    %19 = sbr.rel (0) target = $region21
  $region20: #{encoder_forward.49} parent=0 // pred_region
    _
  $region21: #{encoder_forward.49} parent=0 // pred_fallthru
    _
  %v21 = vld [vmem:[%s0] sm:$0xf]
  %v22 = vunpack.c.l.bf16 %v21
  %vm23 = vcmask 261120
  %v24 = vsel %vm23, %v22, 0.0
  %25 = vadd.xlane.f32.xlu0 %v24
  %v26 = vpop.xlane.xlu0 %25
  %v27 = vrcp.pop 32.0
  %v28 = vmul.f32 %v26, %v27
  %v29 = vsub.f32 %v22, %v28
  %v30 = vmul.f32 %v29, %v29
  %v31 = vsel %vm23, %v30, 0.0
  %32 = vadd.xlane.f32.xlu0 %v31
  %v33 = vpop.xlane.xlu0 %32
  %v34 = vmul.f32 %v33, %v27
  %v35 = vadd.f32 %v34, 1e-06
  %v36 = vrsqrt.pop %v35
  %v37 = vmul.f32 %v29, %v36
  %v38 = vld [vmem:[%s1] sm:$0x1]
  %v40 = vlaneseq
  %v41 = vshrl.u32 %v40, 7
  %v42 = vsub.s32 0, %v41
  %v43 = vrot.slane %v38, %v42
  %v45 = vmul.f32 %v37, %v43
  %v46 = vld [vmem:[%s2] sm:$0x1]
  %v48 = vlaneseq
  %v49 = vshrl.u32 %v48, 7
  %v50 = vsub.s32 0, %v49
  %v51 = vrot.slane %v46, %v50
  %v53 = vadd.f32 %v45, %v51
  %v54 = vpack.c.bf16 %v53, %v53
  %v55 = vld [vmem:[%s3] sm:$0xf]
  %v56 = vld [vmem:[%s3 + $0x4] sm:$0xf]
  %v57 = vld [vmem:[%s3 + $0x8] sm:$0xf]
  %v58 = vld [vmem:[%s3 + $0xc] sm:$0xf]
  %v59 = vld [vmem:[%s4] sm:$0x1]
  %v61 = vlaneseq
  %v62 = vshrl.u32 %v61, 7
  %v63 = vsub.s32 0, %v62
  %v64 = vrot.slane %v59, %v63
  %v70 = vunpack.c.l.b16 %v55
  %v71 = vunpack.c.l.b16 %v56
  %v72 = vunpack.c.l.b16 %v57
  %v73 = vunpack.c.l.b16 %v58
  %v74 = vpack.c.b16 %v71, %v70
  %v75 = vpack.c.b16 %v73, %v72
  %v79 = vsel %vm23, %v54, 0
  %81 = vmatprep.subr.bf16.mxu0 0
  %82 = vmatpush1.bf16.msra.mxu0 %v74
  %83 = vmatprep.subr.bf16.mxu0 0
  %84 = vmatpush1.bf16.msra.mxu0 %v75
  %85 = vmatprep.subr.bf16.mxu0 0
  %86 = vmatpush1.bf16.msra.mxu0 0
  %87 = vmatprep.subr.bf16.mxu0 0
  %88 = vmatpush1.bf16.msra.mxu0 0
  %89 = vmatprep.subr.bf16.mxu0 0
  %90 = vmatpush1.bf16.msra.mxu0 0
  %91 = vmatprep.subr.bf16.mxu0 0
  %92 = vmatpush1.bf16.msra.mxu0 0
  %93 = vmatprep.subr.bf16.mxu0 0
  %94 = vmatpush1.bf16.msra.mxu0 0
  %95 = vmatprep.subr.bf16.mxu0 0
  %96 = vmatpush1.bf16.msra.mxu0 0
  %97 = vmatprep.subr.bf16.mxu0 0
  %98 = vmatpush1.bf16.msra.mxu0 0
  %99 = vmatprep.subr.bf16.mxu0 0
  %100 = vmatpush1.bf16.msra.mxu0 0
  %101 = vmatprep.subr.bf16.mxu0 0
  %102 = vmatpush1.bf16.msra.mxu0 0
  %103 = vmatprep.subr.bf16.mxu0 0
  %104 = vmatpush1.bf16.msra.mxu0 0
  %105 = vmatprep.subr.bf16.mxu0 0
  %106 = vmatpush1.bf16.msra.mxu0 0
  %107 = vmatprep.subr.bf16.mxu0 0
  %108 = vmatpush1.bf16.msra.mxu0 0
  %109 = vmatprep.subr.bf16.mxu0 0
  %110 = vmatpush1.bf16.msra.mxu0 0
  %111 = vmatprep.subr.bf16.mxu0 0
  %112 = vmatpush1.bf16.msra.mxu0 0
  %113 = vmatprep.mubr.bf16.mxu0 0
  %114 = vmatmul.mubr.bf16.gmra.mrb[0].mxu0 %v79
  %v115 = vpop.f32.mrb[0].mxu0
  %v116 = vadd.f32 %v64, %v115
  %v117 = vpop.f32.mrb[0].mxu0
  %v118 = vpop.f32.mrb[0].mxu0
  %v119 = vpop.f32.mrb[0].mxu0
  %120 = vdwg.mxu0
  %v121 = vmul.f32 %v116, %v116
  %v122 = vmul.f32 %v116, %v121
  %v123 = vmul.f32 %v122, 0.044715
  %v124 = vadd.f32 %v116, %v123
  %v125 = vmul.f32 %v124, 0.7978846
  %v126 = vtanh.pop %v125
  %v127 = vadd.f32 %v126, 1.0
  %v128 = vmul.f32 %v127, 0.5
  %v129 = vmul.f32 %v116, %v128
  %v130 = vpack.c.bf16 %v129, %v129
  %vm131 = vcmask 519168
  %132 = vst.msk [vmem:[%s5] sm:$0xf] %vm131, %v130
  // Predicated region
  $region22: #{encoder_forward.49} parent=0 // pred_check
    _
  $region23: #{encoder_forward.49} parent=0 // pred_check_branch
    %134 = sbr.rel (0) target = $region25
  $region24: #{encoder_forward.49} parent=0 // pred_region
    _
  $region25: #{encoder_forward.49} parent=0 // pred_fallthru
    _
  // Predicated region
  $region26: #{encoder_forward.49} parent=0 // pred_check
    _
  $region27: #{encoder_forward.49} parent=0 // pred_check_branch
    %136 = sbr.rel (0) target = $region29
  $region28: #{encoder_forward.49} parent=0 // pred_region
    _
  $region29: #{encoder_forward.49} parent=0 // pred_fallthru
    _

// kernel: encoder_forward.41
$region0: #{encoder_forward.41}
  #allocation0 [shape = 'u32[]', space=smem, size = 0x4, offset = 0x4, fixed_abs, tag = 'smem constant byte address 0x4 - core index']
  #allocation1 [shape = 'u32[144,128]{1,0:T(1,128)}', space=vmem, size = 0x12000, scoped, tag = 'internal scratch']
  %s0 = inlined_call_operand.vmem [shape: bf16[16,32], index: 0, kind: input, shape index: {}]
  %s1 = inlined_call_operand.vmem [shape: f32[1,32], index: 1, kind: input, shape index: {}]
  %s2 = inlined_call_operand.vmem [shape: f32[1,32], index: 2, kind: input, shape index: {}]
  %s3 = inlined_call_operand.vmem [shape: bf16[32,96], index: 3, kind: input, shape index: {}]
  %s4 = inlined_call_operand.vmem [shape: f32[1,96], index: 4, kind: input, shape index: {}]
  %s5 = inlined_call_operand.vmem [shape: bf16[16,96], index: 5, kind: output, shape index: {}]
  %s6 = sld [smem:[#allocation0]]
  $region30: #{encoder_forward.41} parent=0
    _
  %s8 = ssub.s32 1, %s6
  %s9 = scalar_select 0, %s8, %s6
  // Predicated region
  $region2: #{encoder_forward.41} parent=0 // pred_check
    _
  $region3: #{encoder_forward.41} parent=0 // pred_check_branch
    %11 = sbr.rel (0) target = $region5
  $region4: #{encoder_forward.41} parent=0 // pred_region
    _
  $region5: #{encoder_forward.41} parent=0 // pred_fallthru
    _
  // Predicated region
  $region6: #{encoder_forward.41} parent=0 // pred_check
    _
  $region7: #{encoder_forward.41} parent=0 // pred_check_branch
    %13 = sbr.rel (0) target = $region9
  $region8: #{encoder_forward.41} parent=0 // pred_region
    _
  $region9: #{encoder_forward.41} parent=0 // pred_fallthru
    _
  // Predicated region
  $region10: #{encoder_forward.41} parent=0 // pred_check
    _
  $region11: #{encoder_forward.41} parent=0 // pred_check_branch
    %15 = sbr.rel (0) target = $region13
  $region12: #{encoder_forward.41} parent=0 // pred_region
    _
  $region13: #{encoder_forward.41} parent=0 // pred_fallthru
    _
  // Predicated region
  $region14: #{encoder_forward.41} parent=0 // pred_check
    _
  $region15: #{encoder_forward.41} parent=0 // pred_check_branch
    %17 = sbr.rel (0) target = $region17
  $region16: #{encoder_forward.41} parent=0 // pred_region
    _
  $region17: #{encoder_forward.41} parent=0 // pred_fallthru
    _
  // Predicated region
  $region18: #{encoder_forward.41} parent=0 // pred_check
    _
  $region19: #{encoder_forward.41} parent=0 // pred_check_branch
    %19 = sbr.rel (0) target = $region21
  $region20: #{encoder_forward.41} parent=0 // pred_region
    _
  $region21: #{encoder_forward.41} parent=0 // pred_fallthru
    _
  %v21 = vld [vmem:[%s0] sm:$0xf]
  %v22 = vld [vmem:[%s0 + $0x4] sm:$0xf]
  %v23 = vunpack.c.l.bf16 %v21
  %v24 = vunpack.c.l.bf16 %v22
  %vm25 = vcmask 261120
  %v26 = vsel %vm25, %v23, 0.0
  %27 = vadd.xlane.f32.xlu0 %v26
  %v28 = vpop.xlane.xlu0 %27
  %v29 = vsel %vm25, %v24, 0.0
  %30 = vadd.xlane.f32.xlu0 %v29
  %v31 = vpop.xlane.xlu0 %30
  %v32 = vrcp.pop 32.0
  %v33 = vmul.f32 %v28, %v32
  %v34 = vmul.f32 %v31, %v32
  %v35 = vsub.f32 %v23, %v33
  %v36 = vsub.f32 %v24, %v34
  %v37 = vmul.f32 %v35, %v35
  %v38 = vmul.f32 %v36, %v36
  %v39 = vsel %vm25, %v37, 0.0
  %40 = vadd.xlane.f32.xlu0 %v39
  %v41 = vpop.xlane.xlu0 %40
  %v42 = vsel %vm25, %v38, 0.0
  %43 = vadd.xlane.f32.xlu0 %v42
  %v44 = vpop.xlane.xlu0 %43
  %v45 = vmul.f32 %v41, %v32
  %v46 = vmul.f32 %v44, %v32
  %v47 = vadd.f32 %v45, 1e-06
  %v48 = vadd.f32 %v46, 1e-06
  %v49 = vrsqrt.pop %v47
  %v50 = vrsqrt.pop %v48
  %v51 = vmul.f32 %v35, %v49
  %v52 = vmul.f32 %v36, %v50
  %v53 = vld [vmem:[%s1] sm:$0x1]
  %v55 = vlaneseq
  %v56 = vshrl.u32 %v55, 7
  %v57 = vsub.s32 0, %v56
  %v58 = vrot.slane %v53, %v57
  %v60 = vmul.f32 %v51, %v58
  %v61 = vmul.f32 %v52, %v58
  %v62 = vld [vmem:[%s2] sm:$0x1]
  %v64 = vlaneseq
  %v65 = vshrl.u32 %v64, 7
  %v66 = vsub.s32 0, %v65
  %v67 = vrot.slane %v62, %v66
  %v69 = vadd.f32 %v60, %v67
  %v70 = vadd.f32 %v61, %v67
  %v71 = vpack.c.bf16 %v70, %v69
  %v72 = vld [vmem:[%s3] sm:$0xf]
  %v73 = vld [vmem:[%s3 + $0x4] sm:$0xf]
  %v74 = vld [vmem:[%s3 + $0x8] sm:$0xf]
  %v75 = vld [vmem:[%s3 + $0xc] sm:$0xf]
  %v76 = vld [vmem:[%s4] sm:$0x1]
  %v78 = vlaneseq
  %v79 = vshrl.u32 %v78, 7
  %v80 = vsub.s32 0, %v79
  %v81 = vrot.slane %v76, %v80
  %v87 = vunpack.c.l.b16 %v72
  %v88 = vunpack.c.l.b16 %v73
  %v89 = vunpack.c.l.b16 %v74
  %v90 = vunpack.c.l.b16 %v75
  %v91 = vpack.c.b16 %v88, %v87
  %v92 = vpack.c.b16 %v90, %v89
  %v96 = vsel %vm25, %v71, 0
  %98 = vmatprep.subr.bf16.mxu0 0
  %99 = vmatpush1.bf16.msra.mxu0 %v91
  %100 = vmatprep.subr.bf16.mxu0 0
  %101 = vmatpush1.bf16.msra.mxu0 %v92
  %102 = vmatprep.subr.bf16.mxu0 0
  %103 = vmatpush1.bf16.msra.mxu0 0
  %104 = vmatprep.subr.bf16.mxu0 0
  %105 = vmatpush1.bf16.msra.mxu0 0
  %106 = vmatprep.subr.bf16.mxu0 0
  %107 = vmatpush1.bf16.msra.mxu0 0
  %108 = vmatprep.subr.bf16.mxu0 0
  %109 = vmatpush1.bf16.msra.mxu0 0
  %110 = vmatprep.subr.bf16.mxu0 0
  %111 = vmatpush1.bf16.msra.mxu0 0
  %112 = vmatprep.subr.bf16.mxu0 0
  %113 = vmatpush1.bf16.msra.mxu0 0
  %114 = vmatprep.subr.bf16.mxu0 0
  %115 = vmatpush1.bf16.msra.mxu0 0
  %116 = vmatprep.subr.bf16.mxu0 0
  %117 = vmatpush1.bf16.msra.mxu0 0
  %118 = vmatprep.subr.bf16.mxu0 0
  %119 = vmatpush1.bf16.msra.mxu0 0
  %120 = vmatprep.subr.bf16.mxu0 0
  %121 = vmatpush1.bf16.msra.mxu0 0
  %122 = vmatprep.subr.bf16.mxu0 0
  %123 = vmatpush1.bf16.msra.mxu0 0
  %124 = vmatprep.subr.bf16.mxu0 0
  %125 = vmatpush1.bf16.msra.mxu0 0
  %126 = vmatprep.subr.bf16.mxu0 0
  %127 = vmatpush1.bf16.msra.mxu0 0
  %128 = vmatprep.subr.bf16.mxu0 0
  %129 = vmatpush1.bf16.msra.mxu0 0
  %130 = vmatprep.mubr.bf16.mxu0 0
  %131 = vmatmul.mubr.bf16.gmra.mrb[0].mxu0 %v96
  %v132 = vpop.f32.mrb[0].mxu0
  %v133 = vadd.f32 %v81, %v132
  %v134 = vpop.f32.mrb[0].mxu0
  %v135 = vpop.f32.mrb[0].mxu0
  %v136 = vadd.f32 %v81, %v135
  %v137 = vpop.f32.mrb[0].mxu0
  %138 = vdwg.mxu0
  %v139 = vpack.c.bf16 %v136, %v133
  %v141 = vunpack.c.l.b16 %v139
  %v142 = vunpack.c.h.b16 %v139
  %v143 = vpack.c.b16 %v141, %v141
  %v144 = vpack.c.b16 %v142, %v142
  %vm147 = vcmask 781312
  %148 = vst.msk [vmem:[%s5] sm:$0xf] %vm147, %v143
  %149 = vst.msk [vmem:[%s5 + $0x4] sm:$0xf] %vm147, %v144
  // Predicated region
  $region22: #{encoder_forward.41} parent=0 // pred_check
    _
  $region23: #{encoder_forward.41} parent=0 // pred_check_branch
    %151 = sbr.rel (0) target = $region25
  $region24: #{encoder_forward.41} parent=0 // pred_region
    _
  $region25: #{encoder_forward.41} parent=0 // pred_fallthru
    _
  // Predicated region
  $region26: #{encoder_forward.41} parent=0 // pred_check
    _
  $region27: #{encoder_forward.41} parent=0 // pred_check_branch
    %153 = sbr.rel (0) target = $region29
  $region28: #{encoder_forward.41} parent=0 // pred_region
    _
  $region29: #{encoder_forward.41} parent=0 // pred_fallthru
    _

// kernel: encoder_forward.55
$region0: #{encoder_forward.55}
  #allocation0 [shape = 'u32[]', space=smem, size = 0x4, offset = 0x4, fixed_abs, tag = 'smem constant byte address 0x4 - core index']
  #allocation1 [shape = 'u32[144,128]{1,0:T(1,128)}', space=vmem, size = 0x12000, scoped, tag = 'internal scratch']
  %s0 = inlined_call_operand.vmem [shape: bf16[4,64], index: 0, kind: input, shape index: {}]
  %s1 = inlined_call_operand.vmem [shape: bf16[64,32], index: 1, kind: input, shape index: {}]
  %s2 = inlined_call_operand.vmem [shape: f32[1,32], index: 2, kind: input, shape index: {}]
  %s3 = inlined_call_operand.vmem [shape: bf16[4,32], index: 3, kind: input, shape index: {}]
  %s4 = inlined_call_operand.vmem [shape: bf16[4,32], index: 4, kind: output, shape index: {}]
  %s5 = sld [smem:[#allocation0]]
  $region26: #{encoder_forward.55} parent=0
    _
  %s7 = ssub.s32 1, %s5
  %s8 = scalar_select 0, %s7, %s5
  // Predicated region
  $region2: #{encoder_forward.55} parent=0 // pred_check
    _
  $region3: #{encoder_forward.55} parent=0 // pred_check_branch
    %10 = sbr.rel (0) target = $region5
  $region4: #{encoder_forward.55} parent=0 // pred_region
    _
  $region5: #{encoder_forward.55} parent=0 // pred_fallthru
    _
  // Predicated region
  $region6: #{encoder_forward.55} parent=0 // pred_check
    _
  $region7: #{encoder_forward.55} parent=0 // pred_check_branch
    %12 = sbr.rel (0) target = $region9
  $region8: #{encoder_forward.55} parent=0 // pred_region
    _
  $region9: #{encoder_forward.55} parent=0 // pred_fallthru
    _
  // Predicated region
  $region10: #{encoder_forward.55} parent=0 // pred_check
    _
  $region11: #{encoder_forward.55} parent=0 // pred_check_branch
    %14 = sbr.rel (0) target = $region13
  $region12: #{encoder_forward.55} parent=0 // pred_region
    _
  $region13: #{encoder_forward.55} parent=0 // pred_fallthru
    _
  // Predicated region
  $region14: #{encoder_forward.55} parent=0 // pred_check
    _
  $region15: #{encoder_forward.55} parent=0 // pred_check_branch
    %16 = sbr.rel (0) target = $region17
  $region16: #{encoder_forward.55} parent=0 // pred_region
    _
  $region17: #{encoder_forward.55} parent=0 // pred_fallthru
    _
  %v18 = vld [vmem:[%s0] sm:$0x3]
  %v19 = vld [vmem:[%s1] sm:$0xf]
  %v20 = vld [vmem:[%s1 + $0x4] sm:$0xf]
  %v21 = vld [vmem:[%s1 + $0x8] sm:$0xf]
  %v22 = vld [vmem:[%s1 + $0xc] sm:$0xf]
  %v23 = vld [vmem:[%s1 + $0x10] sm:$0xf]
  %v24 = vld [vmem:[%s1 + $0x14] sm:$0xf]
  %v25 = vld [vmem:[%s1 + $0x18] sm:$0xf]
  %v26 = vld [vmem:[%s1 + $0x1c] sm:$0xf]
  %v27 = vld [vmem:[%s2] sm:$0x1]
  %v29 = vlaneseq
  %v30 = vshrl.u32 %v29, 7
  %v31 = vsub.s32 0, %v30
  %v32 = vrot.slane %v27, %v31
  %v42 = vunpack.c.l.b16 %v19
  %v43 = vunpack.c.l.b16 %v20
  %v44 = vunpack.c.l.b16 %v21
  %v45 = vunpack.c.l.b16 %v22
  %v46 = vunpack.c.l.b16 %v23
  %v47 = vunpack.c.l.b16 %v24
  %v48 = vunpack.c.l.b16 %v25
  %v49 = vunpack.c.l.b16 %v26
  %v50 = vpack.c.b16 %v43, %v42
  %v51 = vpack.c.b16 %v45, %v44
  %v52 = vpack.c.b16 %v47, %v46
  %v53 = vpack.c.b16 %v49, %v48
  %vm58 = vcmask 523264
  %v60 = vsel %vm58, %v18, 0
  %62 = vmatprep.subr.bf16.mxu0 0
  %63 = vmatpush1.bf16.msra.mxu0 %v50
  %64 = vmatprep.subr.bf16.mxu0 0
  %65 = vmatpush1.bf16.msra.mxu0 %v51
  %66 = vmatprep.subr.bf16.mxu0 0
  %67 = vmatpush1.bf16.msra.mxu0 %v52
  %68 = vmatprep.subr.bf16.mxu0 0
  %69 = vmatpush1.bf16.msra.mxu0 %v53
  %70 = vmatprep.subr.bf16.mxu0 0
  %71 = vmatpush1.bf16.msra.mxu0 0
  %72 = vmatprep.subr.bf16.mxu0 0
  %73 = vmatpush1.bf16.msra.mxu0 0
  %74 = vmatprep.subr.bf16.mxu0 0
  %75 = vmatpush1.bf16.msra.mxu0 0
  %76 = vmatprep.subr.bf16.mxu0 0
  %77 = vmatpush1.bf16.msra.mxu0 0
  %78 = vmatprep.subr.bf16.mxu0 0
  %79 = vmatpush1.bf16.msra.mxu0 0
  %80 = vmatprep.subr.bf16.mxu0 0
  %81 = vmatpush1.bf16.msra.mxu0 0
  %82 = vmatprep.subr.bf16.mxu0 0
  %83 = vmatpush1.bf16.msra.mxu0 0
  %84 = vmatprep.subr.bf16.mxu0 0
  %85 = vmatpush1.bf16.msra.mxu0 0
  %86 = vmatprep.subr.bf16.mxu0 0
  %87 = vmatpush1.bf16.msra.mxu0 0
  %88 = vmatprep.subr.bf16.mxu0 0
  %89 = vmatpush1.bf16.msra.mxu0 0
  %90 = vmatprep.subr.bf16.mxu0 0
  %91 = vmatpush1.bf16.msra.mxu0 0
  %92 = vmatprep.subr.bf16.mxu0 0
  %93 = vmatpush1.bf16.msra.mxu0 0
  %94 = vmatprep.mubr.bf16.mxu0 0
  %95 = vmatmul.mubr.bf16.gmra.mrb[0].mxu0 %v60
  %v96 = vpop.f32.mrb[0].mxu0
  %v97 = vadd.f32 %v32, %v96
  %v98 = vpop.f32.mrb[0].mxu0
  %v99 = vpop.f32.mrb[0].mxu0
  %v100 = vpop.f32.mrb[0].mxu0
  %101 = vdwg.mxu0
  %v102 = vld [vmem:[%s3] sm:$0x3]
  %v103 = vunpack.c.l.bf16 %v102
  %v104 = vadd.f32 %v97, %v103
  %v105 = vpack.c.bf16 %v104, %v104
  %vm106 = vcmask 254976
  %107 = vst.msk [vmem:[%s4] sm:$0x3] %vm106, %v105
  // Predicated region
  $region18: #{encoder_forward.55} parent=0 // pred_check
    _
  $region19: #{encoder_forward.55} parent=0 // pred_check_branch
    %109 = sbr.rel (0) target = $region21
  $region20: #{encoder_forward.55} parent=0 // pred_region
    _
  $region21: #{encoder_forward.55} parent=0 // pred_fallthru
    _
  // Predicated region
  $region22: #{encoder_forward.55} parent=0 // pred_check
    _
  $region23: #{encoder_forward.55} parent=0 // pred_check_branch
    %111 = sbr.rel (0) target = $region25
  $region24: #{encoder_forward.55} parent=0 // pred_region
    _
  $region25: #{encoder_forward.55} parent=0 // pred_fallthru
    _

// kernel: encoder_forward.50
$region0: #{encoder_forward.50}
  #allocation0 [shape = 'u32[]', space=smem, size = 0x4, offset = 0x4, fixed_abs, tag = 'smem constant byte address 0x4 - core index']
  #allocation1 [shape = 'u32[144,128]{1,0:T(1,128)}', space=vmem, size = 0x12000, scoped, tag = 'internal scratch']
  %s0 = inlined_call_operand.vmem [shape: bf16[8,64], index: 0, kind: input, shape index: {}]
  %s1 = inlined_call_operand.vmem [shape: bf16[64,32], index: 1, kind: input, shape index: {}]
  %s2 = inlined_call_operand.vmem [shape: f32[1,32], index: 2, kind: input, shape index: {}]
  %s3 = inlined_call_operand.vmem [shape: bf16[8,32], index: 3, kind: input, shape index: {}]
  %s4 = inlined_call_operand.vmem [shape: bf16[8,32], index: 4, kind: output, shape index: {}]
  %s5 = sld [smem:[#allocation0]]
  $region26: #{encoder_forward.50} parent=0
    _
  %s7 = ssub.s32 1, %s5
  %s8 = scalar_select 0, %s7, %s5
  // Predicated region
  $region2: #{encoder_forward.50} parent=0 // pred_check
    _
  $region3: #{encoder_forward.50} parent=0 // pred_check_branch
    %10 = sbr.rel (0) target = $region5
  $region4: #{encoder_forward.50} parent=0 // pred_region
    _
  $region5: #{encoder_forward.50} parent=0 // pred_fallthru
    _
  // Predicated region
  $region6: #{encoder_forward.50} parent=0 // pred_check
    _
  $region7: #{encoder_forward.50} parent=0 // pred_check_branch
    %12 = sbr.rel (0) target = $region9
  $region8: #{encoder_forward.50} parent=0 // pred_region
    _
  $region9: #{encoder_forward.50} parent=0 // pred_fallthru
    _
  // Predicated region
  $region10: #{encoder_forward.50} parent=0 // pred_check
    _
  $region11: #{encoder_forward.50} parent=0 // pred_check_branch
    %14 = sbr.rel (0) target = $region13
  $region12: #{encoder_forward.50} parent=0 // pred_region
    _
  $region13: #{encoder_forward.50} parent=0 // pred_fallthru
    _
  // Predicated region
  $region14: #{encoder_forward.50} parent=0 // pred_check
    _
  $region15: #{encoder_forward.50} parent=0 // pred_check_branch
    %16 = sbr.rel (0) target = $region17
  $region16: #{encoder_forward.50} parent=0 // pred_region
    _
  $region17: #{encoder_forward.50} parent=0 // pred_fallthru
    _
  %v18 = vld [vmem:[%s0] sm:$0xf]
  %v19 = vld [vmem:[%s1] sm:$0xf]
  %v20 = vld [vmem:[%s1 + $0x4] sm:$0xf]
  %v21 = vld [vmem:[%s1 + $0x8] sm:$0xf]
  %v22 = vld [vmem:[%s1 + $0xc] sm:$0xf]
  %v23 = vld [vmem:[%s1 + $0x10] sm:$0xf]
  %v24 = vld [vmem:[%s1 + $0x14] sm:$0xf]
  %v25 = vld [vmem:[%s1 + $0x18] sm:$0xf]
  %v26 = vld [vmem:[%s1 + $0x1c] sm:$0xf]
  %v27 = vld [vmem:[%s2] sm:$0x1]
  %v29 = vlaneseq
  %v30 = vshrl.u32 %v29, 7
  %v31 = vsub.s32 0, %v30
  %v32 = vrot.slane %v27, %v31
  %v42 = vunpack.c.l.b16 %v19
  %v43 = vunpack.c.l.b16 %v20
  %v44 = vunpack.c.l.b16 %v21
  %v45 = vunpack.c.l.b16 %v22
  %v46 = vunpack.c.l.b16 %v23
  %v47 = vunpack.c.l.b16 %v24
  %v48 = vunpack.c.l.b16 %v25
  %v49 = vunpack.c.l.b16 %v26
  %v50 = vpack.c.b16 %v43, %v42
  %v51 = vpack.c.b16 %v45, %v44
  %v52 = vpack.c.b16 %v47, %v46
  %v53 = vpack.c.b16 %v49, %v48
  %vm58 = vcmask 523264
  %v60 = vsel %vm58, %v18, 0
  %62 = vmatprep.subr.bf16.mxu0 0
  %63 = vmatpush1.bf16.msra.mxu0 %v50
  %64 = vmatprep.subr.bf16.mxu0 0
  %65 = vmatpush1.bf16.msra.mxu0 %v51
  %66 = vmatprep.subr.bf16.mxu0 0
  %67 = vmatpush1.bf16.msra.mxu0 %v52
  %68 = vmatprep.subr.bf16.mxu0 0
  %69 = vmatpush1.bf16.msra.mxu0 %v53
  %70 = vmatprep.subr.bf16.mxu0 0
  %71 = vmatpush1.bf16.msra.mxu0 0
  %72 = vmatprep.subr.bf16.mxu0 0
  %73 = vmatpush1.bf16.msra.mxu0 0
  %74 = vmatprep.subr.bf16.mxu0 0
  %75 = vmatpush1.bf16.msra.mxu0 0
  %76 = vmatprep.subr.bf16.mxu0 0
  %77 = vmatpush1.bf16.msra.mxu0 0
  %78 = vmatprep.subr.bf16.mxu0 0
  %79 = vmatpush1.bf16.msra.mxu0 0
  %80 = vmatprep.subr.bf16.mxu0 0
  %81 = vmatpush1.bf16.msra.mxu0 0
  %82 = vmatprep.subr.bf16.mxu0 0
  %83 = vmatpush1.bf16.msra.mxu0 0
  %84 = vmatprep.subr.bf16.mxu0 0
  %85 = vmatpush1.bf16.msra.mxu0 0
  %86 = vmatprep.subr.bf16.mxu0 0
  %87 = vmatpush1.bf16.msra.mxu0 0
  %88 = vmatprep.subr.bf16.mxu0 0
  %89 = vmatpush1.bf16.msra.mxu0 0
  %90 = vmatprep.subr.bf16.mxu0 0
  %91 = vmatpush1.bf16.msra.mxu0 0
  %92 = vmatprep.subr.bf16.mxu0 0
  %93 = vmatpush1.bf16.msra.mxu0 0
  %94 = vmatprep.mubr.bf16.mxu0 0
  %95 = vmatmul.mubr.bf16.gmra.mrb[0].mxu0 %v60
  %v96 = vpop.f32.mrb[0].mxu0
  %v97 = vadd.f32 %v32, %v96
  %v98 = vpop.f32.mrb[0].mxu0
  %v99 = vpop.f32.mrb[0].mxu0
  %v100 = vpop.f32.mrb[0].mxu0
  %101 = vdwg.mxu0
  %v102 = vld [vmem:[%s3] sm:$0xf]
  %v103 = vunpack.c.l.bf16 %v102
  %v104 = vadd.f32 %v97, %v103
  %v105 = vpack.c.bf16 %v104, %v104
  %vm106 = vcmask 257024
  %107 = vst.msk [vmem:[%s4] sm:$0xf] %vm106, %v105
  // Predicated region
  $region18: #{encoder_forward.50} parent=0 // pred_check
    _
  $region19: #{encoder_forward.50} parent=0 // pred_check_branch
    %109 = sbr.rel (0) target = $region21
  $region20: #{encoder_forward.50} parent=0 // pred_region
    _
  $region21: #{encoder_forward.50} parent=0 // pred_fallthru
    _
  // Predicated region
  $region22: #{encoder_forward.50} parent=0 // pred_check
    _
  $region23: #{encoder_forward.50} parent=0 // pred_check_branch
    %111 = sbr.rel (0) target = $region25
  $region24: #{encoder_forward.50} parent=0 // pred_region
    _
  $region25: #{encoder_forward.50} parent=0 // pred_fallthru
    _

// kernel: encoder_forward.43
$region0: #{encoder_forward.43}
  #allocation0 [shape = 'u32[]', space=smem, size = 0x4, offset = 0x4, fixed_abs, tag = 'smem constant byte address 0x4 - core index']
  #allocation1 [shape = 'u32[144,128]{1,0:T(1,128)}', space=vmem, size = 0x12000, scoped, tag = 'internal scratch']
  %s0 = inlined_call_operand.vmem [shape: bf16[16,32], index: 0, kind: input, shape index: {}]
  %s1 = inlined_call_operand.vmem [shape: bf16[32,32], index: 1, kind: input, shape index: {}]
  %s2 = inlined_call_operand.vmem [shape: f32[1,32], index: 2, kind: input, shape index: {}]
  %s3 = inlined_call_operand.vmem [shape: bf16[16,32], index: 3, kind: input, shape index: {}]
  %s4 = inlined_call_operand.vmem [shape: bf16[16,32], index: 4, kind: output, shape index: {}]
  %s5 = sld [smem:[#allocation0]]
  $region26: #{encoder_forward.43} parent=0
    _
  %s7 = ssub.s32 1, %s5
  %s8 = scalar_select 0, %s7, %s5
  // Predicated region
  $region2: #{encoder_forward.43} parent=0 // pred_check
    _
  $region3: #{encoder_forward.43} parent=0 // pred_check_branch
    %10 = sbr.rel (0) target = $region5
  $region4: #{encoder_forward.43} parent=0 // pred_region
    _
  $region5: #{encoder_forward.43} parent=0 // pred_fallthru
    _
  // Predicated region
  $region6: #{encoder_forward.43} parent=0 // pred_check
    _
  $region7: #{encoder_forward.43} parent=0 // pred_check_branch
    %12 = sbr.rel (0) target = $region9
  $region8: #{encoder_forward.43} parent=0 // pred_region
    _
  $region9: #{encoder_forward.43} parent=0 // pred_fallthru
    _
  // Predicated region
  $region10: #{encoder_forward.43} parent=0 // pred_check
    _
  $region11: #{encoder_forward.43} parent=0 // pred_check_branch
    %14 = sbr.rel (0) target = $region13
  $region12: #{encoder_forward.43} parent=0 // pred_region
    _
  $region13: #{encoder_forward.43} parent=0 // pred_fallthru
    _
  // Predicated region
  $region14: #{encoder_forward.43} parent=0 // pred_check
    _
  $region15: #{encoder_forward.43} parent=0 // pred_check_branch
    %16 = sbr.rel (0) target = $region17
  $region16: #{encoder_forward.43} parent=0 // pred_region
    _
  $region17: #{encoder_forward.43} parent=0 // pred_fallthru
    _
  %v18 = vld [vmem:[%s0] sm:$0xf]
  %v19 = vld [vmem:[%s0 + $0x4] sm:$0xf]
  %v20 = vld [vmem:[%s1] sm:$0xf]
  %v21 = vld [vmem:[%s1 + $0x4] sm:$0xf]
  %v22 = vld [vmem:[%s1 + $0x8] sm:$0xf]
  %v23 = vld [vmem:[%s1 + $0xc] sm:$0xf]
  %v24 = vld [vmem:[%s2] sm:$0x1]
  %v26 = vlaneseq
  %v27 = vshrl.u32 %v26, 7
  %v28 = vsub.s32 0, %v27
  %v29 = vrot.slane %v24, %v28
  %v33 = vunpack.c.l.b16 %v18
  %v34 = vunpack.c.l.b16 %v19
  %v35 = vpack.c.b16 %v34, %v33
  %v40 = vunpack.c.l.b16 %v20
  %v41 = vunpack.c.l.b16 %v21
  %v42 = vunpack.c.l.b16 %v22
  %v43 = vunpack.c.l.b16 %v23
  %v44 = vpack.c.b16 %v41, %v40
  %v45 = vpack.c.b16 %v43, %v42
  %vm48 = vcmask 261120
  %v50 = vsel %vm48, %v35, 0
  %52 = vmatprep.subr.bf16.mxu0 0
  %53 = vmatpush1.bf16.msra.mxu0 %v44
  %54 = vmatprep.subr.bf16.mxu0 0
  %55 = vmatpush1.bf16.msra.mxu0 %v45
  %56 = vmatprep.subr.bf16.mxu0 0
  %57 = vmatpush1.bf16.msra.mxu0 0
  %58 = vmatprep.subr.bf16.mxu0 0
  %59 = vmatpush1.bf16.msra.mxu0 0
  %60 = vmatprep.subr.bf16.mxu0 0
  %61 = vmatpush1.bf16.msra.mxu0 0
  %62 = vmatprep.subr.bf16.mxu0 0
  %63 = vmatpush1.bf16.msra.mxu0 0
  %64 = vmatprep.subr.bf16.mxu0 0
  %65 = vmatpush1.bf16.msra.mxu0 0
  %66 = vmatprep.subr.bf16.mxu0 0
  %67 = vmatpush1.bf16.msra.mxu0 0
  %68 = vmatprep.subr.bf16.mxu0 0
  %69 = vmatpush1.bf16.msra.mxu0 0
  %70 = vmatprep.subr.bf16.mxu0 0
  %71 = vmatpush1.bf16.msra.mxu0 0
  %72 = vmatprep.subr.bf16.mxu0 0
  %73 = vmatpush1.bf16.msra.mxu0 0
  %74 = vmatprep.subr.bf16.mxu0 0
  %75 = vmatpush1.bf16.msra.mxu0 0
  %76 = vmatprep.subr.bf16.mxu0 0
  %77 = vmatpush1.bf16.msra.mxu0 0
  %78 = vmatprep.subr.bf16.mxu0 0
  %79 = vmatpush1.bf16.msra.mxu0 0
  %80 = vmatprep.subr.bf16.mxu0 0
  %81 = vmatpush1.bf16.msra.mxu0 0
  %82 = vmatprep.subr.bf16.mxu0 0
  %83 = vmatpush1.bf16.msra.mxu0 0
  %84 = vmatprep.mubr.bf16.mxu0 0
  %85 = vmatmul.mubr.bf16.gmra.mrb[0].mxu0 %v50
  %v86 = vpop.f32.mrb[0].mxu0
  %v87 = vadd.f32 %v29, %v86
  %v88 = vpop.f32.mrb[0].mxu0
  %v89 = vpop.f32.mrb[0].mxu0
  %v90 = vadd.f32 %v29, %v89
  %v91 = vpop.f32.mrb[0].mxu0
  %92 = vdwg.mxu0
  %v93 = vld [vmem:[%s3] sm:$0xf]
  %v94 = vld [vmem:[%s3 + $0x4] sm:$0xf]
  %v95 = vunpack.c.l.bf16 %v93
  %v96 = vunpack.c.l.bf16 %v94
  %v97 = vadd.f32 %v87, %v95
  %v98 = vadd.f32 %v90, %v96
  %v99 = vpack.c.bf16 %v98, %v97
  %v101 = vunpack.c.l.b16 %v99
  %v102 = vunpack.c.h.b16 %v99
  %v103 = vpack.c.b16 %v101, %v101
  %v104 = vpack.c.b16 %v102, %v102
  %vm107 = vcmask 257024
  %108 = vst.msk [vmem:[%s4] sm:$0xf] %vm107, %v103
  %109 = vst.msk [vmem:[%s4 + $0x4] sm:$0xf] %vm107, %v104
  // Predicated region
  $region18: #{encoder_forward.43} parent=0 // pred_check
    _
  $region19: #{encoder_forward.43} parent=0 // pred_check_branch
    %111 = sbr.rel (0) target = $region21
  $region20: #{encoder_forward.43} parent=0 // pred_region
    _
  $region21: #{encoder_forward.43} parent=0 // pred_fallthru
    _
  // Predicated region
  $region22: #{encoder_forward.43} parent=0 // pred_check
    _
  $region23: #{encoder_forward.43} parent=0 // pred_check_branch
    %113 = sbr.rel (0) target = $region25
  $region24: #{encoder_forward.43} parent=0 // pred_region
    _
  $region25: #{encoder_forward.43} parent=0 // pred_fallthru
    _

// kernel: encoder_forward.42
$region0: #{encoder_forward.42}
  #allocation0 [shape = 'u32[]', space=smem, size = 0x4, offset = 0x4, fixed_abs, tag = 'smem constant byte address 0x4 - core index']
  #allocation1 [shape = 'u32[144,128]{1,0:T(1,128)}', space=vmem, size = 0x12000, scoped, tag = 'internal scratch']
  %s0 = inlined_call_operand.vmem [shape: bf16[2,8,96], index: 0, kind: input, shape index: {}]
  %s1 = inlined_call_operand.vmem [shape: bf16[2,8,32], index: 1, kind: output, shape index: {0}]
  %s2 = inlined_call_operand.hbm [shape: bf16[2,4,8,8], index: 2, kind: output, shape index: {1}]
  %3 = xla_tuple %s1, %s2
  %s4 = sld [smem:[#allocation0]]
  $region45: #{encoder_forward.42} parent=0
    _
  %s6 = ssub.s32 1, %s4
  %s7 = scalar_select 0, %s6, %s4
  $region1: #{encoder_forward.42} parent=0
    #allocation2 [shape = 'u8[16384]{0}', space=vmem, size = 0x4000, scoped, tag = 'output window, operand 1']
    #allocation3 [shape = 's32[2]{0}', space=sflag, size = 0x8, scoped, tag = 'scoped memory for encoder_forward.42']
    %8 = vsyncpa [#allocation3], 0
    %s9 = scalar_lea.sflag [#allocation3], 1
    %10 = vsyncpa %s9, 0
    loop: start=0, step=1, limit=4
    $region2: #{encoder_forward.42} parent=1 // loop_pre_header
      _
    $region3: #{encoder_forward.42} parent=1 // loop_header
      %s12 = sphi 0, %s16
      %p13 = scmp.ge.s32.totalorder %s12, 4
      %s22 = sphi 0, %s24
      %s25 = sphi 0, %s22
      %s26 = sphi 0, %s25
      %s42 = sphi 0, %s26
      %s48 = sphi 0, %s50
      %s51 = sphi 0, %s48
      %s52 = sphi 0, %s51
      %s68 = sphi 0, %s52
      %s74 = sphi 0, %s76
      %s77 = sphi 0, %s74
      %s78 = sphi 0, %s77
      %s94 = sphi 0, %s78
    $region4: #{encoder_forward.42} parent=1 // loop_header_branch
      %15 = sbr.rel (%p13) target = $region8
    $region5: #{encoder_forward.42} parent=1 // loop_body
      %s17 = ssub.s32 %s12, 1
      %s18 = ssub.s32 %s12, 2
      %s19 = sadd.s32 %s12, 1
      %s20 = ssub.s32 %s12, %s19
      %p21 = scmp.eq.s32.totalorder %s20, 0
      %s23 = sadd.s32 %s22, 1
      %s24 = scalar_select %p21, %s22, %s23
      %p27 = pneg %p21
      %p28 = scmp.eq.s32.totalorder %s12, 1
      %p29 = por %p27, %p28
      %p30 = scmp.ne.s32.totalorder %s22, %s25
      %p31 = scmp.eq.s32.totalorder %s12, 0
      %p32 = por %p30, %p31
      %p33 = scmp.ne.s32.totalorder %s22, %s25
      %p34 = scmp.eq.s32.totalorder %s17, 1
      %p35 = por %p33, %p34
      %p36 = scmp.ne.s32.totalorder %s25, %s26
      %p37 = scmp.eq.s32.totalorder %s17, 0
      %p38 = por %p36, %p37
      %p39 = scmp.ne.s32.totalorder %s25, %s26
      %p40 = scmp.eq.s32.totalorder %s18, 1
      %p41 = por %p39, %p40
      %p43 = scmp.ne.s32.totalorder %s26, %s42
      %p44 = scmp.eq.s32.totalorder %s18, 0
      %p45 = por %p43, %p44
      %s46 = ssub.s32 %s12, %s19
      %p47 = scmp.eq.s32.totalorder %s46, 0
      %s49 = sadd.s32 %s48, 1
      %s50 = scalar_select %p47, %s48, %s49
      %p53 = pneg %p47
      %p54 = scmp.eq.s32.totalorder %s12, 1
      %p55 = por %p53, %p54
      %p56 = scmp.ne.s32.totalorder %s48, %s51
      %p57 = scmp.eq.s32.totalorder %s12, 0
      %p58 = por %p56, %p57
      %p59 = scmp.ne.s32.totalorder %s48, %s51
      %p60 = scmp.eq.s32.totalorder %s17, 1
      %p61 = por %p59, %p60
      %p62 = scmp.ne.s32.totalorder %s51, %s52
      %p63 = scmp.eq.s32.totalorder %s17, 0
      %p64 = por %p62, %p63
      %p65 = scmp.ne.s32.totalorder %s51, %s52
      %p66 = scmp.eq.s32.totalorder %s18, 1
      %p67 = por %p65, %p66
      %p69 = scmp.ne.s32.totalorder %s52, %s68
      %p70 = scmp.eq.s32.totalorder %s18, 0
      %p71 = por %p69, %p70
      %s72 = ssub.s32 %s12, %s19
      %p73 = scmp.eq.s32.totalorder %s72, 0
      %s75 = sadd.s32 %s74, 1
      %s76 = scalar_select %p73, %s74, %s75
      %p79 = pneg %p73
      %p80 = scmp.eq.s32.totalorder %s12, 1
      %p81 = por %p79, %p80
      %p82 = scmp.ne.s32.totalorder %s74, %s77
      %p83 = scmp.eq.s32.totalorder %s12, 0
      %p84 = por %p82, %p83
      %p85 = scmp.ne.s32.totalorder %s74, %s77
      %p86 = scmp.eq.s32.totalorder %s17, 1
      %p87 = por %p85, %p86
      %p88 = scmp.ne.s32.totalorder %s77, %s78
      %p89 = scmp.eq.s32.totalorder %s17, 0
      %p90 = por %p88, %p89
      %p91 = scmp.ne.s32.totalorder %s77, %s78
      %p92 = scmp.eq.s32.totalorder %s18, 1
      %p93 = por %p91, %p92
      %p95 = scmp.ne.s32.totalorder %s78, %s94
      %p96 = scmp.eq.s32.totalorder %s18, 0
      %p97 = por %p95, %p96
      %p98 = scmp.le.s32.totalorder 1, %s12
      %p99 = scmp.lt.s32.totalorder %s12, 3
      %p100 = pnand %p98, %p99
      %p101 = pneg %p100
      // Predicated region
      $region9: #{encoder_forward.42} parent=5 // pred_check
        _
      $region10: #{encoder_forward.42} parent=5 // pred_check_branch
        %103 = sbr.rel (%p100) target = $region12
      $region11: #{encoder_forward.42} parent=5 // pred_region
        %s104 = ssub.s32 %s12, 1
      $region12: #{encoder_forward.42} parent=5 // pred_fallthru
        _
      %p105 = scmp.lt.s32.totalorder %s12, 2
      // Predicated region
      $region13: #{encoder_forward.42} parent=5 // pred_check
        %p106 = pneg %p105
      $region14: #{encoder_forward.42} parent=5 // pred_check_branch
        %108 = sbr.rel (%p106) target = $region16
      $region15: #{encoder_forward.42} parent=5 // pred_region
        // Predicated region
        $region17: #{encoder_forward.42} parent=15 // pred_check
          %p109 = pneg %p32
        $region18: #{encoder_forward.42} parent=15 // pred_check_branch
          %111 = sbr.rel (%p109) target = $region20
        $region19: #{encoder_forward.42} parent=15 // pred_region
          %p112 = scmp.lt.s32.totalorder %s12, 1
          %s113 = scalar_select %p112, %s12, 1
          %s114 = smul.addr %s113, 4
          %s115 = scalar_lea.vmem %s0, %s114
        $region20: #{encoder_forward.42} parent=15 // pred_fallthru
          _
      $region16: #{encoder_forward.42} parent=5 // pred_fallthru
        _
      %p116 = scmp.le.s32.totalorder 1, %s12
      %p117 = scmp.lt.s32.totalorder %s12, 3
      %p118 = pnand %p116, %p117
      %p119 = pneg %p118
      // Predicated region
      $region21: #{encoder_forward.42} parent=5 // pred_check
        _
      $region22: #{encoder_forward.42} parent=5 // pred_check_branch
        %121 = sbr.rel (%p118) target = $region24
      $region23: #{encoder_forward.42} parent=5 // pred_region
        %s122 = ssub.s32 %s12, 1
        %p123 = scmp.lt.s32.totalorder %s17, 1
        %s124 = scalar_select %p123, %s17, 1
        %s125 = smul.addr %s124, 4
        %s126 = scalar_lea.vmem %s0, %s125
        %p127 = pneg %p38
        %p128 = pneg %p35
        %p129 = pneg %p64
        %p130 = pneg %p61
        %p131 = scmp.lt.s32.totalorder %s17, 1
        %s132 = scalar_select %p131, %s17, 1
        %s133 = smul.addr %s132, 4
        %s134 = scalar_lea.vmem %s1, %s133
        %p135 = pneg %p90
        %p136 = pneg %p87
        %s137 = sand.u32 %s77, 1
        %s138 = scalar_lea.sflag [#allocation3], %s137
        %s139 = sand.u32 %s77, 1
        %s140 = smul.addr %s139, 16
        %s141 = scalar_lea.vmem [#allocation2], %s140
        %p142 = scmp.lt.s32.totalorder %s17, 1
        %s143 = scalar_select %p142, %s17, 1
        %s144 = smul.addr %s143, 4
        %s145 = scalar_lea.vmem %s0, %s144
        %p146 = scmp.lt.s32.totalorder %s17, 1
        %s147 = scalar_select %p146, %s17, 1
        %s148 = smul.addr %s147, 4
        %s149 = scalar_lea.vmem %s1, %s148
        %v151 = vld [vmem:[%s145] sm:$0xf]
        %v153 = vunpack.c.l.b16 %v151
        %v154 = vpack.c.b16 %v153, %v153
        %155 = vrot.lane.b32.xlu0 %v154, 96
        %v156 = vpop.permute.xlu0 %155
        %vm157 = vcmask 64512
        %v159 = vsel %vm157, %v151, 0
        %v162 = vsel %vm157, %v156, 0
        %164 = vmatprep.subr.bf16.mxu0 0
        %165 = vmatpush1.bf16.xpose.msra.mxu0 %v162
        %166 = vmatprep.subr.bf16.mxu0 0
        %167 = vmatpush1.bf16.xpose.msra.mxu0 0
        %168 = vmatprep.subr.bf16.mxu0 0
        %169 = vmatpush1.bf16.xpose.msra.mxu0 0
        %170 = vmatprep.subr.bf16.mxu0 0
        %171 = vmatpush1.bf16.xpose.msra.mxu0 0
        %172 = vmatprep.subr.bf16.mxu0 0
        %173 = vmatpush1.bf16.xpose.msra.mxu0 0
        %174 = vmatprep.subr.bf16.mxu0 0
        %175 = vmatpush1.bf16.xpose.msra.mxu0 0
        %176 = vmatprep.subr.bf16.mxu0 0
        %177 = vmatpush1.bf16.xpose.msra.mxu0 0
        %178 = vmatprep.subr.bf16.mxu0 0
        %179 = vmatpush1.bf16.xpose.msra.mxu0 0
        %180 = vmatprep.subr.bf16.mxu0 0
        %181 = vmatpush1.bf16.xpose.msra.mxu0 0
        %182 = vmatprep.subr.bf16.mxu0 0
        %183 = vmatpush1.bf16.xpose.msra.mxu0 0
        %184 = vmatprep.subr.bf16.mxu0 0
        %185 = vmatpush1.bf16.xpose.msra.mxu0 0
        %186 = vmatprep.subr.bf16.mxu0 0
        %187 = vmatpush1.bf16.xpose.msra.mxu0 0
        %188 = vmatprep.subr.bf16.mxu0 0
        %189 = vmatpush1.bf16.xpose.msra.mxu0 0
        %190 = vmatprep.subr.bf16.mxu0 0
        %191 = vmatpush1.bf16.xpose.msra.mxu0 0
        %192 = vmatprep.subr.bf16.mxu0 0
        %193 = vmatpush1.bf16.xpose.msra.mxu0 0
        %194 = vmatprep.subr.bf16.mxu0 0
        %195 = vmatpush1.bf16.xpose.msra.mxu0 0
        %196 = vmatprep.mubr.bf16.mxu0 0
        %197 = vmatmul.mubr.bf16.gmra.mrb[0].mxu0 %v159
        %v198 = vpop.f32.mrb[0].mxu0
        %v199 = vadd.f32 0.0, %v198
        %v200 = vpop.f32.mrb[0].mxu0
        %v201 = vpop.f32.mrb[0].mxu0
        %v202 = vpop.f32.mrb[0].mxu0
        %203 = vdwg.mxu0
        %v204 = vmul.f32 %v199, 0.35355338
        %v205 = vsel %vm157, %v204, -inf
        %206 = vmax.xlane.f32.xlu0 %v205
        %v207 = vpop.xlane.xlu0 %206
        %v208 = vsub.f32 %v204, %v207
        %v209 = vmul.f32 %v208, 1.442695
        %v210 = vpow.pop %v209
        %v211 = vsel %vm157, %v210, 0.0
        %212 = vadd.xlane.f32.xlu0 %v211
        %v213 = vpop.xlane.xlu0 %212
        %v214 = vrcp.pop %v213
        %v215 = vmul.f32 %v210, %v214
        %v216 = vpack.c.bf16 %v215, %v215
        %217 = vrot.lane.b32.xlu0 %v154, 64
        %v218 = vpop.permute.xlu0 %217
        %v220 = vsel %vm157, %v216, 0
        %vm222 = vcmask 1043456
        %v224 = vsel %vm222, %v218, 0
        %226 = vmatprep.subr.bf16.mxu0 0
        %227 = vmatpush1.bf16.msra.mxu0 %v224
        %228 = vmatprep.subr.bf16.mxu0 0
        %229 = vmatpush1.bf16.msra.mxu0 0
        %230 = vmatprep.subr.bf16.mxu0 0
        %231 = vmatpush1.bf16.msra.mxu0 0
        %232 = vmatprep.subr.bf16.mxu0 0
        %233 = vmatpush1.bf16.msra.mxu0 0
        %234 = vmatprep.subr.bf16.mxu0 0
        %235 = vmatpush1.bf16.msra.mxu0 0
        %236 = vmatprep.subr.bf16.mxu0 0
        %237 = vmatpush1.bf16.msra.mxu0 0
        %238 = vmatprep.subr.bf16.mxu0 0
        %239 = vmatpush1.bf16.msra.mxu0 0
        %240 = vmatprep.subr.bf16.mxu0 0
        %241 = vmatpush1.bf16.msra.mxu0 0
        %242 = vmatprep.subr.bf16.mxu0 0
        %243 = vmatpush1.bf16.msra.mxu0 0
        %244 = vmatprep.subr.bf16.mxu0 0
        %245 = vmatpush1.bf16.msra.mxu0 0
        %246 = vmatprep.subr.bf16.mxu0 0
        %247 = vmatpush1.bf16.msra.mxu0 0
        %248 = vmatprep.subr.bf16.mxu0 0
        %249 = vmatpush1.bf16.msra.mxu0 0
        %250 = vmatprep.subr.bf16.mxu0 0
        %251 = vmatpush1.bf16.msra.mxu0 0
        %252 = vmatprep.subr.bf16.mxu0 0
        %253 = vmatpush1.bf16.msra.mxu0 0
        %254 = vmatprep.subr.bf16.mxu0 0
        %255 = vmatpush1.bf16.msra.mxu0 0
        %256 = vmatprep.subr.bf16.mxu0 0
        %257 = vmatpush1.bf16.msra.mxu0 0
        %258 = vmatprep.mubr.bf16.mxu0 0
        %259 = vmatmul.mubr.bf16.gmra.mrb[0].mxu0 %v220
        %v260 = vpop.f32.mrb[0].mxu0
        %v261 = vadd.f32 0.0, %v260
        %v262 = vpop.f32.mrb[0].mxu0
        %v263 = vpop.f32.mrb[0].mxu0
        %v264 = vpop.f32.mrb[0].mxu0
        %265 = vdwg.mxu0
        %vm266 = vcmask 60416
        %267 = vst.msk [vmem:[%s141] sm:$0xf] %vm266, %v216
        %268 = vrot.lane.b32.xlu0 %v154, 120
        %v269 = vpop.permute.xlu0 %268
        %270 = vrot.lane.b32.xlu0 %v154, 88
        %v271 = vpop.permute.xlu0 %270
        %v273 = vsel %vm157, %v269, 0
        %v276 = vsel %vm157, %v271, 0
        %278 = vmatprep.subr.bf16.mxu0 0
        %279 = vmatpush1.bf16.xpose.msra.mxu0 %v276
        %280 = vmatprep.subr.bf16.mxu0 0
        %281 = vmatpush1.bf16.xpose.msra.mxu0 0
        %282 = vmatprep.subr.bf16.mxu0 0
        %283 = vmatpush1.bf16.xpose.msra.mxu0 0
        %284 = vmatprep.subr.bf16.mxu0 0
        %285 = vmatpush1.bf16.xpose.msra.mxu0 0
        %286 = vmatprep.subr.bf16.mxu0 0
        %287 = vmatpush1.bf16.xpose.msra.mxu0 0
        %288 = vmatprep.subr.bf16.mxu0 0
        %289 = vmatpush1.bf16.xpose.msra.mxu0 0
        %290 = vmatprep.subr.bf16.mxu0 0
        %291 = vmatpush1.bf16.xpose.msra.mxu0 0
        %292 = vmatprep.subr.bf16.mxu0 0
        %293 = vmatpush1.bf16.xpose.msra.mxu0 0
        %294 = vmatprep.subr.bf16.mxu0 0
        %295 = vmatpush1.bf16.xpose.msra.mxu0 0
        %296 = vmatprep.subr.bf16.mxu0 0
        %297 = vmatpush1.bf16.xpose.msra.mxu0 0
        %298 = vmatprep.subr.bf16.mxu0 0
        %299 = vmatpush1.bf16.xpose.msra.mxu0 0
        %300 = vmatprep.subr.bf16.mxu0 0
        %301 = vmatpush1.bf16.xpose.msra.mxu0 0
        %302 = vmatprep.subr.bf16.mxu0 0
        %303 = vmatpush1.bf16.xpose.msra.mxu0 0
        %304 = vmatprep.subr.bf16.mxu0 0
        %305 = vmatpush1.bf16.xpose.msra.mxu0 0
        %306 = vmatprep.subr.bf16.mxu0 0
        %307 = vmatpush1.bf16.xpose.msra.mxu0 0
        %308 = vmatprep.subr.bf16.mxu0 0
        %309 = vmatpush1.bf16.xpose.msra.mxu0 0
        %310 = vmatprep.mubr.bf16.mxu0 0
        %311 = vmatmul.mubr.bf16.gmra.mrb[0].mxu0 %v273
        %v312 = vpop.f32.mrb[0].mxu0
        %v313 = vadd.f32 0.0, %v312
        %v314 = vpop.f32.mrb[0].mxu0
        %v315 = vpop.f32.mrb[0].mxu0
        %v316 = vpop.f32.mrb[0].mxu0
        %317 = vdwg.mxu0
        %v318 = vmul.f32 %v313, 0.35355338
        %v319 = vsel %vm157, %v318, -inf
        %320 = vmax.xlane.f32.xlu0 %v319
        %v321 = vpop.xlane.xlu0 %320
        %v322 = vsub.f32 %v318, %v321
        %v323 = vmul.f32 %v322, 1.442695
        %v324 = vpow.pop %v323
        %v325 = vsel %vm157, %v324, 0.0
        %326 = vadd.xlane.f32.xlu0 %v325
        %v327 = vpop.xlane.xlu0 %326
        %v328 = vrcp.pop %v327
        %v329 = vmul.f32 %v324, %v328
        %v330 = vpack.c.bf16 %v329, %v329
        %331 = vrot.lane.b32.xlu0 %v154, 56
        %v332 = vpop.permute.xlu0 %331
        %v334 = vsel %vm157, %v330, 0
        %v337 = vsel %vm222, %v332, 0
        %339 = vmatprep.subr.bf16.mxu0 0
        %340 = vmatpush1.bf16.msra.mxu0 %v337
        %341 = vmatprep.subr.bf16.mxu0 0
        %342 = vmatpush1.bf16.msra.mxu0 0
        %343 = vmatprep.subr.bf16.mxu0 0
        %344 = vmatpush1.bf16.msra.mxu0 0
        %345 = vmatprep.subr.bf16.mxu0 0
        %346 = vmatpush1.bf16.msra.mxu0 0
        %347 = vmatprep.subr.bf16.mxu0 0
        %348 = vmatpush1.bf16.msra.mxu0 0
        %349 = vmatprep.subr.bf16.mxu0 0
        %350 = vmatpush1.bf16.msra.mxu0 0
        %351 = vmatprep.subr.bf16.mxu0 0
        %352 = vmatpush1.bf16.msra.mxu0 0
        %353 = vmatprep.subr.bf16.mxu0 0
        %354 = vmatpush1.bf16.msra.mxu0 0
        %355 = vmatprep.subr.bf16.mxu0 0
        %356 = vmatpush1.bf16.msra.mxu0 0
        %357 = vmatprep.subr.bf16.mxu0 0
        %358 = vmatpush1.bf16.msra.mxu0 0
        %359 = vmatprep.subr.bf16.mxu0 0
        %360 = vmatpush1.bf16.msra.mxu0 0
        %361 = vmatprep.subr.bf16.mxu0 0
        %362 = vmatpush1.bf16.msra.mxu0 0
        %363 = vmatprep.subr.bf16.mxu0 0
        %364 = vmatpush1.bf16.msra.mxu0 0
        %365 = vmatprep.subr.bf16.mxu0 0
        %366 = vmatpush1.bf16.msra.mxu0 0
        %367 = vmatprep.subr.bf16.mxu0 0
        %368 = vmatpush1.bf16.msra.mxu0 0
        %369 = vmatprep.subr.bf16.mxu0 0
        %370 = vmatpush1.bf16.msra.mxu0 0
        %371 = vmatprep.mubr.bf16.mxu0 0
        %372 = vmatmul.mubr.bf16.gmra.mrb[0].mxu0 %v334
        %v373 = vpop.f32.mrb[0].mxu0
        %v374 = vadd.f32 0.0, %v373
        %v375 = vpop.f32.mrb[0].mxu0
        %v376 = vpop.f32.mrb[0].mxu0
        %v377 = vpop.f32.mrb[0].mxu0
        %378 = vdwg.mxu0
        %s379 = scalar_lea.vmem %s141, 4 [#allocation2]
        %380 = vst.msk [vmem:[%s379] sm:$0xf] %vm266, %v330
        %381 = vrot.lane.b32.xlu0 %v154, 112
        %v382 = vpop.permute.xlu0 %381
        %383 = vrot.lane.b32.xlu0 %v154, 80
        %v384 = vpop.permute.xlu0 %383
        %v386 = vsel %vm157, %v382, 0
        %v389 = vsel %vm157, %v384, 0
        %391 = vmatprep.subr.bf16.mxu0 0
        %392 = vmatpush1.bf16.xpose.msra.mxu0 %v389
        %393 = vmatprep.subr.bf16.mxu0 0
        %394 = vmatpush1.bf16.xpose.msra.mxu0 0
        %395 = vmatprep.subr.bf16.mxu0 0
        %396 = vmatpush1.bf16.xpose.msra.mxu0 0
        %397 = vmatprep.subr.bf16.mxu0 0
        %398 = vmatpush1.bf16.xpose.msra.mxu0 0
        %399 = vmatprep.subr.bf16.mxu0 0
        %400 = vmatpush1.bf16.xpose.msra.mxu0 0
        %401 = vmatprep.subr.bf16.mxu0 0
        %402 = vmatpush1.bf16.xpose.msra.mxu0 0
        %403 = vmatprep.subr.bf16.mxu0 0
        %404 = vmatpush1.bf16.xpose.msra.mxu0 0
        %405 = vmatprep.subr.bf16.mxu0 0
        %406 = vmatpush1.bf16.xpose.msra.mxu0 0
        %407 = vmatprep.subr.bf16.mxu0 0
        %408 = vmatpush1.bf16.xpose.msra.mxu0 0
        %409 = vmatprep.subr.bf16.mxu0 0
        %410 = vmatpush1.bf16.xpose.msra.mxu0 0
        %411 = vmatprep.subr.bf16.mxu0 0
        %412 = vmatpush1.bf16.xpose.msra.mxu0 0
        %413 = vmatprep.subr.bf16.mxu0 0
        %414 = vmatpush1.bf16.xpose.msra.mxu0 0
        %415 = vmatprep.subr.bf16.mxu0 0
        %416 = vmatpush1.bf16.xpose.msra.mxu0 0
        %417 = vmatprep.subr.bf16.mxu0 0
        %418 = vmatpush1.bf16.xpose.msra.mxu0 0
        %419 = vmatprep.subr.bf16.mxu0 0
        %420 = vmatpush1.bf16.xpose.msra.mxu0 0
        %421 = vmatprep.subr.bf16.mxu0 0
        %422 = vmatpush1.bf16.xpose.msra.mxu0 0
        %423 = vmatprep.mubr.bf16.mxu0 0
        %424 = vmatmul.mubr.bf16.gmra.mrb[0].mxu0 %v386
        %v425 = vpop.f32.mrb[0].mxu0
        %v426 = vadd.f32 0.0, %v425
        %v427 = vpop.f32.mrb[0].mxu0
        %v428 = vpop.f32.mrb[0].mxu0
        %v429 = vpop.f32.mrb[0].mxu0
        %430 = vdwg.mxu0
        %v431 = vmul.f32 %v426, 0.35355338
        %v432 = vsel %vm157, %v431, -inf
        %433 = vmax.xlane.f32.xlu0 %v432
        %v434 = vpop.xlane.xlu0 %433
        %v435 = vsub.f32 %v431, %v434
        %v436 = vmul.f32 %v435, 1.442695
        %v437 = vpow.pop %v436
        %v438 = vsel %vm157, %v437, 0.0
        %439 = vadd.xlane.f32.xlu0 %v438
        %v440 = vpop.xlane.xlu0 %439
        %v441 = vrcp.pop %v440
        %v442 = vmul.f32 %v437, %v441
        %v443 = vpack.c.bf16 %v442, %v442
        %444 = vrot.lane.b32.xlu0 %v154, 48
        %v445 = vpop.permute.xlu0 %444
        %v447 = vsel %vm157, %v443, 0
        %v450 = vsel %vm222, %v445, 0
        %452 = vmatprep.subr.bf16.mxu0 0
        %453 = vmatpush1.bf16.msra.mxu0 %v450
        %454 = vmatprep.subr.bf16.mxu0 0
        %455 = vmatpush1.bf16.msra.mxu0 0
        %456 = vmatprep.subr.bf16.mxu0 0
        %457 = vmatpush1.bf16.msra.mxu0 0
        %458 = vmatprep.subr.bf16.mxu0 0
        %459 = vmatpush1.bf16.msra.mxu0 0
        %460 = vmatprep.subr.bf16.mxu0 0
        %461 = vmatpush1.bf16.msra.mxu0 0
        %462 = vmatprep.subr.bf16.mxu0 0
        %463 = vmatpush1.bf16.msra.mxu0 0
        %464 = vmatprep.subr.bf16.mxu0 0
        %465 = vmatpush1.bf16.msra.mxu0 0
        %466 = vmatprep.subr.bf16.mxu0 0
        %467 = vmatpush1.bf16.msra.mxu0 0
        %468 = vmatprep.subr.bf16.mxu0 0
        %469 = vmatpush1.bf16.msra.mxu0 0
        %470 = vmatprep.subr.bf16.mxu0 0
        %471 = vmatpush1.bf16.msra.mxu0 0
        %472 = vmatprep.subr.bf16.mxu0 0
        %473 = vmatpush1.bf16.msra.mxu0 0
        %474 = vmatprep.subr.bf16.mxu0 0
        %475 = vmatpush1.bf16.msra.mxu0 0
        %476 = vmatprep.subr.bf16.mxu0 0
        %477 = vmatpush1.bf16.msra.mxu0 0
        %478 = vmatprep.subr.bf16.mxu0 0
        %479 = vmatpush1.bf16.msra.mxu0 0
        %480 = vmatprep.subr.bf16.mxu0 0
        %481 = vmatpush1.bf16.msra.mxu0 0
        %482 = vmatprep.subr.bf16.mxu0 0
        %483 = vmatpush1.bf16.msra.mxu0 0
        %484 = vmatprep.mubr.bf16.mxu0 0
        %485 = vmatmul.mubr.bf16.gmra.mrb[0].mxu0 %v447
        %v486 = vpop.f32.mrb[0].mxu0
        %v487 = vadd.f32 0.0, %v486
        %v488 = vpop.f32.mrb[0].mxu0
        %v489 = vpop.f32.mrb[0].mxu0
        %v490 = vpop.f32.mrb[0].mxu0
        %491 = vdwg.mxu0
        %s492 = scalar_lea.vmem %s141, 8 [#allocation2]
        %493 = vst.msk [vmem:[%s492] sm:$0xf] %vm266, %v443
        %494 = vrot.lane.b32.xlu0 %v154, 104
        %v495 = vpop.permute.xlu0 %494
        %496 = vrot.lane.b32.xlu0 %v154, 72
        %v497 = vpop.permute.xlu0 %496
        %v499 = vsel %vm157, %v495, 0
        %v502 = vsel %vm157, %v497, 0
        %504 = vmatprep.subr.bf16.mxu0 0
        %505 = vmatpush1.bf16.xpose.msra.mxu0 %v502
        %506 = vmatprep.subr.bf16.mxu0 0
        %507 = vmatpush1.bf16.xpose.msra.mxu0 0
        %508 = vmatprep.subr.bf16.mxu0 0
        %509 = vmatpush1.bf16.xpose.msra.mxu0 0
        %510 = vmatprep.subr.bf16.mxu0 0
        %511 = vmatpush1.bf16.xpose.msra.mxu0 0
        %512 = vmatprep.subr.bf16.mxu0 0
        %513 = vmatpush1.bf16.xpose.msra.mxu0 0
        %514 = vmatprep.subr.bf16.mxu0 0
        %515 = vmatpush1.bf16.xpose.msra.mxu0 0
        %516 = vmatprep.subr.bf16.mxu0 0
        %517 = vmatpush1.bf16.xpose.msra.mxu0 0
        %518 = vmatprep.subr.bf16.mxu0 0
        %519 = vmatpush1.bf16.xpose.msra.mxu0 0
        %520 = vmatprep.subr.bf16.mxu0 0
        %521 = vmatpush1.bf16.xpose.msra.mxu0 0
        %522 = vmatprep.subr.bf16.mxu0 0
        %523 = vmatpush1.bf16.xpose.msra.mxu0 0
        %524 = vmatprep.subr.bf16.mxu0 0
        %525 = vmatpush1.bf16.xpose.msra.mxu0 0
        %526 = vmatprep.subr.bf16.mxu0 0
        %527 = vmatpush1.bf16.xpose.msra.mxu0 0
        %528 = vmatprep.subr.bf16.mxu0 0
        %529 = vmatpush1.bf16.xpose.msra.mxu0 0
        %530 = vmatprep.subr.bf16.mxu0 0
        %531 = vmatpush1.bf16.xpose.msra.mxu0 0
        %532 = vmatprep.subr.bf16.mxu0 0
        %533 = vmatpush1.bf16.xpose.msra.mxu0 0
        %534 = vmatprep.subr.bf16.mxu0 0
        %535 = vmatpush1.bf16.xpose.msra.mxu0 0
        %536 = vmatprep.mubr.bf16.mxu0 0
        %537 = vmatmul.mubr.bf16.gmra.mrb[0].mxu0 %v499
        %v538 = vpop.f32.mrb[0].mxu0
        %v539 = vadd.f32 0.0, %v538
        %v540 = vpop.f32.mrb[0].mxu0
        %v541 = vpop.f32.mrb[0].mxu0
        %v542 = vpop.f32.mrb[0].mxu0
        %543 = vdwg.mxu0
        %v544 = vmul.f32 %v539, 0.35355338
        %v545 = vsel %vm157, %v544, -inf
        %546 = vmax.xlane.f32.xlu0 %v545
        %v547 = vpop.xlane.xlu0 %546
        %v548 = vsub.f32 %v544, %v547
        %v549 = vmul.f32 %v548, 1.442695
        %v550 = vpow.pop %v549
        %v551 = vsel %vm157, %v550, 0.0
        %552 = vadd.xlane.f32.xlu0 %v551
        %v553 = vpop.xlane.xlu0 %552
        %v554 = vrcp.pop %v553
        %v555 = vmul.f32 %v550, %v554
        %v556 = vpack.c.bf16 %v555, %v555
        %557 = vrot.lane.b32.xlu0 %v154, 40
        %v558 = vpop.permute.xlu0 %557
        %v560 = vsel %vm157, %v556, 0
        %v563 = vsel %vm222, %v558, 0
        %565 = vmatprep.subr.bf16.mxu0 0
        %566 = vmatpush1.bf16.msra.mxu0 %v563
        %567 = vmatprep.subr.bf16.mxu0 0
        %568 = vmatpush1.bf16.msra.mxu0 0
        %569 = vmatprep.subr.bf16.mxu0 0
        %570 = vmatpush1.bf16.msra.mxu0 0
        %571 = vmatprep.subr.bf16.mxu0 0
        %572 = vmatpush1.bf16.msra.mxu0 0
        %573 = vmatprep.subr.bf16.mxu0 0
        %574 = vmatpush1.bf16.msra.mxu0 0
        %575 = vmatprep.subr.bf16.mxu0 0
        %576 = vmatpush1.bf16.msra.mxu0 0
        %577 = vmatprep.subr.bf16.mxu0 0
        %578 = vmatpush1.bf16.msra.mxu0 0
        %579 = vmatprep.subr.bf16.mxu0 0
        %580 = vmatpush1.bf16.msra.mxu0 0
        %581 = vmatprep.subr.bf16.mxu0 0
        %582 = vmatpush1.bf16.msra.mxu0 0
        %583 = vmatprep.subr.bf16.mxu0 0
        %584 = vmatpush1.bf16.msra.mxu0 0
        %585 = vmatprep.subr.bf16.mxu0 0
        %586 = vmatpush1.bf16.msra.mxu0 0
        %587 = vmatprep.subr.bf16.mxu0 0
        %588 = vmatpush1.bf16.msra.mxu0 0
        %589 = vmatprep.subr.bf16.mxu0 0
        %590 = vmatpush1.bf16.msra.mxu0 0
        %591 = vmatprep.subr.bf16.mxu0 0
        %592 = vmatpush1.bf16.msra.mxu0 0
        %593 = vmatprep.subr.bf16.mxu0 0
        %594 = vmatpush1.bf16.msra.mxu0 0
        %595 = vmatprep.subr.bf16.mxu0 0
        %596 = vmatpush1.bf16.msra.mxu0 0
        %597 = vmatprep.mubr.bf16.mxu0 0
        %598 = vmatmul.mubr.bf16.gmra.mrb[0].mxu0 %v560
        %v599 = vpop.f32.mrb[0].mxu0
        %v600 = vadd.f32 0.0, %v599
        %v601 = vpop.f32.mrb[0].mxu0
        %v602 = vpop.f32.mrb[0].mxu0
        %v603 = vpop.f32.mrb[0].mxu0
        %604 = vdwg.mxu0
        %s605 = scalar_lea.vmem %s141, 12 [#allocation2]
        %606 = vst.msk [vmem:[%s605] sm:$0xf] %vm266, %v556
        %608 = vrot.lane.b32.xlu0 %v374, 8
        %v609 = vpop.permute.xlu0 %608
        %612 = vrot.lane.b32.xlu0 %v487, 16
        %v613 = vpop.permute.xlu0 %612
        %616 = vrot.lane.b32.xlu0 %v600, 24
        %v617 = vpop.permute.xlu0 %616
        %v619 = vsel %vm157, %v261, %v609
        %vm620 = vcmask 130048
        %v621 = vsel %vm620, %v619, %v613
        %vm622 = vcmask 195584
        %v623 = vsel %vm622, %v621, %v617
        %v624 = vpack.c.bf16 %v623, %v623
        %vm625 = vcmask 257024
        %626 = vst.msk [vmem:[%s149] sm:$0xf] %vm625, %v624
        %p627 = scmp.lt.s32.totalorder %s17, 1
        %s628 = scalar_select %p627, %s17, 1
        %s629 = smul.addr %s628, 4
        %s630 = scalar_lea.vmem %s1, %s629
        %s631 = sand.u32 %s77, 1
        %s632 = scalar_lea.sflag [#allocation3], %s631
        %s633 = sand.u32 %s77, 1
        %s634 = smul.addr %s633, 16
        %s635 = scalar_lea.vmem [#allocation2], %s634
        // Predicated region
        $region25: #{encoder_forward.42} parent=23 // pred_check
          %p636 = pneg %p61
        $region26: #{encoder_forward.42} parent=23 // pred_check_branch
          %638 = sbr.rel (%p636) target = $region28
        $region27: #{encoder_forward.42} parent=23 // pred_region
          _
        $region28: #{encoder_forward.42} parent=23 // pred_fallthru
          _
        // Predicated region
        $region29: #{encoder_forward.42} parent=23 // pred_check
          %p639 = pneg %p87
        $region30: #{encoder_forward.42} parent=23 // pred_check_branch
          %641 = sbr.rel (%p639) target = $region32
        $region31: #{encoder_forward.42} parent=23 // pred_region
          %s643 = ssub.s32 256, 256
          %644 = vsyncadd %s632, %s643
          %s645 = smul.addr %s17, 4
          %s646 = smul.addr %s645, 64
          %s647 = scalar_lea.hbm %s2, %s646
          %s648 = sshll.u32 %s635, 4
          %s649 = int_to_ptr.vmem [resolvable:$true] %s648
          %654 = dma.vmem_to_hbm [thread:$0]  %s649, 256, %s647, %s632, 64, 64, 4
        $region32: #{encoder_forward.42} parent=23 // pred_fallthru
          _
      $region24: #{encoder_forward.42} parent=5 // pred_fallthru
        _
      %p655 = scmp.le.s32.totalorder 2, %s12
      // Predicated region
      $region33: #{encoder_forward.42} parent=5 // pred_check
        %p656 = pneg %p655
      $region34: #{encoder_forward.42} parent=5 // pred_check_branch
        %658 = sbr.rel (%p656) target = $region36
      $region35: #{encoder_forward.42} parent=5 // pred_region
        %s659 = ssub.s32 %s12, 2
        // Predicated region
        $region37: #{encoder_forward.42} parent=35 // pred_check
          %p660 = pneg %p67
        $region38: #{encoder_forward.42} parent=35 // pred_check_branch
          %662 = sbr.rel (%p660) target = $region40
        $region39: #{encoder_forward.42} parent=35 // pred_region
          %p663 = scmp.lt.s32.totalorder %s18, 1
          %s664 = scalar_select %p663, %s18, 1
          %s665 = smul.addr %s664, 4
          %s666 = scalar_lea.vmem %s1, %s665
        $region40: #{encoder_forward.42} parent=35 // pred_fallthru
          _
        // Predicated region
        $region41: #{encoder_forward.42} parent=35 // pred_check
          %p667 = pneg %p93
        $region42: #{encoder_forward.42} parent=35 // pred_check_branch
          %669 = sbr.rel (%p667) target = $region44
        $region43: #{encoder_forward.42} parent=35 // pred_region
          %s670 = sand.u32 %s78, 1
          %s671 = scalar_lea.sflag [#allocation3], %s670
          %s672 = sand.u32 %s78, 1
          %s673 = smul.addr %s672, 16
          %s674 = scalar_lea.vmem [#allocation2], %s673
          %675 = dma.done %s671, 256
        $region44: #{encoder_forward.42} parent=35 // pred_fallthru
          _
      $region36: #{encoder_forward.42} parent=5 // pred_fallthru
        _
    $region6: #{encoder_forward.42} parent=1 // loop_footer
      %s16 = sadd.s32 1, %s12
    $region7: #{encoder_forward.42} parent=1 // loop_footer_branch
      %11 = sbr.rel target = $region3
    $region8: #{encoder_forward.42} parent=1 // loop_exit
      _
    %676 = vsyncpa [#allocation3], 1
    %s677 = scalar_lea.sflag [#allocation3], 1
    %678 = vsyncpa %s677, 1

// kernel: encoder_forward.45
$region0: #{encoder_forward.45}
  #allocation0 [shape = 'u32[]', space=smem, size = 0x4, offset = 0x4, fixed_abs, tag = 'smem constant byte address 0x4 - core index']
  #allocation1 [shape = 'u32[144,128]{1,0:T(1,128)}', space=vmem, size = 0x12000, scoped, tag = 'internal scratch']
  %s0 = inlined_call_operand.vmem [shape: bf16[16,64], index: 0, kind: input, shape index: {}]
  %s1 = inlined_call_operand.vmem [shape: bf16[64,32], index: 1, kind: input, shape index: {}]
  %s2 = inlined_call_operand.vmem [shape: f32[1,32], index: 2, kind: input, shape index: {}]
  %s3 = inlined_call_operand.vmem [shape: bf16[16,32], index: 3, kind: input, shape index: {}]
  %s4 = inlined_call_operand.vmem [shape: bf16[16,32], index: 4, kind: output, shape index: {}]
  %s5 = sld [smem:[#allocation0]]
  $region26: #{encoder_forward.45} parent=0
    _
  %s7 = ssub.s32 1, %s5
  %s8 = scalar_select 0, %s7, %s5
  // Predicated region
  $region2: #{encoder_forward.45} parent=0 // pred_check
    _
  $region3: #{encoder_forward.45} parent=0 // pred_check_branch
    %10 = sbr.rel (0) target = $region5
  $region4: #{encoder_forward.45} parent=0 // pred_region
    _
  $region5: #{encoder_forward.45} parent=0 // pred_fallthru
    _
  // Predicated region
  $region6: #{encoder_forward.45} parent=0 // pred_check
    _
  $region7: #{encoder_forward.45} parent=0 // pred_check_branch
    %12 = sbr.rel (0) target = $region9
  $region8: #{encoder_forward.45} parent=0 // pred_region
    _
  $region9: #{encoder_forward.45} parent=0 // pred_fallthru
    _
  // Predicated region
  $region10: #{encoder_forward.45} parent=0 // pred_check
    _
  $region11: #{encoder_forward.45} parent=0 // pred_check_branch
    %14 = sbr.rel (0) target = $region13
  $region12: #{encoder_forward.45} parent=0 // pred_region
    _
  $region13: #{encoder_forward.45} parent=0 // pred_fallthru
    _
  // Predicated region
  $region14: #{encoder_forward.45} parent=0 // pred_check
    _
  $region15: #{encoder_forward.45} parent=0 // pred_check_branch
    %16 = sbr.rel (0) target = $region17
  $region16: #{encoder_forward.45} parent=0 // pred_region
    _
  $region17: #{encoder_forward.45} parent=0 // pred_fallthru
    _
  %v18 = vld [vmem:[%s0] sm:$0xf]
  %v19 = vld [vmem:[%s0 + $0x4] sm:$0xf]
  %v20 = vld [vmem:[%s1] sm:$0xf]
  %v21 = vld [vmem:[%s1 + $0x4] sm:$0xf]
  %v22 = vld [vmem:[%s1 + $0x8] sm:$0xf]
  %v23 = vld [vmem:[%s1 + $0xc] sm:$0xf]
  %v24 = vld [vmem:[%s1 + $0x10] sm:$0xf]
  %v25 = vld [vmem:[%s1 + $0x14] sm:$0xf]
  %v26 = vld [vmem:[%s1 + $0x18] sm:$0xf]
  %v27 = vld [vmem:[%s1 + $0x1c] sm:$0xf]
  %v28 = vld [vmem:[%s2] sm:$0x1]
  %v30 = vlaneseq
  %v31 = vshrl.u32 %v30, 7
  %v32 = vsub.s32 0, %v31
  %v33 = vrot.slane %v28, %v32
  %v37 = vunpack.c.l.b16 %v18
  %v38 = vunpack.c.l.b16 %v19
  %v39 = vpack.c.b16 %v38, %v37
  %v48 = vunpack.c.l.b16 %v20
  %v49 = vunpack.c.l.b16 %v21
  %v50 = vunpack.c.l.b16 %v22
  %v51 = vunpack.c.l.b16 %v23
  %v52 = vunpack.c.l.b16 %v24
  %v53 = vunpack.c.l.b16 %v25
  %v54 = vunpack.c.l.b16 %v26
  %v55 = vunpack.c.l.b16 %v27
  %v56 = vpack.c.b16 %v49, %v48
  %v57 = vpack.c.b16 %v51, %v50
  %v58 = vpack.c.b16 %v53, %v52
  %v59 = vpack.c.b16 %v55, %v54
  %vm64 = vcmask 523264
  %v66 = vsel %vm64, %v39, 0
  %68 = vmatprep.subr.bf16.mxu0 0
  %69 = vmatpush1.bf16.msra.mxu0 %v56
  %70 = vmatprep.subr.bf16.mxu0 0
  %71 = vmatpush1.bf16.msra.mxu0 %v57
  %72 = vmatprep.subr.bf16.mxu0 0
  %73 = vmatpush1.bf16.msra.mxu0 %v58
  %74 = vmatprep.subr.bf16.mxu0 0
  %75 = vmatpush1.bf16.msra.mxu0 %v59
  %76 = vmatprep.subr.bf16.mxu0 0
  %77 = vmatpush1.bf16.msra.mxu0 0
  %78 = vmatprep.subr.bf16.mxu0 0
  %79 = vmatpush1.bf16.msra.mxu0 0
  %80 = vmatprep.subr.bf16.mxu0 0
  %81 = vmatpush1.bf16.msra.mxu0 0
  %82 = vmatprep.subr.bf16.mxu0 0
  %83 = vmatpush1.bf16.msra.mxu0 0
  %84 = vmatprep.subr.bf16.mxu0 0
  %85 = vmatpush1.bf16.msra.mxu0 0
  %86 = vmatprep.subr.bf16.mxu0 0
  %87 = vmatpush1.bf16.msra.mxu0 0
  %88 = vmatprep.subr.bf16.mxu0 0
  %89 = vmatpush1.bf16.msra.mxu0 0
  %90 = vmatprep.subr.bf16.mxu0 0
  %91 = vmatpush1.bf16.msra.mxu0 0
  %92 = vmatprep.subr.bf16.mxu0 0
  %93 = vmatpush1.bf16.msra.mxu0 0
  %94 = vmatprep.subr.bf16.mxu0 0
  %95 = vmatpush1.bf16.msra.mxu0 0
  %96 = vmatprep.subr.bf16.mxu0 0
  %97 = vmatpush1.bf16.msra.mxu0 0
  %98 = vmatprep.subr.bf16.mxu0 0
  %99 = vmatpush1.bf16.msra.mxu0 0
  %100 = vmatprep.mubr.bf16.mxu0 0
  %101 = vmatmul.mubr.bf16.gmra.mrb[0].mxu0 %v66
  %v102 = vpop.f32.mrb[0].mxu0
  %v103 = vadd.f32 %v33, %v102
  %v104 = vpop.f32.mrb[0].mxu0
  %v105 = vpop.f32.mrb[0].mxu0
  %v106 = vadd.f32 %v33, %v105
  %v107 = vpop.f32.mrb[0].mxu0
  %108 = vdwg.mxu0
  %v109 = vld [vmem:[%s3] sm:$0xf]
  %v110 = vld [vmem:[%s3 + $0x4] sm:$0xf]
  %v111 = vunpack.c.l.bf16 %v109
  %v112 = vunpack.c.l.bf16 %v110
  %v113 = vadd.f32 %v103, %v111
  %v114 = vadd.f32 %v106, %v112
  %v115 = vpack.c.bf16 %v114, %v113
  %v117 = vunpack.c.l.b16 %v115
  %v118 = vunpack.c.h.b16 %v115
  %v119 = vpack.c.b16 %v117, %v117
  %v120 = vpack.c.b16 %v118, %v118
  %vm123 = vcmask 257024
  %124 = vst.msk [vmem:[%s4] sm:$0xf] %vm123, %v119
  %125 = vst.msk [vmem:[%s4 + $0x4] sm:$0xf] %vm123, %v120
  // Predicated region
  $region18: #{encoder_forward.45} parent=0 // pred_check
    _
  $region19: #{encoder_forward.45} parent=0 // pred_check_branch
    %127 = sbr.rel (0) target = $region21
  $region20: #{encoder_forward.45} parent=0 // pred_region
    _
  $region21: #{encoder_forward.45} parent=0 // pred_fallthru
    _
  // Predicated region
  $region22: #{encoder_forward.45} parent=0 // pred_check
    _
  $region23: #{encoder_forward.45} parent=0 // pred_check_branch
    %129 = sbr.rel (0) target = $region25
  $region24: #{encoder_forward.45} parent=0 // pred_region
    _
  $region25: #{encoder_forward.45} parent=0 // pred_fallthru
    _

// kernel: encoder_forward.44
$region0: #{encoder_forward.44}
  #allocation0 [shape = 'u32[]', space=smem, size = 0x4, offset = 0x4, fixed_abs, tag = 'smem constant byte address 0x4 - core index']
  #allocation1 [shape = 'u32[144,128]{1,0:T(1,128)}', space=vmem, size = 0x12000, scoped, tag = 'internal scratch']
  %s0 = inlined_call_operand.vmem [shape: bf16[16,32], index: 0, kind: input, shape index: {}]
  %s1 = inlined_call_operand.vmem [shape: f32[1,32], index: 1, kind: input, shape index: {}]
  %s2 = inlined_call_operand.vmem [shape: f32[1,32], index: 2, kind: input, shape index: {}]
  %s3 = inlined_call_operand.vmem [shape: bf16[32,64], index: 3, kind: input, shape index: {}]
  %s4 = inlined_call_operand.vmem [shape: f32[1,64], index: 4, kind: input, shape index: {}]
  %s5 = inlined_call_operand.vmem [shape: bf16[16,64], index: 5, kind: output, shape index: {}]
  %s6 = sld [smem:[#allocation0]]
  $region30: #{encoder_forward.44} parent=0
    _
  %s8 = ssub.s32 1, %s6
  %s9 = scalar_select 0, %s8, %s6
  // Predicated region
  $region2: #{encoder_forward.44} parent=0 // pred_check
    _
  $region3: #{encoder_forward.44} parent=0 // pred_check_branch
    %11 = sbr.rel (0) target = $region5
  $region4: #{encoder_forward.44} parent=0 // pred_region
    _
  $region5: #{encoder_forward.44} parent=0 // pred_fallthru
    _
  // Predicated region
  $region6: #{encoder_forward.44} parent=0 // pred_check
    _
  $region7: #{encoder_forward.44} parent=0 // pred_check_branch
    %13 = sbr.rel (0) target = $region9
  $region8: #{encoder_forward.44} parent=0 // pred_region
    _
  $region9: #{encoder_forward.44} parent=0 // pred_fallthru
    _
  // Predicated region
  $region10: #{encoder_forward.44} parent=0 // pred_check
    _
  $region11: #{encoder_forward.44} parent=0 // pred_check_branch
    %15 = sbr.rel (0) target = $region13
  $region12: #{encoder_forward.44} parent=0 // pred_region
    _
  $region13: #{encoder_forward.44} parent=0 // pred_fallthru
    _
  // Predicated region
  $region14: #{encoder_forward.44} parent=0 // pred_check
    _
  $region15: #{encoder_forward.44} parent=0 // pred_check_branch
    %17 = sbr.rel (0) target = $region17
  $region16: #{encoder_forward.44} parent=0 // pred_region
    _
  $region17: #{encoder_forward.44} parent=0 // pred_fallthru
    _
  // Predicated region
  $region18: #{encoder_forward.44} parent=0 // pred_check
    _
  $region19: #{encoder_forward.44} parent=0 // pred_check_branch
    %19 = sbr.rel (0) target = $region21
  $region20: #{encoder_forward.44} parent=0 // pred_region
    _
  $region21: #{encoder_forward.44} parent=0 // pred_fallthru
    _
  %v21 = vld [vmem:[%s0] sm:$0xf]
  %v22 = vld [vmem:[%s0 + $0x4] sm:$0xf]
  %v23 = vunpack.c.l.bf16 %v21
  %v24 = vunpack.c.l.bf16 %v22
  %vm25 = vcmask 261120
  %v26 = vsel %vm25, %v23, 0.0
  %27 = vadd.xlane.f32.xlu0 %v26
  %v28 = vpop.xlane.xlu0 %27
  %v29 = vsel %vm25, %v24, 0.0
  %30 = vadd.xlane.f32.xlu0 %v29
  %v31 = vpop.xlane.xlu0 %30
  %v32 = vrcp.pop 32.0
  %v33 = vmul.f32 %v28, %v32
  %v34 = vmul.f32 %v31, %v32
  %v35 = vsub.f32 %v23, %v33
  %v36 = vsub.f32 %v24, %v34
  %v37 = vmul.f32 %v35, %v35
  %v38 = vmul.f32 %v36, %v36
  %v39 = vsel %vm25, %v37, 0.0
  %40 = vadd.xlane.f32.xlu0 %v39
  %v41 = vpop.xlane.xlu0 %40
  %v42 = vsel %vm25, %v38, 0.0
  %43 = vadd.xlane.f32.xlu0 %v42
  %v44 = vpop.xlane.xlu0 %43
  %v45 = vmul.f32 %v41, %v32
  %v46 = vmul.f32 %v44, %v32
  %v47 = vadd.f32 %v45, 1e-06
  %v48 = vadd.f32 %v46, 1e-06
  %v49 = vrsqrt.pop %v47
  %v50 = vrsqrt.pop %v48
  %v51 = vmul.f32 %v35, %v49
  %v52 = vmul.f32 %v36, %v50
  %v53 = vld [vmem:[%s1] sm:$0x1]
  %v55 = vlaneseq
  %v56 = vshrl.u32 %v55, 7
  %v57 = vsub.s32 0, %v56
  %v58 = vrot.slane %v53, %v57
  %v60 = vmul.f32 %v51, %v58
  %v61 = vmul.f32 %v52, %v58
  %v62 = vld [vmem:[%s2] sm:$0x1]
  %v64 = vlaneseq
  %v65 = vshrl.u32 %v64, 7
  %v66 = vsub.s32 0, %v65
  %v67 = vrot.slane %v62, %v66
  %v69 = vadd.f32 %v60, %v67
  %v70 = vadd.f32 %v61, %v67
  %v71 = vpack.c.bf16 %v70, %v69
  %v72 = vld [vmem:[%s3] sm:$0xf]
  %v73 = vld [vmem:[%s3 + $0x4] sm:$0xf]
  %v74 = vld [vmem:[%s3 + $0x8] sm:$0xf]
  %v75 = vld [vmem:[%s3 + $0xc] sm:$0xf]
  %v76 = vld [vmem:[%s4] sm:$0x1]
  %v78 = vlaneseq
  %v79 = vshrl.u32 %v78, 7
  %v80 = vsub.s32 0, %v79
  %v81 = vrot.slane %v76, %v80
  %v87 = vunpack.c.l.b16 %v72
  %v88 = vunpack.c.l.b16 %v73
  %v89 = vunpack.c.l.b16 %v74
  %v90 = vunpack.c.l.b16 %v75
  %v91 = vpack.c.b16 %v88, %v87
  %v92 = vpack.c.b16 %v90, %v89
  %v96 = vsel %vm25, %v71, 0
  %98 = vmatprep.subr.bf16.mxu0 0
  %99 = vmatpush1.bf16.msra.mxu0 %v91
  %100 = vmatprep.subr.bf16.mxu0 0
  %101 = vmatpush1.bf16.msra.mxu0 %v92
  %102 = vmatprep.subr.bf16.mxu0 0
  %103 = vmatpush1.bf16.msra.mxu0 0
  %104 = vmatprep.subr.bf16.mxu0 0
  %105 = vmatpush1.bf16.msra.mxu0 0
  %106 = vmatprep.subr.bf16.mxu0 0
  %107 = vmatpush1.bf16.msra.mxu0 0
  %108 = vmatprep.subr.bf16.mxu0 0
  %109 = vmatpush1.bf16.msra.mxu0 0
  %110 = vmatprep.subr.bf16.mxu0 0
  %111 = vmatpush1.bf16.msra.mxu0 0
  %112 = vmatprep.subr.bf16.mxu0 0
  %113 = vmatpush1.bf16.msra.mxu0 0
  %114 = vmatprep.subr.bf16.mxu0 0
  %115 = vmatpush1.bf16.msra.mxu0 0
  %116 = vmatprep.subr.bf16.mxu0 0
  %117 = vmatpush1.bf16.msra.mxu0 0
  %118 = vmatprep.subr.bf16.mxu0 0
  %119 = vmatpush1.bf16.msra.mxu0 0
  %120 = vmatprep.subr.bf16.mxu0 0
  %121 = vmatpush1.bf16.msra.mxu0 0
  %122 = vmatprep.subr.bf16.mxu0 0
  %123 = vmatpush1.bf16.msra.mxu0 0
  %124 = vmatprep.subr.bf16.mxu0 0
  %125 = vmatpush1.bf16.msra.mxu0 0
  %126 = vmatprep.subr.bf16.mxu0 0
  %127 = vmatpush1.bf16.msra.mxu0 0
  %128 = vmatprep.subr.bf16.mxu0 0
  %129 = vmatpush1.bf16.msra.mxu0 0
  %130 = vmatprep.mubr.bf16.mxu0 0
  %131 = vmatmul.mubr.bf16.gmra.mrb[0].mxu0 %v96
  %v132 = vpop.f32.mrb[0].mxu0
  %v133 = vadd.f32 %v81, %v132
  %v134 = vpop.f32.mrb[0].mxu0
  %v135 = vpop.f32.mrb[0].mxu0
  %v136 = vadd.f32 %v81, %v135
  %v137 = vpop.f32.mrb[0].mxu0
  %138 = vdwg.mxu0
  %v139 = vmul.f32 %v133, %v133
  %v140 = vmul.f32 %v136, %v136
  %v141 = vmul.f32 %v133, %v139
  %v142 = vmul.f32 %v136, %v140
  %v143 = vmul.f32 %v141, 0.044715
  %v144 = vmul.f32 %v142, 0.044715
  %v145 = vadd.f32 %v133, %v143
  %v146 = vadd.f32 %v136, %v144
  %v147 = vmul.f32 %v145, 0.7978846
  %v148 = vmul.f32 %v146, 0.7978846
  %v149 = vtanh.pop %v147
  %v150 = vtanh.pop %v148
  %v151 = vadd.f32 %v149, 1.0
  %v152 = vadd.f32 %v150, 1.0
  %v153 = vmul.f32 %v151, 0.5
  %v154 = vmul.f32 %v152, 0.5
  %v155 = vmul.f32 %v133, %v153
  %v156 = vmul.f32 %v136, %v154
  %v157 = vpack.c.bf16 %v156, %v155
  %v159 = vunpack.c.l.b16 %v157
  %v160 = vunpack.c.h.b16 %v157
  %v161 = vpack.c.b16 %v159, %v159
  %v162 = vpack.c.b16 %v160, %v160
  %vm165 = vcmask 519168
  %166 = vst.msk [vmem:[%s5] sm:$0xf] %vm165, %v161
  %167 = vst.msk [vmem:[%s5 + $0x4] sm:$0xf] %vm165, %v162
  // Predicated region
  $region22: #{encoder_forward.44} parent=0 // pred_check
    _
  $region23: #{encoder_forward.44} parent=0 // pred_check_branch
    %169 = sbr.rel (0) target = $region25
  $region24: #{encoder_forward.44} parent=0 // pred_region
    _
  $region25: #{encoder_forward.44} parent=0 // pred_fallthru
    _
  // Predicated region
  $region26: #{encoder_forward.44} parent=0 // pred_check
    _
  $region27: #{encoder_forward.44} parent=0 // pred_check_branch
    %171 = sbr.rel (0) target = $region29
  $region28: #{encoder_forward.44} parent=0 // pred_region
    _
  $region29: #{encoder_forward.44} parent=0 // pred_fallthru
    _

// kernel: encoder_forward.71
$region0: #{encoder_forward.71}
  #allocation0 [shape = 'u32[]', space=smem, size = 0x4, offset = 0x4, fixed_abs, tag = 'smem constant byte address 0x4 - core index']
  #allocation1 [shape = 'u32[144,128]{1,0:T(1,128)}', space=vmem, size = 0x12000, scoped, tag = 'internal scratch']
  %s0 = inlined_call_operand.vmem [shape: bf16[28,32], index: 0, kind: input, shape index: {}]
  %s1 = inlined_call_operand.vmem [shape: f32[1,32], index: 1, kind: input, shape index: {}]
  %s2 = inlined_call_operand.vmem [shape: f32[1,32], index: 2, kind: input, shape index: {}]
  %s3 = inlined_call_operand.vmem [shape: bf16[32,96], index: 3, kind: input, shape index: {}]
  %s4 = inlined_call_operand.vmem [shape: f32[1,96], index: 4, kind: input, shape index: {}]
  %s5 = inlined_call_operand.vmem [shape: bf16[28,96], index: 5, kind: output, shape index: {}]
  %s6 = sld [smem:[#allocation0]]
  $region30: #{encoder_forward.71} parent=0
    _
  %s8 = ssub.s32 1, %s6
  %s9 = scalar_select 0, %s8, %s6
  // Predicated region
  $region2: #{encoder_forward.71} parent=0 // pred_check
    _
  $region3: #{encoder_forward.71} parent=0 // pred_check_branch
    %11 = sbr.rel (0) target = $region5
  $region4: #{encoder_forward.71} parent=0 // pred_region
    _
  $region5: #{encoder_forward.71} parent=0 // pred_fallthru
    _
  // Predicated region
  $region6: #{encoder_forward.71} parent=0 // pred_check
    _
  $region7: #{encoder_forward.71} parent=0 // pred_check_branch
    %13 = sbr.rel (0) target = $region9
  $region8: #{encoder_forward.71} parent=0 // pred_region
    _
  $region9: #{encoder_forward.71} parent=0 // pred_fallthru
    _
  // Predicated region
  $region10: #{encoder_forward.71} parent=0 // pred_check
    _
  $region11: #{encoder_forward.71} parent=0 // pred_check_branch
    %15 = sbr.rel (0) target = $region13
  $region12: #{encoder_forward.71} parent=0 // pred_region
    _
  $region13: #{encoder_forward.71} parent=0 // pred_fallthru
    _
  // Predicated region
  $region14: #{encoder_forward.71} parent=0 // pred_check
    _
  $region15: #{encoder_forward.71} parent=0 // pred_check_branch
    %17 = sbr.rel (0) target = $region17
  $region16: #{encoder_forward.71} parent=0 // pred_region
    _
  $region17: #{encoder_forward.71} parent=0 // pred_fallthru
    _
  // Predicated region
  $region18: #{encoder_forward.71} parent=0 // pred_check
    _
  $region19: #{encoder_forward.71} parent=0 // pred_check_branch
    %19 = sbr.rel (0) target = $region21
  $region20: #{encoder_forward.71} parent=0 // pred_region
    _
  $region21: #{encoder_forward.71} parent=0 // pred_fallthru
    _
  %v21 = vld [vmem:[%s0] sm:$0xf]
  %v22 = vld [vmem:[%s0 + $0x4] sm:$0xf]
  %v23 = vld [vmem:[%s0 + $0x8] sm:$0xf]
  %v24 = vld [vmem:[%s0 + $0xc] sm:$0x3]
  %v25 = vunpack.c.l.bf16 %v21
  %v26 = vunpack.c.l.bf16 %v22
  %v27 = vunpack.c.l.bf16 %v23
  %v28 = vunpack.c.l.bf16 %v24
  %vm29 = vcmask 261120
  %v30 = vsel %vm29, %v25, 0.0
  %31 = vadd.xlane.f32.xlu0 %v30
  %v32 = vpop.xlane.xlu0 %31
  %v33 = vsel %vm29, %v26, 0.0
  %34 = vadd.xlane.f32.xlu0 %v33
  %v35 = vpop.xlane.xlu0 %34
  %v36 = vsel %vm29, %v27, 0.0
  %37 = vadd.xlane.f32.xlu0 %v36
  %v38 = vpop.xlane.xlu0 %37
  %vm39 = vcmask 257024
  %v40 = vsel %vm39, %v28, 0.0
  %41 = vadd.xlane.f32.xlu0 %v40
  %v42 = vpop.xlane.xlu0 %41
  %v43 = vrcp.pop 32.0
  %v44 = vmul.f32 %v32, %v43
  %v45 = vmul.f32 %v35, %v43
  %v46 = vmul.f32 %v38, %v43
  %v47 = vmul.f32 %v42, %v43
  %v48 = vsub.f32 %v25, %v44
  %v49 = vsub.f32 %v26, %v45
  %v50 = vsub.f32 %v27, %v46
  %v51 = vsub.f32 %v28, %v47
  %v52 = vmul.f32 %v48, %v48
  %v53 = vmul.f32 %v49, %v49
  %v54 = vmul.f32 %v50, %v50
  %v55 = vmul.f32 %v51, %v51
  %v56 = vsel %vm29, %v52, 0.0
  %57 = vadd.xlane.f32.xlu0 %v56
  %v58 = vpop.xlane.xlu0 %57
  %v59 = vsel %vm29, %v53, 0.0
  %60 = vadd.xlane.f32.xlu0 %v59
  %v61 = vpop.xlane.xlu0 %60
  %v62 = vsel %vm29, %v54, 0.0
  %63 = vadd.xlane.f32.xlu0 %v62
  %v64 = vpop.xlane.xlu0 %63
  %v65 = vsel %vm39, %v55, 0.0
  %66 = vadd.xlane.f32.xlu0 %v65
  %v67 = vpop.xlane.xlu0 %66
  %v68 = vmul.f32 %v58, %v43
  %v69 = vmul.f32 %v61, %v43
  %v70 = vmul.f32 %v64, %v43
  %v71 = vmul.f32 %v67, %v43
  %v72 = vadd.f32 %v68, 1e-06
  %v73 = vadd.f32 %v69, 1e-06
  %v74 = vadd.f32 %v70, 1e-06
  %v75 = vadd.f32 %v71, 1e-06
  %v76 = vrsqrt.pop %v72
  %v77 = vrsqrt.pop %v73
  %v78 = vrsqrt.pop %v74
  %v79 = vrsqrt.pop %v75
  %v80 = vmul.f32 %v48, %v76
  %v81 = vmul.f32 %v49, %v77
  %v82 = vmul.f32 %v50, %v78
  %v83 = vmul.f32 %v51, %v79
  %v84 = vld [vmem:[%s1] sm:$0x1]
  %v86 = vlaneseq
  %v87 = vshrl.u32 %v86, 7
  %v88 = vsub.s32 0, %v87
  %v89 = vrot.slane %v84, %v88
  %v91 = vmul.f32 %v80, %v89
  %v92 = vmul.f32 %v81, %v89
  %v93 = vmul.f32 %v82, %v89
  %v94 = vmul.f32 %v83, %v89
  %v95 = vld [vmem:[%s2] sm:$0x1]
  %v97 = vlaneseq
  %v98 = vshrl.u32 %v97, 7
  %v99 = vsub.s32 0, %v98
  %v100 = vrot.slane %v95, %v99
  %v102 = vadd.f32 %v91, %v100
  %v103 = vadd.f32 %v92, %v100
  %v104 = vadd.f32 %v93, %v100
  %v105 = vadd.f32 %v94, %v100
  %v106 = vpack.c.bf16 %v103, %v102
  %v107 = vpack.c.bf16 %v105, %v104
  %v108 = vld [vmem:[%s3] sm:$0xf]
  %v109 = vld [vmem:[%s3 + $0x4] sm:$0xf]
  %v110 = vld [vmem:[%s3 + $0x8] sm:$0xf]
  %v111 = vld [vmem:[%s3 + $0xc] sm:$0xf]
  %v112 = vld [vmem:[%s4] sm:$0x1]
  %v114 = vlaneseq
  %v115 = vshrl.u32 %v114, 7
  %v116 = vsub.s32 0, %v115
  %v117 = vrot.slane %v112, %v116
  %v123 = vunpack.c.l.b16 %v108
  %v124 = vunpack.c.l.b16 %v109
  %v125 = vunpack.c.l.b16 %v110
  %v126 = vunpack.c.l.b16 %v111
  %v127 = vpack.c.b16 %v124, %v123
  %v128 = vpack.c.b16 %v126, %v125
  %v132 = vsel %vm29, %v106, 0
  %v135 = vsel %vm29, %v107, 0
  %137 = vmatprep.subr.bf16.mxu0 0
  %138 = vmatpush1.bf16.msra.mxu0 %v127
  %139 = vmatprep.subr.bf16.mxu0 0
  %140 = vmatpush1.bf16.msra.mxu0 %v128
  %141 = vmatprep.subr.bf16.mxu0 0
  %142 = vmatpush1.bf16.msra.mxu0 0
  %143 = vmatprep.subr.bf16.mxu0 0
  %144 = vmatpush1.bf16.msra.mxu0 0
  %145 = vmatprep.subr.bf16.mxu0 0
  %146 = vmatpush1.bf16.msra.mxu0 0
  %147 = vmatprep.subr.bf16.mxu0 0
  %148 = vmatpush1.bf16.msra.mxu0 0
  %149 = vmatprep.subr.bf16.mxu0 0
  %150 = vmatpush1.bf16.msra.mxu0 0
  %151 = vmatprep.subr.bf16.mxu0 0
  %152 = vmatpush1.bf16.msra.mxu0 0
  %153 = vmatprep.subr.bf16.mxu0 0
  %154 = vmatpush1.bf16.msra.mxu0 0
  %155 = vmatprep.subr.bf16.mxu0 0
  %156 = vmatpush1.bf16.msra.mxu0 0
  %157 = vmatprep.subr.bf16.mxu0 0
  %158 = vmatpush1.bf16.msra.mxu0 0
  %159 = vmatprep.subr.bf16.mxu0 0
  %160 = vmatpush1.bf16.msra.mxu0 0
  %161 = vmatprep.subr.bf16.mxu0 0
  %162 = vmatpush1.bf16.msra.mxu0 0
  %163 = vmatprep.subr.bf16.mxu0 0
  %164 = vmatpush1.bf16.msra.mxu0 0
  %165 = vmatprep.subr.bf16.mxu0 0
  %166 = vmatpush1.bf16.msra.mxu0 0
  %167 = vmatprep.subr.bf16.mxu0 0
  %168 = vmatpush1.bf16.msra.mxu0 0
  %169 = vmatprep.mubr.bf16.mxu0 0
  %170 = vmatmul.mubr.bf16.gmra.mrb[0].mxu0 %v132
  %v171 = vpop.f32.mrb[0].mxu0
  %v172 = vadd.f32 %v117, %v171
  %v173 = vpop.f32.mrb[0].mxu0
  %v174 = vpop.f32.mrb[0].mxu0
  %v175 = vadd.f32 %v117, %v174
  %v176 = vpop.f32.mrb[0].mxu0
  %177 = vmatprep.mubr.bf16.mxu0 0
  %178 = vmatmul.mubr.bf16.gmra.mrb[0].mxu0 %v135
  %v179 = vpop.f32.mrb[0].mxu0
  %v180 = vadd.f32 %v117, %v179
  %v181 = vpop.f32.mrb[0].mxu0
  %v182 = vpop.f32.mrb[0].mxu0
  %v183 = vadd.f32 %v117, %v182
  %v184 = vpop.f32.mrb[0].mxu0
  %185 = vdwg.mxu0
  %v186 = vpack.c.bf16 %v175, %v172
  %v187 = vpack.c.bf16 %v183, %v180
  %v190 = vunpack.c.l.b16 %v186
  %v191 = vunpack.c.h.b16 %v186
  %v192 = vunpack.c.l.b16 %v187
  %v193 = vunpack.c.h.b16 %v187
  %v194 = vpack.c.b16 %v190, %v190
  %v195 = vpack.c.b16 %v191, %v191
  %v196 = vpack.c.b16 %v192, %v192
  %v197 = vpack.c.b16 %v193, %v193
  %vm202 = vcmask 781312
  %203 = vst.msk [vmem:[%s5] sm:$0xf] %vm202, %v194
  %204 = vst.msk [vmem:[%s5 + $0x4] sm:$0xf] %vm202, %v195
  %205 = vst.msk [vmem:[%s5 + $0x8] sm:$0xf] %vm202, %v196
  %vm206 = vcmask 779264
  %207 = vst.msk [vmem:[%s5 + $0xc] sm:$0x3] %vm206, %v197
  // Predicated region
  $region22: #{encoder_forward.71} parent=0 // pred_check
    _
  $region23: #{encoder_forward.71} parent=0 // pred_check_branch
    %209 = sbr.rel (0) target = $region25
  $region24: #{encoder_forward.71} parent=0 // pred_region
    _
  $region25: #{encoder_forward.71} parent=0 // pred_fallthru
    _
  // Predicated region
  $region26: #{encoder_forward.71} parent=0 // pred_check
    _
  $region27: #{encoder_forward.71} parent=0 // pred_check_branch
    %211 = sbr.rel (0) target = $region29
  $region28: #{encoder_forward.71} parent=0 // pred_region
    _
  $region29: #{encoder_forward.71} parent=0 // pred_fallthru
    _

// kernel: encoder_forward.73
$region0: #{encoder_forward.73}
  #allocation0 [shape = 'u32[]', space=smem, size = 0x4, offset = 0x4, fixed_abs, tag = 'smem constant byte address 0x4 - core index']
  #allocation1 [shape = 'u32[144,128]{1,0:T(1,128)}', space=vmem, size = 0x12000, scoped, tag = 'internal scratch']
  %s0 = inlined_call_operand.vmem [shape: bf16[28,32], index: 0, kind: input, shape index: {}]
  %s1 = inlined_call_operand.vmem [shape: bf16[32,32], index: 1, kind: input, shape index: {}]
  %s2 = inlined_call_operand.vmem [shape: f32[1,32], index: 2, kind: input, shape index: {}]
  %s3 = inlined_call_operand.vmem [shape: bf16[28,32], index: 3, kind: input, shape index: {}]
  %s4 = inlined_call_operand.vmem [shape: bf16[28,32], index: 4, kind: output, shape index: {}]
  %s5 = sld [smem:[#allocation0]]
  $region26: #{encoder_forward.73} parent=0
    _
  %s7 = ssub.s32 1, %s5
  %s8 = scalar_select 0, %s7, %s5
  // Predicated region
  $region2: #{encoder_forward.73} parent=0 // pred_check
    _
  $region3: #{encoder_forward.73} parent=0 // pred_check_branch
    %10 = sbr.rel (0) target = $region5
  $region4: #{encoder_forward.73} parent=0 // pred_region
    _
  $region5: #{encoder_forward.73} parent=0 // pred_fallthru
    _
  // Predicated region
  $region6: #{encoder_forward.73} parent=0 // pred_check
    _
  $region7: #{encoder_forward.73} parent=0 // pred_check_branch
    %12 = sbr.rel (0) target = $region9
  $region8: #{encoder_forward.73} parent=0 // pred_region
    _
  $region9: #{encoder_forward.73} parent=0 // pred_fallthru
    _
  // Predicated region
  $region10: #{encoder_forward.73} parent=0 // pred_check
    _
  $region11: #{encoder_forward.73} parent=0 // pred_check_branch
    %14 = sbr.rel (0) target = $region13
  $region12: #{encoder_forward.73} parent=0 // pred_region
    _
  $region13: #{encoder_forward.73} parent=0 // pred_fallthru
    _
  // Predicated region
  $region14: #{encoder_forward.73} parent=0 // pred_check
    _
  $region15: #{encoder_forward.73} parent=0 // pred_check_branch
    %16 = sbr.rel (0) target = $region17
  $region16: #{encoder_forward.73} parent=0 // pred_region
    _
  $region17: #{encoder_forward.73} parent=0 // pred_fallthru
    _
  %v18 = vld [vmem:[%s0] sm:$0xf]
  %v19 = vld [vmem:[%s0 + $0x4] sm:$0xf]
  %v20 = vld [vmem:[%s0 + $0x8] sm:$0xf]
  %v21 = vld [vmem:[%s0 + $0xc] sm:$0x3]
  %v22 = vld [vmem:[%s1] sm:$0xf]
  %v23 = vld [vmem:[%s1 + $0x4] sm:$0xf]
  %v24 = vld [vmem:[%s1 + $0x8] sm:$0xf]
  %v25 = vld [vmem:[%s1 + $0xc] sm:$0xf]
  %v26 = vld [vmem:[%s2] sm:$0x1]
  %v28 = vlaneseq
  %v29 = vshrl.u32 %v28, 7
  %v30 = vsub.s32 0, %v29
  %v31 = vrot.slane %v26, %v30
  %v37 = vunpack.c.l.b16 %v18
  %v38 = vunpack.c.l.b16 %v19
  %v39 = vunpack.c.l.b16 %v20
  %v40 = vunpack.c.l.b16 %v21
  %v41 = vpack.c.b16 %v38, %v37
  %v42 = vpack.c.b16 %v40, %v39
  %v47 = vunpack.c.l.b16 %v22
  %v48 = vunpack.c.l.b16 %v23
  %v49 = vunpack.c.l.b16 %v24
  %v50 = vunpack.c.l.b16 %v25
  %v51 = vpack.c.b16 %v48, %v47
  %v52 = vpack.c.b16 %v50, %v49
  %vm55 = vcmask 261120
  %v57 = vsel %vm55, %v41, 0
  %v60 = vsel %vm55, %v42, 0
  %62 = vmatprep.subr.bf16.mxu0 0
  %63 = vmatpush1.bf16.msra.mxu0 %v51
  %64 = vmatprep.subr.bf16.mxu0 0
  %65 = vmatpush1.bf16.msra.mxu0 %v52
  %66 = vmatprep.subr.bf16.mxu0 0
  %67 = vmatpush1.bf16.msra.mxu0 0
  %68 = vmatprep.subr.bf16.mxu0 0
  %69 = vmatpush1.bf16.msra.mxu0 0
  %70 = vmatprep.subr.bf16.mxu0 0
  %71 = vmatpush1.bf16.msra.mxu0 0
  %72 = vmatprep.subr.bf16.mxu0 0
  %73 = vmatpush1.bf16.msra.mxu0 0
  %74 = vmatprep.subr.bf16.mxu0 0
  %75 = vmatpush1.bf16.msra.mxu0 0
  %76 = vmatprep.subr.bf16.mxu0 0
  %77 = vmatpush1.bf16.msra.mxu0 0
  %78 = vmatprep.subr.bf16.mxu0 0
  %79 = vmatpush1.bf16.msra.mxu0 0
  %80 = vmatprep.subr.bf16.mxu0 0
  %81 = vmatpush1.bf16.msra.mxu0 0
  %82 = vmatprep.subr.bf16.mxu0 0
  %83 = vmatpush1.bf16.msra.mxu0 0
  %84 = vmatprep.subr.bf16.mxu0 0
  %85 = vmatpush1.bf16.msra.mxu0 0
  %86 = vmatprep.subr.bf16.mxu0 0
  %87 = vmatpush1.bf16.msra.mxu0 0
  %88 = vmatprep.subr.bf16.mxu0 0
  %89 = vmatpush1.bf16.msra.mxu0 0
  %90 = vmatprep.subr.bf16.mxu0 0
  %91 = vmatpush1.bf16.msra.mxu0 0
  %92 = vmatprep.subr.bf16.mxu0 0
  %93 = vmatpush1.bf16.msra.mxu0 0
  %94 = vmatprep.mubr.bf16.mxu0 0
  %95 = vmatmul.mubr.bf16.gmra.mrb[0].mxu0 %v57
  %v96 = vpop.f32.mrb[0].mxu0
  %v97 = vadd.f32 %v31, %v96
  %v98 = vpop.f32.mrb[0].mxu0
  %v99 = vpop.f32.mrb[0].mxu0
  %v100 = vadd.f32 %v31, %v99
  %v101 = vpop.f32.mrb[0].mxu0
  %102 = vmatprep.mubr.bf16.mxu0 0
  %103 = vmatmul.mubr.bf16.gmra.mrb[0].mxu0 %v60
  %v104 = vpop.f32.mrb[0].mxu0
  %v105 = vadd.f32 %v31, %v104
  %v106 = vpop.f32.mrb[0].mxu0
  %v107 = vpop.f32.mrb[0].mxu0
  %v108 = vadd.f32 %v31, %v107
  %v109 = vpop.f32.mrb[0].mxu0
  %110 = vdwg.mxu0
  %v111 = vld [vmem:[%s3] sm:$0xf]
  %v112 = vld [vmem:[%s3 + $0x4] sm:$0xf]
  %v113 = vld [vmem:[%s3 + $0x8] sm:$0xf]
  %v114 = vld [vmem:[%s3 + $0xc] sm:$0x3]
  %v115 = vunpack.c.l.bf16 %v111
  %v116 = vunpack.c.l.bf16 %v112
  %v117 = vunpack.c.l.bf16 %v113
  %v118 = vunpack.c.l.bf16 %v114
  %v119 = vadd.f32 %v97, %v115
  %v120 = vadd.f32 %v100, %v116
  %v121 = vadd.f32 %v105, %v117
  %v122 = vadd.f32 %v108, %v118
  %v123 = vpack.c.bf16 %v120, %v119
  %v124 = vpack.c.bf16 %v122, %v121
  %v127 = vunpack.c.l.b16 %v123
  %v128 = vunpack.c.h.b16 %v123
  %v129 = vunpack.c.l.b16 %v124
  %v130 = vunpack.c.h.b16 %v124
  %v131 = vpack.c.b16 %v127, %v127
  %v132 = vpack.c.b16 %v128, %v128
  %v133 = vpack.c.b16 %v129, %v129
  %v134 = vpack.c.b16 %v130, %v130
  %vm139 = vcmask 257024
  %140 = vst.msk [vmem:[%s4] sm:$0xf] %vm139, %v131
  %141 = vst.msk [vmem:[%s4 + $0x4] sm:$0xf] %vm139, %v132
  %142 = vst.msk [vmem:[%s4 + $0x8] sm:$0xf] %vm139, %v133
  %vm143 = vcmask 254976
  %144 = vst.msk [vmem:[%s4 + $0xc] sm:$0x3] %vm143, %v134
  // Predicated region
  $region18: #{encoder_forward.73} parent=0 // pred_check
    _
  $region19: #{encoder_forward.73} parent=0 // pred_check_branch
    %146 = sbr.rel (0) target = $region21
  $region20: #{encoder_forward.73} parent=0 // pred_region
    _
  $region21: #{encoder_forward.73} parent=0 // pred_fallthru
    _
  // Predicated region
  $region22: #{encoder_forward.73} parent=0 // pred_check
    _
  $region23: #{encoder_forward.73} parent=0 // pred_check_branch
    %148 = sbr.rel (0) target = $region25
  $region24: #{encoder_forward.73} parent=0 // pred_region
    _
  $region25: #{encoder_forward.73} parent=0 // pred_fallthru
    _

// kernel: encoder_forward.74
$region0: #{encoder_forward.74}
  #allocation0 [shape = 'u32[]', space=smem, size = 0x4, offset = 0x4, fixed_abs, tag = 'smem constant byte address 0x4 - core index']
  #allocation1 [shape = 'u32[144,128]{1,0:T(1,128)}', space=vmem, size = 0x12000, scoped, tag = 'internal scratch']
  %s0 = inlined_call_operand.vmem [shape: bf16[28,32], index: 0, kind: input, shape index: {}]
  %s1 = inlined_call_operand.vmem [shape: f32[1,32], index: 1, kind: input, shape index: {}]
  %s2 = inlined_call_operand.vmem [shape: f32[1,32], index: 2, kind: input, shape index: {}]
  %s3 = inlined_call_operand.vmem [shape: bf16[32,64], index: 3, kind: input, shape index: {}]
  %s4 = inlined_call_operand.vmem [shape: f32[1,64], index: 4, kind: input, shape index: {}]
  %s5 = inlined_call_operand.vmem [shape: bf16[28,64], index: 5, kind: output, shape index: {}]
  %s6 = sld [smem:[#allocation0]]
  $region30: #{encoder_forward.74} parent=0
    _
  %s8 = ssub.s32 1, %s6
  %s9 = scalar_select 0, %s8, %s6
  // Predicated region
  $region2: #{encoder_forward.74} parent=0 // pred_check
    _
  $region3: #{encoder_forward.74} parent=0 // pred_check_branch
    %11 = sbr.rel (0) target = $region5
  $region4: #{encoder_forward.74} parent=0 // pred_region
    _
  $region5: #{encoder_forward.74} parent=0 // pred_fallthru
    _
  // Predicated region
  $region6: #{encoder_forward.74} parent=0 // pred_check
    _
  $region7: #{encoder_forward.74} parent=0 // pred_check_branch
    %13 = sbr.rel (0) target = $region9
  $region8: #{encoder_forward.74} parent=0 // pred_region
    _
  $region9: #{encoder_forward.74} parent=0 // pred_fallthru
    _
  // Predicated region
  $region10: #{encoder_forward.74} parent=0 // pred_check
    _
  $region11: #{encoder_forward.74} parent=0 // pred_check_branch
    %15 = sbr.rel (0) target = $region13
  $region12: #{encoder_forward.74} parent=0 // pred_region
    _
  $region13: #{encoder_forward.74} parent=0 // pred_fallthru
    _
  // Predicated region
  $region14: #{encoder_forward.74} parent=0 // pred_check
    _
  $region15: #{encoder_forward.74} parent=0 // pred_check_branch
    %17 = sbr.rel (0) target = $region17
  $region16: #{encoder_forward.74} parent=0 // pred_region
    _
  $region17: #{encoder_forward.74} parent=0 // pred_fallthru
    _
  // Predicated region
  $region18: #{encoder_forward.74} parent=0 // pred_check
    _
  $region19: #{encoder_forward.74} parent=0 // pred_check_branch
    %19 = sbr.rel (0) target = $region21
  $region20: #{encoder_forward.74} parent=0 // pred_region
    _
  $region21: #{encoder_forward.74} parent=0 // pred_fallthru
    _
  %v21 = vld [vmem:[%s0] sm:$0xf]
  %v22 = vld [vmem:[%s0 + $0x4] sm:$0xf]
  %v23 = vld [vmem:[%s0 + $0x8] sm:$0xf]
  %v24 = vld [vmem:[%s0 + $0xc] sm:$0x3]
  %v25 = vunpack.c.l.bf16 %v21
  %v26 = vunpack.c.l.bf16 %v22
  %v27 = vunpack.c.l.bf16 %v23
  %v28 = vunpack.c.l.bf16 %v24
  %vm29 = vcmask 261120
  %v30 = vsel %vm29, %v25, 0.0
  %31 = vadd.xlane.f32.xlu0 %v30
  %v32 = vpop.xlane.xlu0 %31
  %v33 = vsel %vm29, %v26, 0.0
  %34 = vadd.xlane.f32.xlu0 %v33
  %v35 = vpop.xlane.xlu0 %34
  %v36 = vsel %vm29, %v27, 0.0
  %37 = vadd.xlane.f32.xlu0 %v36
  %v38 = vpop.xlane.xlu0 %37
  %vm39 = vcmask 257024
  %v40 = vsel %vm39, %v28, 0.0
  %41 = vadd.xlane.f32.xlu0 %v40
  %v42 = vpop.xlane.xlu0 %41
  %v43 = vrcp.pop 32.0
  %v44 = vmul.f32 %v32, %v43
  %v45 = vmul.f32 %v35, %v43
  %v46 = vmul.f32 %v38, %v43
  %v47 = vmul.f32 %v42, %v43
  %v48 = vsub.f32 %v25, %v44
  %v49 = vsub.f32 %v26, %v45
  %v50 = vsub.f32 %v27, %v46
  %v51 = vsub.f32 %v28, %v47
  %v52 = vmul.f32 %v48, %v48
  %v53 = vmul.f32 %v49, %v49
  %v54 = vmul.f32 %v50, %v50
  %v55 = vmul.f32 %v51, %v51
  %v56 = vsel %vm29, %v52, 0.0
  %57 = vadd.xlane.f32.xlu0 %v56
  %v58 = vpop.xlane.xlu0 %57
  %v59 = vsel %vm29, %v53, 0.0
  %60 = vadd.xlane.f32.xlu0 %v59
  %v61 = vpop.xlane.xlu0 %60
  %v62 = vsel %vm29, %v54, 0.0
  %63 = vadd.xlane.f32.xlu0 %v62
  %v64 = vpop.xlane.xlu0 %63
  %v65 = vsel %vm39, %v55, 0.0
  %66 = vadd.xlane.f32.xlu0 %v65
  %v67 = vpop.xlane.xlu0 %66
  %v68 = vmul.f32 %v58, %v43
  %v69 = vmul.f32 %v61, %v43
  %v70 = vmul.f32 %v64, %v43
  %v71 = vmul.f32 %v67, %v43
  %v72 = vadd.f32 %v68, 1e-06
  %v73 = vadd.f32 %v69, 1e-06
  %v74 = vadd.f32 %v70, 1e-06
  %v75 = vadd.f32 %v71, 1e-06
  %v76 = vrsqrt.pop %v72
  %v77 = vrsqrt.pop %v73
  %v78 = vrsqrt.pop %v74
  %v79 = vrsqrt.pop %v75
  %v80 = vmul.f32 %v48, %v76
  %v81 = vmul.f32 %v49, %v77
  %v82 = vmul.f32 %v50, %v78
  %v83 = vmul.f32 %v51, %v79
  %v84 = vld [vmem:[%s1] sm:$0x1]
  %v86 = vlaneseq
  %v87 = vshrl.u32 %v86, 7
  %v88 = vsub.s32 0, %v87
  %v89 = vrot.slane %v84, %v88
  %v91 = vmul.f32 %v80, %v89
  %v92 = vmul.f32 %v81, %v89
  %v93 = vmul.f32 %v82, %v89
  %v94 = vmul.f32 %v83, %v89
  %v95 = vld [vmem:[%s2] sm:$0x1]
  %v97 = vlaneseq
  %v98 = vshrl.u32 %v97, 7
  %v99 = vsub.s32 0, %v98
  %v100 = vrot.slane %v95, %v99
  %v102 = vadd.f32 %v91, %v100
  %v103 = vadd.f32 %v92, %v100
  %v104 = vadd.f32 %v93, %v100
  %v105 = vadd.f32 %v94, %v100
  %v106 = vpack.c.bf16 %v103, %v102
  %v107 = vpack.c.bf16 %v105, %v104
  %v108 = vld [vmem:[%s3] sm:$0xf]
  %v109 = vld [vmem:[%s3 + $0x4] sm:$0xf]
  %v110 = vld [vmem:[%s3 + $0x8] sm:$0xf]
  %v111 = vld [vmem:[%s3 + $0xc] sm:$0xf]
  %v112 = vld [vmem:[%s4] sm:$0x1]
  %v114 = vlaneseq
  %v115 = vshrl.u32 %v114, 7
  %v116 = vsub.s32 0, %v115
  %v117 = vrot.slane %v112, %v116
  %v123 = vunpack.c.l.b16 %v108
  %v124 = vunpack.c.l.b16 %v109
  %v125 = vunpack.c.l.b16 %v110
  %v126 = vunpack.c.l.b16 %v111
  %v127 = vpack.c.b16 %v124, %v123
  %v128 = vpack.c.b16 %v126, %v125
  %v132 = vsel %vm29, %v106, 0
  %v135 = vsel %vm29, %v107, 0
  %137 = vmatprep.subr.bf16.mxu0 0
  %138 = vmatpush1.bf16.msra.mxu0 %v127
  %139 = vmatprep.subr.bf16.mxu0 0
  %140 = vmatpush1.bf16.msra.mxu0 %v128
  %141 = vmatprep.subr.bf16.mxu0 0
  %142 = vmatpush1.bf16.msra.mxu0 0
  %143 = vmatprep.subr.bf16.mxu0 0
  %144 = vmatpush1.bf16.msra.mxu0 0
  %145 = vmatprep.subr.bf16.mxu0 0
  %146 = vmatpush1.bf16.msra.mxu0 0
  %147 = vmatprep.subr.bf16.mxu0 0
  %148 = vmatpush1.bf16.msra.mxu0 0
  %149 = vmatprep.subr.bf16.mxu0 0
  %150 = vmatpush1.bf16.msra.mxu0 0
  %151 = vmatprep.subr.bf16.mxu0 0
  %152 = vmatpush1.bf16.msra.mxu0 0
  %153 = vmatprep.subr.bf16.mxu0 0
  %154 = vmatpush1.bf16.msra.mxu0 0
  %155 = vmatprep.subr.bf16.mxu0 0
  %156 = vmatpush1.bf16.msra.mxu0 0
  %157 = vmatprep.subr.bf16.mxu0 0
  %158 = vmatpush1.bf16.msra.mxu0 0
  %159 = vmatprep.subr.bf16.mxu0 0
  %160 = vmatpush1.bf16.msra.mxu0 0
  %161 = vmatprep.subr.bf16.mxu0 0
  %162 = vmatpush1.bf16.msra.mxu0 0
  %163 = vmatprep.subr.bf16.mxu0 0
  %164 = vmatpush1.bf16.msra.mxu0 0
  %165 = vmatprep.subr.bf16.mxu0 0
  %166 = vmatpush1.bf16.msra.mxu0 0
  %167 = vmatprep.subr.bf16.mxu0 0
  %168 = vmatpush1.bf16.msra.mxu0 0
  %169 = vmatprep.mubr.bf16.mxu0 0
  %170 = vmatmul.mubr.bf16.gmra.mrb[0].mxu0 %v132
  %v171 = vpop.f32.mrb[0].mxu0
  %v172 = vadd.f32 %v117, %v171
  %v173 = vpop.f32.mrb[0].mxu0
  %v174 = vpop.f32.mrb[0].mxu0
  %v175 = vadd.f32 %v117, %v174
  %v176 = vpop.f32.mrb[0].mxu0
  %177 = vmatprep.mubr.bf16.mxu0 0
  %178 = vmatmul.mubr.bf16.gmra.mrb[0].mxu0 %v135
  %v179 = vpop.f32.mrb[0].mxu0
  %v180 = vadd.f32 %v117, %v179
  %v181 = vpop.f32.mrb[0].mxu0
  %v182 = vpop.f32.mrb[0].mxu0
  %v183 = vadd.f32 %v117, %v182
  %v184 = vpop.f32.mrb[0].mxu0
  %185 = vdwg.mxu0
  %v186 = vmul.f32 %v172, %v172
  %v187 = vmul.f32 %v175, %v175
  %v188 = vmul.f32 %v180, %v180
  %v189 = vmul.f32 %v183, %v183
  %v190 = vmul.f32 %v172, %v186
  %v191 = vmul.f32 %v175, %v187
  %v192 = vmul.f32 %v180, %v188
  %v193 = vmul.f32 %v183, %v189
  %v194 = vmul.f32 %v190, 0.044715
  %v195 = vmul.f32 %v191, 0.044715
  %v196 = vmul.f32 %v192, 0.044715
  %v197 = vmul.f32 %v193, 0.044715
  %v198 = vadd.f32 %v172, %v194
  %v199 = vadd.f32 %v175, %v195
  %v200 = vadd.f32 %v180, %v196
  %v201 = vadd.f32 %v183, %v197
  %v202 = vmul.f32 %v198, 0.7978846
  %v203 = vmul.f32 %v199, 0.7978846
  %v204 = vmul.f32 %v200, 0.7978846
  %v205 = vmul.f32 %v201, 0.7978846
  %v206 = vtanh.pop %v202
  %v207 = vtanh.pop %v203
  %v208 = vtanh.pop %v204
  %v209 = vtanh.pop %v205
  %v210 = vadd.f32 %v206, 1.0
  %v211 = vadd.f32 %v207, 1.0
  %v212 = vadd.f32 %v208, 1.0
  %v213 = vadd.f32 %v209, 1.0
  %v214 = vmul.f32 %v210, 0.5
  %v215 = vmul.f32 %v211, 0.5
  %v216 = vmul.f32 %v212, 0.5
  %v217 = vmul.f32 %v213, 0.5
  %v218 = vmul.f32 %v172, %v214
  %v219 = vmul.f32 %v175, %v215
  %v220 = vmul.f32 %v180, %v216
  %v221 = vmul.f32 %v183, %v217
  %v222 = vpack.c.bf16 %v219, %v218
  %v223 = vpack.c.bf16 %v221, %v220
  %v226 = vunpack.c.l.b16 %v222
  %v227 = vunpack.c.h.b16 %v222
  %v228 = vunpack.c.l.b16 %v223
  %v229 = vunpack.c.h.b16 %v223
  %v230 = vpack.c.b16 %v226, %v226
  %v231 = vpack.c.b16 %v227, %v227
  %v232 = vpack.c.b16 %v228, %v228
  %v233 = vpack.c.b16 %v229, %v229
  %vm238 = vcmask 519168
  %239 = vst.msk [vmem:[%s5] sm:$0xf] %vm238, %v230
  %240 = vst.msk [vmem:[%s5 + $0x4] sm:$0xf] %vm238, %v231
  %241 = vst.msk [vmem:[%s5 + $0x8] sm:$0xf] %vm238, %v232
  %vm242 = vcmask 517120
  %243 = vst.msk [vmem:[%s5 + $0xc] sm:$0x3] %vm242, %v233
  // Predicated region
  $region22: #{encoder_forward.74} parent=0 // pred_check
    _
  $region23: #{encoder_forward.74} parent=0 // pred_check_branch
    %245 = sbr.rel (0) target = $region25
  $region24: #{encoder_forward.74} parent=0 // pred_region
    _
  $region25: #{encoder_forward.74} parent=0 // pred_fallthru
    _
  // Predicated region
  $region26: #{encoder_forward.74} parent=0 // pred_check
    _
  $region27: #{encoder_forward.74} parent=0 // pred_check_branch
    %247 = sbr.rel (0) target = $region29
  $region28: #{encoder_forward.74} parent=0 // pred_region
    _
  $region29: #{encoder_forward.74} parent=0 // pred_fallthru
    _

// kernel: encoder_forward.72
$region0: #{encoder_forward.72}
  #allocation0 [shape = 'u32[]', space=smem, size = 0x4, offset = 0x4, fixed_abs, tag = 'smem constant byte address 0x4 - core index']
  #allocation1 [shape = 'u32[144,128]{1,0:T(1,128)}', space=vmem, size = 0x12000, scoped, tag = 'internal scratch']
  %s0 = inlined_call_operand.vmem [shape: bf16[2,14,96], index: 0, kind: input, shape index: {}]
  %s1 = inlined_call_operand.vmem [shape: bf16[2,14,32], index: 1, kind: output, shape index: {0}]
  %s2 = inlined_call_operand.vmem [shape: bf16[2,4,14,14], index: 2, kind: output, shape index: {1}]
  %3 = xla_tuple %s1, %s2
  %s4 = sld [smem:[#allocation0]]
  $region45: #{encoder_forward.72} parent=0
    _
  %s6 = ssub.s32 1, %s4
  %s7 = scalar_select 0, %s6, %s4
  loop: start=0, step=1, limit=4
  $region2: #{encoder_forward.72} parent=0 // loop_pre_header
    _
  $region3: #{encoder_forward.72} parent=0 // loop_header
    %s9 = sphi 0, %s13
    %p10 = scmp.ge.s32.totalorder %s9, 4
    %s19 = sphi 0, %s21
    %s22 = sphi 0, %s19
    %s23 = sphi 0, %s22
    %s39 = sphi 0, %s23
    %s45 = sphi 0, %s47
    %s48 = sphi 0, %s45
    %s49 = sphi 0, %s48
    %s65 = sphi 0, %s49
    %s71 = sphi 0, %s73
    %s74 = sphi 0, %s71
    %s75 = sphi 0, %s74
    %s91 = sphi 0, %s75
  $region4: #{encoder_forward.72} parent=0 // loop_header_branch
    %12 = sbr.rel (%p10) target = $region8
  $region5: #{encoder_forward.72} parent=0 // loop_body
    %s14 = ssub.s32 %s9, 1
    %s15 = ssub.s32 %s9, 2
    %s16 = sadd.s32 %s9, 1
    %s17 = ssub.s32 %s9, %s16
    %p18 = scmp.eq.s32.totalorder %s17, 0
    %s20 = sadd.s32 %s19, 1
    %s21 = scalar_select %p18, %s19, %s20
    %p24 = pneg %p18
    %p25 = scmp.eq.s32.totalorder %s9, 1
    %p26 = por %p24, %p25
    %p27 = scmp.ne.s32.totalorder %s19, %s22
    %p28 = scmp.eq.s32.totalorder %s9, 0
    %p29 = por %p27, %p28
    %p30 = scmp.ne.s32.totalorder %s19, %s22
    %p31 = scmp.eq.s32.totalorder %s14, 1
    %p32 = por %p30, %p31
    %p33 = scmp.ne.s32.totalorder %s22, %s23
    %p34 = scmp.eq.s32.totalorder %s14, 0
    %p35 = por %p33, %p34
    %p36 = scmp.ne.s32.totalorder %s22, %s23
    %p37 = scmp.eq.s32.totalorder %s15, 1
    %p38 = por %p36, %p37
    %p40 = scmp.ne.s32.totalorder %s23, %s39
    %p41 = scmp.eq.s32.totalorder %s15, 0
    %p42 = por %p40, %p41
    %s43 = ssub.s32 %s9, %s16
    %p44 = scmp.eq.s32.totalorder %s43, 0
    %s46 = sadd.s32 %s45, 1
    %s47 = scalar_select %p44, %s45, %s46
    %p50 = pneg %p44
    %p51 = scmp.eq.s32.totalorder %s9, 1
    %p52 = por %p50, %p51
    %p53 = scmp.ne.s32.totalorder %s45, %s48
    %p54 = scmp.eq.s32.totalorder %s9, 0
    %p55 = por %p53, %p54
    %p56 = scmp.ne.s32.totalorder %s45, %s48
    %p57 = scmp.eq.s32.totalorder %s14, 1
    %p58 = por %p56, %p57
    %p59 = scmp.ne.s32.totalorder %s48, %s49
    %p60 = scmp.eq.s32.totalorder %s14, 0
    %p61 = por %p59, %p60
    %p62 = scmp.ne.s32.totalorder %s48, %s49
    %p63 = scmp.eq.s32.totalorder %s15, 1
    %p64 = por %p62, %p63
    %p66 = scmp.ne.s32.totalorder %s49, %s65
    %p67 = scmp.eq.s32.totalorder %s15, 0
    %p68 = por %p66, %p67
    %s69 = ssub.s32 %s9, %s16
    %p70 = scmp.eq.s32.totalorder %s69, 0
    %s72 = sadd.s32 %s71, 1
    %s73 = scalar_select %p70, %s71, %s72
    %p76 = pneg %p70
    %p77 = scmp.eq.s32.totalorder %s9, 1
    %p78 = por %p76, %p77
    %p79 = scmp.ne.s32.totalorder %s71, %s74
    %p80 = scmp.eq.s32.totalorder %s9, 0
    %p81 = por %p79, %p80
    %p82 = scmp.ne.s32.totalorder %s71, %s74
    %p83 = scmp.eq.s32.totalorder %s14, 1
    %p84 = por %p82, %p83
    %p85 = scmp.ne.s32.totalorder %s74, %s75
    %p86 = scmp.eq.s32.totalorder %s14, 0
    %p87 = por %p85, %p86
    %p88 = scmp.ne.s32.totalorder %s74, %s75
    %p89 = scmp.eq.s32.totalorder %s15, 1
    %p90 = por %p88, %p89
    %p92 = scmp.ne.s32.totalorder %s75, %s91
    %p93 = scmp.eq.s32.totalorder %s15, 0
    %p94 = por %p92, %p93
    %p95 = scmp.le.s32.totalorder 1, %s9
    %p96 = scmp.lt.s32.totalorder %s9, 3
    %p97 = pnand %p95, %p96
    %p98 = pneg %p97
    // Predicated region
    $region9: #{encoder_forward.72} parent=5 // pred_check
      _
    $region10: #{encoder_forward.72} parent=5 // pred_check_branch
      %100 = sbr.rel (%p97) target = $region12
    $region11: #{encoder_forward.72} parent=5 // pred_region
      %s101 = ssub.s32 %s9, 1
    $region12: #{encoder_forward.72} parent=5 // pred_fallthru
      _
    %p102 = scmp.lt.s32.totalorder %s9, 2
    // Predicated region
    $region13: #{encoder_forward.72} parent=5 // pred_check
      %p103 = pneg %p102
    $region14: #{encoder_forward.72} parent=5 // pred_check_branch
      %105 = sbr.rel (%p103) target = $region16
    $region15: #{encoder_forward.72} parent=5 // pred_region
      // Predicated region
      $region17: #{encoder_forward.72} parent=15 // pred_check
        %p106 = pneg %p29
      $region18: #{encoder_forward.72} parent=15 // pred_check_branch
        %108 = sbr.rel (%p106) target = $region20
      $region19: #{encoder_forward.72} parent=15 // pred_region
        %p109 = scmp.lt.s32.totalorder %s9, 1
        %s110 = scalar_select %p109, %s9, 1
        %s111 = smul.addr %s110, 2
        %s112 = smul.addr %s111, 4
        %s113 = scalar_lea.vmem %s0, %s112
      $region20: #{encoder_forward.72} parent=15 // pred_fallthru
        _
    $region16: #{encoder_forward.72} parent=5 // pred_fallthru
      _
    %p114 = scmp.le.s32.totalorder 1, %s9
    %p115 = scmp.lt.s32.totalorder %s9, 3
    %p116 = pnand %p114, %p115
    %p117 = pneg %p116
    // Predicated region
    $region21: #{encoder_forward.72} parent=5 // pred_check
      _
    $region22: #{encoder_forward.72} parent=5 // pred_check_branch
      %119 = sbr.rel (%p116) target = $region24
    $region23: #{encoder_forward.72} parent=5 // pred_region
      %s120 = ssub.s32 %s9, 1
      %p121 = scmp.lt.s32.totalorder %s14, 1
      %s122 = scalar_select %p121, %s14, 1
      %s123 = smul.addr %s122, 2
      %s124 = smul.addr %s123, 4
      %s125 = scalar_lea.vmem %s0, %s124
      %p126 = pneg %p35
      %p127 = pneg %p32
      %p128 = pneg %p61
      %p129 = pneg %p58
      %p130 = scmp.lt.s32.totalorder %s14, 1
      %s131 = scalar_select %p130, %s14, 1
      %s132 = smul.addr %s131, 2
      %s133 = smul.addr %s132, 4
      %s134 = scalar_lea.vmem %s1, %s133
      %p135 = pneg %p87
      %p136 = pneg %p84
      %p137 = scmp.lt.s32.totalorder %s14, 1
      %s138 = scalar_select %p137, %s14, 1
      %s139 = smul.addr %s138, 8
      %s140 = smul.addr %s139, 4
      %s141 = scalar_lea.vmem %s2, %s140
      %p142 = scmp.lt.s32.totalorder %s14, 1
      %s143 = scalar_select %p142, %s14, 1
      %s144 = smul.addr %s143, 2
      %s145 = smul.addr %s144, 4
      %s146 = scalar_lea.vmem %s0, %s145
      %p147 = scmp.lt.s32.totalorder %s14, 1
      %s148 = scalar_select %p147, %s14, 1
      %s149 = smul.addr %s148, 2
      %s150 = smul.addr %s149, 4
      %s151 = scalar_lea.vmem %s1, %s150
      %p152 = scmp.lt.s32.totalorder %s14, 1
      %s153 = scalar_select %p152, %s14, 1
      %s154 = smul.addr %s153, 8
      %s155 = smul.addr %s154, 4
      %s156 = scalar_lea.vmem %s2, %s155
      %v158 = vld [vmem:[%s146] sm:$0xf]
      %v159 = vld [vmem:[%s146 + $0x4] sm:$0x7]
      %v162 = vunpack.c.l.b16 %v158
      %v163 = vunpack.c.l.b16 %v159
      %v164 = vpack.c.b16 %v163, %v162
      %165 = vrot.lane.b32.xlu0 %v164, 96
      %v166 = vpop.permute.xlu0 %165
      %vm167 = vcmask 64512
      %v169 = vsel %vm167, %v164, 0
      %v172 = vsel %vm167, %v166, 0
      %174 = vmatprep.subr.bf16.mxu0 0
      %175 = vmatpush1.bf16.xpose.msra.mxu0 %v172
      %176 = vmatprep.subr.bf16.mxu0 0
      %177 = vmatpush1.bf16.xpose.msra.mxu0 0
      %178 = vmatprep.subr.bf16.mxu0 0
      %179 = vmatpush1.bf16.xpose.msra.mxu0 0
      %180 = vmatprep.subr.bf16.mxu0 0
      %181 = vmatpush1.bf16.xpose.msra.mxu0 0
      %182 = vmatprep.subr.bf16.mxu0 0
      %183 = vmatpush1.bf16.xpose.msra.mxu0 0
      %184 = vmatprep.subr.bf16.mxu0 0
      %185 = vmatpush1.bf16.xpose.msra.mxu0 0
      %186 = vmatprep.subr.bf16.mxu0 0
      %187 = vmatpush1.bf16.xpose.msra.mxu0 0
      %188 = vmatprep.subr.bf16.mxu0 0
      %189 = vmatpush1.bf16.xpose.msra.mxu0 0
      %190 = vmatprep.subr.bf16.mxu0 0
      %191 = vmatpush1.bf16.xpose.msra.mxu0 0
      %192 = vmatprep.subr.bf16.mxu0 0
      %193 = vmatpush1.bf16.xpose.msra.mxu0 0
      %194 = vmatprep.subr.bf16.mxu0 0
      %195 = vmatpush1.bf16.xpose.msra.mxu0 0
      %196 = vmatprep.subr.bf16.mxu0 0
      %197 = vmatpush1.bf16.xpose.msra.mxu0 0
      %198 = vmatprep.subr.bf16.mxu0 0
      %199 = vmatpush1.bf16.xpose.msra.mxu0 0
      %200 = vmatprep.subr.bf16.mxu0 0
      %201 = vmatpush1.bf16.xpose.msra.mxu0 0
      %202 = vmatprep.subr.bf16.mxu0 0
      %203 = vmatpush1.bf16.xpose.msra.mxu0 0
      %204 = vmatprep.subr.bf16.mxu0 0
      %205 = vmatpush1.bf16.xpose.msra.mxu0 0
      %206 = vmatprep.mubr.bf16.mxu0 0
      %207 = vmatmul.mubr.bf16.gmra.mrb[0].mxu0 %v169
      %v208 = vpop.f32.mrb[0].mxu0
      %v209 = vadd.f32 0.0, %v208
      %v210 = vpop.f32.mrb[0].mxu0
      %v211 = vpop.f32.mrb[0].mxu0
      %v212 = vadd.f32 0.0, %v211
      %v213 = vpop.f32.mrb[0].mxu0
      %214 = vdwg.mxu0
      %v215 = vmul.f32 %v209, 0.35355338
      %v216 = vmul.f32 %v212, 0.35355338
      %vm217 = vcmask 113664
      %v218 = vsel %vm217, %v215, -inf
      %219 = vmax.xlane.f32.xlu0 %v218
      %v220 = vpop.xlane.xlu0 %219
      %vm221 = vcmask 111616
      %v222 = vsel %vm221, %v216, -inf
      %223 = vmax.xlane.f32.xlu0 %v222
      %v224 = vpop.xlane.xlu0 %223
      %v225 = vsub.f32 %v215, %v220
      %v226 = vsub.f32 %v216, %v224
      %v227 = vmul.f32 %v225, 1.442695
      %v228 = vpow.pop %v227
      %v229 = vmul.f32 %v226, 1.442695
      %v230 = vpow.pop %v229
      %v231 = vsel %vm217, %v228, 0.0
      %232 = vadd.xlane.f32.xlu0 %v231
      %v233 = vpop.xlane.xlu0 %232
      %v234 = vsel %vm221, %v230, 0.0
      %235 = vadd.xlane.f32.xlu0 %v234
      %v236 = vpop.xlane.xlu0 %235
      %v237 = vrcp.pop %v233
      %v238 = vrcp.pop %v236
      %v239 = vmul.f32 %v228, %v237
      %v240 = vmul.f32 %v230, %v238
      %v241 = vpack.c.bf16 %v240, %v239
      %242 = vrot.lane.b32.xlu0 %v164, 64
      %v243 = vpop.permute.xlu0 %242
      %v245 = vsel %vm217, %v241, 0
      %vm247 = vcmask 1046528
      %v249 = vsel %vm247, %v243, 0
      %251 = vmatprep.subr.bf16.mxu0 0
      %252 = vmatpush1.bf16.msra.mxu0 %v249
      %253 = vmatprep.subr.bf16.mxu0 0
      %254 = vmatpush1.bf16.msra.mxu0 0
      %255 = vmatprep.subr.bf16.mxu0 0
      %256 = vmatpush1.bf16.msra.mxu0 0
      %257 = vmatprep.subr.bf16.mxu0 0
      %258 = vmatpush1.bf16.msra.mxu0 0
      %259 = vmatprep.subr.bf16.mxu0 0
      %260 = vmatpush1.bf16.msra.mxu0 0
      %261 = vmatprep.subr.bf16.mxu0 0
      %262 = vmatpush1.bf16.msra.mxu0 0
      %263 = vmatprep.subr.bf16.mxu0 0
      %264 = vmatpush1.bf16.msra.mxu0 0
      %265 = vmatprep.subr.bf16.mxu0 0
      %266 = vmatpush1.bf16.msra.mxu0 0
      %267 = vmatprep.subr.bf16.mxu0 0
      %268 = vmatpush1.bf16.msra.mxu0 0
      %269 = vmatprep.subr.bf16.mxu0 0
      %270 = vmatpush1.bf16.msra.mxu0 0
      %271 = vmatprep.subr.bf16.mxu0 0
      %272 = vmatpush1.bf16.msra.mxu0 0
      %273 = vmatprep.subr.bf16.mxu0 0
      %274 = vmatpush1.bf16.msra.mxu0 0
      %275 = vmatprep.subr.bf16.mxu0 0
      %276 = vmatpush1.bf16.msra.mxu0 0
      %277 = vmatprep.subr.bf16.mxu0 0
      %278 = vmatpush1.bf16.msra.mxu0 0
      %279 = vmatprep.subr.bf16.mxu0 0
      %280 = vmatpush1.bf16.msra.mxu0 0
      %281 = vmatprep.subr.bf16.mxu0 0
      %282 = vmatpush1.bf16.msra.mxu0 0
      %283 = vmatprep.mubr.bf16.mxu0 0
      %284 = vmatmul.mubr.bf16.gmra.mrb[0].mxu0 %v245
      %v285 = vpop.f32.mrb[0].mxu0
      %v286 = vadd.f32 0.0, %v285
      %v287 = vpop.f32.mrb[0].mxu0
      %v288 = vpop.f32.mrb[0].mxu0
      %v289 = vadd.f32 0.0, %v288
      %v290 = vpop.f32.mrb[0].mxu0
      %291 = vdwg.mxu0
      %v293 = vunpack.c.l.b16 %v241
      %v294 = vunpack.c.h.b16 %v241
      %v295 = vpack.c.b16 %v293, %v293
      %v296 = vpack.c.b16 %v294, %v294
      %vm299 = vcmask 109568
      %300 = vst.msk [vmem:[%s156] sm:$0xf] %vm299, %v295
      %vm301 = vcmask 108544
      %302 = vst.msk [vmem:[%s156 + $0x4] sm:$0x7] %vm301, %v296
      %303 = vrot.lane.b32.xlu0 %v164, 120
      %v304 = vpop.permute.xlu0 %303
      %305 = vrot.lane.b32.xlu0 %v164, 88
      %v306 = vpop.permute.xlu0 %305
      %v308 = vsel %vm167, %v304, 0
      %v311 = vsel %vm167, %v306, 0
      %313 = vmatprep.subr.bf16.mxu0 0
      %314 = vmatpush1.bf16.xpose.msra.mxu0 %v311
      %315 = vmatprep.subr.bf16.mxu0 0
      %316 = vmatpush1.bf16.xpose.msra.mxu0 0
      %317 = vmatprep.subr.bf16.mxu0 0
      %318 = vmatpush1.bf16.xpose.msra.mxu0 0
      %319 = vmatprep.subr.bf16.mxu0 0
      %320 = vmatpush1.bf16.xpose.msra.mxu0 0
      %321 = vmatprep.subr.bf16.mxu0 0
      %322 = vmatpush1.bf16.xpose.msra.mxu0 0
      %323 = vmatprep.subr.bf16.mxu0 0
      %324 = vmatpush1.bf16.xpose.msra.mxu0 0
      %325 = vmatprep.subr.bf16.mxu0 0
      %326 = vmatpush1.bf16.xpose.msra.mxu0 0
      %327 = vmatprep.subr.bf16.mxu0 0
      %328 = vmatpush1.bf16.xpose.msra.mxu0 0
      %329 = vmatprep.subr.bf16.mxu0 0
      %330 = vmatpush1.bf16.xpose.msra.mxu0 0
      %331 = vmatprep.subr.bf16.mxu0 0
      %332 = vmatpush1.bf16.xpose.msra.mxu0 0
      %333 = vmatprep.subr.bf16.mxu0 0
      %334 = vmatpush1.bf16.xpose.msra.mxu0 0
      %335 = vmatprep.subr.bf16.mxu0 0
      %336 = vmatpush1.bf16.xpose.msra.mxu0 0
      %337 = vmatprep.subr.bf16.mxu0 0
      %338 = vmatpush1.bf16.xpose.msra.mxu0 0
      %339 = vmatprep.subr.bf16.mxu0 0
      %340 = vmatpush1.bf16.xpose.msra.mxu0 0
      %341 = vmatprep.subr.bf16.mxu0 0
      %342 = vmatpush1.bf16.xpose.msra.mxu0 0
      %343 = vmatprep.subr.bf16.mxu0 0
      %344 = vmatpush1.bf16.xpose.msra.mxu0 0
      %345 = vmatprep.mubr.bf16.mxu0 0
      %346 = vmatmul.mubr.bf16.gmra.mrb[0].mxu0 %v308
      %v347 = vpop.f32.mrb[0].mxu0
      %v348 = vadd.f32 0.0, %v347
      %v349 = vpop.f32.mrb[0].mxu0
      %v350 = vpop.f32.mrb[0].mxu0
      %v351 = vadd.f32 0.0, %v350
      %v352 = vpop.f32.mrb[0].mxu0
      %353 = vdwg.mxu0
      %v354 = vmul.f32 %v348, 0.35355338
      %v355 = vmul.f32 %v351, 0.35355338
      %v356 = vsel %vm217, %v354, -inf
      %357 = vmax.xlane.f32.xlu0 %v356
      %v358 = vpop.xlane.xlu0 %357
      %v359 = vsel %vm221, %v355, -inf
      %360 = vmax.xlane.f32.xlu0 %v359
      %v361 = vpop.xlane.xlu0 %360
      %v362 = vsub.f32 %v354, %v358
      %v363 = vsub.f32 %v355, %v361
      %v364 = vmul.f32 %v362, 1.442695
      %v365 = vpow.pop %v364
      %v366 = vmul.f32 %v363, 1.442695
      %v367 = vpow.pop %v366
      %v368 = vsel %vm217, %v365, 0.0
      %369 = vadd.xlane.f32.xlu0 %v368
      %v370 = vpop.xlane.xlu0 %369
      %v371 = vsel %vm221, %v367, 0.0
      %372 = vadd.xlane.f32.xlu0 %v371
      %v373 = vpop.xlane.xlu0 %372
      %v374 = vrcp.pop %v370
      %v375 = vrcp.pop %v373
      %v376 = vmul.f32 %v365, %v374
      %v377 = vmul.f32 %v367, %v375
      %v378 = vpack.c.bf16 %v377, %v376
      %379 = vrot.lane.b32.xlu0 %v164, 56
      %v380 = vpop.permute.xlu0 %379
      %v382 = vsel %vm217, %v378, 0
      %v385 = vsel %vm247, %v380, 0
      %387 = vmatprep.subr.bf16.mxu0 0
      %388 = vmatpush1.bf16.msra.mxu0 %v385
      %389 = vmatprep.subr.bf16.mxu0 0
      %390 = vmatpush1.bf16.msra.mxu0 0
      %391 = vmatprep.subr.bf16.mxu0 0
      %392 = vmatpush1.bf16.msra.mxu0 0
      %393 = vmatprep.subr.bf16.mxu0 0
      %394 = vmatpush1.bf16.msra.mxu0 0
      %395 = vmatprep.subr.bf16.mxu0 0
      %396 = vmatpush1.bf16.msra.mxu0 0
      %397 = vmatprep.subr.bf16.mxu0 0
      %398 = vmatpush1.bf16.msra.mxu0 0
      %399 = vmatprep.subr.bf16.mxu0 0
      %400 = vmatpush1.bf16.msra.mxu0 0
      %401 = vmatprep.subr.bf16.mxu0 0
      %402 = vmatpush1.bf16.msra.mxu0 0
      %403 = vmatprep.subr.bf16.mxu0 0
      %404 = vmatpush1.bf16.msra.mxu0 0
      %405 = vmatprep.subr.bf16.mxu0 0
      %406 = vmatpush1.bf16.msra.mxu0 0
      %407 = vmatprep.subr.bf16.mxu0 0
      %408 = vmatpush1.bf16.msra.mxu0 0
      %409 = vmatprep.subr.bf16.mxu0 0
      %410 = vmatpush1.bf16.msra.mxu0 0
      %411 = vmatprep.subr.bf16.mxu0 0
      %412 = vmatpush1.bf16.msra.mxu0 0
      %413 = vmatprep.subr.bf16.mxu0 0
      %414 = vmatpush1.bf16.msra.mxu0 0
      %415 = vmatprep.subr.bf16.mxu0 0
      %416 = vmatpush1.bf16.msra.mxu0 0
      %417 = vmatprep.subr.bf16.mxu0 0
      %418 = vmatpush1.bf16.msra.mxu0 0
      %419 = vmatprep.mubr.bf16.mxu0 0
      %420 = vmatmul.mubr.bf16.gmra.mrb[0].mxu0 %v382
      %v421 = vpop.f32.mrb[0].mxu0
      %v422 = vadd.f32 0.0, %v421
      %v423 = vpop.f32.mrb[0].mxu0
      %v424 = vpop.f32.mrb[0].mxu0
      %v425 = vadd.f32 0.0, %v424
      %v426 = vpop.f32.mrb[0].mxu0
      %427 = vdwg.mxu0
      %v429 = vunpack.c.l.b16 %v378
      %v430 = vunpack.c.h.b16 %v378
      %v431 = vpack.c.b16 %v429, %v429
      %v432 = vpack.c.b16 %v430, %v430
      %s435 = scalar_lea.vmem %s156, 8
      %436 = vst.msk [vmem:[%s435] sm:$0xf] %vm299, %v431
      %437 = vst.msk [vmem:[%s435 + $0x4] sm:$0x7] %vm301, %v432
      %438 = vrot.lane.b32.xlu0 %v164, 112
      %v439 = vpop.permute.xlu0 %438
      %440 = vrot.lane.b32.xlu0 %v164, 80
      %v441 = vpop.permute.xlu0 %440
      %v443 = vsel %vm167, %v439, 0
      %v446 = vsel %vm167, %v441, 0
      %448 = vmatprep.subr.bf16.mxu0 0
      %449 = vmatpush1.bf16.xpose.msra.mxu0 %v446
      %450 = vmatprep.subr.bf16.mxu0 0
      %451 = vmatpush1.bf16.xpose.msra.mxu0 0
      %452 = vmatprep.subr.bf16.mxu0 0
      %453 = vmatpush1.bf16.xpose.msra.mxu0 0
      %454 = vmatprep.subr.bf16.mxu0 0
      %455 = vmatpush1.bf16.xpose.msra.mxu0 0
      %456 = vmatprep.subr.bf16.mxu0 0
      %457 = vmatpush1.bf16.xpose.msra.mxu0 0
      %458 = vmatprep.subr.bf16.mxu0 0
      %459 = vmatpush1.bf16.xpose.msra.mxu0 0
      %460 = vmatprep.subr.bf16.mxu0 0
      %461 = vmatpush1.bf16.xpose.msra.mxu0 0
      %462 = vmatprep.subr.bf16.mxu0 0
      %463 = vmatpush1.bf16.xpose.msra.mxu0 0
      %464 = vmatprep.subr.bf16.mxu0 0
      %465 = vmatpush1.bf16.xpose.msra.mxu0 0
      %466 = vmatprep.subr.bf16.mxu0 0
      %467 = vmatpush1.bf16.xpose.msra.mxu0 0
      %468 = vmatprep.subr.bf16.mxu0 0
      %469 = vmatpush1.bf16.xpose.msra.mxu0 0
      %470 = vmatprep.subr.bf16.mxu0 0
      %471 = vmatpush1.bf16.xpose.msra.mxu0 0
      %472 = vmatprep.subr.bf16.mxu0 0
      %473 = vmatpush1.bf16.xpose.msra.mxu0 0
      %474 = vmatprep.subr.bf16.mxu0 0
      %475 = vmatpush1.bf16.xpose.msra.mxu0 0
      %476 = vmatprep.subr.bf16.mxu0 0
      %477 = vmatpush1.bf16.xpose.msra.mxu0 0
      %478 = vmatprep.subr.bf16.mxu0 0
      %479 = vmatpush1.bf16.xpose.msra.mxu0 0
      %480 = vmatprep.mubr.bf16.mxu0 0
      %481 = vmatmul.mubr.bf16.gmra.mrb[0].mxu0 %v443
      %v482 = vpop.f32.mrb[0].mxu0
      %v483 = vadd.f32 0.0, %v482
      %v484 = vpop.f32.mrb[0].mxu0
      %v485 = vpop.f32.mrb[0].mxu0
      %v486 = vadd.f32 0.0, %v485
      %v487 = vpop.f32.mrb[0].mxu0
      %488 = vdwg.mxu0
      %v489 = vmul.f32 %v483, 0.35355338
      %v490 = vmul.f32 %v486, 0.35355338
      %v491 = vsel %vm217, %v489, -inf
      %492 = vmax.xlane.f32.xlu0 %v491
      %v493 = vpop.xlane.xlu0 %492
      %v494 = vsel %vm221, %v490, -inf
      %495 = vmax.xlane.f32.xlu0 %v494
      %v496 = vpop.xlane.xlu0 %495
      %v497 = vsub.f32 %v489, %v493
      %v498 = vsub.f32 %v490, %v496
      %v499 = vmul.f32 %v497, 1.442695
      %v500 = vpow.pop %v499
      %v501 = vmul.f32 %v498, 1.442695
      %v502 = vpow.pop %v501
      %v503 = vsel %vm217, %v500, 0.0
      %504 = vadd.xlane.f32.xlu0 %v503
      %v505 = vpop.xlane.xlu0 %504
      %v506 = vsel %vm221, %v502, 0.0
      %507 = vadd.xlane.f32.xlu0 %v506
      %v508 = vpop.xlane.xlu0 %507
      %v509 = vrcp.pop %v505
      %v510 = vrcp.pop %v508
      %v511 = vmul.f32 %v500, %v509
      %v512 = vmul.f32 %v502, %v510
      %v513 = vpack.c.bf16 %v512, %v511
      %514 = vrot.lane.b32.xlu0 %v164, 48
      %v515 = vpop.permute.xlu0 %514
      %v517 = vsel %vm217, %v513, 0
      %v520 = vsel %vm247, %v515, 0
      %522 = vmatprep.subr.bf16.mxu0 0
      %523 = vmatpush1.bf16.msra.mxu0 %v520
      %524 = vmatprep.subr.bf16.mxu0 0
      %525 = vmatpush1.bf16.msra.mxu0 0
      %526 = vmatprep.subr.bf16.mxu0 0
      %527 = vmatpush1.bf16.msra.mxu0 0
      %528 = vmatprep.subr.bf16.mxu0 0
      %529 = vmatpush1.bf16.msra.mxu0 0
      %530 = vmatprep.subr.bf16.mxu0 0
      %531 = vmatpush1.bf16.msra.mxu0 0
      %532 = vmatprep.subr.bf16.mxu0 0
      %533 = vmatpush1.bf16.msra.mxu0 0
      %534 = vmatprep.subr.bf16.mxu0 0
      %535 = vmatpush1.bf16.msra.mxu0 0
      %536 = vmatprep.subr.bf16.mxu0 0
      %537 = vmatpush1.bf16.msra.mxu0 0
      %538 = vmatprep.subr.bf16.mxu0 0
      %539 = vmatpush1.bf16.msra.mxu0 0
      %540 = vmatprep.subr.bf16.mxu0 0
      %541 = vmatpush1.bf16.msra.mxu0 0
      %542 = vmatprep.subr.bf16.mxu0 0
      %543 = vmatpush1.bf16.msra.mxu0 0
      %544 = vmatprep.subr.bf16.mxu0 0
      %545 = vmatpush1.bf16.msra.mxu0 0
      %546 = vmatprep.subr.bf16.mxu0 0
      %547 = vmatpush1.bf16.msra.mxu0 0
      %548 = vmatprep.subr.bf16.mxu0 0
      %549 = vmatpush1.bf16.msra.mxu0 0
      %550 = vmatprep.subr.bf16.mxu0 0
      %551 = vmatpush1.bf16.msra.mxu0 0
      %552 = vmatprep.subr.bf16.mxu0 0
      %553 = vmatpush1.bf16.msra.mxu0 0
      %554 = vmatprep.mubr.bf16.mxu0 0
      %555 = vmatmul.mubr.bf16.gmra.mrb[0].mxu0 %v517
      %v556 = vpop.f32.mrb[0].mxu0
      %v557 = vadd.f32 0.0, %v556
      %v558 = vpop.f32.mrb[0].mxu0
      %v559 = vpop.f32.mrb[0].mxu0
      %v560 = vadd.f32 0.0, %v559
      %v561 = vpop.f32.mrb[0].mxu0
      %562 = vdwg.mxu0
      %v564 = vunpack.c.l.b16 %v513
      %v565 = vunpack.c.h.b16 %v513
      %v566 = vpack.c.b16 %v564, %v564
      %v567 = vpack.c.b16 %v565, %v565
      %s570 = scalar_lea.vmem %s156, 16
      %571 = vst.msk [vmem:[%s570] sm:$0xf] %vm299, %v566
      %572 = vst.msk [vmem:[%s570 + $0x4] sm:$0x7] %vm301, %v567
      %573 = vrot.lane.b32.xlu0 %v164, 104
      %v574 = vpop.permute.xlu0 %573
      %575 = vrot.lane.b32.xlu0 %v164, 72
      %v576 = vpop.permute.xlu0 %575
      %v578 = vsel %vm167, %v574, 0
      %v581 = vsel %vm167, %v576, 0
      %583 = vmatprep.subr.bf16.mxu0 0
      %584 = vmatpush1.bf16.xpose.msra.mxu0 %v581
      %585 = vmatprep.subr.bf16.mxu0 0
      %586 = vmatpush1.bf16.xpose.msra.mxu0 0
      %587 = vmatprep.subr.bf16.mxu0 0
      %588 = vmatpush1.bf16.xpose.msra.mxu0 0
      %589 = vmatprep.subr.bf16.mxu0 0
      %590 = vmatpush1.bf16.xpose.msra.mxu0 0
      %591 = vmatprep.subr.bf16.mxu0 0
      %592 = vmatpush1.bf16.xpose.msra.mxu0 0
      %593 = vmatprep.subr.bf16.mxu0 0
      %594 = vmatpush1.bf16.xpose.msra.mxu0 0
      %595 = vmatprep.subr.bf16.mxu0 0
      %596 = vmatpush1.bf16.xpose.msra.mxu0 0
      %597 = vmatprep.subr.bf16.mxu0 0
      %598 = vmatpush1.bf16.xpose.msra.mxu0 0
      %599 = vmatprep.subr.bf16.mxu0 0
      %600 = vmatpush1.bf16.xpose.msra.mxu0 0
      %601 = vmatprep.subr.bf16.mxu0 0
      %602 = vmatpush1.bf16.xpose.msra.mxu0 0
      %603 = vmatprep.subr.bf16.mxu0 0
      %604 = vmatpush1.bf16.xpose.msra.mxu0 0
      %605 = vmatprep.subr.bf16.mxu0 0
      %606 = vmatpush1.bf16.xpose.msra.mxu0 0
      %607 = vmatprep.subr.bf16.mxu0 0
      %608 = vmatpush1.bf16.xpose.msra.mxu0 0
      %609 = vmatprep.subr.bf16.mxu0 0
      %610 = vmatpush1.bf16.xpose.msra.mxu0 0
      %611 = vmatprep.subr.bf16.mxu0 0
      %612 = vmatpush1.bf16.xpose.msra.mxu0 0
      %613 = vmatprep.subr.bf16.mxu0 0
      %614 = vmatpush1.bf16.xpose.msra.mxu0 0
      %615 = vmatprep.mubr.bf16.mxu0 0
      %616 = vmatmul.mubr.bf16.gmra.mrb[0].mxu0 %v578
      %v617 = vpop.f32.mrb[0].mxu0
      %v618 = vadd.f32 0.0, %v617
      %v619 = vpop.f32.mrb[0].mxu0
      %v620 = vpop.f32.mrb[0].mxu0
      %v621 = vadd.f32 0.0, %v620
      %v622 = vpop.f32.mrb[0].mxu0
      %623 = vdwg.mxu0
      %v624 = vmul.f32 %v618, 0.35355338
      %v625 = vmul.f32 %v621, 0.35355338
      %v626 = vsel %vm217, %v624, -inf
      %627 = vmax.xlane.f32.xlu0 %v626
      %v628 = vpop.xlane.xlu0 %627
      %v629 = vsel %vm221, %v625, -inf
      %630 = vmax.xlane.f32.xlu0 %v629
      %v631 = vpop.xlane.xlu0 %630
      %v632 = vsub.f32 %v624, %v628
      %v633 = vsub.f32 %v625, %v631
      %v634 = vmul.f32 %v632, 1.442695
      %v635 = vpow.pop %v634
      %v636 = vmul.f32 %v633, 1.442695
      %v637 = vpow.pop %v636
      %v638 = vsel %vm217, %v635, 0.0
      %639 = vadd.xlane.f32.xlu0 %v638
      %v640 = vpop.xlane.xlu0 %639
      %v641 = vsel %vm221, %v637, 0.0
      %642 = vadd.xlane.f32.xlu0 %v641
      %v643 = vpop.xlane.xlu0 %642
      %v644 = vrcp.pop %v640
      %v645 = vrcp.pop %v643
      %v646 = vmul.f32 %v635, %v644
      %v647 = vmul.f32 %v637, %v645
      %v648 = vpack.c.bf16 %v647, %v646
      %649 = vrot.lane.b32.xlu0 %v164, 40
      %v650 = vpop.permute.xlu0 %649
      %v652 = vsel %vm217, %v648, 0
      %v655 = vsel %vm247, %v650, 0
      %657 = vmatprep.subr.bf16.mxu0 0
      %658 = vmatpush1.bf16.msra.mxu0 %v655
      %659 = vmatprep.subr.bf16.mxu0 0
      %660 = vmatpush1.bf16.msra.mxu0 0
      %661 = vmatprep.subr.bf16.mxu0 0
      %662 = vmatpush1.bf16.msra.mxu0 0
      %663 = vmatprep.subr.bf16.mxu0 0
      %664 = vmatpush1.bf16.msra.mxu0 0
      %665 = vmatprep.subr.bf16.mxu0 0
      %666 = vmatpush1.bf16.msra.mxu0 0
      %667 = vmatprep.subr.bf16.mxu0 0
      %668 = vmatpush1.bf16.msra.mxu0 0
      %669 = vmatprep.subr.bf16.mxu0 0
      %670 = vmatpush1.bf16.msra.mxu0 0
      %671 = vmatprep.subr.bf16.mxu0 0
      %672 = vmatpush1.bf16.msra.mxu0 0
      %673 = vmatprep.subr.bf16.mxu0 0
      %674 = vmatpush1.bf16.msra.mxu0 0
      %675 = vmatprep.subr.bf16.mxu0 0
      %676 = vmatpush1.bf16.msra.mxu0 0
      %677 = vmatprep.subr.bf16.mxu0 0
      %678 = vmatpush1.bf16.msra.mxu0 0
      %679 = vmatprep.subr.bf16.mxu0 0
      %680 = vmatpush1.bf16.msra.mxu0 0
      %681 = vmatprep.subr.bf16.mxu0 0
      %682 = vmatpush1.bf16.msra.mxu0 0
      %683 = vmatprep.subr.bf16.mxu0 0
      %684 = vmatpush1.bf16.msra.mxu0 0
      %685 = vmatprep.subr.bf16.mxu0 0
      %686 = vmatpush1.bf16.msra.mxu0 0
      %687 = vmatprep.subr.bf16.mxu0 0
      %688 = vmatpush1.bf16.msra.mxu0 0
      %689 = vmatprep.mubr.bf16.mxu0 0
      %690 = vmatmul.mubr.bf16.gmra.mrb[0].mxu0 %v652
      %v691 = vpop.f32.mrb[0].mxu0
      %v692 = vadd.f32 0.0, %v691
      %v693 = vpop.f32.mrb[0].mxu0
      %v694 = vpop.f32.mrb[0].mxu0
      %v695 = vadd.f32 0.0, %v694
      %v696 = vpop.f32.mrb[0].mxu0
      %697 = vdwg.mxu0
      %v699 = vunpack.c.l.b16 %v648
      %v700 = vunpack.c.h.b16 %v648
      %v701 = vpack.c.b16 %v699, %v699
      %v702 = vpack.c.b16 %v700, %v700
      %s705 = scalar_lea.vmem %s156, 24
      %706 = vst.msk [vmem:[%s705] sm:$0xf] %vm299, %v701
      %707 = vst.msk [vmem:[%s705 + $0x4] sm:$0x7] %vm301, %v702
      %710 = vrot.lane.b32.xlu0 %v422, 8
      %v711 = vpop.permute.xlu0 %710
      %712 = vrot.lane.b32.xlu0 %v425, 8
      %v713 = vpop.permute.xlu0 %712
      %718 = vrot.lane.b32.xlu0 %v557, 16
      %v719 = vpop.permute.xlu0 %718
      %720 = vrot.lane.b32.xlu0 %v560, 16
      %v721 = vpop.permute.xlu0 %720
      %726 = vrot.lane.b32.xlu0 %v692, 24
      %v727 = vpop.permute.xlu0 %726
      %728 = vrot.lane.b32.xlu0 %v695, 24
      %v729 = vpop.permute.xlu0 %728
      %v732 = vsel %vm167, %v286, %v711
      %v733 = vsel %vm167, %v289, %v713
      %vm734 = vcmask 130048
      %v735 = vsel %vm734, %v732, %v719
      %v736 = vsel %vm734, %v733, %v721
      %vm737 = vcmask 195584
      %v738 = vsel %vm737, %v735, %v727
      %v739 = vsel %vm737, %v736, %v729
      %v740 = vpack.c.bf16 %v739, %v738
      %v742 = vunpack.c.l.b16 %v740
      %v743 = vunpack.c.h.b16 %v740
      %v744 = vpack.c.b16 %v742, %v742
      %v745 = vpack.c.b16 %v743, %v743
      %vm748 = vcmask 257024
      %749 = vst.msk [vmem:[%s151] sm:$0xf] %vm748, %v744
      %vm750 = vcmask 256000
      %751 = vst.msk [vmem:[%s151 + $0x4] sm:$0x7] %vm750, %v745
      %p752 = scmp.lt.s32.totalorder %s14, 1
      %s753 = scalar_select %p752, %s14, 1
      %s754 = smul.addr %s753, 2
      %s755 = smul.addr %s754, 4
      %s756 = scalar_lea.vmem %s1, %s755
      %p757 = scmp.lt.s32.totalorder %s14, 1
      %s758 = scalar_select %p757, %s14, 1
      %s759 = smul.addr %s758, 8
      %s760 = smul.addr %s759, 4
      %s761 = scalar_lea.vmem %s2, %s760
      // Predicated region
      $region25: #{encoder_forward.72} parent=23 // pred_check
        %p762 = pneg %p58
      $region26: #{encoder_forward.72} parent=23 // pred_check_branch
        %764 = sbr.rel (%p762) target = $region28
      $region27: #{encoder_forward.72} parent=23 // pred_region
        _
      $region28: #{encoder_forward.72} parent=23 // pred_fallthru
        _
      // Predicated region
      $region29: #{encoder_forward.72} parent=23 // pred_check
        %p765 = pneg %p84
      $region30: #{encoder_forward.72} parent=23 // pred_check_branch
        %767 = sbr.rel (%p765) target = $region32
      $region31: #{encoder_forward.72} parent=23 // pred_region
        _
      $region32: #{encoder_forward.72} parent=23 // pred_fallthru
        _
    $region24: #{encoder_forward.72} parent=5 // pred_fallthru
      _
    %p768 = scmp.le.s32.totalorder 2, %s9
    // Predicated region
    $region33: #{encoder_forward.72} parent=5 // pred_check
      %p769 = pneg %p768
    $region34: #{encoder_forward.72} parent=5 // pred_check_branch
      %771 = sbr.rel (%p769) target = $region36
    $region35: #{encoder_forward.72} parent=5 // pred_region
      %s772 = ssub.s32 %s9, 2
      // Predicated region
      $region37: #{encoder_forward.72} parent=35 // pred_check
        %p773 = pneg %p64
      $region38: #{encoder_forward.72} parent=35 // pred_check_branch
        %775 = sbr.rel (%p773) target = $region40
      $region39: #{encoder_forward.72} parent=35 // pred_region
        %p776 = scmp.lt.s32.totalorder %s15, 1
        %s777 = scalar_select %p776, %s15, 1
        %s778 = smul.addr %s777, 2
        %s779 = smul.addr %s778, 4
        %s780 = scalar_lea.vmem %s1, %s779
      $region40: #{encoder_forward.72} parent=35 // pred_fallthru
        _
      // Predicated region
      $region41: #{encoder_forward.72} parent=35 // pred_check
        %p781 = pneg %p90
      $region42: #{encoder_forward.72} parent=35 // pred_check_branch
        %783 = sbr.rel (%p781) target = $region44
      $region43: #{encoder_forward.72} parent=35 // pred_region
        %p784 = scmp.lt.s32.totalorder %s15, 1
        %s785 = scalar_select %p784, %s15, 1
        %s786 = smul.addr %s785, 8
        %s787 = smul.addr %s786, 4
        %s788 = scalar_lea.vmem %s2, %s787
      $region44: #{encoder_forward.72} parent=35 // pred_fallthru
        _
    $region36: #{encoder_forward.72} parent=5 // pred_fallthru
      _
  $region6: #{encoder_forward.72} parent=0 // loop_footer
    %s13 = sadd.s32 1, %s9
  $region7: #{encoder_forward.72} parent=0 // loop_footer_branch
    %8 = sbr.rel target = $region3
  $region8: #{encoder_forward.72} parent=0 // loop_exit
    _

// kernel: encoder_forward.75
$region0: #{encoder_forward.75}
  #allocation0 [shape = 'u32[]', space=smem, size = 0x4, offset = 0x4, fixed_abs, tag = 'smem constant byte address 0x4 - core index']
  #allocation1 [shape = 'u32[144,128]{1,0:T(1,128)}', space=vmem, size = 0x12000, scoped, tag = 'internal scratch']
  %s0 = inlined_call_operand.vmem [shape: bf16[28,64], index: 0, kind: input, shape index: {}]
  %s1 = inlined_call_operand.vmem [shape: bf16[64,32], index: 1, kind: input, shape index: {}]
  %s2 = inlined_call_operand.vmem [shape: f32[1,32], index: 2, kind: input, shape index: {}]
  %s3 = inlined_call_operand.vmem [shape: bf16[28,32], index: 3, kind: input, shape index: {}]
  %s4 = inlined_call_operand.vmem [shape: bf16[28,32], index: 4, kind: output, shape index: {}]
  %s5 = sld [smem:[#allocation0]]
  $region26: #{encoder_forward.75} parent=0
    _
  %s7 = ssub.s32 1, %s5
  %s8 = scalar_select 0, %s7, %s5
  // Predicated region
  $region2: #{encoder_forward.75} parent=0 // pred_check
    _
  $region3: #{encoder_forward.75} parent=0 // pred_check_branch
    %10 = sbr.rel (0) target = $region5
  $region4: #{encoder_forward.75} parent=0 // pred_region
    _
  $region5: #{encoder_forward.75} parent=0 // pred_fallthru
    _
  // Predicated region
  $region6: #{encoder_forward.75} parent=0 // pred_check
    _
  $region7: #{encoder_forward.75} parent=0 // pred_check_branch
    %12 = sbr.rel (0) target = $region9
  $region8: #{encoder_forward.75} parent=0 // pred_region
    _
  $region9: #{encoder_forward.75} parent=0 // pred_fallthru
    _
  // Predicated region
  $region10: #{encoder_forward.75} parent=0 // pred_check
    _
  $region11: #{encoder_forward.75} parent=0 // pred_check_branch
    %14 = sbr.rel (0) target = $region13
  $region12: #{encoder_forward.75} parent=0 // pred_region
    _
  $region13: #{encoder_forward.75} parent=0 // pred_fallthru
    _
  // Predicated region
  $region14: #{encoder_forward.75} parent=0 // pred_check
    _
  $region15: #{encoder_forward.75} parent=0 // pred_check_branch
    %16 = sbr.rel (0) target = $region17
  $region16: #{encoder_forward.75} parent=0 // pred_region
    _
  $region17: #{encoder_forward.75} parent=0 // pred_fallthru
    _
  %v18 = vld [vmem:[%s0] sm:$0xf]
  %v19 = vld [vmem:[%s0 + $0x4] sm:$0xf]
  %v20 = vld [vmem:[%s0 + $0x8] sm:$0xf]
  %v21 = vld [vmem:[%s0 + $0xc] sm:$0x3]
  %v22 = vld [vmem:[%s1] sm:$0xf]
  %v23 = vld [vmem:[%s1 + $0x4] sm:$0xf]
  %v24 = vld [vmem:[%s1 + $0x8] sm:$0xf]
  %v25 = vld [vmem:[%s1 + $0xc] sm:$0xf]
  %v26 = vld [vmem:[%s1 + $0x10] sm:$0xf]
  %v27 = vld [vmem:[%s1 + $0x14] sm:$0xf]
  %v28 = vld [vmem:[%s1 + $0x18] sm:$0xf]
  %v29 = vld [vmem:[%s1 + $0x1c] sm:$0xf]
  %v30 = vld [vmem:[%s2] sm:$0x1]
  %v32 = vlaneseq
  %v33 = vshrl.u32 %v32, 7
  %v34 = vsub.s32 0, %v33
  %v35 = vrot.slane %v30, %v34
  %v41 = vunpack.c.l.b16 %v18
  %v42 = vunpack.c.l.b16 %v19
  %v43 = vunpack.c.l.b16 %v20
  %v44 = vunpack.c.l.b16 %v21
  %v45 = vpack.c.b16 %v42, %v41
  %v46 = vpack.c.b16 %v44, %v43
  %v55 = vunpack.c.l.b16 %v22
  %v56 = vunpack.c.l.b16 %v23
  %v57 = vunpack.c.l.b16 %v24
  %v58 = vunpack.c.l.b16 %v25
  %v59 = vunpack.c.l.b16 %v26
  %v60 = vunpack.c.l.b16 %v27
  %v61 = vunpack.c.l.b16 %v28
  %v62 = vunpack.c.l.b16 %v29
  %v63 = vpack.c.b16 %v56, %v55
  %v64 = vpack.c.b16 %v58, %v57
  %v65 = vpack.c.b16 %v60, %v59
  %v66 = vpack.c.b16 %v62, %v61
  %vm71 = vcmask 523264
  %v73 = vsel %vm71, %v45, 0
  %v76 = vsel %vm71, %v46, 0
  %78 = vmatprep.subr.bf16.mxu0 0
  %79 = vmatpush1.bf16.msra.mxu0 %v63
  %80 = vmatprep.subr.bf16.mxu0 0
  %81 = vmatpush1.bf16.msra.mxu0 %v64
  %82 = vmatprep.subr.bf16.mxu0 0
  %83 = vmatpush1.bf16.msra.mxu0 %v65
  %84 = vmatprep.subr.bf16.mxu0 0
  %85 = vmatpush1.bf16.msra.mxu0 %v66
  %86 = vmatprep.subr.bf16.mxu0 0
  %87 = vmatpush1.bf16.msra.mxu0 0
  %88 = vmatprep.subr.bf16.mxu0 0
  %89 = vmatpush1.bf16.msra.mxu0 0
  %90 = vmatprep.subr.bf16.mxu0 0
  %91 = vmatpush1.bf16.msra.mxu0 0
  %92 = vmatprep.subr.bf16.mxu0 0
  %93 = vmatpush1.bf16.msra.mxu0 0
  %94 = vmatprep.subr.bf16.mxu0 0
  %95 = vmatpush1.bf16.msra.mxu0 0
  %96 = vmatprep.subr.bf16.mxu0 0
  %97 = vmatpush1.bf16.msra.mxu0 0
  %98 = vmatprep.subr.bf16.mxu0 0
  %99 = vmatpush1.bf16.msra.mxu0 0
  %100 = vmatprep.subr.bf16.mxu0 0
  %101 = vmatpush1.bf16.msra.mxu0 0
  %102 = vmatprep.subr.bf16.mxu0 0
  %103 = vmatpush1.bf16.msra.mxu0 0
  %104 = vmatprep.subr.bf16.mxu0 0
  %105 = vmatpush1.bf16.msra.mxu0 0
  %106 = vmatprep.subr.bf16.mxu0 0
  %107 = vmatpush1.bf16.msra.mxu0 0
  %108 = vmatprep.subr.bf16.mxu0 0
  %109 = vmatpush1.bf16.msra.mxu0 0
  %110 = vmatprep.mubr.bf16.mxu0 0
  %111 = vmatmul.mubr.bf16.gmra.mrb[0].mxu0 %v73
  %v112 = vpop.f32.mrb[0].mxu0
  %v113 = vadd.f32 %v35, %v112
  %v114 = vpop.f32.mrb[0].mxu0
  %v115 = vpop.f32.mrb[0].mxu0
  %v116 = vadd.f32 %v35, %v115
  %v117 = vpop.f32.mrb[0].mxu0
  %118 = vmatprep.mubr.bf16.mxu0 0
  %119 = vmatmul.mubr.bf16.gmra.mrb[0].mxu0 %v76
  %v120 = vpop.f32.mrb[0].mxu0
  %v121 = vadd.f32 %v35, %v120
  %v122 = vpop.f32.mrb[0].mxu0
  %v123 = vpop.f32.mrb[0].mxu0
  %v124 = vadd.f32 %v35, %v123
  %v125 = vpop.f32.mrb[0].mxu0
  %126 = vdwg.mxu0
  %v127 = vld [vmem:[%s3] sm:$0xf]
  %v128 = vld [vmem:[%s3 + $0x4] sm:$0xf]
  %v129 = vld [vmem:[%s3 + $0x8] sm:$0xf]
  %v130 = vld [vmem:[%s3 + $0xc] sm:$0x3]
  %v131 = vunpack.c.l.bf16 %v127
  %v132 = vunpack.c.l.bf16 %v128
  %v133 = vunpack.c.l.bf16 %v129
  %v134 = vunpack.c.l.bf16 %v130
  %v135 = vadd.f32 %v113, %v131
  %v136 = vadd.f32 %v116, %v132
  %v137 = vadd.f32 %v121, %v133
  %v138 = vadd.f32 %v124, %v134
  %v139 = vpack.c.bf16 %v136, %v135
  %v140 = vpack.c.bf16 %v138, %v137
  %v143 = vunpack.c.l.b16 %v139
  %v144 = vunpack.c.h.b16 %v139
  %v145 = vunpack.c.l.b16 %v140
  %v146 = vunpack.c.h.b16 %v140
  %v147 = vpack.c.b16 %v143, %v143
  %v148 = vpack.c.b16 %v144, %v144
  %v149 = vpack.c.b16 %v145, %v145
  %v150 = vpack.c.b16 %v146, %v146
  %vm155 = vcmask 257024
  %156 = vst.msk [vmem:[%s4] sm:$0xf] %vm155, %v147
  %157 = vst.msk [vmem:[%s4 + $0x4] sm:$0xf] %vm155, %v148
  %158 = vst.msk [vmem:[%s4 + $0x8] sm:$0xf] %vm155, %v149
  %vm159 = vcmask 254976
  %160 = vst.msk [vmem:[%s4 + $0xc] sm:$0x3] %vm159, %v150
  // Predicated region
  $region18: #{encoder_forward.75} parent=0 // pred_check
    _
  $region19: #{encoder_forward.75} parent=0 // pred_check_branch
    %162 = sbr.rel (0) target = $region21
  $region20: #{encoder_forward.75} parent=0 // pred_region
    _
  $region21: #{encoder_forward.75} parent=0 // pred_fallthru
    _
  // Predicated region
  $region22: #{encoder_forward.75} parent=0 // pred_check
    _
  $region23: #{encoder_forward.75} parent=0 // pred_check_branch
    %164 = sbr.rel (0) target = $region25
  $region24: #{encoder_forward.75} parent=0 // pred_region
    _
  $region25: #{encoder_forward.75} parent=0 // pred_fallthru
    _

// kernel: encoder_forward.81
$region0: #{encoder_forward.81}
  #allocation0 [shape = 'u32[]', space=smem, size = 0x4, offset = 0x4, fixed_abs, tag = 'smem constant byte address 0x4 - core index']
  #allocation1 [shape = 'u32[144,128]{1,0:T(1,128)}', space=vmem, size = 0x12000, scoped, tag = 'internal scratch']
  %s0 = inlined_call_operand.vmem [shape: bf16[28,32], index: 0, kind: input, shape index: {}]
  %s1 = inlined_call_operand.vmem [shape: f32[1,32], index: 1, kind: input, shape index: {}]
  %s2 = inlined_call_operand.vmem [shape: f32[1,32], index: 2, kind: input, shape index: {}]
  %s3 = inlined_call_operand.vmem [shape: bf16[28,32], index: 3, kind: output, shape index: {}]
  %s4 = sld [smem:[#allocation0]]
  $region22: #{encoder_forward.81} parent=0
    _
  %s6 = ssub.s32 1, %s4
  %s7 = scalar_select 0, %s6, %s4
  // Predicated region
  $region2: #{encoder_forward.81} parent=0 // pred_check
    _
  $region3: #{encoder_forward.81} parent=0 // pred_check_branch
    %9 = sbr.rel (0) target = $region5
  $region4: #{encoder_forward.81} parent=0 // pred_region
    _
  $region5: #{encoder_forward.81} parent=0 // pred_fallthru
    _
  // Predicated region
  $region6: #{encoder_forward.81} parent=0 // pred_check
    _
  $region7: #{encoder_forward.81} parent=0 // pred_check_branch
    %11 = sbr.rel (0) target = $region9
  $region8: #{encoder_forward.81} parent=0 // pred_region
    _
  $region9: #{encoder_forward.81} parent=0 // pred_fallthru
    _
  // Predicated region
  $region10: #{encoder_forward.81} parent=0 // pred_check
    _
  $region11: #{encoder_forward.81} parent=0 // pred_check_branch
    %13 = sbr.rel (0) target = $region13
  $region12: #{encoder_forward.81} parent=0 // pred_region
    _
  $region13: #{encoder_forward.81} parent=0 // pred_fallthru
    _
  %v14 = vld [vmem:[%s0] sm:$0xf]
  %v15 = vld [vmem:[%s0 + $0x4] sm:$0xf]
  %v16 = vld [vmem:[%s0 + $0x8] sm:$0xf]
  %v17 = vld [vmem:[%s0 + $0xc] sm:$0x3]
  %v18 = vunpack.c.l.bf16 %v14
  %v19 = vunpack.c.l.bf16 %v15
  %v20 = vunpack.c.l.bf16 %v16
  %v21 = vunpack.c.l.bf16 %v17
  %vm22 = vcmask 261120
  %v23 = vsel %vm22, %v18, 0.0
  %24 = vadd.xlane.f32.xlu0 %v23
  %v25 = vpop.xlane.xlu0 %24
  %v26 = vsel %vm22, %v19, 0.0
  %27 = vadd.xlane.f32.xlu0 %v26
  %v28 = vpop.xlane.xlu0 %27
  %v29 = vsel %vm22, %v20, 0.0
  %30 = vadd.xlane.f32.xlu0 %v29
  %v31 = vpop.xlane.xlu0 %30
  %vm32 = vcmask 257024
  %v33 = vsel %vm32, %v21, 0.0
  %34 = vadd.xlane.f32.xlu0 %v33
  %v35 = vpop.xlane.xlu0 %34
  %v36 = vrcp.pop 32.0
  %v37 = vmul.f32 %v25, %v36
  %v38 = vmul.f32 %v28, %v36
  %v39 = vmul.f32 %v31, %v36
  %v40 = vmul.f32 %v35, %v36
  %v41 = vsub.f32 %v18, %v37
  %v42 = vsub.f32 %v19, %v38
  %v43 = vsub.f32 %v20, %v39
  %v44 = vsub.f32 %v21, %v40
  %v45 = vmul.f32 %v41, %v41
  %v46 = vmul.f32 %v42, %v42
  %v47 = vmul.f32 %v43, %v43
  %v48 = vmul.f32 %v44, %v44
  %v49 = vsel %vm22, %v45, 0.0
  %50 = vadd.xlane.f32.xlu0 %v49
  %v51 = vpop.xlane.xlu0 %50
  %v52 = vsel %vm22, %v46, 0.0
  %53 = vadd.xlane.f32.xlu0 %v52
  %v54 = vpop.xlane.xlu0 %53
  %v55 = vsel %vm22, %v47, 0.0
  %56 = vadd.xlane.f32.xlu0 %v55
  %v57 = vpop.xlane.xlu0 %56
  %v58 = vsel %vm32, %v48, 0.0
  %59 = vadd.xlane.f32.xlu0 %v58
  %v60 = vpop.xlane.xlu0 %59
  %v61 = vmul.f32 %v51, %v36
  %v62 = vmul.f32 %v54, %v36
  %v63 = vmul.f32 %v57, %v36
  %v64 = vmul.f32 %v60, %v36
  %v65 = vadd.f32 %v61, 1e-06
  %v66 = vadd.f32 %v62, 1e-06
  %v67 = vadd.f32 %v63, 1e-06
  %v68 = vadd.f32 %v64, 1e-06
  %v69 = vrsqrt.pop %v65
  %v70 = vrsqrt.pop %v66
  %v71 = vrsqrt.pop %v67
  %v72 = vrsqrt.pop %v68
  %v73 = vmul.f32 %v41, %v69
  %v74 = vmul.f32 %v42, %v70
  %v75 = vmul.f32 %v43, %v71
  %v76 = vmul.f32 %v44, %v72
  %v77 = vld [vmem:[%s1] sm:$0x1]
  %v79 = vlaneseq
  %v80 = vshrl.u32 %v79, 7
  %v81 = vsub.s32 0, %v80
  %v82 = vrot.slane %v77, %v81
  %v84 = vmul.f32 %v73, %v82
  %v85 = vmul.f32 %v74, %v82
  %v86 = vmul.f32 %v75, %v82
  %v87 = vmul.f32 %v76, %v82
  %v88 = vld [vmem:[%s2] sm:$0x1]
  %v90 = vlaneseq
  %v91 = vshrl.u32 %v90, 7
  %v92 = vsub.s32 0, %v91
  %v93 = vrot.slane %v88, %v92
  %v95 = vadd.f32 %v84, %v93
  %v96 = vadd.f32 %v85, %v93
  %v97 = vadd.f32 %v86, %v93
  %v98 = vadd.f32 %v87, %v93
  %v99 = vpack.c.bf16 %v96, %v95
  %v100 = vpack.c.bf16 %v98, %v97
  %v103 = vunpack.c.l.b16 %v99
  %v104 = vunpack.c.h.b16 %v99
  %v105 = vunpack.c.l.b16 %v100
  %v106 = vunpack.c.h.b16 %v100
  %v107 = vpack.c.b16 %v103, %v103
  %v108 = vpack.c.b16 %v104, %v104
  %v109 = vpack.c.b16 %v105, %v105
  %v110 = vpack.c.b16 %v106, %v106
  %115 = vst.msk [vmem:[%s3] sm:$0xf] %vm32, %v107
  %116 = vst.msk [vmem:[%s3 + $0x4] sm:$0xf] %vm32, %v108
  %117 = vst.msk [vmem:[%s3 + $0x8] sm:$0xf] %vm32, %v109
  %vm118 = vcmask 254976
  %119 = vst.msk [vmem:[%s3 + $0xc] sm:$0x3] %vm118, %v110
  // Predicated region
  $region14: #{encoder_forward.81} parent=0 // pred_check
    _
  $region15: #{encoder_forward.81} parent=0 // pred_check_branch
    %121 = sbr.rel (0) target = $region17
  $region16: #{encoder_forward.81} parent=0 // pred_region
    _
  $region17: #{encoder_forward.81} parent=0 // pred_fallthru
    _
  // Predicated region
  $region18: #{encoder_forward.81} parent=0 // pred_check
    _
  $region19: #{encoder_forward.81} parent=0 // pred_check_branch
    %123 = sbr.rel (0) target = $region21
  $region20: #{encoder_forward.81} parent=0 // pred_region
    _
  $region21: #{encoder_forward.81} parent=0 // pred_fallthru
    _

</llo_original>
